<compile_context>
chip_gen: v7x
topology: tpu7x:2x2x1
jax: 0.10.0
libtpu: 0.0.40
codegen_flags: <defaults>
</compile_context>

<pallas_src>
import functools

import jax
import jax.numpy as jnp
from jax.experimental import pallas as pl
from jax.experimental.pallas import tpu as pltpu

IN_FEATURES = 4096
HIDDEN = 2048


def _mlp_kernel(x_ref, w1_ref, b1_ref, alpha_ref, w2_ref, o_ref, h_acc, *, tk):
    """Fused:  h = PReLU(x @ W1 + b1);  out_partial = h @ W2  (per H block).

    Grid: (H tiles ["parallel"], K tiles ["arbitrary"]).
      - axis 1 tiles the 4096-wide reduction (K) of the first matmul; the
        hidden activation block is accumulated in a VMEM f32 scratch.
      - axis 0 tiles the hidden dim (H); each H block produces a partial
        second-matmul result into its own output slab.  Partials are combined
        (and b2 added once) by a trivial XLA reduction in the wrapper.
    """
    k = pl.program_id(1)
    nk = pl.num_programs(1)

    @pl.when(k == 0)
    def _():
        h_acc[...] = jnp.zeros_like(h_acc)

    # First matmul (partial over this K tile), bf16 x bf16 -> f32 accumulate.
    k0 = pl.multiple_of(k * tk, tk)
    x_tile = x_ref[:, pl.ds(k0, tk)]
    h_acc[...] += jnp.dot(
        x_tile, w1_ref[...], preferred_element_type=jnp.float32
    )

    @pl.when(k == nk - 1)
    def _():
        h = h_acc[...] + b1_ref[...]            # (B, th) + (1, th)
        alpha = alpha_ref[0]                    # PReLU shared parameter (SMEM)
        h = jnp.where(h >= 0.0, h, alpha * h)   # PReLU
        part = jnp.dot(
            h.astype(w2_ref.dtype), w2_ref[...],
            preferred_element_type=jnp.float32,
        )
        # TODO(synk): training-mode Dropout(p=0.5) would need RNG masking here;
        # eval-mode dropout is the identity, which is what we implement.
        o_ref[...] = part.astype(o_ref.dtype)


def embedding_image_nn(x, w1, b1, alpha, w2, b2, *, tk=2048, th=1024):
    """x: (B, 4096) -> (B, output_size).

    w1: (4096, 2048), b1: (1, 2048), alpha: (1,), w2: (2048, N), b2: (1, N).
    """
    B, K = x.shape
    assert K == IN_FEATURES
    H = w1.shape[1]
    N = w2.shape[1]
    assert K % tk == 0 and H % th == 0

    # Weight-streaming regime: cast the big operands to bf16 (halves HBM bytes,
    # native MXU dtype). Accumulation stays f32 inside the kernel.
    x_bf = x.astype(jnp.bfloat16)
    w1_bf = w1.astype(jnp.bfloat16)
    w2_bf = w2.astype(jnp.bfloat16)

    nh = H // th
    nk = K // tk

    partials = pl.pallas_call(
        functools.partial(_mlp_kernel, tk=tk),
        out_shape=jax.ShapeDtypeStruct((nh, B, N), jnp.float32),
        grid_spec=pltpu.PrefetchScalarGridSpec(
            num_scalar_prefetch=0,
            grid=(nh, nk),
            in_specs=[
                # x resident (tiny); sliced per K step inside the kernel.
                pl.BlockSpec((B, K), lambda h, k: (0, 0)),
                # W1 (K tile, H tile) -- the dominant HBM stream.
                pl.BlockSpec((tk, th), lambda h, k: (k, h)),
                # b1 H tile.
                pl.BlockSpec((1, th), lambda h, k: (0, h)),
                # PReLU alpha: whole (1,) array in SMEM (scalar path).
                pl.BlockSpec(memory_space=pltpu.MemorySpace.SMEM),
                # W2 H tile (rows matching this H block).
                pl.BlockSpec((th, N), lambda h, k: (h, 0)),
            ],
            # One partial (B, N) slab per H block; leading dim squeezed.
            out_specs=pl.BlockSpec((None, B, N), lambda h, k: (h, 0, 0)),
            scratch_shapes=[pltpu.VMEM((B, th), jnp.float32)],
        ),
        compiler_params=pltpu.CompilerParams(
            dimension_semantics=("parallel", "arbitrary"),
            vmem_limit_bytes=48 << 20,   # fits v7x's 64 MiB/TC with headroom
        ),
    )(x_bf, w1_bf, b1, alpha, w2_bf)

    # Cross-H (cross-core) combine + single bias add; fuses into one tiny
    # XLA op over an (nh, B, N) array.
    out = partials.sum(axis=0) + b2
    return out.astype(x.dtype)


def reference(x, w1, b1, alpha, w2, b2):
    """Same math as the kernel (bf16 operands, f32 accumulation)."""
    h = jnp.dot(x.astype(jnp.bfloat16), w1.astype(jnp.bfloat16),
                preferred_element_type=jnp.float32) + b1
    h = jnp.where(h >= 0.0, h, alpha[0] * h)
    out = jnp.dot(h.astype(jnp.bfloat16), w2.astype(jnp.bfloat16),
                  preferred_element_type=jnp.float32) + b2
    return out


if __name__ == "__main__":
    OUTPUT_SIZE = 128   # module's `output_size` constructor arg
    B = 8               # small batch

    key = jax.random.PRNGKey(0)
    kx, k1, kb1, k2, kb2 = jax.random.split(key, 5)

    # Deterministic synthetic parameters (scaled to keep values sane).
    x = jax.random.normal(kx, (B, IN_FEATURES), dtype=jnp.float32)
    w1 = jax.random.normal(k1, (IN_FEATURES, HIDDEN), dtype=jnp.float32) * (
        1.0 / jnp.sqrt(IN_FEATURES)
    )
    b1 = jax.random.normal(kb1, (1, HIDDEN), dtype=jnp.float32) * 0.01
    alpha = jnp.full((1,), 0.25, dtype=jnp.float32)  # PReLU default init
    w2 = jax.random.normal(k2, (HIDDEN, OUTPUT_SIZE), dtype=jnp.float32) * (
        1.0 / jnp.sqrt(HIDDEN)
    )
    b2 = jax.random.normal(kb2, (1, OUTPUT_SIZE), dtype=jnp.float32) * 0.01

    fn = jax.jit(functools.partial(embedding_image_nn, tk=2048, th=1024))
    out = jax.block_until_ready(fn(x, w1, b1, alpha, w2, b2))
    ref = reference(x, w1, b1, alpha, w2, b2)

    assert out.shape == (B, OUTPUT_SIZE), out.shape
    assert jnp.allclose(out, ref, atol=2e-2, rtol=2e-2), float(
        jnp.max(jnp.abs(out - ref))
    )
    print("KERNEL_OK")
</pallas_src>

<mosaic_0001>
module attributes {stable_mosaic.version = 11 : i64} {
  func.func @_mlp_kernel(%arg0: i32, %arg1: i32, %arg2: memref<8x4096xbf16, #tpu.memory_space<vmem>>, %arg3: memref<2048x1024xbf16, #tpu.memory_space<vmem>>, %arg4: memref<1x1024xf32, #tpu.memory_space<vmem>>, %arg5: memref<1xf32, #tpu.memory_space<smem>>, %arg6: memref<1024x128xbf16, #tpu.memory_space<vmem>>, %arg7: memref<1x8x128xf32, #tpu.memory_space<vmem>>, %arg8: memref<8x1024xf32, #tpu.memory_space<vmem>>) attributes {dimension_semantics = [#tpu.dimension_semantics<parallel>, #tpu.dimension_semantics<arbitrary>], iteration_bounds = array<i64: 2, 2>, scalar_prefetch = 0 : i64, scratch_operands = 1 : i64, tpu.core_type = #tpu.core_type<tc>, window_params = [{pipeline_mode = #tpu.pipeline_mode<synchronous>, transform_indices = @transform_0, window_bounds = array<i64: 8, 4096>}, {transform_indices = @transform_1, window_bounds = array<i64: 2048, 1024>}, {transform_indices = @transform_2, window_bounds = array<i64: 1, 1024>}, {transform_indices = @transform_3, window_bounds = array<i64: 1>}, {transform_indices = @transform_4, window_bounds = array<i64: 1024, 128>}, {transform_indices = @transform_5, window_bounds = array<i64: 1, 8, 128>}]} {
    %c0_i32 = arith.constant 0 : i32
    %0 = arith.cmpi eq, %arg1, %c0_i32 : i32
    %1 = arith.extui %0 : i1 to i32
    %c0_i32_0 = arith.constant 0 : i32
    %2 = arith.cmpi ne, %1, %c0_i32_0 : i32
    scf.if %2 {
      %cst_8 = arith.constant 0.000000e+00 : f32
      %15 = vector.broadcast %cst_8 : f32 to vector<8x1024xf32>
      %c0_9 = arith.constant 0 : index
      %c0_10 = arith.constant 0 : index
      %16 = vector.load %arg8[%c0_9, %c0_10] : memref<8x1024xf32, #tpu.memory_space<vmem>>, vector<8x1024xf32>
      tpu.vector_store %arg8[%c0_9, %c0_10], %15 {strides = array<i32>} : memref<8x1024xf32, #tpu.memory_space<vmem>>, vector<8x1024xf32>,
    } else {
    }
    %c2048_i32 = arith.constant 2048 : i32
    %3 = arith.muli %arg1, %c2048_i32 : i32
    %4 = tpu.assume_multiple %3, 2048 : i32
    %c0 = arith.constant 0 : index
    %5 = arith.index_cast %4 : i32 to index
    %6 = vector.load %arg2[%c0, %5] : memref<8x4096xbf16, #tpu.memory_space<vmem>>, vector<8x2048xbf16>
    %c0_1 = arith.constant 0 : index
    %c0_2 = arith.constant 0 : index
    %7 = vector.load %arg8[%c0_1, %c0_2] : memref<8x1024xf32, #tpu.memory_space<vmem>>, vector<8x1024xf32>
    %c0_3 = arith.constant 0 : index
    %c0_4 = arith.constant 0 : index
    %8 = vector.load %arg3[%c0_3, %c0_4] : memref<2048x1024xbf16, #tpu.memory_space<vmem>>, vector<2048x1024xbf16>
    %cst = arith.constant dense<0.000000e+00> : vector<8x1024xf32>
    %9 = tpu.matmul %6, %8, %cst {dimension_numbers = #tpu.dot_dimension_numbers<[1], [0], [0], [1], [0, 0, 1, 1], [], []>} : vector<8x2048xbf16>, vector<2048x1024xbf16>, vector<8x1024xf32> -> vector<8x1024xf32>
    %10 = arith.addf %7, %9 : vector<8x1024xf32>
    %c0_5 = arith.constant 0 : index
    %c0_6 = arith.constant 0 : index
    %11 = vector.load %arg8[%c0_5, %c0_6] : memref<8x1024xf32, #tpu.memory_space<vmem>>, vector<8x1024xf32>
    tpu.vector_store %arg8[%c0_5, %c0_6], %10 {strides = array<i32>} : memref<8x1024xf32, #tpu.memory_space<vmem>>, vector<8x1024xf32>,
    %c1_i32 = arith.constant 1 : i32
    %12 = arith.cmpi eq, %arg1, %c1_i32 : i32
    %13 = arith.extui %12 : i1 to i32
    %c0_i32_7 = arith.constant 0 : i32
    %14 = arith.cmpi ne, %13, %c0_i32_7 : i32
    scf.if %14 {
      %c0_8 = arith.constant 0 : index
      %c0_9 = arith.constant 0 : index
      %15 = vector.load %arg8[%c0_8, %c0_9] : memref<8x1024xf32, #tpu.memory_space<vmem>>, vector<8x1024xf32>
      %c0_10 = arith.constant 0 : index
      %c0_11 = arith.constant 0 : index
      %16 = vector.load %arg4[%c0_10, %c0_11] : memref<1x1024xf32, #tpu.memory_space<vmem>>, vector<1x1024xf32>
      %17 = vector.broadcast %16 : vector<1x1024xf32> to vector<8x1024xf32>
      %18 = arith.addf %15, %17 : vector<8x1024xf32>
      %c0_12 = arith.constant 0 : index
      %19 = memref.load %arg5[%c0_12] : memref<1xf32, #tpu.memory_space<smem>>
      %cst_13 = arith.constant 0.000000e+00 : f32
      %20 = vector.broadcast %cst_13 : f32 to vector<8x1024xf32>
      %21 = arith.cmpf oge, %18, %20 : vector<8x1024xf32>
      %22 = vector.broadcast %19 : f32 to vector<8x1024xf32>
      %23 = arith.mulf %22, %18 : vector<8x1024xf32>
      %24 = arith.select %21, %18, %23 : vector<8x1024xi1>, vector<8x1024xf32>
      %25 = arith.truncf %24 : vector<8x1024xf32> to vector<8x1024xbf16>
      %c0_14 = arith.constant 0 : index
      %c0_15 = arith.constant 0 : index
      %26 = vector.load %arg6[%c0_14, %c0_15] : memref<1024x128xbf16, #tpu.memory_space<vmem>>, vector<1024x128xbf16>
      %cst_16 = arith.constant dense<0.000000e+00> : vector<8x128xf32>
      %27 = tpu.matmul %25, %26, %cst_16 {dimension_numbers = #tpu.dot_dimension_numbers<[1], [0], [0], [1], [0, 0, 1, 1], [], []>} : vector<8x1024xbf16>, vector<1024x128xbf16>, vector<8x128xf32> -> vector<8x128xf32>
      %c0_17 = arith.constant 0 : index
      %c0_18 = arith.constant 0 : index
      %c0_19 = arith.constant 0 : index
      %28 = vector.load %arg7[%c0_17, %c0_18, %c0_19] : memref<1x8x128xf32, #tpu.memory_space<vmem>>, vector<1x8x128xf32>
      %29 = vector.shape_cast %28 : vector<1x8x128xf32> to vector<8x128xf32>
      %30 = vector.shape_cast %27 : vector<8x128xf32> to vector<1x8x128xf32>
      tpu.vector_store %arg7[%c0_17, %c0_18, %c0_19], %30 {strides = array<i32>} : memref<1x8x128xf32, #tpu.memory_space<vmem>>, vector<1x8x128xf32>,
    } else {
    }
    return
  }
  func.func @transform_0(%arg0: i32, %arg1: i32) -> (i32, i32) {
    %c0_i32 = arith.constant 0 : i32
    %c0_i32_0 = arith.constant 0 : i32
    %c0_i32_1 = arith.constant 0 : i32
    return %c0_i32, %c0_i32_0 : i32, i32
  }
  func.func @transform_1(%arg0: i32, %arg1: i32) -> (i32, i32) {
    %c0_i32 = arith.constant 0 : i32
    return %arg1, %arg0 : i32, i32
  }
  func.func @transform_2(%arg0: i32, %arg1: i32) -> (i32, i32) {
    %c0_i32 = arith.constant 0 : i32
    %c0_i32_0 = arith.constant 0 : i32
    return %c0_i32, %arg0 : i32, i32
  }
  func.func @transform_3(%arg0: i32, %arg1: i32) -> i32 {
    %c0_i32 = arith.constant 0 : i32
    %c0_i32_0 = arith.constant 0 : i32
    return %c0_i32 : i32
  }
  func.func @transform_4(%arg0: i32, %arg1: i32) -> (i32, i32) {
    %c0_i32 = arith.constant 0 : i32
    %c0_i32_0 = arith.constant 0 : i32
    return %arg0, %c0_i32 : i32, i32
  }
  func.func @transform_5(%arg0: i32, %arg1: i32) -> (i32, i32, i32) {
    %c0_i32 = arith.constant 0 : i32
    %c0_i32_0 = arith.constant 0 : i32
    %c0_i32_1 = arith.constant 0 : i32
    return %arg0, %c0_i32, %c0_i32_0 : i32, i32, i32
  }
}

</mosaic_0001>

<llo_original>
// kernel: embedding_image_nn.1
$region0: #{embedding_image_nn.1}
  #allocation0 [shape = 'u32[]', space=smem, size = 0x4, offset = 0x4, fixed_abs, tag = 'smem constant byte address 0x4 - core index']
  #allocation1 [shape = 'u32[144,128]{1,0:T(1,128)}', space=vmem, size = 0x12000, scoped, tag = 'internal scratch']
  #allocation2 [shape = 'f32[8,1024]{1,0:T(8,128)}', space=vmem, size = 0x8000, scoped, tag = 'scratch operand']
  #allocation3 [shape = 'f32[1]{0:T(128)S(6)}', space=smem, size = 0x200, scoped, tag = 'scoped memory for embedding_image_nn.1']
  %s0 = inlined_call_operand.hbm [shape: bf16[8,4096], index: 0, kind: input, shape index: {}]
  %s1 = inlined_call_operand.vmem [shape: bf16[4096,2048], index: 1, kind: input, shape index: {}]
  %s2 = inlined_call_operand.hbm [shape: f32[1,2048], index: 2, kind: input, shape index: {}]
  %s3 = inlined_call_operand.<no memory space> [shape: f32[1], index: 3, kind: input, shape index: {}]
  %s4 = inlined_call_operand.hbm [shape: bf16[2048,128], index: 4, kind: input, shape index: {}]
  %s5 = inlined_call_operand.hbm [shape: f32[2,8,128], index: 5, kind: output, shape index: {}]
  %s6 = sld [smem:[#allocation0]]
  $region96: #{embedding_image_nn.1} parent=0
    _
  %s8 = ssub.s32 1, %s6
  %s9 = scalar_select 0, %s8, %s6
  %10 = sst [smem:[#allocation3]] %s3
  $region1: #{embedding_image_nn.1} parent=0
    #allocation4 [shape = 'u8[65536]{0}', space=vmem, size = 0x10000, scoped, tag = 'input window, operand 0, single buffered']
    #allocation5 [shape = 's32[2]{0}', space=sflag, size = 0x8, scoped, tag = 'scoped memory for embedding_image_nn.1']
    #allocation6 [shape = 's32[2]{0}', space=sflag, size = 0x8, scoped, tag = 'scoped memory for embedding_image_nn.1']
    #allocation7 [shape = 'u8[8388608]{0}', space=vmem, size = 0x800000, scoped, tag = 'input window, operand 1']
    #allocation8 [shape = 'u8[8192]{0}', space=vmem, size = 0x2000, scoped, tag = 'input window, operand 2']
    #allocation9 [shape = 's32[2]{0}', space=sflag, size = 0x8, scoped, tag = 'scoped memory for embedding_image_nn.1']
    #allocation10 [shape = 'u8[524288]{0}', space=vmem, size = 0x80000, scoped, tag = 'input window, operand 4']
    #allocation11 [shape = 'u8[8192]{0}', space=vmem, size = 0x2000, scoped, tag = 'output window, operand 0']
    %11 = vsyncpa [#allocation5], 0
    %12 = vsyncpa [#allocation9], 0
    %s13 = scalar_lea.sflag [#allocation9], 1
    %14 = vsyncpa %s13, 0
    %15 = vsyncpa [#allocation6], 0
    %s16 = scalar_lea.sflag [#allocation6], 1
    %17 = vsyncpa %s16, 0
    loop: start=0, step=1, limit=6
    $region2: #{embedding_image_nn.1} parent=1 // loop_pre_header
      _
    $region3: #{embedding_image_nn.1} parent=1 // loop_header
      %s19 = sphi 0, %s23
      %p20 = scmp.ge.s32.totalorder %s19, 6
      %s26 = sphi 0, %s38
      %s27 = sphi 0, %s34
      %s28 = sphi 0, %s26
      %s29 = sphi 0, %s27
      %s30 = sphi 0, %s28
      %s31 = sphi 0, %s29
      %s39 = sphi 0, %s39
      %s41 = sphi 0, %s39
      %s42 = sphi 0, %s41
      %s56 = sphi 0, %s42
      %s64 = sphi 0, %s66
      %s67 = sphi 0, %s64
      %s68 = sphi 0, %s67
      %s84 = sphi 0, %s68
      %s90 = sphi 0, %s92
      %s93 = sphi 0, %s90
      %s94 = sphi 0, %s93
      %s110 = sphi 0, %s94
      %s114 = sphi 0, %s114
      %s116 = sphi 0, %s114
      %s117 = sphi 0, %s116
      %s131 = sphi 0, %s117
      %s137 = sphi 0, %s139
      %s140 = sphi 0, %s137
      %s141 = sphi 0, %s140
      %s157 = sphi 0, %s141
      %s163 = sphi 0, %s165
      %s166 = sphi 0, %s163
      %s167 = sphi 0, %s166
      %s183 = sphi 0, %s167
    $region4: #{embedding_image_nn.1} parent=1 // loop_header_branch
      %22 = sbr.rel (%p20) target = $region8
    $region5: #{embedding_image_nn.1} parent=1 // loop_body
      %s24 = ssub.s32 %s19, 1
      %s25 = ssub.s32 %s19, 2
      %s32 = sadd.s32 1, %s27
      %p33 = scmp.ge.s32.totalorder %s32, 2
      %s34 = scalar_select %p33, 0, %s32
      %s35 = sadd.s32 1, %s26
      %s36 = scalar_select %p33, %s35, %s26
      %p37 = scmp.ge.s32.totalorder %s36, 2
      %s38 = scalar_select %p37, 0, %s36
      %s40 = sadd.s32 %s39, 1
      %p43 = scmp.eq.s32.totalorder %s19, 3
      %p44 = scmp.ne.s32.totalorder %s39, %s41
      %p45 = scmp.eq.s32.totalorder %s19, 0
      %p46 = por %p44, %p45
      %p47 = scmp.ne.s32.totalorder %s39, %s41
      %p48 = scmp.eq.s32.totalorder %s24, 3
      %p49 = por %p47, %p48
      %p50 = scmp.ne.s32.totalorder %s41, %s42
      %p51 = scmp.eq.s32.totalorder %s24, 0
      %p52 = por %p50, %p51
      %p53 = scmp.ne.s32.totalorder %s41, %s42
      %p54 = scmp.eq.s32.totalorder %s25, 3
      %p55 = por %p53, %p54
      %p57 = scmp.ne.s32.totalorder %s42, %s56
      %p58 = scmp.eq.s32.totalorder %s25, 0
      %p59 = por %p57, %p58
      %s60 = ssub.s32 %s27, %s34
      %s61 = ssub.s32 %s26, %s38
      %s62 = sor.u32 %s60, %s61
      %p63 = scmp.eq.s32.totalorder %s62, 0
      %s65 = sadd.s32 %s64, 1
      %s66 = scalar_select %p63, %s64, %s65
      %p69 = pneg %p63
      %p70 = scmp.eq.s32.totalorder %s19, 3
      %p71 = por %p69, %p70
      %p72 = scmp.ne.s32.totalorder %s64, %s67
      %p73 = scmp.eq.s32.totalorder %s19, 0
      %p74 = por %p72, %p73
      %p75 = scmp.ne.s32.totalorder %s64, %s67
      %p76 = scmp.eq.s32.totalorder %s24, 3
      %p77 = por %p75, %p76
      %p78 = scmp.ne.s32.totalorder %s67, %s68
      %p79 = scmp.eq.s32.totalorder %s24, 0
      %p80 = por %p78, %p79
      %p81 = scmp.ne.s32.totalorder %s67, %s68
      %p82 = scmp.eq.s32.totalorder %s25, 3
      %p83 = por %p81, %p82
      %p85 = scmp.ne.s32.totalorder %s68, %s84
      %p86 = scmp.eq.s32.totalorder %s25, 0
      %p87 = por %p85, %p86
      %s88 = ssub.s32 %s26, %s38
      %p89 = scmp.eq.s32.totalorder %s88, 0
      %s91 = sadd.s32 %s90, 1
      %s92 = scalar_select %p89, %s90, %s91
      %p95 = pneg %p89
      %p96 = scmp.eq.s32.totalorder %s19, 3
      %p97 = por %p95, %p96
      %p98 = scmp.ne.s32.totalorder %s90, %s93
      %p99 = scmp.eq.s32.totalorder %s19, 0
      %p100 = por %p98, %p99
      %p101 = scmp.ne.s32.totalorder %s90, %s93
      %p102 = scmp.eq.s32.totalorder %s24, 3
      %p103 = por %p101, %p102
      %p104 = scmp.ne.s32.totalorder %s93, %s94
      %p105 = scmp.eq.s32.totalorder %s24, 0
      %p106 = por %p104, %p105
      %p107 = scmp.ne.s32.totalorder %s93, %s94
      %p108 = scmp.eq.s32.totalorder %s25, 3
      %p109 = por %p107, %p108
      %p111 = scmp.ne.s32.totalorder %s94, %s110
      %p112 = scmp.eq.s32.totalorder %s25, 0
      %p113 = por %p111, %p112
      %s115 = sadd.s32 %s114, 1
      %p118 = scmp.eq.s32.totalorder %s19, 3
      %p119 = scmp.ne.s32.totalorder %s114, %s116
      %p120 = scmp.eq.s32.totalorder %s19, 0
      %p121 = por %p119, %p120
      %p122 = scmp.ne.s32.totalorder %s114, %s116
      %p123 = scmp.eq.s32.totalorder %s24, 3
      %p124 = por %p122, %p123
      %p125 = scmp.ne.s32.totalorder %s116, %s117
      %p126 = scmp.eq.s32.totalorder %s24, 0
      %p127 = por %p125, %p126
      %p128 = scmp.ne.s32.totalorder %s116, %s117
      %p129 = scmp.eq.s32.totalorder %s25, 3
      %p130 = por %p128, %p129
      %p132 = scmp.ne.s32.totalorder %s117, %s131
      %p133 = scmp.eq.s32.totalorder %s25, 0
      %p134 = por %p132, %p133
      %s135 = ssub.s32 %s26, %s38
      %p136 = scmp.eq.s32.totalorder %s135, 0
      %s138 = sadd.s32 %s137, 1
      %s139 = scalar_select %p136, %s137, %s138
      %p142 = pneg %p136
      %p143 = scmp.eq.s32.totalorder %s19, 3
      %p144 = por %p142, %p143
      %p145 = scmp.ne.s32.totalorder %s137, %s140
      %p146 = scmp.eq.s32.totalorder %s19, 0
      %p147 = por %p145, %p146
      %p148 = scmp.ne.s32.totalorder %s137, %s140
      %p149 = scmp.eq.s32.totalorder %s24, 3
      %p150 = por %p148, %p149
      %p151 = scmp.ne.s32.totalorder %s140, %s141
      %p152 = scmp.eq.s32.totalorder %s24, 0
      %p153 = por %p151, %p152
      %p154 = scmp.ne.s32.totalorder %s140, %s141
      %p155 = scmp.eq.s32.totalorder %s25, 3
      %p156 = por %p154, %p155
      %p158 = scmp.ne.s32.totalorder %s141, %s157
      %p159 = scmp.eq.s32.totalorder %s25, 0
      %p160 = por %p158, %p159
      %s161 = ssub.s32 %s26, %s38
      %p162 = scmp.eq.s32.totalorder %s161, 0
      %s164 = sadd.s32 %s163, 1
      %s165 = scalar_select %p162, %s163, %s164
      %p168 = pneg %p162
      %p169 = scmp.eq.s32.totalorder %s19, 3
      %p170 = por %p168, %p169
      %p171 = scmp.ne.s32.totalorder %s163, %s166
      %p172 = scmp.eq.s32.totalorder %s19, 0
      %p173 = por %p171, %p172
      %p174 = scmp.ne.s32.totalorder %s163, %s166
      %p175 = scmp.eq.s32.totalorder %s24, 3
      %p176 = por %p174, %p175
      %p177 = scmp.ne.s32.totalorder %s166, %s167
      %p178 = scmp.eq.s32.totalorder %s24, 0
      %p179 = por %p177, %p178
      %p180 = scmp.ne.s32.totalorder %s166, %s167
      %p181 = scmp.eq.s32.totalorder %s25, 3
      %p182 = por %p180, %p181
      %p184 = scmp.ne.s32.totalorder %s167, %s183
      %p185 = scmp.eq.s32.totalorder %s25, 0
      %p186 = por %p184, %p185
      %p187 = scmp.le.s32.totalorder 1, %s19
      %p188 = scmp.lt.s32.totalorder %s19, 5
      %p189 = pnand %p187, %p188
      %p190 = pneg %p189
      // Predicated region
      $region9: #{embedding_image_nn.1} parent=5 // pred_check
        _
      $region10: #{embedding_image_nn.1} parent=5 // pred_check_branch
        %192 = sbr.rel (%p189) target = $region12
      $region11: #{embedding_image_nn.1} parent=5 // pred_region
        %s193 = ssub.s32 %s19, 1
        // Predicated region
        $region13: #{embedding_image_nn.1} parent=11 // pred_check
          %p194 = pneg %p52
        $region14: #{embedding_image_nn.1} parent=11 // pred_check_branch
          %196 = sbr.rel (%p194) target = $region16
        $region15: #{embedding_image_nn.1} parent=11 // pred_region
          %s198 = ssub.s32 2048, 2048
          %199 = vsyncadd [#allocation5], %s198
          %s201 = sshll.u32 [#allocation4], 4
          %s202 = int_to_ptr.vmem [resolvable:$true] %s201
          %204 = dma.hbm_to_vmem [thread:$0]  %s0, 2048, %s202, [#allocation5]
        $region16: #{embedding_image_nn.1} parent=11 // pred_fallthru
          _
        // Predicated region
        $region17: #{embedding_image_nn.1} parent=11 // pred_check
          %p205 = pneg %p127
        $region18: #{embedding_image_nn.1} parent=11 // pred_check_branch
          %207 = sbr.rel (%p205) target = $region20
        $region19: #{embedding_image_nn.1} parent=11 // pred_region
          _
        $region20: #{embedding_image_nn.1} parent=11 // pred_fallthru
          _
      $region12: #{embedding_image_nn.1} parent=5 // pred_fallthru
        _
      %p208 = scmp.lt.s32.totalorder %s19, 4
      // Predicated region
      $region21: #{embedding_image_nn.1} parent=5 // pred_check
        %p209 = pneg %p208
      $region22: #{embedding_image_nn.1} parent=5 // pred_check_branch
        %211 = sbr.rel (%p209) target = $region24
      $region23: #{embedding_image_nn.1} parent=5 // pred_region
        // Predicated region
        $region25: #{embedding_image_nn.1} parent=23 // pred_check
          %p212 = pneg %p74
        $region26: #{embedding_image_nn.1} parent=23 // pred_check_branch
          %214 = sbr.rel (%p212) target = $region28
        $region27: #{embedding_image_nn.1} parent=23 // pred_region
          %s215 = sand.u32 %s64, 1
          %s216 = sand.u32 %s64, 1
          %s217 = smul.addr %s216, 8192
          %s218 = scalar_lea.vmem [#allocation7], %s217
          %s219 = smul.u32 256, %s27
          %s220 = smul.u32 8, %s26
          %s221 = smul.addr %s219, 16
          %s222 = sadd.s32 %s220, %s221
          %s223 = smul.addr %s222, 4
          %s224 = scalar_lea.vmem %s1, %s223
          // Predicated region
          $region29: #{embedding_image_nn.1} parent=27 // pred_check
            _
          $region30: #{embedding_image_nn.1} parent=27 // pred_check_branch
            %226 = sbr.rel (0) target = $region32
          $region31: #{embedding_image_nn.1} parent=27 // pred_region
            // Predicated region
            $region33: #{embedding_image_nn.1} parent=31 // pred_check
              _
            $region34: #{embedding_image_nn.1} parent=31 // pred_check_branch
              %228 = sbr.rel (0) target = $region36
            $region35: #{embedding_image_nn.1} parent=31 // pred_region
              loop: start=0, step=1, limit=1
              $region37: #{embedding_image_nn.1} parent=35 // loop_pre_header
                _
              $region38: #{embedding_image_nn.1} parent=35 // loop_header
                %s230 = sphi 0, %s234
                %p231 = scmp.ge.s32.totalorder %s230, 1
                %s235 = sphi %s224, %s224
                %s236 = sphi %s218, %s218
              $region39: #{embedding_image_nn.1} parent=35 // loop_header_branch
                %233 = sbr.rel (%p231) target = $region43
              $region40: #{embedding_image_nn.1} parent=35 // loop_body
                %v237 = vld [vmem:[%s235] sm:$0xff]
                %238 = vst [vmem:[%s236] sm:$0xff] %v237
                %v239 = vld [vmem:[%s235 + $0x8] sm:$0xff]
                %240 = vst [vmem:[%s236 + $0x8] sm:$0xff] %v239
                %v241 = vld [vmem:[%s235 + $0x10] sm:$0xff]
                %242 = vst [vmem:[%s236 + $0x10] sm:$0xff] %v241
                %v243 = vld [vmem:[%s235 + $0x18] sm:$0xff]
                %244 = vst [vmem:[%s236 + $0x18] sm:$0xff] %v243
                %v245 = vld [vmem:[%s235 + $0x40] sm:$0xff]
                %246 = vst [vmem:[%s236 + $0x20] sm:$0xff] %v245
                %v247 = vld [vmem:[%s235 + $0x48] sm:$0xff]
                %248 = vst [vmem:[%s236 + $0x28] sm:$0xff] %v247
                %v249 = vld [vmem:[%s235 + $0x50] sm:$0xff]
                %250 = vst [vmem:[%s236 + $0x30] sm:$0xff] %v249
                %v251 = vld [vmem:[%s235 + $0x58] sm:$0xff]
                %252 = vst [vmem:[%s236 + $0x38] sm:$0xff] %v251
                %v253 = vld [vmem:[%s235 + $0x80] sm:$0xff]
                %254 = vst [vmem:[%s236 + $0x40] sm:$0xff] %v253
                %v255 = vld [vmem:[%s235 + $0x88] sm:$0xff]
                %256 = vst [vmem:[%s236 + $0x48] sm:$0xff] %v255
                %v257 = vld [vmem:[%s235 + $0x90] sm:$0xff]
                %258 = vst [vmem:[%s236 + $0x50] sm:$0xff] %v257
                %v259 = vld [vmem:[%s235 + $0x98] sm:$0xff]
                %260 = vst [vmem:[%s236 + $0x58] sm:$0xff] %v259
                %v261 = vld [vmem:[%s235 + $0xc0] sm:$0xff]
                %262 = vst [vmem:[%s236 + $0x60] sm:$0xff] %v261
                %v263 = vld [vmem:[%s235 + $0xc8] sm:$0xff]
                %264 = vst [vmem:[%s236 + $0x68] sm:$0xff] %v263
                %v265 = vld [vmem:[%s235 + $0xd0] sm:$0xff]
                %266 = vst [vmem:[%s236 + $0x70] sm:$0xff] %v265
                %v267 = vld [vmem:[%s235 + $0xd8] sm:$0xff]
                %268 = vst [vmem:[%s236 + $0x78] sm:$0xff] %v267
                %v269 = vld [vmem:[%s235 + $0x100] sm:$0xff]
                %270 = vst [vmem:[%s236 + $0x80] sm:$0xff] %v269
                %v271 = vld [vmem:[%s235 + $0x108] sm:$0xff]
                %272 = vst [vmem:[%s236 + $0x88] sm:$0xff] %v271
                %v273 = vld [vmem:[%s235 + $0x110] sm:$0xff]
                %274 = vst [vmem:[%s236 + $0x90] sm:$0xff] %v273
                %v275 = vld [vmem:[%s235 + $0x118] sm:$0xff]
                %276 = vst [vmem:[%s236 + $0x98] sm:$0xff] %v275
                %v277 = vld [vmem:[%s235 + $0x140] sm:$0xff]
                %278 = vst [vmem:[%s236 + $0xa0] sm:$0xff] %v277
                %v279 = vld [vmem:[%s235 + $0x148] sm:$0xff]
                %280 = vst [vmem:[%s236 + $0xa8] sm:$0xff] %v279
                %v281 = vld [vmem:[%s235 + $0x150] sm:$0xff]
                %282 = vst [vmem:[%s236 + $0xb0] sm:$0xff] %v281
                %v283 = vld [vmem:[%s235 + $0x158] sm:$0xff]
                %284 = vst [vmem:[%s236 + $0xb8] sm:$0xff] %v283
                %v285 = vld [vmem:[%s235 + $0x180] sm:$0xff]
                %286 = vst [vmem:[%s236 + $0xc0] sm:$0xff] %v285
                %v287 = vld [vmem:[%s235 + $0x188] sm:$0xff]
                %288 = vst [vmem:[%s236 + $0xc8] sm:$0xff] %v287
                %v289 = vld [vmem:[%s235 + $0x190] sm:$0xff]
                %290 = vst [vmem:[%s236 + $0xd0] sm:$0xff] %v289
                %v291 = vld [vmem:[%s235 + $0x198] sm:$0xff]
                %292 = vst [vmem:[%s236 + $0xd8] sm:$0xff] %v291
                %v293 = vld [vmem:[%s235 + $0x1c0] sm:$0xff]
                %294 = vst [vmem:[%s236 + $0xe0] sm:$0xff] %v293
                %v295 = vld [vmem:[%s235 + $0x1c8] sm:$0xff]
                %296 = vst [vmem:[%s236 + $0xe8] sm:$0xff] %v295
                %v297 = vld [vmem:[%s235 + $0x1d0] sm:$0xff]
                %298 = vst [vmem:[%s236 + $0xf0] sm:$0xff] %v297
                %v299 = vld [vmem:[%s235 + $0x1d8] sm:$0xff]
                %300 = vst [vmem:[%s236 + $0xf8] sm:$0xff] %v299
                %v301 = vld [vmem:[%s235 + $0x200] sm:$0xff]
                %302 = vst [vmem:[%s236 + $0x100] sm:$0xff] %v301
                %v303 = vld [vmem:[%s235 + $0x208] sm:$0xff]
                %304 = vst [vmem:[%s236 + $0x108] sm:$0xff] %v303
                %v305 = vld [vmem:[%s235 + $0x210] sm:$0xff]
                %306 = vst [vmem:[%s236 + $0x110] sm:$0xff] %v305
                %v307 = vld [vmem:[%s235 + $0x218] sm:$0xff]
                %308 = vst [vmem:[%s236 + $0x118] sm:$0xff] %v307
                %v309 = vld [vmem:[%s235 + $0x240] sm:$0xff]
                %310 = vst [vmem:[%s236 + $0x120] sm:$0xff] %v309
                %v311 = vld [vmem:[%s235 + $0x248] sm:$0xff]
                %312 = vst [vmem:[%s236 + $0x128] sm:$0xff] %v311
                %v313 = vld [vmem:[%s235 + $0x250] sm:$0xff]
                %314 = vst [vmem:[%s236 + $0x130] sm:$0xff] %v313
                %v315 = vld [vmem:[%s235 + $0x258] sm:$0xff]
                %316 = vst [vmem:[%s236 + $0x138] sm:$0xff] %v315
                %v317 = vld [vmem:[%s235 + $0x280] sm:$0xff]
                %318 = vst [vmem:[%s236 + $0x140] sm:$0xff] %v317
                %v319 = vld [vmem:[%s235 + $0x288] sm:$0xff]
                %320 = vst [vmem:[%s236 + $0x148] sm:$0xff] %v319
                %v321 = vld [vmem:[%s235 + $0x290] sm:$0xff]
                %322 = vst [vmem:[%s236 + $0x150] sm:$0xff] %v321
                %v323 = vld [vmem:[%s235 + $0x298] sm:$0xff]
                %324 = vst [vmem:[%s236 + $0x158] sm:$0xff] %v323
                %v325 = vld [vmem:[%s235 + $0x2c0] sm:$0xff]
                %326 = vst [vmem:[%s236 + $0x160] sm:$0xff] %v325
                %v327 = vld [vmem:[%s235 + $0x2c8] sm:$0xff]
                %328 = vst [vmem:[%s236 + $0x168] sm:$0xff] %v327
                %v329 = vld [vmem:[%s235 + $0x2d0] sm:$0xff]
                %330 = vst [vmem:[%s236 + $0x170] sm:$0xff] %v329
                %v331 = vld [vmem:[%s235 + $0x2d8] sm:$0xff]
                %332 = vst [vmem:[%s236 + $0x178] sm:$0xff] %v331
                %v333 = vld [vmem:[%s235 + $0x300] sm:$0xff]
                %334 = vst [vmem:[%s236 + $0x180] sm:$0xff] %v333
                %v335 = vld [vmem:[%s235 + $0x308] sm:$0xff]
                %336 = vst [vmem:[%s236 + $0x188] sm:$0xff] %v335
                %v337 = vld [vmem:[%s235 + $0x310] sm:$0xff]
                %338 = vst [vmem:[%s236 + $0x190] sm:$0xff] %v337
                %v339 = vld [vmem:[%s235 + $0x318] sm:$0xff]
                %340 = vst [vmem:[%s236 + $0x198] sm:$0xff] %v339
                %v341 = vld [vmem:[%s235 + $0x340] sm:$0xff]
                %342 = vst [vmem:[%s236 + $0x1a0] sm:$0xff] %v341
                %v343 = vld [vmem:[%s235 + $0x348] sm:$0xff]
                %344 = vst [vmem:[%s236 + $0x1a8] sm:$0xff] %v343
                %v345 = vld [vmem:[%s235 + $0x350] sm:$0xff]
                %346 = vst [vmem:[%s236 + $0x1b0] sm:$0xff] %v345
                %v347 = vld [vmem:[%s235 + $0x358] sm:$0xff]
                %348 = vst [vmem:[%s236 + $0x1b8] sm:$0xff] %v347
                %v349 = vld [vmem:[%s235 + $0x380] sm:$0xff]
                %350 = vst [vmem:[%s236 + $0x1c0] sm:$0xff] %v349
                %v351 = vld [vmem:[%s235 + $0x388] sm:$0xff]
                %352 = vst [vmem:[%s236 + $0x1c8] sm:$0xff] %v351
                %v353 = vld [vmem:[%s235 + $0x390] sm:$0xff]
                %354 = vst [vmem:[%s236 + $0x1d0] sm:$0xff] %v353
                %v355 = vld [vmem:[%s235 + $0x398] sm:$0xff]
                %356 = vst [vmem:[%s236 + $0x1d8] sm:$0xff] %v355
                %v357 = vld [vmem:[%s235 + $0x3c0] sm:$0xff]
                %358 = vst [vmem:[%s236 + $0x1e0] sm:$0xff] %v357
                %v359 = vld [vmem:[%s235 + $0x3c8] sm:$0xff]
                %360 = vst [vmem:[%s236 + $0x1e8] sm:$0xff] %v359
                %v361 = vld [vmem:[%s235 + $0x3d0] sm:$0xff]
                %362 = vst [vmem:[%s236 + $0x1f0] sm:$0xff] %v361
                %v363 = vld [vmem:[%s235 + $0x3d8] sm:$0xff]
                %364 = vst [vmem:[%s236 + $0x1f8] sm:$0xff] %v363
                %v365 = vld [vmem:[%s235 + $0x400] sm:$0xff]
                %366 = vst [vmem:[%s236 + $0x200] sm:$0xff] %v365
                %v367 = vld [vmem:[%s235 + $0x408] sm:$0xff]
                %368 = vst [vmem:[%s236 + $0x208] sm:$0xff] %v367
                %v369 = vld [vmem:[%s235 + $0x410] sm:$0xff]
                %370 = vst [vmem:[%s236 + $0x210] sm:$0xff] %v369
                %v371 = vld [vmem:[%s235 + $0x418] sm:$0xff]
                %372 = vst [vmem:[%s236 + $0x218] sm:$0xff] %v371
                %v373 = vld [vmem:[%s235 + $0x440] sm:$0xff]
                %374 = vst [vmem:[%s236 + $0x220] sm:$0xff] %v373
                %v375 = vld [vmem:[%s235 + $0x448] sm:$0xff]
                %376 = vst [vmem:[%s236 + $0x228] sm:$0xff] %v375
                %v377 = vld [vmem:[%s235 + $0x450] sm:$0xff]
                %378 = vst [vmem:[%s236 + $0x230] sm:$0xff] %v377
                %v379 = vld [vmem:[%s235 + $0x458] sm:$0xff]
                %380 = vst [vmem:[%s236 + $0x238] sm:$0xff] %v379
                %v381 = vld [vmem:[%s235 + $0x480] sm:$0xff]
                %382 = vst [vmem:[%s236 + $0x240] sm:$0xff] %v381
                %v383 = vld [vmem:[%s235 + $0x488] sm:$0xff]
                %384 = vst [vmem:[%s236 + $0x248] sm:$0xff] %v383
                %v385 = vld [vmem:[%s235 + $0x490] sm:$0xff]
                %386 = vst [vmem:[%s236 + $0x250] sm:$0xff] %v385
                %v387 = vld [vmem:[%s235 + $0x498] sm:$0xff]
                %388 = vst [vmem:[%s236 + $0x258] sm:$0xff] %v387
                %v389 = vld [vmem:[%s235 + $0x4c0] sm:$0xff]
                %390 = vst [vmem:[%s236 + $0x260] sm:$0xff] %v389
                %v391 = vld [vmem:[%s235 + $0x4c8] sm:$0xff]
                %392 = vst [vmem:[%s236 + $0x268] sm:$0xff] %v391
                %v393 = vld [vmem:[%s235 + $0x4d0] sm:$0xff]
                %394 = vst [vmem:[%s236 + $0x270] sm:$0xff] %v393
                %v395 = vld [vmem:[%s235 + $0x4d8] sm:$0xff]
                %396 = vst [vmem:[%s236 + $0x278] sm:$0xff] %v395
                %v397 = vld [vmem:[%s235 + $0x500] sm:$0xff]
                %398 = vst [vmem:[%s236 + $0x280] sm:$0xff] %v397
                %v399 = vld [vmem:[%s235 + $0x508] sm:$0xff]
                %400 = vst [vmem:[%s236 + $0x288] sm:$0xff] %v399
                %v401 = vld [vmem:[%s235 + $0x510] sm:$0xff]
                %402 = vst [vmem:[%s236 + $0x290] sm:$0xff] %v401
                %v403 = vld [vmem:[%s235 + $0x518] sm:$0xff]
                %404 = vst [vmem:[%s236 + $0x298] sm:$0xff] %v403
                %v405 = vld [vmem:[%s235 + $0x540] sm:$0xff]
                %406 = vst [vmem:[%s236 + $0x2a0] sm:$0xff] %v405
                %v407 = vld [vmem:[%s235 + $0x548] sm:$0xff]
                %408 = vst [vmem:[%s236 + $0x2a8] sm:$0xff] %v407
                %v409 = vld [vmem:[%s235 + $0x550] sm:$0xff]
                %410 = vst [vmem:[%s236 + $0x2b0] sm:$0xff] %v409
                %v411 = vld [vmem:[%s235 + $0x558] sm:$0xff]
                %412 = vst [vmem:[%s236 + $0x2b8] sm:$0xff] %v411
                %v413 = vld [vmem:[%s235 + $0x580] sm:$0xff]
                %414 = vst [vmem:[%s236 + $0x2c0] sm:$0xff] %v413
                %v415 = vld [vmem:[%s235 + $0x588] sm:$0xff]
                %416 = vst [vmem:[%s236 + $0x2c8] sm:$0xff] %v415
                %v417 = vld [vmem:[%s235 + $0x590] sm:$0xff]
                %418 = vst [vmem:[%s236 + $0x2d0] sm:$0xff] %v417
                %v419 = vld [vmem:[%s235 + $0x598] sm:$0xff]
                %420 = vst [vmem:[%s236 + $0x2d8] sm:$0xff] %v419
                %v421 = vld [vmem:[%s235 + $0x5c0] sm:$0xff]
                %422 = vst [vmem:[%s236 + $0x2e0] sm:$0xff] %v421
                %v423 = vld [vmem:[%s235 + $0x5c8] sm:$0xff]
                %424 = vst [vmem:[%s236 + $0x2e8] sm:$0xff] %v423
                %v425 = vld [vmem:[%s235 + $0x5d0] sm:$0xff]
                %426 = vst [vmem:[%s236 + $0x2f0] sm:$0xff] %v425
                %v427 = vld [vmem:[%s235 + $0x5d8] sm:$0xff]
                %428 = vst [vmem:[%s236 + $0x2f8] sm:$0xff] %v427
                %v429 = vld [vmem:[%s235 + $0x600] sm:$0xff]
                %430 = vst [vmem:[%s236 + $0x300] sm:$0xff] %v429
                %v431 = vld [vmem:[%s235 + $0x608] sm:$0xff]
                %432 = vst [vmem:[%s236 + $0x308] sm:$0xff] %v431
                %v433 = vld [vmem:[%s235 + $0x610] sm:$0xff]
                %434 = vst [vmem:[%s236 + $0x310] sm:$0xff] %v433
                %v435 = vld [vmem:[%s235 + $0x618] sm:$0xff]
                %436 = vst [vmem:[%s236 + $0x318] sm:$0xff] %v435
                %v437 = vld [vmem:[%s235 + $0x640] sm:$0xff]
                %438 = vst [vmem:[%s236 + $0x320] sm:$0xff] %v437
                %v439 = vld [vmem:[%s235 + $0x648] sm:$0xff]
                %440 = vst [vmem:[%s236 + $0x328] sm:$0xff] %v439
                %v441 = vld [vmem:[%s235 + $0x650] sm:$0xff]
                %442 = vst [vmem:[%s236 + $0x330] sm:$0xff] %v441
                %v443 = vld [vmem:[%s235 + $0x658] sm:$0xff]
                %444 = vst [vmem:[%s236 + $0x338] sm:$0xff] %v443
                %v445 = vld [vmem:[%s235 + $0x680] sm:$0xff]
                %446 = vst [vmem:[%s236 + $0x340] sm:$0xff] %v445
                %v447 = vld [vmem:[%s235 + $0x688] sm:$0xff]
                %448 = vst [vmem:[%s236 + $0x348] sm:$0xff] %v447
                %v449 = vld [vmem:[%s235 + $0x690] sm:$0xff]
                %450 = vst [vmem:[%s236 + $0x350] sm:$0xff] %v449
                %v451 = vld [vmem:[%s235 + $0x698] sm:$0xff]
                %452 = vst [vmem:[%s236 + $0x358] sm:$0xff] %v451
                %v453 = vld [vmem:[%s235 + $0x6c0] sm:$0xff]
                %454 = vst [vmem:[%s236 + $0x360] sm:$0xff] %v453
                %v455 = vld [vmem:[%s235 + $0x6c8] sm:$0xff]
                %456 = vst [vmem:[%s236 + $0x368] sm:$0xff] %v455
                %v457 = vld [vmem:[%s235 + $0x6d0] sm:$0xff]
                %458 = vst [vmem:[%s236 + $0x370] sm:$0xff] %v457
                %v459 = vld [vmem:[%s235 + $0x6d8] sm:$0xff]
                %460 = vst [vmem:[%s236 + $0x378] sm:$0xff] %v459
                %v461 = vld [vmem:[%s235 + $0x700] sm:$0xff]
                %462 = vst [vmem:[%s236 + $0x380] sm:$0xff] %v461
                %v463 = vld [vmem:[%s235 + $0x708] sm:$0xff]
                %464 = vst [vmem:[%s236 + $0x388] sm:$0xff] %v463
                %v465 = vld [vmem:[%s235 + $0x710] sm:$0xff]
                %466 = vst [vmem:[%s236 + $0x390] sm:$0xff] %v465
                %v467 = vld [vmem:[%s235 + $0x718] sm:$0xff]
                %468 = vst [vmem:[%s236 + $0x398] sm:$0xff] %v467
                %v469 = vld [vmem:[%s235 + $0x740] sm:$0xff]
                %470 = vst [vmem:[%s236 + $0x3a0] sm:$0xff] %v469
                %v471 = vld [vmem:[%s235 + $0x748] sm:$0xff]
                %472 = vst [vmem:[%s236 + $0x3a8] sm:$0xff] %v471
                %v473 = vld [vmem:[%s235 + $0x750] sm:$0xff]
                %474 = vst [vmem:[%s236 + $0x3b0] sm:$0xff] %v473
                %v475 = vld [vmem:[%s235 + $0x758] sm:$0xff]
                %476 = vst [vmem:[%s236 + $0x3b8] sm:$0xff] %v475
                %v477 = vld [vmem:[%s235 + $0x780] sm:$0xff]
                %478 = vst [vmem:[%s236 + $0x3c0] sm:$0xff] %v477
                %v479 = vld [vmem:[%s235 + $0x788] sm:$0xff]
                %480 = vst [vmem:[%s236 + $0x3c8] sm:$0xff] %v479
                %v481 = vld [vmem:[%s235 + $0x790] sm:$0xff]
                %482 = vst [vmem:[%s236 + $0x3d0] sm:$0xff] %v481
                %v483 = vld [vmem:[%s235 + $0x798] sm:$0xff]
                %484 = vst [vmem:[%s236 + $0x3d8] sm:$0xff] %v483
                %v485 = vld [vmem:[%s235 + $0x7c0] sm:$0xff]
                %486 = vst [vmem:[%s236 + $0x3e0] sm:$0xff] %v485
                %v487 = vld [vmem:[%s235 + $0x7c8] sm:$0xff]
                %488 = vst [vmem:[%s236 + $0x3e8] sm:$0xff] %v487
                %v489 = vld [vmem:[%s235 + $0x7d0] sm:$0xff]
                %490 = vst [vmem:[%s236 + $0x3f0] sm:$0xff] %v489
                %v491 = vld [vmem:[%s235 + $0x7d8] sm:$0xff]
                %492 = vst [vmem:[%s236 + $0x3f8] sm:$0xff] %v491
                %v493 = vld [vmem:[%s235 + $0x800] sm:$0xff]
                %494 = vst [vmem:[%s236 + $0x400] sm:$0xff] %v493
                %v495 = vld [vmem:[%s235 + $0x808] sm:$0xff]
                %496 = vst [vmem:[%s236 + $0x408] sm:$0xff] %v495
                %v497 = vld [vmem:[%s235 + $0x810] sm:$0xff]
                %498 = vst [vmem:[%s236 + $0x410] sm:$0xff] %v497
                %v499 = vld [vmem:[%s235 + $0x818] sm:$0xff]
                %500 = vst [vmem:[%s236 + $0x418] sm:$0xff] %v499
                %v501 = vld [vmem:[%s235 + $0x840] sm:$0xff]
                %502 = vst [vmem:[%s236 + $0x420] sm:$0xff] %v501
                %v503 = vld [vmem:[%s235 + $0x848] sm:$0xff]
                %504 = vst [vmem:[%s236 + $0x428] sm:$0xff] %v503
                %v505 = vld [vmem:[%s235 + $0x850] sm:$0xff]
                %506 = vst [vmem:[%s236 + $0x430] sm:$0xff] %v505
                %v507 = vld [vmem:[%s235 + $0x858] sm:$0xff]
                %508 = vst [vmem:[%s236 + $0x438] sm:$0xff] %v507
                %v509 = vld [vmem:[%s235 + $0x880] sm:$0xff]
                %510 = vst [vmem:[%s236 + $0x440] sm:$0xff] %v509
                %v511 = vld [vmem:[%s235 + $0x888] sm:$0xff]
                %512 = vst [vmem:[%s236 + $0x448] sm:$0xff] %v511
                %v513 = vld [vmem:[%s235 + $0x890] sm:$0xff]
                %514 = vst [vmem:[%s236 + $0x450] sm:$0xff] %v513
                %v515 = vld [vmem:[%s235 + $0x898] sm:$0xff]
                %516 = vst [vmem:[%s236 + $0x458] sm:$0xff] %v515
                %v517 = vld [vmem:[%s235 + $0x8c0] sm:$0xff]
                %518 = vst [vmem:[%s236 + $0x460] sm:$0xff] %v517
                %v519 = vld [vmem:[%s235 + $0x8c8] sm:$0xff]
                %520 = vst [vmem:[%s236 + $0x468] sm:$0xff] %v519
                %v521 = vld [vmem:[%s235 + $0x8d0] sm:$0xff]
                %522 = vst [vmem:[%s236 + $0x470] sm:$0xff] %v521
                %v523 = vld [vmem:[%s235 + $0x8d8] sm:$0xff]
                %524 = vst [vmem:[%s236 + $0x478] sm:$0xff] %v523
                %v525 = vld [vmem:[%s235 + $0x900] sm:$0xff]
                %526 = vst [vmem:[%s236 + $0x480] sm:$0xff] %v525
                %v527 = vld [vmem:[%s235 + $0x908] sm:$0xff]
                %528 = vst [vmem:[%s236 + $0x488] sm:$0xff] %v527
                %v529 = vld [vmem:[%s235 + $0x910] sm:$0xff]
                %530 = vst [vmem:[%s236 + $0x490] sm:$0xff] %v529
                %v531 = vld [vmem:[%s235 + $0x918] sm:$0xff]
                %532 = vst [vmem:[%s236 + $0x498] sm:$0xff] %v531
                %v533 = vld [vmem:[%s235 + $0x940] sm:$0xff]
                %534 = vst [vmem:[%s236 + $0x4a0] sm:$0xff] %v533
                %v535 = vld [vmem:[%s235 + $0x948] sm:$0xff]
                %536 = vst [vmem:[%s236 + $0x4a8] sm:$0xff] %v535
                %v537 = vld [vmem:[%s235 + $0x950] sm:$0xff]
                %538 = vst [vmem:[%s236 + $0x4b0] sm:$0xff] %v537
                %v539 = vld [vmem:[%s235 + $0x958] sm:$0xff]
                %540 = vst [vmem:[%s236 + $0x4b8] sm:$0xff] %v539
                %v541 = vld [vmem:[%s235 + $0x980] sm:$0xff]
                %542 = vst [vmem:[%s236 + $0x4c0] sm:$0xff] %v541
                %v543 = vld [vmem:[%s235 + $0x988] sm:$0xff]
                %544 = vst [vmem:[%s236 + $0x4c8] sm:$0xff] %v543
                %v545 = vld [vmem:[%s235 + $0x990] sm:$0xff]
                %546 = vst [vmem:[%s236 + $0x4d0] sm:$0xff] %v545
                %v547 = vld [vmem:[%s235 + $0x998] sm:$0xff]
                %548 = vst [vmem:[%s236 + $0x4d8] sm:$0xff] %v547
                %v549 = vld [vmem:[%s235 + $0x9c0] sm:$0xff]
                %550 = vst [vmem:[%s236 + $0x4e0] sm:$0xff] %v549
                %v551 = vld [vmem:[%s235 + $0x9c8] sm:$0xff]
                %552 = vst [vmem:[%s236 + $0x4e8] sm:$0xff] %v551
                %v553 = vld [vmem:[%s235 + $0x9d0] sm:$0xff]
                %554 = vst [vmem:[%s236 + $0x4f0] sm:$0xff] %v553
                %v555 = vld [vmem:[%s235 + $0x9d8] sm:$0xff]
                %556 = vst [vmem:[%s236 + $0x4f8] sm:$0xff] %v555
                %v557 = vld [vmem:[%s235 + $0xa00] sm:$0xff]
                %558 = vst [vmem:[%s236 + $0x500] sm:$0xff] %v557
                %v559 = vld [vmem:[%s235 + $0xa08] sm:$0xff]
                %560 = vst [vmem:[%s236 + $0x508] sm:$0xff] %v559
                %v561 = vld [vmem:[%s235 + $0xa10] sm:$0xff]
                %562 = vst [vmem:[%s236 + $0x510] sm:$0xff] %v561
                %v563 = vld [vmem:[%s235 + $0xa18] sm:$0xff]
                %564 = vst [vmem:[%s236 + $0x518] sm:$0xff] %v563
                %v565 = vld [vmem:[%s235 + $0xa40] sm:$0xff]
                %566 = vst [vmem:[%s236 + $0x520] sm:$0xff] %v565
                %v567 = vld [vmem:[%s235 + $0xa48] sm:$0xff]
                %568 = vst [vmem:[%s236 + $0x528] sm:$0xff] %v567
                %v569 = vld [vmem:[%s235 + $0xa50] sm:$0xff]
                %570 = vst [vmem:[%s236 + $0x530] sm:$0xff] %v569
                %v571 = vld [vmem:[%s235 + $0xa58] sm:$0xff]
                %572 = vst [vmem:[%s236 + $0x538] sm:$0xff] %v571
                %v573 = vld [vmem:[%s235 + $0xa80] sm:$0xff]
                %574 = vst [vmem:[%s236 + $0x540] sm:$0xff] %v573
                %v575 = vld [vmem:[%s235 + $0xa88] sm:$0xff]
                %576 = vst [vmem:[%s236 + $0x548] sm:$0xff] %v575
                %v577 = vld [vmem:[%s235 + $0xa90] sm:$0xff]
                %578 = vst [vmem:[%s236 + $0x550] sm:$0xff] %v577
                %v579 = vld [vmem:[%s235 + $0xa98] sm:$0xff]
                %580 = vst [vmem:[%s236 + $0x558] sm:$0xff] %v579
                %v581 = vld [vmem:[%s235 + $0xac0] sm:$0xff]
                %582 = vst [vmem:[%s236 + $0x560] sm:$0xff] %v581
                %v583 = vld [vmem:[%s235 + $0xac8] sm:$0xff]
                %584 = vst [vmem:[%s236 + $0x568] sm:$0xff] %v583
                %v585 = vld [vmem:[%s235 + $0xad0] sm:$0xff]
                %586 = vst [vmem:[%s236 + $0x570] sm:$0xff] %v585
                %v587 = vld [vmem:[%s235 + $0xad8] sm:$0xff]
                %588 = vst [vmem:[%s236 + $0x578] sm:$0xff] %v587
                %v589 = vld [vmem:[%s235 + $0xb00] sm:$0xff]
                %590 = vst [vmem:[%s236 + $0x580] sm:$0xff] %v589
                %v591 = vld [vmem:[%s235 + $0xb08] sm:$0xff]
                %592 = vst [vmem:[%s236 + $0x588] sm:$0xff] %v591
                %v593 = vld [vmem:[%s235 + $0xb10] sm:$0xff]
                %594 = vst [vmem:[%s236 + $0x590] sm:$0xff] %v593
                %v595 = vld [vmem:[%s235 + $0xb18] sm:$0xff]
                %596 = vst [vmem:[%s236 + $0x598] sm:$0xff] %v595
                %v597 = vld [vmem:[%s235 + $0xb40] sm:$0xff]
                %598 = vst [vmem:[%s236 + $0x5a0] sm:$0xff] %v597
                %v599 = vld [vmem:[%s235 + $0xb48] sm:$0xff]
                %600 = vst [vmem:[%s236 + $0x5a8] sm:$0xff] %v599
                %v601 = vld [vmem:[%s235 + $0xb50] sm:$0xff]
                %602 = vst [vmem:[%s236 + $0x5b0] sm:$0xff] %v601
                %v603 = vld [vmem:[%s235 + $0xb58] sm:$0xff]
                %604 = vst [vmem:[%s236 + $0x5b8] sm:$0xff] %v603
                %v605 = vld [vmem:[%s235 + $0xb80] sm:$0xff]
                %606 = vst [vmem:[%s236 + $0x5c0] sm:$0xff] %v605
                %v607 = vld [vmem:[%s235 + $0xb88] sm:$0xff]
                %608 = vst [vmem:[%s236 + $0x5c8] sm:$0xff] %v607
                %v609 = vld [vmem:[%s235 + $0xb90] sm:$0xff]
                %610 = vst [vmem:[%s236 + $0x5d0] sm:$0xff] %v609
                %v611 = vld [vmem:[%s235 + $0xb98] sm:$0xff]
                %612 = vst [vmem:[%s236 + $0x5d8] sm:$0xff] %v611
                %v613 = vld [vmem:[%s235 + $0xbc0] sm:$0xff]
                %614 = vst [vmem:[%s236 + $0x5e0] sm:$0xff] %v613
                %v615 = vld [vmem:[%s235 + $0xbc8] sm:$0xff]
                %616 = vst [vmem:[%s236 + $0x5e8] sm:$0xff] %v615
                %v617 = vld [vmem:[%s235 + $0xbd0] sm:$0xff]
                %618 = vst [vmem:[%s236 + $0x5f0] sm:$0xff] %v617
                %v619 = vld [vmem:[%s235 + $0xbd8] sm:$0xff]
                %620 = vst [vmem:[%s236 + $0x5f8] sm:$0xff] %v619
                %v621 = vld [vmem:[%s235 + $0xc00] sm:$0xff]
                %622 = vst [vmem:[%s236 + $0x600] sm:$0xff] %v621
                %v623 = vld [vmem:[%s235 + $0xc08] sm:$0xff]
                %624 = vst [vmem:[%s236 + $0x608] sm:$0xff] %v623
                %v625 = vld [vmem:[%s235 + $0xc10] sm:$0xff]
                %626 = vst [vmem:[%s236 + $0x610] sm:$0xff] %v625
                %v627 = vld [vmem:[%s235 + $0xc18] sm:$0xff]
                %628 = vst [vmem:[%s236 + $0x618] sm:$0xff] %v627
                %v629 = vld [vmem:[%s235 + $0xc40] sm:$0xff]
                %630 = vst [vmem:[%s236 + $0x620] sm:$0xff] %v629
                %v631 = vld [vmem:[%s235 + $0xc48] sm:$0xff]
                %632 = vst [vmem:[%s236 + $0x628] sm:$0xff] %v631
                %v633 = vld [vmem:[%s235 + $0xc50] sm:$0xff]
                %634 = vst [vmem:[%s236 + $0x630] sm:$0xff] %v633
                %v635 = vld [vmem:[%s235 + $0xc58] sm:$0xff]
                %636 = vst [vmem:[%s236 + $0x638] sm:$0xff] %v635
                %v637 = vld [vmem:[%s235 + $0xc80] sm:$0xff]
                %638 = vst [vmem:[%s236 + $0x640] sm:$0xff] %v637
                %v639 = vld [vmem:[%s235 + $0xc88] sm:$0xff]
                %640 = vst [vmem:[%s236 + $0x648] sm:$0xff] %v639
                %v641 = vld [vmem:[%s235 + $0xc90] sm:$0xff]
                %642 = vst [vmem:[%s236 + $0x650] sm:$0xff] %v641
                %v643 = vld [vmem:[%s235 + $0xc98] sm:$0xff]
                %644 = vst [vmem:[%s236 + $0x658] sm:$0xff] %v643
                %v645 = vld [vmem:[%s235 + $0xcc0] sm:$0xff]
                %646 = vst [vmem:[%s236 + $0x660] sm:$0xff] %v645
                %v647 = vld [vmem:[%s235 + $0xcc8] sm:$0xff]
                %648 = vst [vmem:[%s236 + $0x668] sm:$0xff] %v647
                %v649 = vld [vmem:[%s235 + $0xcd0] sm:$0xff]
                %650 = vst [vmem:[%s236 + $0x670] sm:$0xff] %v649
                %v651 = vld [vmem:[%s235 + $0xcd8] sm:$0xff]
                %652 = vst [vmem:[%s236 + $0x678] sm:$0xff] %v651
                %v653 = vld [vmem:[%s235 + $0xd00] sm:$0xff]
                %654 = vst [vmem:[%s236 + $0x680] sm:$0xff] %v653
                %v655 = vld [vmem:[%s235 + $0xd08] sm:$0xff]
                %656 = vst [vmem:[%s236 + $0x688] sm:$0xff] %v655
                %v657 = vld [vmem:[%s235 + $0xd10] sm:$0xff]
                %658 = vst [vmem:[%s236 + $0x690] sm:$0xff] %v657
                %v659 = vld [vmem:[%s235 + $0xd18] sm:$0xff]
                %660 = vst [vmem:[%s236 + $0x698] sm:$0xff] %v659
                %v661 = vld [vmem:[%s235 + $0xd40] sm:$0xff]
                %662 = vst [vmem:[%s236 + $0x6a0] sm:$0xff] %v661
                %v663 = vld [vmem:[%s235 + $0xd48] sm:$0xff]
                %664 = vst [vmem:[%s236 + $0x6a8] sm:$0xff] %v663
                %v665 = vld [vmem:[%s235 + $0xd50] sm:$0xff]
                %666 = vst [vmem:[%s236 + $0x6b0] sm:$0xff] %v665
                %v667 = vld [vmem:[%s235 + $0xd58] sm:$0xff]
                %668 = vst [vmem:[%s236 + $0x6b8] sm:$0xff] %v667
                %v669 = vld [vmem:[%s235 + $0xd80] sm:$0xff]
                %670 = vst [vmem:[%s236 + $0x6c0] sm:$0xff] %v669
                %v671 = vld [vmem:[%s235 + $0xd88] sm:$0xff]
                %672 = vst [vmem:[%s236 + $0x6c8] sm:$0xff] %v671
                %v673 = vld [vmem:[%s235 + $0xd90] sm:$0xff]
                %674 = vst [vmem:[%s236 + $0x6d0] sm:$0xff] %v673
                %v675 = vld [vmem:[%s235 + $0xd98] sm:$0xff]
                %676 = vst [vmem:[%s236 + $0x6d8] sm:$0xff] %v675
                %v677 = vld [vmem:[%s235 + $0xdc0] sm:$0xff]
                %678 = vst [vmem:[%s236 + $0x6e0] sm:$0xff] %v677
                %v679 = vld [vmem:[%s235 + $0xdc8] sm:$0xff]
                %680 = vst [vmem:[%s236 + $0x6e8] sm:$0xff] %v679
                %v681 = vld [vmem:[%s235 + $0xdd0] sm:$0xff]
                %682 = vst [vmem:[%s236 + $0x6f0] sm:$0xff] %v681
                %v683 = vld [vmem:[%s235 + $0xdd8] sm:$0xff]
                %684 = vst [vmem:[%s236 + $0x6f8] sm:$0xff] %v683
                %v685 = vld [vmem:[%s235 + $0xe00] sm:$0xff]
                %686 = vst [vmem:[%s236 + $0x700] sm:$0xff] %v685
                %v687 = vld [vmem:[%s235 + $0xe08] sm:$0xff]
                %688 = vst [vmem:[%s236 + $0x708] sm:$0xff] %v687
                %v689 = vld [vmem:[%s235 + $0xe10] sm:$0xff]
                %690 = vst [vmem:[%s236 + $0x710] sm:$0xff] %v689
                %v691 = vld [vmem:[%s235 + $0xe18] sm:$0xff]
                %692 = vst [vmem:[%s236 + $0x718] sm:$0xff] %v691
                %v693 = vld [vmem:[%s235 + $0xe40] sm:$0xff]
                %694 = vst [vmem:[%s236 + $0x720] sm:$0xff] %v693
                %v695 = vld [vmem:[%s235 + $0xe48] sm:$0xff]
                %696 = vst [vmem:[%s236 + $0x728] sm:$0xff] %v695
                %v697 = vld [vmem:[%s235 + $0xe50] sm:$0xff]
                %698 = vst [vmem:[%s236 + $0x730] sm:$0xff] %v697
                %v699 = vld [vmem:[%s235 + $0xe58] sm:$0xff]
                %700 = vst [vmem:[%s236 + $0x738] sm:$0xff] %v699
                %v701 = vld [vmem:[%s235 + $0xe80] sm:$0xff]
                %702 = vst [vmem:[%s236 + $0x740] sm:$0xff] %v701
                %v703 = vld [vmem:[%s235 + $0xe88] sm:$0xff]
                %704 = vst [vmem:[%s236 + $0x748] sm:$0xff] %v703
                %v705 = vld [vmem:[%s235 + $0xe90] sm:$0xff]
                %706 = vst [vmem:[%s236 + $0x750] sm:$0xff] %v705
                %v707 = vld [vmem:[%s235 + $0xe98] sm:$0xff]
                %708 = vst [vmem:[%s236 + $0x758] sm:$0xff] %v707
                %v709 = vld [vmem:[%s235 + $0xec0] sm:$0xff]
                %710 = vst [vmem:[%s236 + $0x760] sm:$0xff] %v709
                %v711 = vld [vmem:[%s235 + $0xec8] sm:$0xff]
                %712 = vst [vmem:[%s236 + $0x768] sm:$0xff] %v711
                %v713 = vld [vmem:[%s235 + $0xed0] sm:$0xff]
                %714 = vst [vmem:[%s236 + $0x770] sm:$0xff] %v713
                %v715 = vld [vmem:[%s235 + $0xed8] sm:$0xff]
                %716 = vst [vmem:[%s236 + $0x778] sm:$0xff] %v715
                %v717 = vld [vmem:[%s235 + $0xf00] sm:$0xff]
                %718 = vst [vmem:[%s236 + $0x780] sm:$0xff] %v717
                %v719 = vld [vmem:[%s235 + $0xf08] sm:$0xff]
                %720 = vst [vmem:[%s236 + $0x788] sm:$0xff] %v719
                %v721 = vld [vmem:[%s235 + $0xf10] sm:$0xff]
                %722 = vst [vmem:[%s236 + $0x790] sm:$0xff] %v721
                %v723 = vld [vmem:[%s235 + $0xf18] sm:$0xff]
                %724 = vst [vmem:[%s236 + $0x798] sm:$0xff] %v723
                %v725 = vld [vmem:[%s235 + $0xf40] sm:$0xff]
                %726 = vst [vmem:[%s236 + $0x7a0] sm:$0xff] %v725
                %v727 = vld [vmem:[%s235 + $0xf48] sm:$0xff]
                %728 = vst [vmem:[%s236 + $0x7a8] sm:$0xff] %v727
                %v729 = vld [vmem:[%s235 + $0xf50] sm:$0xff]
                %730 = vst [vmem:[%s236 + $0x7b0] sm:$0xff] %v729
                %v731 = vld [vmem:[%s235 + $0xf58] sm:$0xff]
                %732 = vst [vmem:[%s236 + $0x7b8] sm:$0xff] %v731
                %v733 = vld [vmem:[%s235 + $0xf80] sm:$0xff]
                %734 = vst [vmem:[%s236 + $0x7c0] sm:$0xff] %v733
                %v735 = vld [vmem:[%s235 + $0xf88] sm:$0xff]
                %736 = vst [vmem:[%s236 + $0x7c8] sm:$0xff] %v735
                %v737 = vld [vmem:[%s235 + $0xf90] sm:$0xff]
                %738 = vst [vmem:[%s236 + $0x7d0] sm:$0xff] %v737
                %v739 = vld [vmem:[%s235 + $0xf98] sm:$0xff]
                %740 = vst [vmem:[%s236 + $0x7d8] sm:$0xff] %v739
                %v741 = vld [vmem:[%s235 + $0xfc0] sm:$0xff]
                %742 = vst [vmem:[%s236 + $0x7e0] sm:$0xff] %v741
                %v743 = vld [vmem:[%s235 + $0xfc8] sm:$0xff]
                %744 = vst [vmem:[%s236 + $0x7e8] sm:$0xff] %v743
                %v745 = vld [vmem:[%s235 + $0xfd0] sm:$0xff]
                %746 = vst [vmem:[%s236 + $0x7f0] sm:$0xff] %v745
                %v747 = vld [vmem:[%s235 + $0xfd8] sm:$0xff]
                %748 = vst [vmem:[%s236 + $0x7f8] sm:$0xff] %v747
                %v749 = vld [vmem:[%s235 + $0x1000] sm:$0xff]
                %750 = vst [vmem:[%s236 + $0x800] sm:$0xff] %v749
                %v751 = vld [vmem:[%s235 + $0x1008] sm:$0xff]
                %752 = vst [vmem:[%s236 + $0x808] sm:$0xff] %v751
                %v753 = vld [vmem:[%s235 + $0x1010] sm:$0xff]
                %754 = vst [vmem:[%s236 + $0x810] sm:$0xff] %v753
                %v755 = vld [vmem:[%s235 + $0x1018] sm:$0xff]
                %756 = vst [vmem:[%s236 + $0x818] sm:$0xff] %v755
                %v757 = vld [vmem:[%s235 + $0x1040] sm:$0xff]
                %758 = vst [vmem:[%s236 + $0x820] sm:$0xff] %v757
                %v759 = vld [vmem:[%s235 + $0x1048] sm:$0xff]
                %760 = vst [vmem:[%s236 + $0x828] sm:$0xff] %v759
                %v761 = vld [vmem:[%s235 + $0x1050] sm:$0xff]
                %762 = vst [vmem:[%s236 + $0x830] sm:$0xff] %v761
                %v763 = vld [vmem:[%s235 + $0x1058] sm:$0xff]
                %764 = vst [vmem:[%s236 + $0x838] sm:$0xff] %v763
                %v765 = vld [vmem:[%s235 + $0x1080] sm:$0xff]
                %766 = vst [vmem:[%s236 + $0x840] sm:$0xff] %v765
                %v767 = vld [vmem:[%s235 + $0x1088] sm:$0xff]
                %768 = vst [vmem:[%s236 + $0x848] sm:$0xff] %v767
                %v769 = vld [vmem:[%s235 + $0x1090] sm:$0xff]
                %770 = vst [vmem:[%s236 + $0x850] sm:$0xff] %v769
                %v771 = vld [vmem:[%s235 + $0x1098] sm:$0xff]
                %772 = vst [vmem:[%s236 + $0x858] sm:$0xff] %v771
                %v773 = vld [vmem:[%s235 + $0x10c0] sm:$0xff]
                %774 = vst [vmem:[%s236 + $0x860] sm:$0xff] %v773
                %v775 = vld [vmem:[%s235 + $0x10c8] sm:$0xff]
                %776 = vst [vmem:[%s236 + $0x868] sm:$0xff] %v775
                %v777 = vld [vmem:[%s235 + $0x10d0] sm:$0xff]
                %778 = vst [vmem:[%s236 + $0x870] sm:$0xff] %v777
                %v779 = vld [vmem:[%s235 + $0x10d8] sm:$0xff]
                %780 = vst [vmem:[%s236 + $0x878] sm:$0xff] %v779
                %v781 = vld [vmem:[%s235 + $0x1100] sm:$0xff]
                %782 = vst [vmem:[%s236 + $0x880] sm:$0xff] %v781
                %v783 = vld [vmem:[%s235 + $0x1108] sm:$0xff]
                %784 = vst [vmem:[%s236 + $0x888] sm:$0xff] %v783
                %v785 = vld [vmem:[%s235 + $0x1110] sm:$0xff]
                %786 = vst [vmem:[%s236 + $0x890] sm:$0xff] %v785
                %v787 = vld [vmem:[%s235 + $0x1118] sm:$0xff]
                %788 = vst [vmem:[%s236 + $0x898] sm:$0xff] %v787
                %v789 = vld [vmem:[%s235 + $0x1140] sm:$0xff]
                %790 = vst [vmem:[%s236 + $0x8a0] sm:$0xff] %v789
                %v791 = vld [vmem:[%s235 + $0x1148] sm:$0xff]
                %792 = vst [vmem:[%s236 + $0x8a8] sm:$0xff] %v791
                %v793 = vld [vmem:[%s235 + $0x1150] sm:$0xff]
                %794 = vst [vmem:[%s236 + $0x8b0] sm:$0xff] %v793
                %v795 = vld [vmem:[%s235 + $0x1158] sm:$0xff]
                %796 = vst [vmem:[%s236 + $0x8b8] sm:$0xff] %v795
                %v797 = vld [vmem:[%s235 + $0x1180] sm:$0xff]
                %798 = vst [vmem:[%s236 + $0x8c0] sm:$0xff] %v797
                %v799 = vld [vmem:[%s235 + $0x1188] sm:$0xff]
                %800 = vst [vmem:[%s236 + $0x8c8] sm:$0xff] %v799
                %v801 = vld [vmem:[%s235 + $0x1190] sm:$0xff]
                %802 = vst [vmem:[%s236 + $0x8d0] sm:$0xff] %v801
                %v803 = vld [vmem:[%s235 + $0x1198] sm:$0xff]
                %804 = vst [vmem:[%s236 + $0x8d8] sm:$0xff] %v803
                %v805 = vld [vmem:[%s235 + $0x11c0] sm:$0xff]
                %806 = vst [vmem:[%s236 + $0x8e0] sm:$0xff] %v805
                %v807 = vld [vmem:[%s235 + $0x11c8] sm:$0xff]
                %808 = vst [vmem:[%s236 + $0x8e8] sm:$0xff] %v807
                %v809 = vld [vmem:[%s235 + $0x11d0] sm:$0xff]
                %810 = vst [vmem:[%s236 + $0x8f0] sm:$0xff] %v809
                %v811 = vld [vmem:[%s235 + $0x11d8] sm:$0xff]
                %812 = vst [vmem:[%s236 + $0x8f8] sm:$0xff] %v811
                %v813 = vld [vmem:[%s235 + $0x1200] sm:$0xff]
                %814 = vst [vmem:[%s236 + $0x900] sm:$0xff] %v813
                %v815 = vld [vmem:[%s235 + $0x1208] sm:$0xff]
                %816 = vst [vmem:[%s236 + $0x908] sm:$0xff] %v815
                %v817 = vld [vmem:[%s235 + $0x1210] sm:$0xff]
                %818 = vst [vmem:[%s236 + $0x910] sm:$0xff] %v817
                %v819 = vld [vmem:[%s235 + $0x1218] sm:$0xff]
                %820 = vst [vmem:[%s236 + $0x918] sm:$0xff] %v819
                %v821 = vld [vmem:[%s235 + $0x1240] sm:$0xff]
                %822 = vst [vmem:[%s236 + $0x920] sm:$0xff] %v821
                %v823 = vld [vmem:[%s235 + $0x1248] sm:$0xff]
                %824 = vst [vmem:[%s236 + $0x928] sm:$0xff] %v823
                %v825 = vld [vmem:[%s235 + $0x1250] sm:$0xff]
                %826 = vst [vmem:[%s236 + $0x930] sm:$0xff] %v825
                %v827 = vld [vmem:[%s235 + $0x1258] sm:$0xff]
                %828 = vst [vmem:[%s236 + $0x938] sm:$0xff] %v827
                %v829 = vld [vmem:[%s235 + $0x1280] sm:$0xff]
                %830 = vst [vmem:[%s236 + $0x940] sm:$0xff] %v829
                %v831 = vld [vmem:[%s235 + $0x1288] sm:$0xff]
                %832 = vst [vmem:[%s236 + $0x948] sm:$0xff] %v831
                %v833 = vld [vmem:[%s235 + $0x1290] sm:$0xff]
                %834 = vst [vmem:[%s236 + $0x950] sm:$0xff] %v833
                %v835 = vld [vmem:[%s235 + $0x1298] sm:$0xff]
                %836 = vst [vmem:[%s236 + $0x958] sm:$0xff] %v835
                %v837 = vld [vmem:[%s235 + $0x12c0] sm:$0xff]
                %838 = vst [vmem:[%s236 + $0x960] sm:$0xff] %v837
                %v839 = vld [vmem:[%s235 + $0x12c8] sm:$0xff]
                %840 = vst [vmem:[%s236 + $0x968] sm:$0xff] %v839
                %v841 = vld [vmem:[%s235 + $0x12d0] sm:$0xff]
                %842 = vst [vmem:[%s236 + $0x970] sm:$0xff] %v841
                %v843 = vld [vmem:[%s235 + $0x12d8] sm:$0xff]
                %844 = vst [vmem:[%s236 + $0x978] sm:$0xff] %v843
                %v845 = vld [vmem:[%s235 + $0x1300] sm:$0xff]
                %846 = vst [vmem:[%s236 + $0x980] sm:$0xff] %v845
                %v847 = vld [vmem:[%s235 + $0x1308] sm:$0xff]
                %848 = vst [vmem:[%s236 + $0x988] sm:$0xff] %v847
                %v849 = vld [vmem:[%s235 + $0x1310] sm:$0xff]
                %850 = vst [vmem:[%s236 + $0x990] sm:$0xff] %v849
                %v851 = vld [vmem:[%s235 + $0x1318] sm:$0xff]
                %852 = vst [vmem:[%s236 + $0x998] sm:$0xff] %v851
                %v853 = vld [vmem:[%s235 + $0x1340] sm:$0xff]
                %854 = vst [vmem:[%s236 + $0x9a0] sm:$0xff] %v853
                %v855 = vld [vmem:[%s235 + $0x1348] sm:$0xff]
                %856 = vst [vmem:[%s236 + $0x9a8] sm:$0xff] %v855
                %v857 = vld [vmem:[%s235 + $0x1350] sm:$0xff]
                %858 = vst [vmem:[%s236 + $0x9b0] sm:$0xff] %v857
                %v859 = vld [vmem:[%s235 + $0x1358] sm:$0xff]
                %860 = vst [vmem:[%s236 + $0x9b8] sm:$0xff] %v859
                %v861 = vld [vmem:[%s235 + $0x1380] sm:$0xff]
                %862 = vst [vmem:[%s236 + $0x9c0] sm:$0xff] %v861
                %v863 = vld [vmem:[%s235 + $0x1388] sm:$0xff]
                %864 = vst [vmem:[%s236 + $0x9c8] sm:$0xff] %v863
                %v865 = vld [vmem:[%s235 + $0x1390] sm:$0xff]
                %866 = vst [vmem:[%s236 + $0x9d0] sm:$0xff] %v865
                %v867 = vld [vmem:[%s235 + $0x1398] sm:$0xff]
                %868 = vst [vmem:[%s236 + $0x9d8] sm:$0xff] %v867
                %v869 = vld [vmem:[%s235 + $0x13c0] sm:$0xff]
                %870 = vst [vmem:[%s236 + $0x9e0] sm:$0xff] %v869
                %v871 = vld [vmem:[%s235 + $0x13c8] sm:$0xff]
                %872 = vst [vmem:[%s236 + $0x9e8] sm:$0xff] %v871
                %v873 = vld [vmem:[%s235 + $0x13d0] sm:$0xff]
                %874 = vst [vmem:[%s236 + $0x9f0] sm:$0xff] %v873
                %v875 = vld [vmem:[%s235 + $0x13d8] sm:$0xff]
                %876 = vst [vmem:[%s236 + $0x9f8] sm:$0xff] %v875
                %v877 = vld [vmem:[%s235 + $0x1400] sm:$0xff]
                %878 = vst [vmem:[%s236 + $0xa00] sm:$0xff] %v877
                %v879 = vld [vmem:[%s235 + $0x1408] sm:$0xff]
                %880 = vst [vmem:[%s236 + $0xa08] sm:$0xff] %v879
                %v881 = vld [vmem:[%s235 + $0x1410] sm:$0xff]
                %882 = vst [vmem:[%s236 + $0xa10] sm:$0xff] %v881
                %v883 = vld [vmem:[%s235 + $0x1418] sm:$0xff]
                %884 = vst [vmem:[%s236 + $0xa18] sm:$0xff] %v883
                %v885 = vld [vmem:[%s235 + $0x1440] sm:$0xff]
                %886 = vst [vmem:[%s236 + $0xa20] sm:$0xff] %v885
                %v887 = vld [vmem:[%s235 + $0x1448] sm:$0xff]
                %888 = vst [vmem:[%s236 + $0xa28] sm:$0xff] %v887
                %v889 = vld [vmem:[%s235 + $0x1450] sm:$0xff]
                %890 = vst [vmem:[%s236 + $0xa30] sm:$0xff] %v889
                %v891 = vld [vmem:[%s235 + $0x1458] sm:$0xff]
                %892 = vst [vmem:[%s236 + $0xa38] sm:$0xff] %v891
                %v893 = vld [vmem:[%s235 + $0x1480] sm:$0xff]
                %894 = vst [vmem:[%s236 + $0xa40] sm:$0xff] %v893
                %v895 = vld [vmem:[%s235 + $0x1488] sm:$0xff]
                %896 = vst [vmem:[%s236 + $0xa48] sm:$0xff] %v895
                %v897 = vld [vmem:[%s235 + $0x1490] sm:$0xff]
                %898 = vst [vmem:[%s236 + $0xa50] sm:$0xff] %v897
                %v899 = vld [vmem:[%s235 + $0x1498] sm:$0xff]
                %900 = vst [vmem:[%s236 + $0xa58] sm:$0xff] %v899
                %v901 = vld [vmem:[%s235 + $0x14c0] sm:$0xff]
                %902 = vst [vmem:[%s236 + $0xa60] sm:$0xff] %v901
                %v903 = vld [vmem:[%s235 + $0x14c8] sm:$0xff]
                %904 = vst [vmem:[%s236 + $0xa68] sm:$0xff] %v903
                %v905 = vld [vmem:[%s235 + $0x14d0] sm:$0xff]
                %906 = vst [vmem:[%s236 + $0xa70] sm:$0xff] %v905
                %v907 = vld [vmem:[%s235 + $0x14d8] sm:$0xff]
                %908 = vst [vmem:[%s236 + $0xa78] sm:$0xff] %v907
                %v909 = vld [vmem:[%s235 + $0x1500] sm:$0xff]
                %910 = vst [vmem:[%s236 + $0xa80] sm:$0xff] %v909
                %v911 = vld [vmem:[%s235 + $0x1508] sm:$0xff]
                %912 = vst [vmem:[%s236 + $0xa88] sm:$0xff] %v911
                %v913 = vld [vmem:[%s235 + $0x1510] sm:$0xff]
                %914 = vst [vmem:[%s236 + $0xa90] sm:$0xff] %v913
                %v915 = vld [vmem:[%s235 + $0x1518] sm:$0xff]
                %916 = vst [vmem:[%s236 + $0xa98] sm:$0xff] %v915
                %v917 = vld [vmem:[%s235 + $0x1540] sm:$0xff]
                %918 = vst [vmem:[%s236 + $0xaa0] sm:$0xff] %v917
                %v919 = vld [vmem:[%s235 + $0x1548] sm:$0xff]
                %920 = vst [vmem:[%s236 + $0xaa8] sm:$0xff] %v919
                %v921 = vld [vmem:[%s235 + $0x1550] sm:$0xff]
                %922 = vst [vmem:[%s236 + $0xab0] sm:$0xff] %v921
                %v923 = vld [vmem:[%s235 + $0x1558] sm:$0xff]
                %924 = vst [vmem:[%s236 + $0xab8] sm:$0xff] %v923
                %v925 = vld [vmem:[%s235 + $0x1580] sm:$0xff]
                %926 = vst [vmem:[%s236 + $0xac0] sm:$0xff] %v925
                %v927 = vld [vmem:[%s235 + $0x1588] sm:$0xff]
                %928 = vst [vmem:[%s236 + $0xac8] sm:$0xff] %v927
                %v929 = vld [vmem:[%s235 + $0x1590] sm:$0xff]
                %930 = vst [vmem:[%s236 + $0xad0] sm:$0xff] %v929
                %v931 = vld [vmem:[%s235 + $0x1598] sm:$0xff]
                %932 = vst [vmem:[%s236 + $0xad8] sm:$0xff] %v931
                %v933 = vld [vmem:[%s235 + $0x15c0] sm:$0xff]
                %934 = vst [vmem:[%s236 + $0xae0] sm:$0xff] %v933
                %v935 = vld [vmem:[%s235 + $0x15c8] sm:$0xff]
                %936 = vst [vmem:[%s236 + $0xae8] sm:$0xff] %v935
                %v937 = vld [vmem:[%s235 + $0x15d0] sm:$0xff]
                %938 = vst [vmem:[%s236 + $0xaf0] sm:$0xff] %v937
                %v939 = vld [vmem:[%s235 + $0x15d8] sm:$0xff]
                %940 = vst [vmem:[%s236 + $0xaf8] sm:$0xff] %v939
                %v941 = vld [vmem:[%s235 + $0x1600] sm:$0xff]
                %942 = vst [vmem:[%s236 + $0xb00] sm:$0xff] %v941
                %v943 = vld [vmem:[%s235 + $0x1608] sm:$0xff]
                %944 = vst [vmem:[%s236 + $0xb08] sm:$0xff] %v943
                %v945 = vld [vmem:[%s235 + $0x1610] sm:$0xff]
                %946 = vst [vmem:[%s236 + $0xb10] sm:$0xff] %v945
                %v947 = vld [vmem:[%s235 + $0x1618] sm:$0xff]
                %948 = vst [vmem:[%s236 + $0xb18] sm:$0xff] %v947
                %v949 = vld [vmem:[%s235 + $0x1640] sm:$0xff]
                %950 = vst [vmem:[%s236 + $0xb20] sm:$0xff] %v949
                %v951 = vld [vmem:[%s235 + $0x1648] sm:$0xff]
                %952 = vst [vmem:[%s236 + $0xb28] sm:$0xff] %v951
                %v953 = vld [vmem:[%s235 + $0x1650] sm:$0xff]
                %954 = vst [vmem:[%s236 + $0xb30] sm:$0xff] %v953
                %v955 = vld [vmem:[%s235 + $0x1658] sm:$0xff]
                %956 = vst [vmem:[%s236 + $0xb38] sm:$0xff] %v955
                %v957 = vld [vmem:[%s235 + $0x1680] sm:$0xff]
                %958 = vst [vmem:[%s236 + $0xb40] sm:$0xff] %v957
                %v959 = vld [vmem:[%s235 + $0x1688] sm:$0xff]
                %960 = vst [vmem:[%s236 + $0xb48] sm:$0xff] %v959
                %v961 = vld [vmem:[%s235 + $0x1690] sm:$0xff]
                %962 = vst [vmem:[%s236 + $0xb50] sm:$0xff] %v961
                %v963 = vld [vmem:[%s235 + $0x1698] sm:$0xff]
                %964 = vst [vmem:[%s236 + $0xb58] sm:$0xff] %v963
                %v965 = vld [vmem:[%s235 + $0x16c0] sm:$0xff]
                %966 = vst [vmem:[%s236 + $0xb60] sm:$0xff] %v965
                %v967 = vld [vmem:[%s235 + $0x16c8] sm:$0xff]
                %968 = vst [vmem:[%s236 + $0xb68] sm:$0xff] %v967
                %v969 = vld [vmem:[%s235 + $0x16d0] sm:$0xff]
                %970 = vst [vmem:[%s236 + $0xb70] sm:$0xff] %v969
                %v971 = vld [vmem:[%s235 + $0x16d8] sm:$0xff]
                %972 = vst [vmem:[%s236 + $0xb78] sm:$0xff] %v971
                %v973 = vld [vmem:[%s235 + $0x1700] sm:$0xff]
                %974 = vst [vmem:[%s236 + $0xb80] sm:$0xff] %v973
                %v975 = vld [vmem:[%s235 + $0x1708] sm:$0xff]
                %976 = vst [vmem:[%s236 + $0xb88] sm:$0xff] %v975
                %v977 = vld [vmem:[%s235 + $0x1710] sm:$0xff]
                %978 = vst [vmem:[%s236 + $0xb90] sm:$0xff] %v977
                %v979 = vld [vmem:[%s235 + $0x1718] sm:$0xff]
                %980 = vst [vmem:[%s236 + $0xb98] sm:$0xff] %v979
                %v981 = vld [vmem:[%s235 + $0x1740] sm:$0xff]
                %982 = vst [vmem:[%s236 + $0xba0] sm:$0xff] %v981
                %v983 = vld [vmem:[%s235 + $0x1748] sm:$0xff]
                %984 = vst [vmem:[%s236 + $0xba8] sm:$0xff] %v983
                %v985 = vld [vmem:[%s235 + $0x1750] sm:$0xff]
                %986 = vst [vmem:[%s236 + $0xbb0] sm:$0xff] %v985
                %v987 = vld [vmem:[%s235 + $0x1758] sm:$0xff]
                %988 = vst [vmem:[%s236 + $0xbb8] sm:$0xff] %v987
                %v989 = vld [vmem:[%s235 + $0x1780] sm:$0xff]
                %990 = vst [vmem:[%s236 + $0xbc0] sm:$0xff] %v989
                %v991 = vld [vmem:[%s235 + $0x1788] sm:$0xff]
                %992 = vst [vmem:[%s236 + $0xbc8] sm:$0xff] %v991
                %v993 = vld [vmem:[%s235 + $0x1790] sm:$0xff]
                %994 = vst [vmem:[%s236 + $0xbd0] sm:$0xff] %v993
                %v995 = vld [vmem:[%s235 + $0x1798] sm:$0xff]
                %996 = vst [vmem:[%s236 + $0xbd8] sm:$0xff] %v995
                %v997 = vld [vmem:[%s235 + $0x17c0] sm:$0xff]
                %998 = vst [vmem:[%s236 + $0xbe0] sm:$0xff] %v997
                %v999 = vld [vmem:[%s235 + $0x17c8] sm:$0xff]
                %1000 = vst [vmem:[%s236 + $0xbe8] sm:$0xff] %v999
                %v1001 = vld [vmem:[%s235 + $0x17d0] sm:$0xff]
                %1002 = vst [vmem:[%s236 + $0xbf0] sm:$0xff] %v1001
                %v1003 = vld [vmem:[%s235 + $0x17d8] sm:$0xff]
                %1004 = vst [vmem:[%s236 + $0xbf8] sm:$0xff] %v1003
                %v1005 = vld [vmem:[%s235 + $0x1800] sm:$0xff]
                %1006 = vst [vmem:[%s236 + $0xc00] sm:$0xff] %v1005
                %v1007 = vld [vmem:[%s235 + $0x1808] sm:$0xff]
                %1008 = vst [vmem:[%s236 + $0xc08] sm:$0xff] %v1007
                %v1009 = vld [vmem:[%s235 + $0x1810] sm:$0xff]
                %1010 = vst [vmem:[%s236 + $0xc10] sm:$0xff] %v1009
                %v1011 = vld [vmem:[%s235 + $0x1818] sm:$0xff]
                %1012 = vst [vmem:[%s236 + $0xc18] sm:$0xff] %v1011
                %v1013 = vld [vmem:[%s235 + $0x1840] sm:$0xff]
                %1014 = vst [vmem:[%s236 + $0xc20] sm:$0xff] %v1013
                %v1015 = vld [vmem:[%s235 + $0x1848] sm:$0xff]
                %1016 = vst [vmem:[%s236 + $0xc28] sm:$0xff] %v1015
                %v1017 = vld [vmem:[%s235 + $0x1850] sm:$0xff]
                %1018 = vst [vmem:[%s236 + $0xc30] sm:$0xff] %v1017
                %v1019 = vld [vmem:[%s235 + $0x1858] sm:$0xff]
                %1020 = vst [vmem:[%s236 + $0xc38] sm:$0xff] %v1019
                %v1021 = vld [vmem:[%s235 + $0x1880] sm:$0xff]
                %1022 = vst [vmem:[%s236 + $0xc40] sm:$0xff] %v1021
                %v1023 = vld [vmem:[%s235 + $0x1888] sm:$0xff]
                %1024 = vst [vmem:[%s236 + $0xc48] sm:$0xff] %v1023
                %v1025 = vld [vmem:[%s235 + $0x1890] sm:$0xff]
                %1026 = vst [vmem:[%s236 + $0xc50] sm:$0xff] %v1025
                %v1027 = vld [vmem:[%s235 + $0x1898] sm:$0xff]
                %1028 = vst [vmem:[%s236 + $0xc58] sm:$0xff] %v1027
                %v1029 = vld [vmem:[%s235 + $0x18c0] sm:$0xff]
                %1030 = vst [vmem:[%s236 + $0xc60] sm:$0xff] %v1029
                %v1031 = vld [vmem:[%s235 + $0x18c8] sm:$0xff]
                %1032 = vst [vmem:[%s236 + $0xc68] sm:$0xff] %v1031
                %v1033 = vld [vmem:[%s235 + $0x18d0] sm:$0xff]
                %1034 = vst [vmem:[%s236 + $0xc70] sm:$0xff] %v1033
                %v1035 = vld [vmem:[%s235 + $0x18d8] sm:$0xff]
                %1036 = vst [vmem:[%s236 + $0xc78] sm:$0xff] %v1035
                %v1037 = vld [vmem:[%s235 + $0x1900] sm:$0xff]
                %1038 = vst [vmem:[%s236 + $0xc80] sm:$0xff] %v1037
                %v1039 = vld [vmem:[%s235 + $0x1908] sm:$0xff]
                %1040 = vst [vmem:[%s236 + $0xc88] sm:$0xff] %v1039
                %v1041 = vld [vmem:[%s235 + $0x1910] sm:$0xff]
                %1042 = vst [vmem:[%s236 + $0xc90] sm:$0xff] %v1041
                %v1043 = vld [vmem:[%s235 + $0x1918] sm:$0xff]
                %1044 = vst [vmem:[%s236 + $0xc98] sm:$0xff] %v1043
                %v1045 = vld [vmem:[%s235 + $0x1940] sm:$0xff]
                %1046 = vst [vmem:[%s236 + $0xca0] sm:$0xff] %v1045
                %v1047 = vld [vmem:[%s235 + $0x1948] sm:$0xff]
                %1048 = vst [vmem:[%s236 + $0xca8] sm:$0xff] %v1047
                %v1049 = vld [vmem:[%s235 + $0x1950] sm:$0xff]
                %1050 = vst [vmem:[%s236 + $0xcb0] sm:$0xff] %v1049
                %v1051 = vld [vmem:[%s235 + $0x1958] sm:$0xff]
                %1052 = vst [vmem:[%s236 + $0xcb8] sm:$0xff] %v1051
                %v1053 = vld [vmem:[%s235 + $0x1980] sm:$0xff]
                %1054 = vst [vmem:[%s236 + $0xcc0] sm:$0xff] %v1053
                %v1055 = vld [vmem:[%s235 + $0x1988] sm:$0xff]
                %1056 = vst [vmem:[%s236 + $0xcc8] sm:$0xff] %v1055
                %v1057 = vld [vmem:[%s235 + $0x1990] sm:$0xff]
                %1058 = vst [vmem:[%s236 + $0xcd0] sm:$0xff] %v1057
                %v1059 = vld [vmem:[%s235 + $0x1998] sm:$0xff]
                %1060 = vst [vmem:[%s236 + $0xcd8] sm:$0xff] %v1059
                %v1061 = vld [vmem:[%s235 + $0x19c0] sm:$0xff]
                %1062 = vst [vmem:[%s236 + $0xce0] sm:$0xff] %v1061
                %v1063 = vld [vmem:[%s235 + $0x19c8] sm:$0xff]
                %1064 = vst [vmem:[%s236 + $0xce8] sm:$0xff] %v1063
                %v1065 = vld [vmem:[%s235 + $0x19d0] sm:$0xff]
                %1066 = vst [vmem:[%s236 + $0xcf0] sm:$0xff] %v1065
                %v1067 = vld [vmem:[%s235 + $0x19d8] sm:$0xff]
                %1068 = vst [vmem:[%s236 + $0xcf8] sm:$0xff] %v1067
                %v1069 = vld [vmem:[%s235 + $0x1a00] sm:$0xff]
                %1070 = vst [vmem:[%s236 + $0xd00] sm:$0xff] %v1069
                %v1071 = vld [vmem:[%s235 + $0x1a08] sm:$0xff]
                %1072 = vst [vmem:[%s236 + $0xd08] sm:$0xff] %v1071
                %v1073 = vld [vmem:[%s235 + $0x1a10] sm:$0xff]
                %1074 = vst [vmem:[%s236 + $0xd10] sm:$0xff] %v1073
                %v1075 = vld [vmem:[%s235 + $0x1a18] sm:$0xff]
                %1076 = vst [vmem:[%s236 + $0xd18] sm:$0xff] %v1075
                %v1077 = vld [vmem:[%s235 + $0x1a40] sm:$0xff]
                %1078 = vst [vmem:[%s236 + $0xd20] sm:$0xff] %v1077
                %v1079 = vld [vmem:[%s235 + $0x1a48] sm:$0xff]
                %1080 = vst [vmem:[%s236 + $0xd28] sm:$0xff] %v1079
                %v1081 = vld [vmem:[%s235 + $0x1a50] sm:$0xff]
                %1082 = vst [vmem:[%s236 + $0xd30] sm:$0xff] %v1081
                %v1083 = vld [vmem:[%s235 + $0x1a58] sm:$0xff]
                %1084 = vst [vmem:[%s236 + $0xd38] sm:$0xff] %v1083
                %v1085 = vld [vmem:[%s235 + $0x1a80] sm:$0xff]
                %1086 = vst [vmem:[%s236 + $0xd40] sm:$0xff] %v1085
                %v1087 = vld [vmem:[%s235 + $0x1a88] sm:$0xff]
                %1088 = vst [vmem:[%s236 + $0xd48] sm:$0xff] %v1087
                %v1089 = vld [vmem:[%s235 + $0x1a90] sm:$0xff]
                %1090 = vst [vmem:[%s236 + $0xd50] sm:$0xff] %v1089
                %v1091 = vld [vmem:[%s235 + $0x1a98] sm:$0xff]
                %1092 = vst [vmem:[%s236 + $0xd58] sm:$0xff] %v1091
                %v1093 = vld [vmem:[%s235 + $0x1ac0] sm:$0xff]
                %1094 = vst [vmem:[%s236 + $0xd60] sm:$0xff] %v1093
                %v1095 = vld [vmem:[%s235 + $0x1ac8] sm:$0xff]
                %1096 = vst [vmem:[%s236 + $0xd68] sm:$0xff] %v1095
                %v1097 = vld [vmem:[%s235 + $0x1ad0] sm:$0xff]
                %1098 = vst [vmem:[%s236 + $0xd70] sm:$0xff] %v1097
                %v1099 = vld [vmem:[%s235 + $0x1ad8] sm:$0xff]
                %1100 = vst [vmem:[%s236 + $0xd78] sm:$0xff] %v1099
                %v1101 = vld [vmem:[%s235 + $0x1b00] sm:$0xff]
                %1102 = vst [vmem:[%s236 + $0xd80] sm:$0xff] %v1101
                %v1103 = vld [vmem:[%s235 + $0x1b08] sm:$0xff]
                %1104 = vst [vmem:[%s236 + $0xd88] sm:$0xff] %v1103
                %v1105 = vld [vmem:[%s235 + $0x1b10] sm:$0xff]
                %1106 = vst [vmem:[%s236 + $0xd90] sm:$0xff] %v1105
                %v1107 = vld [vmem:[%s235 + $0x1b18] sm:$0xff]
                %1108 = vst [vmem:[%s236 + $0xd98] sm:$0xff] %v1107
                %v1109 = vld [vmem:[%s235 + $0x1b40] sm:$0xff]
                %1110 = vst [vmem:[%s236 + $0xda0] sm:$0xff] %v1109
                %v1111 = vld [vmem:[%s235 + $0x1b48] sm:$0xff]
                %1112 = vst [vmem:[%s236 + $0xda8] sm:$0xff] %v1111
                %v1113 = vld [vmem:[%s235 + $0x1b50] sm:$0xff]
                %1114 = vst [vmem:[%s236 + $0xdb0] sm:$0xff] %v1113
                %v1115 = vld [vmem:[%s235 + $0x1b58] sm:$0xff]
                %1116 = vst [vmem:[%s236 + $0xdb8] sm:$0xff] %v1115
                %v1117 = vld [vmem:[%s235 + $0x1b80] sm:$0xff]
                %1118 = vst [vmem:[%s236 + $0xdc0] sm:$0xff] %v1117
                %v1119 = vld [vmem:[%s235 + $0x1b88] sm:$0xff]
                %1120 = vst [vmem:[%s236 + $0xdc8] sm:$0xff] %v1119
                %v1121 = vld [vmem:[%s235 + $0x1b90] sm:$0xff]
                %1122 = vst [vmem:[%s236 + $0xdd0] sm:$0xff] %v1121
                %v1123 = vld [vmem:[%s235 + $0x1b98] sm:$0xff]
                %1124 = vst [vmem:[%s236 + $0xdd8] sm:$0xff] %v1123
                %v1125 = vld [vmem:[%s235 + $0x1bc0] sm:$0xff]
                %1126 = vst [vmem:[%s236 + $0xde0] sm:$0xff] %v1125
                %v1127 = vld [vmem:[%s235 + $0x1bc8] sm:$0xff]
                %1128 = vst [vmem:[%s236 + $0xde8] sm:$0xff] %v1127
                %v1129 = vld [vmem:[%s235 + $0x1bd0] sm:$0xff]
                %1130 = vst [vmem:[%s236 + $0xdf0] sm:$0xff] %v1129
                %v1131 = vld [vmem:[%s235 + $0x1bd8] sm:$0xff]
                %1132 = vst [vmem:[%s236 + $0xdf8] sm:$0xff] %v1131
                %v1133 = vld [vmem:[%s235 + $0x1c00] sm:$0xff]
                %1134 = vst [vmem:[%s236 + $0xe00] sm:$0xff] %v1133
                %v1135 = vld [vmem:[%s235 + $0x1c08] sm:$0xff]
                %1136 = vst [vmem:[%s236 + $0xe08] sm:$0xff] %v1135
                %v1137 = vld [vmem:[%s235 + $0x1c10] sm:$0xff]
                %1138 = vst [vmem:[%s236 + $0xe10] sm:$0xff] %v1137
                %v1139 = vld [vmem:[%s235 + $0x1c18] sm:$0xff]
                %1140 = vst [vmem:[%s236 + $0xe18] sm:$0xff] %v1139
                %v1141 = vld [vmem:[%s235 + $0x1c40] sm:$0xff]
                %1142 = vst [vmem:[%s236 + $0xe20] sm:$0xff] %v1141
                %v1143 = vld [vmem:[%s235 + $0x1c48] sm:$0xff]
                %1144 = vst [vmem:[%s236 + $0xe28] sm:$0xff] %v1143
                %v1145 = vld [vmem:[%s235 + $0x1c50] sm:$0xff]
                %1146 = vst [vmem:[%s236 + $0xe30] sm:$0xff] %v1145
                %v1147 = vld [vmem:[%s235 + $0x1c58] sm:$0xff]
                %1148 = vst [vmem:[%s236 + $0xe38] sm:$0xff] %v1147
                %v1149 = vld [vmem:[%s235 + $0x1c80] sm:$0xff]
                %1150 = vst [vmem:[%s236 + $0xe40] sm:$0xff] %v1149
                %v1151 = vld [vmem:[%s235 + $0x1c88] sm:$0xff]
                %1152 = vst [vmem:[%s236 + $0xe48] sm:$0xff] %v1151
                %v1153 = vld [vmem:[%s235 + $0x1c90] sm:$0xff]
                %1154 = vst [vmem:[%s236 + $0xe50] sm:$0xff] %v1153
                %v1155 = vld [vmem:[%s235 + $0x1c98] sm:$0xff]
                %1156 = vst [vmem:[%s236 + $0xe58] sm:$0xff] %v1155
                %v1157 = vld [vmem:[%s235 + $0x1cc0] sm:$0xff]
                %1158 = vst [vmem:[%s236 + $0xe60] sm:$0xff] %v1157
                %v1159 = vld [vmem:[%s235 + $0x1cc8] sm:$0xff]
                %1160 = vst [vmem:[%s236 + $0xe68] sm:$0xff] %v1159
                %v1161 = vld [vmem:[%s235 + $0x1cd0] sm:$0xff]
                %1162 = vst [vmem:[%s236 + $0xe70] sm:$0xff] %v1161
                %v1163 = vld [vmem:[%s235 + $0x1cd8] sm:$0xff]
                %1164 = vst [vmem:[%s236 + $0xe78] sm:$0xff] %v1163
                %v1165 = vld [vmem:[%s235 + $0x1d00] sm:$0xff]
                %1166 = vst [vmem:[%s236 + $0xe80] sm:$0xff] %v1165
                %v1167 = vld [vmem:[%s235 + $0x1d08] sm:$0xff]
                %1168 = vst [vmem:[%s236 + $0xe88] sm:$0xff] %v1167
                %v1169 = vld [vmem:[%s235 + $0x1d10] sm:$0xff]
                %1170 = vst [vmem:[%s236 + $0xe90] sm:$0xff] %v1169
                %v1171 = vld [vmem:[%s235 + $0x1d18] sm:$0xff]
                %1172 = vst [vmem:[%s236 + $0xe98] sm:$0xff] %v1171
                %v1173 = vld [vmem:[%s235 + $0x1d40] sm:$0xff]
                %1174 = vst [vmem:[%s236 + $0xea0] sm:$0xff] %v1173
                %v1175 = vld [vmem:[%s235 + $0x1d48] sm:$0xff]
                %1176 = vst [vmem:[%s236 + $0xea8] sm:$0xff] %v1175
                %v1177 = vld [vmem:[%s235 + $0x1d50] sm:$0xff]
                %1178 = vst [vmem:[%s236 + $0xeb0] sm:$0xff] %v1177
                %v1179 = vld [vmem:[%s235 + $0x1d58] sm:$0xff]
                %1180 = vst [vmem:[%s236 + $0xeb8] sm:$0xff] %v1179
                %v1181 = vld [vmem:[%s235 + $0x1d80] sm:$0xff]
                %1182 = vst [vmem:[%s236 + $0xec0] sm:$0xff] %v1181
                %v1183 = vld [vmem:[%s235 + $0x1d88] sm:$0xff]
                %1184 = vst [vmem:[%s236 + $0xec8] sm:$0xff] %v1183
                %v1185 = vld [vmem:[%s235 + $0x1d90] sm:$0xff]
                %1186 = vst [vmem:[%s236 + $0xed0] sm:$0xff] %v1185
                %v1187 = vld [vmem:[%s235 + $0x1d98] sm:$0xff]
                %1188 = vst [vmem:[%s236 + $0xed8] sm:$0xff] %v1187
                %v1189 = vld [vmem:[%s235 + $0x1dc0] sm:$0xff]
                %1190 = vst [vmem:[%s236 + $0xee0] sm:$0xff] %v1189
                %v1191 = vld [vmem:[%s235 + $0x1dc8] sm:$0xff]
                %1192 = vst [vmem:[%s236 + $0xee8] sm:$0xff] %v1191
                %v1193 = vld [vmem:[%s235 + $0x1dd0] sm:$0xff]
                %1194 = vst [vmem:[%s236 + $0xef0] sm:$0xff] %v1193
                %v1195 = vld [vmem:[%s235 + $0x1dd8] sm:$0xff]
                %1196 = vst [vmem:[%s236 + $0xef8] sm:$0xff] %v1195
                %v1197 = vld [vmem:[%s235 + $0x1e00] sm:$0xff]
                %1198 = vst [vmem:[%s236 + $0xf00] sm:$0xff] %v1197
                %v1199 = vld [vmem:[%s235 + $0x1e08] sm:$0xff]
                %1200 = vst [vmem:[%s236 + $0xf08] sm:$0xff] %v1199
                %v1201 = vld [vmem:[%s235 + $0x1e10] sm:$0xff]
                %1202 = vst [vmem:[%s236 + $0xf10] sm:$0xff] %v1201
                %v1203 = vld [vmem:[%s235 + $0x1e18] sm:$0xff]
                %1204 = vst [vmem:[%s236 + $0xf18] sm:$0xff] %v1203
                %v1205 = vld [vmem:[%s235 + $0x1e40] sm:$0xff]
                %1206 = vst [vmem:[%s236 + $0xf20] sm:$0xff] %v1205
                %v1207 = vld [vmem:[%s235 + $0x1e48] sm:$0xff]
                %1208 = vst [vmem:[%s236 + $0xf28] sm:$0xff] %v1207
                %v1209 = vld [vmem:[%s235 + $0x1e50] sm:$0xff]
                %1210 = vst [vmem:[%s236 + $0xf30] sm:$0xff] %v1209
                %v1211 = vld [vmem:[%s235 + $0x1e58] sm:$0xff]
                %1212 = vst [vmem:[%s236 + $0xf38] sm:$0xff] %v1211
                %v1213 = vld [vmem:[%s235 + $0x1e80] sm:$0xff]
                %1214 = vst [vmem:[%s236 + $0xf40] sm:$0xff] %v1213
                %v1215 = vld [vmem:[%s235 + $0x1e88] sm:$0xff]
                %1216 = vst [vmem:[%s236 + $0xf48] sm:$0xff] %v1215
                %v1217 = vld [vmem:[%s235 + $0x1e90] sm:$0xff]
                %1218 = vst [vmem:[%s236 + $0xf50] sm:$0xff] %v1217
                %v1219 = vld [vmem:[%s235 + $0x1e98] sm:$0xff]
                %1220 = vst [vmem:[%s236 + $0xf58] sm:$0xff] %v1219
                %v1221 = vld [vmem:[%s235 + $0x1ec0] sm:$0xff]
                %1222 = vst [vmem:[%s236 + $0xf60] sm:$0xff] %v1221
                %v1223 = vld [vmem:[%s235 + $0x1ec8] sm:$0xff]
                %1224 = vst [vmem:[%s236 + $0xf68] sm:$0xff] %v1223
                %v1225 = vld [vmem:[%s235 + $0x1ed0] sm:$0xff]
                %1226 = vst [vmem:[%s236 + $0xf70] sm:$0xff] %v1225
                %v1227 = vld [vmem:[%s235 + $0x1ed8] sm:$0xff]
                %1228 = vst [vmem:[%s236 + $0xf78] sm:$0xff] %v1227
                %v1229 = vld [vmem:[%s235 + $0x1f00] sm:$0xff]
                %1230 = vst [vmem:[%s236 + $0xf80] sm:$0xff] %v1229
                %v1231 = vld [vmem:[%s235 + $0x1f08] sm:$0xff]
                %1232 = vst [vmem:[%s236 + $0xf88] sm:$0xff] %v1231
                %v1233 = vld [vmem:[%s235 + $0x1f10] sm:$0xff]
                %1234 = vst [vmem:[%s236 + $0xf90] sm:$0xff] %v1233
                %v1235 = vld [vmem:[%s235 + $0x1f18] sm:$0xff]
                %1236 = vst [vmem:[%s236 + $0xf98] sm:$0xff] %v1235
                %v1237 = vld [vmem:[%s235 + $0x1f40] sm:$0xff]
                %1238 = vst [vmem:[%s236 + $0xfa0] sm:$0xff] %v1237
                %v1239 = vld [vmem:[%s235 + $0x1f48] sm:$0xff]
                %1240 = vst [vmem:[%s236 + $0xfa8] sm:$0xff] %v1239
                %v1241 = vld [vmem:[%s235 + $0x1f50] sm:$0xff]
                %1242 = vst [vmem:[%s236 + $0xfb0] sm:$0xff] %v1241
                %v1243 = vld [vmem:[%s235 + $0x1f58] sm:$0xff]
                %1244 = vst [vmem:[%s236 + $0xfb8] sm:$0xff] %v1243
                %v1245 = vld [vmem:[%s235 + $0x1f80] sm:$0xff]
                %1246 = vst [vmem:[%s236 + $0xfc0] sm:$0xff] %v1245
                %v1247 = vld [vmem:[%s235 + $0x1f88] sm:$0xff]
                %1248 = vst [vmem:[%s236 + $0xfc8] sm:$0xff] %v1247
                %v1249 = vld [vmem:[%s235 + $0x1f90] sm:$0xff]
                %1250 = vst [vmem:[%s236 + $0xfd0] sm:$0xff] %v1249
                %v1251 = vld [vmem:[%s235 + $0x1f98] sm:$0xff]
                %1252 = vst [vmem:[%s236 + $0xfd8] sm:$0xff] %v1251
                %v1253 = vld [vmem:[%s235 + $0x1fc0] sm:$0xff]
                %1254 = vst [vmem:[%s236 + $0xfe0] sm:$0xff] %v1253
                %v1255 = vld [vmem:[%s235 + $0x1fc8] sm:$0xff]
                %1256 = vst [vmem:[%s236 + $0xfe8] sm:$0xff] %v1255
                %v1257 = vld [vmem:[%s235 + $0x1fd0] sm:$0xff]
                %1258 = vst [vmem:[%s236 + $0xff0] sm:$0xff] %v1257
                %v1259 = vld [vmem:[%s235 + $0x1fd8] sm:$0xff]
                %1260 = vst [vmem:[%s236 + $0xff8] sm:$0xff] %v1259
                %v1261 = vld [vmem:[%s235 + $0x2000] sm:$0xff]
                %1262 = vst [vmem:[%s236 + $0x1000] sm:$0xff] %v1261
                %v1263 = vld [vmem:[%s235 + $0x2008] sm:$0xff]
                %1264 = vst [vmem:[%s236 + $0x1008] sm:$0xff] %v1263
                %v1265 = vld [vmem:[%s235 + $0x2010] sm:$0xff]
                %1266 = vst [vmem:[%s236 + $0x1010] sm:$0xff] %v1265
                %v1267 = vld [vmem:[%s235 + $0x2018] sm:$0xff]
                %1268 = vst [vmem:[%s236 + $0x1018] sm:$0xff] %v1267
                %v1269 = vld [vmem:[%s235 + $0x2040] sm:$0xff]
                %1270 = vst [vmem:[%s236 + $0x1020] sm:$0xff] %v1269
                %v1271 = vld [vmem:[%s235 + $0x2048] sm:$0xff]
                %1272 = vst [vmem:[%s236 + $0x1028] sm:$0xff] %v1271
                %v1273 = vld [vmem:[%s235 + $0x2050] sm:$0xff]
                %1274 = vst [vmem:[%s236 + $0x1030] sm:$0xff] %v1273
                %v1275 = vld [vmem:[%s235 + $0x2058] sm:$0xff]
                %1276 = vst [vmem:[%s236 + $0x1038] sm:$0xff] %v1275
                %v1277 = vld [vmem:[%s235 + $0x2080] sm:$0xff]
                %1278 = vst [vmem:[%s236 + $0x1040] sm:$0xff] %v1277
                %v1279 = vld [vmem:[%s235 + $0x2088] sm:$0xff]
                %1280 = vst [vmem:[%s236 + $0x1048] sm:$0xff] %v1279
                %v1281 = vld [vmem:[%s235 + $0x2090] sm:$0xff]
                %1282 = vst [vmem:[%s236 + $0x1050] sm:$0xff] %v1281
                %v1283 = vld [vmem:[%s235 + $0x2098] sm:$0xff]
                %1284 = vst [vmem:[%s236 + $0x1058] sm:$0xff] %v1283
                %v1285 = vld [vmem:[%s235 + $0x20c0] sm:$0xff]
                %1286 = vst [vmem:[%s236 + $0x1060] sm:$0xff] %v1285
                %v1287 = vld [vmem:[%s235 + $0x20c8] sm:$0xff]
                %1288 = vst [vmem:[%s236 + $0x1068] sm:$0xff] %v1287
                %v1289 = vld [vmem:[%s235 + $0x20d0] sm:$0xff]
                %1290 = vst [vmem:[%s236 + $0x1070] sm:$0xff] %v1289
                %v1291 = vld [vmem:[%s235 + $0x20d8] sm:$0xff]
                %1292 = vst [vmem:[%s236 + $0x1078] sm:$0xff] %v1291
                %v1293 = vld [vmem:[%s235 + $0x2100] sm:$0xff]
                %1294 = vst [vmem:[%s236 + $0x1080] sm:$0xff] %v1293
                %v1295 = vld [vmem:[%s235 + $0x2108] sm:$0xff]
                %1296 = vst [vmem:[%s236 + $0x1088] sm:$0xff] %v1295
                %v1297 = vld [vmem:[%s235 + $0x2110] sm:$0xff]
                %1298 = vst [vmem:[%s236 + $0x1090] sm:$0xff] %v1297
                %v1299 = vld [vmem:[%s235 + $0x2118] sm:$0xff]
                %1300 = vst [vmem:[%s236 + $0x1098] sm:$0xff] %v1299
                %v1301 = vld [vmem:[%s235 + $0x2140] sm:$0xff]
                %1302 = vst [vmem:[%s236 + $0x10a0] sm:$0xff] %v1301
                %v1303 = vld [vmem:[%s235 + $0x2148] sm:$0xff]
                %1304 = vst [vmem:[%s236 + $0x10a8] sm:$0xff] %v1303
                %v1305 = vld [vmem:[%s235 + $0x2150] sm:$0xff]
                %1306 = vst [vmem:[%s236 + $0x10b0] sm:$0xff] %v1305
                %v1307 = vld [vmem:[%s235 + $0x2158] sm:$0xff]
                %1308 = vst [vmem:[%s236 + $0x10b8] sm:$0xff] %v1307
                %v1309 = vld [vmem:[%s235 + $0x2180] sm:$0xff]
                %1310 = vst [vmem:[%s236 + $0x10c0] sm:$0xff] %v1309
                %v1311 = vld [vmem:[%s235 + $0x2188] sm:$0xff]
                %1312 = vst [vmem:[%s236 + $0x10c8] sm:$0xff] %v1311
                %v1313 = vld [vmem:[%s235 + $0x2190] sm:$0xff]
                %1314 = vst [vmem:[%s236 + $0x10d0] sm:$0xff] %v1313
                %v1315 = vld [vmem:[%s235 + $0x2198] sm:$0xff]
                %1316 = vst [vmem:[%s236 + $0x10d8] sm:$0xff] %v1315
                %v1317 = vld [vmem:[%s235 + $0x21c0] sm:$0xff]
                %1318 = vst [vmem:[%s236 + $0x10e0] sm:$0xff] %v1317
                %v1319 = vld [vmem:[%s235 + $0x21c8] sm:$0xff]
                %1320 = vst [vmem:[%s236 + $0x10e8] sm:$0xff] %v1319
                %v1321 = vld [vmem:[%s235 + $0x21d0] sm:$0xff]
                %1322 = vst [vmem:[%s236 + $0x10f0] sm:$0xff] %v1321
                %v1323 = vld [vmem:[%s235 + $0x21d8] sm:$0xff]
                %1324 = vst [vmem:[%s236 + $0x10f8] sm:$0xff] %v1323
                %v1325 = vld [vmem:[%s235 + $0x2200] sm:$0xff]
                %1326 = vst [vmem:[%s236 + $0x1100] sm:$0xff] %v1325
                %v1327 = vld [vmem:[%s235 + $0x2208] sm:$0xff]
                %1328 = vst [vmem:[%s236 + $0x1108] sm:$0xff] %v1327
                %v1329 = vld [vmem:[%s235 + $0x2210] sm:$0xff]
                %1330 = vst [vmem:[%s236 + $0x1110] sm:$0xff] %v1329
                %v1331 = vld [vmem:[%s235 + $0x2218] sm:$0xff]
                %1332 = vst [vmem:[%s236 + $0x1118] sm:$0xff] %v1331
                %v1333 = vld [vmem:[%s235 + $0x2240] sm:$0xff]
                %1334 = vst [vmem:[%s236 + $0x1120] sm:$0xff] %v1333
                %v1335 = vld [vmem:[%s235 + $0x2248] sm:$0xff]
                %1336 = vst [vmem:[%s236 + $0x1128] sm:$0xff] %v1335
                %v1337 = vld [vmem:[%s235 + $0x2250] sm:$0xff]
                %1338 = vst [vmem:[%s236 + $0x1130] sm:$0xff] %v1337
                %v1339 = vld [vmem:[%s235 + $0x2258] sm:$0xff]
                %1340 = vst [vmem:[%s236 + $0x1138] sm:$0xff] %v1339
                %v1341 = vld [vmem:[%s235 + $0x2280] sm:$0xff]
                %1342 = vst [vmem:[%s236 + $0x1140] sm:$0xff] %v1341
                %v1343 = vld [vmem:[%s235 + $0x2288] sm:$0xff]
                %1344 = vst [vmem:[%s236 + $0x1148] sm:$0xff] %v1343
                %v1345 = vld [vmem:[%s235 + $0x2290] sm:$0xff]
                %1346 = vst [vmem:[%s236 + $0x1150] sm:$0xff] %v1345
                %v1347 = vld [vmem:[%s235 + $0x2298] sm:$0xff]
                %1348 = vst [vmem:[%s236 + $0x1158] sm:$0xff] %v1347
                %v1349 = vld [vmem:[%s235 + $0x22c0] sm:$0xff]
                %1350 = vst [vmem:[%s236 + $0x1160] sm:$0xff] %v1349
                %v1351 = vld [vmem:[%s235 + $0x22c8] sm:$0xff]
                %1352 = vst [vmem:[%s236 + $0x1168] sm:$0xff] %v1351
                %v1353 = vld [vmem:[%s235 + $0x22d0] sm:$0xff]
                %1354 = vst [vmem:[%s236 + $0x1170] sm:$0xff] %v1353
                %v1355 = vld [vmem:[%s235 + $0x22d8] sm:$0xff]
                %1356 = vst [vmem:[%s236 + $0x1178] sm:$0xff] %v1355
                %v1357 = vld [vmem:[%s235 + $0x2300] sm:$0xff]
                %1358 = vst [vmem:[%s236 + $0x1180] sm:$0xff] %v1357
                %v1359 = vld [vmem:[%s235 + $0x2308] sm:$0xff]
                %1360 = vst [vmem:[%s236 + $0x1188] sm:$0xff] %v1359
                %v1361 = vld [vmem:[%s235 + $0x2310] sm:$0xff]
                %1362 = vst [vmem:[%s236 + $0x1190] sm:$0xff] %v1361
                %v1363 = vld [vmem:[%s235 + $0x2318] sm:$0xff]
                %1364 = vst [vmem:[%s236 + $0x1198] sm:$0xff] %v1363
                %v1365 = vld [vmem:[%s235 + $0x2340] sm:$0xff]
                %1366 = vst [vmem:[%s236 + $0x11a0] sm:$0xff] %v1365
                %v1367 = vld [vmem:[%s235 + $0x2348] sm:$0xff]
                %1368 = vst [vmem:[%s236 + $0x11a8] sm:$0xff] %v1367
                %v1369 = vld [vmem:[%s235 + $0x2350] sm:$0xff]
                %1370 = vst [vmem:[%s236 + $0x11b0] sm:$0xff] %v1369
                %v1371 = vld [vmem:[%s235 + $0x2358] sm:$0xff]
                %1372 = vst [vmem:[%s236 + $0x11b8] sm:$0xff] %v1371
                %v1373 = vld [vmem:[%s235 + $0x2380] sm:$0xff]
                %1374 = vst [vmem:[%s236 + $0x11c0] sm:$0xff] %v1373
                %v1375 = vld [vmem:[%s235 + $0x2388] sm:$0xff]
                %1376 = vst [vmem:[%s236 + $0x11c8] sm:$0xff] %v1375
                %v1377 = vld [vmem:[%s235 + $0x2390] sm:$0xff]
                %1378 = vst [vmem:[%s236 + $0x11d0] sm:$0xff] %v1377
                %v1379 = vld [vmem:[%s235 + $0x2398] sm:$0xff]
                %1380 = vst [vmem:[%s236 + $0x11d8] sm:$0xff] %v1379
                %v1381 = vld [vmem:[%s235 + $0x23c0] sm:$0xff]
                %1382 = vst [vmem:[%s236 + $0x11e0] sm:$0xff] %v1381
                %v1383 = vld [vmem:[%s235 + $0x23c8] sm:$0xff]
                %1384 = vst [vmem:[%s236 + $0x11e8] sm:$0xff] %v1383
                %v1385 = vld [vmem:[%s235 + $0x23d0] sm:$0xff]
                %1386 = vst [vmem:[%s236 + $0x11f0] sm:$0xff] %v1385
                %v1387 = vld [vmem:[%s235 + $0x23d8] sm:$0xff]
                %1388 = vst [vmem:[%s236 + $0x11f8] sm:$0xff] %v1387
                %v1389 = vld [vmem:[%s235 + $0x2400] sm:$0xff]
                %1390 = vst [vmem:[%s236 + $0x1200] sm:$0xff] %v1389
                %v1391 = vld [vmem:[%s235 + $0x2408] sm:$0xff]
                %1392 = vst [vmem:[%s236 + $0x1208] sm:$0xff] %v1391
                %v1393 = vld [vmem:[%s235 + $0x2410] sm:$0xff]
                %1394 = vst [vmem:[%s236 + $0x1210] sm:$0xff] %v1393
                %v1395 = vld [vmem:[%s235 + $0x2418] sm:$0xff]
                %1396 = vst [vmem:[%s236 + $0x1218] sm:$0xff] %v1395
                %v1397 = vld [vmem:[%s235 + $0x2440] sm:$0xff]
                %1398 = vst [vmem:[%s236 + $0x1220] sm:$0xff] %v1397
                %v1399 = vld [vmem:[%s235 + $0x2448] sm:$0xff]
                %1400 = vst [vmem:[%s236 + $0x1228] sm:$0xff] %v1399
                %v1401 = vld [vmem:[%s235 + $0x2450] sm:$0xff]
                %1402 = vst [vmem:[%s236 + $0x1230] sm:$0xff] %v1401
                %v1403 = vld [vmem:[%s235 + $0x2458] sm:$0xff]
                %1404 = vst [vmem:[%s236 + $0x1238] sm:$0xff] %v1403
                %v1405 = vld [vmem:[%s235 + $0x2480] sm:$0xff]
                %1406 = vst [vmem:[%s236 + $0x1240] sm:$0xff] %v1405
                %v1407 = vld [vmem:[%s235 + $0x2488] sm:$0xff]
                %1408 = vst [vmem:[%s236 + $0x1248] sm:$0xff] %v1407
                %v1409 = vld [vmem:[%s235 + $0x2490] sm:$0xff]
                %1410 = vst [vmem:[%s236 + $0x1250] sm:$0xff] %v1409
                %v1411 = vld [vmem:[%s235 + $0x2498] sm:$0xff]
                %1412 = vst [vmem:[%s236 + $0x1258] sm:$0xff] %v1411
                %v1413 = vld [vmem:[%s235 + $0x24c0] sm:$0xff]
                %1414 = vst [vmem:[%s236 + $0x1260] sm:$0xff] %v1413
                %v1415 = vld [vmem:[%s235 + $0x24c8] sm:$0xff]
                %1416 = vst [vmem:[%s236 + $0x1268] sm:$0xff] %v1415
                %v1417 = vld [vmem:[%s235 + $0x24d0] sm:$0xff]
                %1418 = vst [vmem:[%s236 + $0x1270] sm:$0xff] %v1417
                %v1419 = vld [vmem:[%s235 + $0x24d8] sm:$0xff]
                %1420 = vst [vmem:[%s236 + $0x1278] sm:$0xff] %v1419
                %v1421 = vld [vmem:[%s235 + $0x2500] sm:$0xff]
                %1422 = vst [vmem:[%s236 + $0x1280] sm:$0xff] %v1421
                %v1423 = vld [vmem:[%s235 + $0x2508] sm:$0xff]
                %1424 = vst [vmem:[%s236 + $0x1288] sm:$0xff] %v1423
                %v1425 = vld [vmem:[%s235 + $0x2510] sm:$0xff]
                %1426 = vst [vmem:[%s236 + $0x1290] sm:$0xff] %v1425
                %v1427 = vld [vmem:[%s235 + $0x2518] sm:$0xff]
                %1428 = vst [vmem:[%s236 + $0x1298] sm:$0xff] %v1427
                %v1429 = vld [vmem:[%s235 + $0x2540] sm:$0xff]
                %1430 = vst [vmem:[%s236 + $0x12a0] sm:$0xff] %v1429
                %v1431 = vld [vmem:[%s235 + $0x2548] sm:$0xff]
                %1432 = vst [vmem:[%s236 + $0x12a8] sm:$0xff] %v1431
                %v1433 = vld [vmem:[%s235 + $0x2550] sm:$0xff]
                %1434 = vst [vmem:[%s236 + $0x12b0] sm:$0xff] %v1433
                %v1435 = vld [vmem:[%s235 + $0x2558] sm:$0xff]
                %1436 = vst [vmem:[%s236 + $0x12b8] sm:$0xff] %v1435
                %v1437 = vld [vmem:[%s235 + $0x2580] sm:$0xff]
                %1438 = vst [vmem:[%s236 + $0x12c0] sm:$0xff] %v1437
                %v1439 = vld [vmem:[%s235 + $0x2588] sm:$0xff]
                %1440 = vst [vmem:[%s236 + $0x12c8] sm:$0xff] %v1439
                %v1441 = vld [vmem:[%s235 + $0x2590] sm:$0xff]
                %1442 = vst [vmem:[%s236 + $0x12d0] sm:$0xff] %v1441
                %v1443 = vld [vmem:[%s235 + $0x2598] sm:$0xff]
                %1444 = vst [vmem:[%s236 + $0x12d8] sm:$0xff] %v1443
                %v1445 = vld [vmem:[%s235 + $0x25c0] sm:$0xff]
                %1446 = vst [vmem:[%s236 + $0x12e0] sm:$0xff] %v1445
                %v1447 = vld [vmem:[%s235 + $0x25c8] sm:$0xff]
                %1448 = vst [vmem:[%s236 + $0x12e8] sm:$0xff] %v1447
                %v1449 = vld [vmem:[%s235 + $0x25d0] sm:$0xff]
                %1450 = vst [vmem:[%s236 + $0x12f0] sm:$0xff] %v1449
                %v1451 = vld [vmem:[%s235 + $0x25d8] sm:$0xff]
                %1452 = vst [vmem:[%s236 + $0x12f8] sm:$0xff] %v1451
                %v1453 = vld [vmem:[%s235 + $0x2600] sm:$0xff]
                %1454 = vst [vmem:[%s236 + $0x1300] sm:$0xff] %v1453
                %v1455 = vld [vmem:[%s235 + $0x2608] sm:$0xff]
                %1456 = vst [vmem:[%s236 + $0x1308] sm:$0xff] %v1455
                %v1457 = vld [vmem:[%s235 + $0x2610] sm:$0xff]
                %1458 = vst [vmem:[%s236 + $0x1310] sm:$0xff] %v1457
                %v1459 = vld [vmem:[%s235 + $0x2618] sm:$0xff]
                %1460 = vst [vmem:[%s236 + $0x1318] sm:$0xff] %v1459
                %v1461 = vld [vmem:[%s235 + $0x2640] sm:$0xff]
                %1462 = vst [vmem:[%s236 + $0x1320] sm:$0xff] %v1461
                %v1463 = vld [vmem:[%s235 + $0x2648] sm:$0xff]
                %1464 = vst [vmem:[%s236 + $0x1328] sm:$0xff] %v1463
                %v1465 = vld [vmem:[%s235 + $0x2650] sm:$0xff]
                %1466 = vst [vmem:[%s236 + $0x1330] sm:$0xff] %v1465
                %v1467 = vld [vmem:[%s235 + $0x2658] sm:$0xff]
                %1468 = vst [vmem:[%s236 + $0x1338] sm:$0xff] %v1467
                %v1469 = vld [vmem:[%s235 + $0x2680] sm:$0xff]
                %1470 = vst [vmem:[%s236 + $0x1340] sm:$0xff] %v1469
                %v1471 = vld [vmem:[%s235 + $0x2688] sm:$0xff]
                %1472 = vst [vmem:[%s236 + $0x1348] sm:$0xff] %v1471
                %v1473 = vld [vmem:[%s235 + $0x2690] sm:$0xff]
                %1474 = vst [vmem:[%s236 + $0x1350] sm:$0xff] %v1473
                %v1475 = vld [vmem:[%s235 + $0x2698] sm:$0xff]
                %1476 = vst [vmem:[%s236 + $0x1358] sm:$0xff] %v1475
                %v1477 = vld [vmem:[%s235 + $0x26c0] sm:$0xff]
                %1478 = vst [vmem:[%s236 + $0x1360] sm:$0xff] %v1477
                %v1479 = vld [vmem:[%s235 + $0x26c8] sm:$0xff]
                %1480 = vst [vmem:[%s236 + $0x1368] sm:$0xff] %v1479
                %v1481 = vld [vmem:[%s235 + $0x26d0] sm:$0xff]
                %1482 = vst [vmem:[%s236 + $0x1370] sm:$0xff] %v1481
                %v1483 = vld [vmem:[%s235 + $0x26d8] sm:$0xff]
                %1484 = vst [vmem:[%s236 + $0x1378] sm:$0xff] %v1483
                %v1485 = vld [vmem:[%s235 + $0x2700] sm:$0xff]
                %1486 = vst [vmem:[%s236 + $0x1380] sm:$0xff] %v1485
                %v1487 = vld [vmem:[%s235 + $0x2708] sm:$0xff]
                %1488 = vst [vmem:[%s236 + $0x1388] sm:$0xff] %v1487
                %v1489 = vld [vmem:[%s235 + $0x2710] sm:$0xff]
                %1490 = vst [vmem:[%s236 + $0x1390] sm:$0xff] %v1489
                %v1491 = vld [vmem:[%s235 + $0x2718] sm:$0xff]
                %1492 = vst [vmem:[%s236 + $0x1398] sm:$0xff] %v1491
                %v1493 = vld [vmem:[%s235 + $0x2740] sm:$0xff]
                %1494 = vst [vmem:[%s236 + $0x13a0] sm:$0xff] %v1493
                %v1495 = vld [vmem:[%s235 + $0x2748] sm:$0xff]
                %1496 = vst [vmem:[%s236 + $0x13a8] sm:$0xff] %v1495
                %v1497 = vld [vmem:[%s235 + $0x2750] sm:$0xff]
                %1498 = vst [vmem:[%s236 + $0x13b0] sm:$0xff] %v1497
                %v1499 = vld [vmem:[%s235 + $0x2758] sm:$0xff]
                %1500 = vst [vmem:[%s236 + $0x13b8] sm:$0xff] %v1499
                %v1501 = vld [vmem:[%s235 + $0x2780] sm:$0xff]
                %1502 = vst [vmem:[%s236 + $0x13c0] sm:$0xff] %v1501
                %v1503 = vld [vmem:[%s235 + $0x2788] sm:$0xff]
                %1504 = vst [vmem:[%s236 + $0x13c8] sm:$0xff] %v1503
                %v1505 = vld [vmem:[%s235 + $0x2790] sm:$0xff]
                %1506 = vst [vmem:[%s236 + $0x13d0] sm:$0xff] %v1505
                %v1507 = vld [vmem:[%s235 + $0x2798] sm:$0xff]
                %1508 = vst [vmem:[%s236 + $0x13d8] sm:$0xff] %v1507
                %v1509 = vld [vmem:[%s235 + $0x27c0] sm:$0xff]
                %1510 = vst [vmem:[%s236 + $0x13e0] sm:$0xff] %v1509
                %v1511 = vld [vmem:[%s235 + $0x27c8] sm:$0xff]
                %1512 = vst [vmem:[%s236 + $0x13e8] sm:$0xff] %v1511
                %v1513 = vld [vmem:[%s235 + $0x27d0] sm:$0xff]
                %1514 = vst [vmem:[%s236 + $0x13f0] sm:$0xff] %v1513
                %v1515 = vld [vmem:[%s235 + $0x27d8] sm:$0xff]
                %1516 = vst [vmem:[%s236 + $0x13f8] sm:$0xff] %v1515
                %v1517 = vld [vmem:[%s235 + $0x2800] sm:$0xff]
                %1518 = vst [vmem:[%s236 + $0x1400] sm:$0xff] %v1517
                %v1519 = vld [vmem:[%s235 + $0x2808] sm:$0xff]
                %1520 = vst [vmem:[%s236 + $0x1408] sm:$0xff] %v1519
                %v1521 = vld [vmem:[%s235 + $0x2810] sm:$0xff]
                %1522 = vst [vmem:[%s236 + $0x1410] sm:$0xff] %v1521
                %v1523 = vld [vmem:[%s235 + $0x2818] sm:$0xff]
                %1524 = vst [vmem:[%s236 + $0x1418] sm:$0xff] %v1523
                %v1525 = vld [vmem:[%s235 + $0x2840] sm:$0xff]
                %1526 = vst [vmem:[%s236 + $0x1420] sm:$0xff] %v1525
                %v1527 = vld [vmem:[%s235 + $0x2848] sm:$0xff]
                %1528 = vst [vmem:[%s236 + $0x1428] sm:$0xff] %v1527
                %v1529 = vld [vmem:[%s235 + $0x2850] sm:$0xff]
                %1530 = vst [vmem:[%s236 + $0x1430] sm:$0xff] %v1529
                %v1531 = vld [vmem:[%s235 + $0x2858] sm:$0xff]
                %1532 = vst [vmem:[%s236 + $0x1438] sm:$0xff] %v1531
                %v1533 = vld [vmem:[%s235 + $0x2880] sm:$0xff]
                %1534 = vst [vmem:[%s236 + $0x1440] sm:$0xff] %v1533
                %v1535 = vld [vmem:[%s235 + $0x2888] sm:$0xff]
                %1536 = vst [vmem:[%s236 + $0x1448] sm:$0xff] %v1535
                %v1537 = vld [vmem:[%s235 + $0x2890] sm:$0xff]
                %1538 = vst [vmem:[%s236 + $0x1450] sm:$0xff] %v1537
                %v1539 = vld [vmem:[%s235 + $0x2898] sm:$0xff]
                %1540 = vst [vmem:[%s236 + $0x1458] sm:$0xff] %v1539
                %v1541 = vld [vmem:[%s235 + $0x28c0] sm:$0xff]
                %1542 = vst [vmem:[%s236 + $0x1460] sm:$0xff] %v1541
                %v1543 = vld [vmem:[%s235 + $0x28c8] sm:$0xff]
                %1544 = vst [vmem:[%s236 + $0x1468] sm:$0xff] %v1543
                %v1545 = vld [vmem:[%s235 + $0x28d0] sm:$0xff]
                %1546 = vst [vmem:[%s236 + $0x1470] sm:$0xff] %v1545
                %v1547 = vld [vmem:[%s235 + $0x28d8] sm:$0xff]
                %1548 = vst [vmem:[%s236 + $0x1478] sm:$0xff] %v1547
                %v1549 = vld [vmem:[%s235 + $0x2900] sm:$0xff]
                %1550 = vst [vmem:[%s236 + $0x1480] sm:$0xff] %v1549
                %v1551 = vld [vmem:[%s235 + $0x2908] sm:$0xff]
                %1552 = vst [vmem:[%s236 + $0x1488] sm:$0xff] %v1551
                %v1553 = vld [vmem:[%s235 + $0x2910] sm:$0xff]
                %1554 = vst [vmem:[%s236 + $0x1490] sm:$0xff] %v1553
                %v1555 = vld [vmem:[%s235 + $0x2918] sm:$0xff]
                %1556 = vst [vmem:[%s236 + $0x1498] sm:$0xff] %v1555
                %v1557 = vld [vmem:[%s235 + $0x2940] sm:$0xff]
                %1558 = vst [vmem:[%s236 + $0x14a0] sm:$0xff] %v1557
                %v1559 = vld [vmem:[%s235 + $0x2948] sm:$0xff]
                %1560 = vst [vmem:[%s236 + $0x14a8] sm:$0xff] %v1559
                %v1561 = vld [vmem:[%s235 + $0x2950] sm:$0xff]
                %1562 = vst [vmem:[%s236 + $0x14b0] sm:$0xff] %v1561
                %v1563 = vld [vmem:[%s235 + $0x2958] sm:$0xff]
                %1564 = vst [vmem:[%s236 + $0x14b8] sm:$0xff] %v1563
                %v1565 = vld [vmem:[%s235 + $0x2980] sm:$0xff]
                %1566 = vst [vmem:[%s236 + $0x14c0] sm:$0xff] %v1565
                %v1567 = vld [vmem:[%s235 + $0x2988] sm:$0xff]
                %1568 = vst [vmem:[%s236 + $0x14c8] sm:$0xff] %v1567
                %v1569 = vld [vmem:[%s235 + $0x2990] sm:$0xff]
                %1570 = vst [vmem:[%s236 + $0x14d0] sm:$0xff] %v1569
                %v1571 = vld [vmem:[%s235 + $0x2998] sm:$0xff]
                %1572 = vst [vmem:[%s236 + $0x14d8] sm:$0xff] %v1571
                %v1573 = vld [vmem:[%s235 + $0x29c0] sm:$0xff]
                %1574 = vst [vmem:[%s236 + $0x14e0] sm:$0xff] %v1573
                %v1575 = vld [vmem:[%s235 + $0x29c8] sm:$0xff]
                %1576 = vst [vmem:[%s236 + $0x14e8] sm:$0xff] %v1575
                %v1577 = vld [vmem:[%s235 + $0x29d0] sm:$0xff]
                %1578 = vst [vmem:[%s236 + $0x14f0] sm:$0xff] %v1577
                %v1579 = vld [vmem:[%s235 + $0x29d8] sm:$0xff]
                %1580 = vst [vmem:[%s236 + $0x14f8] sm:$0xff] %v1579
                %v1581 = vld [vmem:[%s235 + $0x2a00] sm:$0xff]
                %1582 = vst [vmem:[%s236 + $0x1500] sm:$0xff] %v1581
                %v1583 = vld [vmem:[%s235 + $0x2a08] sm:$0xff]
                %1584 = vst [vmem:[%s236 + $0x1508] sm:$0xff] %v1583
                %v1585 = vld [vmem:[%s235 + $0x2a10] sm:$0xff]
                %1586 = vst [vmem:[%s236 + $0x1510] sm:$0xff] %v1585
                %v1587 = vld [vmem:[%s235 + $0x2a18] sm:$0xff]
                %1588 = vst [vmem:[%s236 + $0x1518] sm:$0xff] %v1587
                %v1589 = vld [vmem:[%s235 + $0x2a40] sm:$0xff]
                %1590 = vst [vmem:[%s236 + $0x1520] sm:$0xff] %v1589
                %v1591 = vld [vmem:[%s235 + $0x2a48] sm:$0xff]
                %1592 = vst [vmem:[%s236 + $0x1528] sm:$0xff] %v1591
                %v1593 = vld [vmem:[%s235 + $0x2a50] sm:$0xff]
                %1594 = vst [vmem:[%s236 + $0x1530] sm:$0xff] %v1593
                %v1595 = vld [vmem:[%s235 + $0x2a58] sm:$0xff]
                %1596 = vst [vmem:[%s236 + $0x1538] sm:$0xff] %v1595
                %v1597 = vld [vmem:[%s235 + $0x2a80] sm:$0xff]
                %1598 = vst [vmem:[%s236 + $0x1540] sm:$0xff] %v1597
                %v1599 = vld [vmem:[%s235 + $0x2a88] sm:$0xff]
                %1600 = vst [vmem:[%s236 + $0x1548] sm:$0xff] %v1599
                %v1601 = vld [vmem:[%s235 + $0x2a90] sm:$0xff]
                %1602 = vst [vmem:[%s236 + $0x1550] sm:$0xff] %v1601
                %v1603 = vld [vmem:[%s235 + $0x2a98] sm:$0xff]
                %1604 = vst [vmem:[%s236 + $0x1558] sm:$0xff] %v1603
                %v1605 = vld [vmem:[%s235 + $0x2ac0] sm:$0xff]
                %1606 = vst [vmem:[%s236 + $0x1560] sm:$0xff] %v1605
                %v1607 = vld [vmem:[%s235 + $0x2ac8] sm:$0xff]
                %1608 = vst [vmem:[%s236 + $0x1568] sm:$0xff] %v1607
                %v1609 = vld [vmem:[%s235 + $0x2ad0] sm:$0xff]
                %1610 = vst [vmem:[%s236 + $0x1570] sm:$0xff] %v1609
                %v1611 = vld [vmem:[%s235 + $0x2ad8] sm:$0xff]
                %1612 = vst [vmem:[%s236 + $0x1578] sm:$0xff] %v1611
                %v1613 = vld [vmem:[%s235 + $0x2b00] sm:$0xff]
                %1614 = vst [vmem:[%s236 + $0x1580] sm:$0xff] %v1613
                %v1615 = vld [vmem:[%s235 + $0x2b08] sm:$0xff]
                %1616 = vst [vmem:[%s236 + $0x1588] sm:$0xff] %v1615
                %v1617 = vld [vmem:[%s235 + $0x2b10] sm:$0xff]
                %1618 = vst [vmem:[%s236 + $0x1590] sm:$0xff] %v1617
                %v1619 = vld [vmem:[%s235 + $0x2b18] sm:$0xff]
                %1620 = vst [vmem:[%s236 + $0x1598] sm:$0xff] %v1619
                %v1621 = vld [vmem:[%s235 + $0x2b40] sm:$0xff]
                %1622 = vst [vmem:[%s236 + $0x15a0] sm:$0xff] %v1621
                %v1623 = vld [vmem:[%s235 + $0x2b48] sm:$0xff]
                %1624 = vst [vmem:[%s236 + $0x15a8] sm:$0xff] %v1623
                %v1625 = vld [vmem:[%s235 + $0x2b50] sm:$0xff]
                %1626 = vst [vmem:[%s236 + $0x15b0] sm:$0xff] %v1625
                %v1627 = vld [vmem:[%s235 + $0x2b58] sm:$0xff]
                %1628 = vst [vmem:[%s236 + $0x15b8] sm:$0xff] %v1627
                %v1629 = vld [vmem:[%s235 + $0x2b80] sm:$0xff]
                %1630 = vst [vmem:[%s236 + $0x15c0] sm:$0xff] %v1629
                %v1631 = vld [vmem:[%s235 + $0x2b88] sm:$0xff]
                %1632 = vst [vmem:[%s236 + $0x15c8] sm:$0xff] %v1631
                %v1633 = vld [vmem:[%s235 + $0x2b90] sm:$0xff]
                %1634 = vst [vmem:[%s236 + $0x15d0] sm:$0xff] %v1633
                %v1635 = vld [vmem:[%s235 + $0x2b98] sm:$0xff]
                %1636 = vst [vmem:[%s236 + $0x15d8] sm:$0xff] %v1635
                %v1637 = vld [vmem:[%s235 + $0x2bc0] sm:$0xff]
                %1638 = vst [vmem:[%s236 + $0x15e0] sm:$0xff] %v1637
                %v1639 = vld [vmem:[%s235 + $0x2bc8] sm:$0xff]
                %1640 = vst [vmem:[%s236 + $0x15e8] sm:$0xff] %v1639
                %v1641 = vld [vmem:[%s235 + $0x2bd0] sm:$0xff]
                %1642 = vst [vmem:[%s236 + $0x15f0] sm:$0xff] %v1641
                %v1643 = vld [vmem:[%s235 + $0x2bd8] sm:$0xff]
                %1644 = vst [vmem:[%s236 + $0x15f8] sm:$0xff] %v1643
                %v1645 = vld [vmem:[%s235 + $0x2c00] sm:$0xff]
                %1646 = vst [vmem:[%s236 + $0x1600] sm:$0xff] %v1645
                %v1647 = vld [vmem:[%s235 + $0x2c08] sm:$0xff]
                %1648 = vst [vmem:[%s236 + $0x1608] sm:$0xff] %v1647
                %v1649 = vld [vmem:[%s235 + $0x2c10] sm:$0xff]
                %1650 = vst [vmem:[%s236 + $0x1610] sm:$0xff] %v1649
                %v1651 = vld [vmem:[%s235 + $0x2c18] sm:$0xff]
                %1652 = vst [vmem:[%s236 + $0x1618] sm:$0xff] %v1651
                %v1653 = vld [vmem:[%s235 + $0x2c40] sm:$0xff]
                %1654 = vst [vmem:[%s236 + $0x1620] sm:$0xff] %v1653
                %v1655 = vld [vmem:[%s235 + $0x2c48] sm:$0xff]
                %1656 = vst [vmem:[%s236 + $0x1628] sm:$0xff] %v1655
                %v1657 = vld [vmem:[%s235 + $0x2c50] sm:$0xff]
                %1658 = vst [vmem:[%s236 + $0x1630] sm:$0xff] %v1657
                %v1659 = vld [vmem:[%s235 + $0x2c58] sm:$0xff]
                %1660 = vst [vmem:[%s236 + $0x1638] sm:$0xff] %v1659
                %v1661 = vld [vmem:[%s235 + $0x2c80] sm:$0xff]
                %1662 = vst [vmem:[%s236 + $0x1640] sm:$0xff] %v1661
                %v1663 = vld [vmem:[%s235 + $0x2c88] sm:$0xff]
                %1664 = vst [vmem:[%s236 + $0x1648] sm:$0xff] %v1663
                %v1665 = vld [vmem:[%s235 + $0x2c90] sm:$0xff]
                %1666 = vst [vmem:[%s236 + $0x1650] sm:$0xff] %v1665
                %v1667 = vld [vmem:[%s235 + $0x2c98] sm:$0xff]
                %1668 = vst [vmem:[%s236 + $0x1658] sm:$0xff] %v1667
                %v1669 = vld [vmem:[%s235 + $0x2cc0] sm:$0xff]
                %1670 = vst [vmem:[%s236 + $0x1660] sm:$0xff] %v1669
                %v1671 = vld [vmem:[%s235 + $0x2cc8] sm:$0xff]
                %1672 = vst [vmem:[%s236 + $0x1668] sm:$0xff] %v1671
                %v1673 = vld [vmem:[%s235 + $0x2cd0] sm:$0xff]
                %1674 = vst [vmem:[%s236 + $0x1670] sm:$0xff] %v1673
                %v1675 = vld [vmem:[%s235 + $0x2cd8] sm:$0xff]
                %1676 = vst [vmem:[%s236 + $0x1678] sm:$0xff] %v1675
                %v1677 = vld [vmem:[%s235 + $0x2d00] sm:$0xff]
                %1678 = vst [vmem:[%s236 + $0x1680] sm:$0xff] %v1677
                %v1679 = vld [vmem:[%s235 + $0x2d08] sm:$0xff]
                %1680 = vst [vmem:[%s236 + $0x1688] sm:$0xff] %v1679
                %v1681 = vld [vmem:[%s235 + $0x2d10] sm:$0xff]
                %1682 = vst [vmem:[%s236 + $0x1690] sm:$0xff] %v1681
                %v1683 = vld [vmem:[%s235 + $0x2d18] sm:$0xff]
                %1684 = vst [vmem:[%s236 + $0x1698] sm:$0xff] %v1683
                %v1685 = vld [vmem:[%s235 + $0x2d40] sm:$0xff]
                %1686 = vst [vmem:[%s236 + $0x16a0] sm:$0xff] %v1685
                %v1687 = vld [vmem:[%s235 + $0x2d48] sm:$0xff]
                %1688 = vst [vmem:[%s236 + $0x16a8] sm:$0xff] %v1687
                %v1689 = vld [vmem:[%s235 + $0x2d50] sm:$0xff]
                %1690 = vst [vmem:[%s236 + $0x16b0] sm:$0xff] %v1689
                %v1691 = vld [vmem:[%s235 + $0x2d58] sm:$0xff]
                %1692 = vst [vmem:[%s236 + $0x16b8] sm:$0xff] %v1691
                %v1693 = vld [vmem:[%s235 + $0x2d80] sm:$0xff]
                %1694 = vst [vmem:[%s236 + $0x16c0] sm:$0xff] %v1693
                %v1695 = vld [vmem:[%s235 + $0x2d88] sm:$0xff]
                %1696 = vst [vmem:[%s236 + $0x16c8] sm:$0xff] %v1695
                %v1697 = vld [vmem:[%s235 + $0x2d90] sm:$0xff]
                %1698 = vst [vmem:[%s236 + $0x16d0] sm:$0xff] %v1697
                %v1699 = vld [vmem:[%s235 + $0x2d98] sm:$0xff]
                %1700 = vst [vmem:[%s236 + $0x16d8] sm:$0xff] %v1699
                %v1701 = vld [vmem:[%s235 + $0x2dc0] sm:$0xff]
                %1702 = vst [vmem:[%s236 + $0x16e0] sm:$0xff] %v1701
                %v1703 = vld [vmem:[%s235 + $0x2dc8] sm:$0xff]
                %1704 = vst [vmem:[%s236 + $0x16e8] sm:$0xff] %v1703
                %v1705 = vld [vmem:[%s235 + $0x2dd0] sm:$0xff]
                %1706 = vst [vmem:[%s236 + $0x16f0] sm:$0xff] %v1705
                %v1707 = vld [vmem:[%s235 + $0x2dd8] sm:$0xff]
                %1708 = vst [vmem:[%s236 + $0x16f8] sm:$0xff] %v1707
                %v1709 = vld [vmem:[%s235 + $0x2e00] sm:$0xff]
                %1710 = vst [vmem:[%s236 + $0x1700] sm:$0xff] %v1709
                %v1711 = vld [vmem:[%s235 + $0x2e08] sm:$0xff]
                %1712 = vst [vmem:[%s236 + $0x1708] sm:$0xff] %v1711
                %v1713 = vld [vmem:[%s235 + $0x2e10] sm:$0xff]
                %1714 = vst [vmem:[%s236 + $0x1710] sm:$0xff] %v1713
                %v1715 = vld [vmem:[%s235 + $0x2e18] sm:$0xff]
                %1716 = vst [vmem:[%s236 + $0x1718] sm:$0xff] %v1715
                %v1717 = vld [vmem:[%s235 + $0x2e40] sm:$0xff]
                %1718 = vst [vmem:[%s236 + $0x1720] sm:$0xff] %v1717
                %v1719 = vld [vmem:[%s235 + $0x2e48] sm:$0xff]
                %1720 = vst [vmem:[%s236 + $0x1728] sm:$0xff] %v1719
                %v1721 = vld [vmem:[%s235 + $0x2e50] sm:$0xff]
                %1722 = vst [vmem:[%s236 + $0x1730] sm:$0xff] %v1721
                %v1723 = vld [vmem:[%s235 + $0x2e58] sm:$0xff]
                %1724 = vst [vmem:[%s236 + $0x1738] sm:$0xff] %v1723
                %v1725 = vld [vmem:[%s235 + $0x2e80] sm:$0xff]
                %1726 = vst [vmem:[%s236 + $0x1740] sm:$0xff] %v1725
                %v1727 = vld [vmem:[%s235 + $0x2e88] sm:$0xff]
                %1728 = vst [vmem:[%s236 + $0x1748] sm:$0xff] %v1727
                %v1729 = vld [vmem:[%s235 + $0x2e90] sm:$0xff]
                %1730 = vst [vmem:[%s236 + $0x1750] sm:$0xff] %v1729
                %v1731 = vld [vmem:[%s235 + $0x2e98] sm:$0xff]
                %1732 = vst [vmem:[%s236 + $0x1758] sm:$0xff] %v1731
                %v1733 = vld [vmem:[%s235 + $0x2ec0] sm:$0xff]
                %1734 = vst [vmem:[%s236 + $0x1760] sm:$0xff] %v1733
                %v1735 = vld [vmem:[%s235 + $0x2ec8] sm:$0xff]
                %1736 = vst [vmem:[%s236 + $0x1768] sm:$0xff] %v1735
                %v1737 = vld [vmem:[%s235 + $0x2ed0] sm:$0xff]
                %1738 = vst [vmem:[%s236 + $0x1770] sm:$0xff] %v1737
                %v1739 = vld [vmem:[%s235 + $0x2ed8] sm:$0xff]
                %1740 = vst [vmem:[%s236 + $0x1778] sm:$0xff] %v1739
                %v1741 = vld [vmem:[%s235 + $0x2f00] sm:$0xff]
                %1742 = vst [vmem:[%s236 + $0x1780] sm:$0xff] %v1741
                %v1743 = vld [vmem:[%s235 + $0x2f08] sm:$0xff]
                %1744 = vst [vmem:[%s236 + $0x1788] sm:$0xff] %v1743
                %v1745 = vld [vmem:[%s235 + $0x2f10] sm:$0xff]
                %1746 = vst [vmem:[%s236 + $0x1790] sm:$0xff] %v1745
                %v1747 = vld [vmem:[%s235 + $0x2f18] sm:$0xff]
                %1748 = vst [vmem:[%s236 + $0x1798] sm:$0xff] %v1747
                %v1749 = vld [vmem:[%s235 + $0x2f40] sm:$0xff]
                %1750 = vst [vmem:[%s236 + $0x17a0] sm:$0xff] %v1749
                %v1751 = vld [vmem:[%s235 + $0x2f48] sm:$0xff]
                %1752 = vst [vmem:[%s236 + $0x17a8] sm:$0xff] %v1751
                %v1753 = vld [vmem:[%s235 + $0x2f50] sm:$0xff]
                %1754 = vst [vmem:[%s236 + $0x17b0] sm:$0xff] %v1753
                %v1755 = vld [vmem:[%s235 + $0x2f58] sm:$0xff]
                %1756 = vst [vmem:[%s236 + $0x17b8] sm:$0xff] %v1755
                %v1757 = vld [vmem:[%s235 + $0x2f80] sm:$0xff]
                %1758 = vst [vmem:[%s236 + $0x17c0] sm:$0xff] %v1757
                %v1759 = vld [vmem:[%s235 + $0x2f88] sm:$0xff]
                %1760 = vst [vmem:[%s236 + $0x17c8] sm:$0xff] %v1759
                %v1761 = vld [vmem:[%s235 + $0x2f90] sm:$0xff]
                %1762 = vst [vmem:[%s236 + $0x17d0] sm:$0xff] %v1761
                %v1763 = vld [vmem:[%s235 + $0x2f98] sm:$0xff]
                %1764 = vst [vmem:[%s236 + $0x17d8] sm:$0xff] %v1763
                %v1765 = vld [vmem:[%s235 + $0x2fc0] sm:$0xff]
                %1766 = vst [vmem:[%s236 + $0x17e0] sm:$0xff] %v1765
                %v1767 = vld [vmem:[%s235 + $0x2fc8] sm:$0xff]
                %1768 = vst [vmem:[%s236 + $0x17e8] sm:$0xff] %v1767
                %v1769 = vld [vmem:[%s235 + $0x2fd0] sm:$0xff]
                %1770 = vst [vmem:[%s236 + $0x17f0] sm:$0xff] %v1769
                %v1771 = vld [vmem:[%s235 + $0x2fd8] sm:$0xff]
                %1772 = vst [vmem:[%s236 + $0x17f8] sm:$0xff] %v1771
                %v1773 = vld [vmem:[%s235 + $0x3000] sm:$0xff]
                %1774 = vst [vmem:[%s236 + $0x1800] sm:$0xff] %v1773
                %v1775 = vld [vmem:[%s235 + $0x3008] sm:$0xff]
                %1776 = vst [vmem:[%s236 + $0x1808] sm:$0xff] %v1775
                %v1777 = vld [vmem:[%s235 + $0x3010] sm:$0xff]
                %1778 = vst [vmem:[%s236 + $0x1810] sm:$0xff] %v1777
                %v1779 = vld [vmem:[%s235 + $0x3018] sm:$0xff]
                %1780 = vst [vmem:[%s236 + $0x1818] sm:$0xff] %v1779
                %v1781 = vld [vmem:[%s235 + $0x3040] sm:$0xff]
                %1782 = vst [vmem:[%s236 + $0x1820] sm:$0xff] %v1781
                %v1783 = vld [vmem:[%s235 + $0x3048] sm:$0xff]
                %1784 = vst [vmem:[%s236 + $0x1828] sm:$0xff] %v1783
                %v1785 = vld [vmem:[%s235 + $0x3050] sm:$0xff]
                %1786 = vst [vmem:[%s236 + $0x1830] sm:$0xff] %v1785
                %v1787 = vld [vmem:[%s235 + $0x3058] sm:$0xff]
                %1788 = vst [vmem:[%s236 + $0x1838] sm:$0xff] %v1787
                %v1789 = vld [vmem:[%s235 + $0x3080] sm:$0xff]
                %1790 = vst [vmem:[%s236 + $0x1840] sm:$0xff] %v1789
                %v1791 = vld [vmem:[%s235 + $0x3088] sm:$0xff]
                %1792 = vst [vmem:[%s236 + $0x1848] sm:$0xff] %v1791
                %v1793 = vld [vmem:[%s235 + $0x3090] sm:$0xff]
                %1794 = vst [vmem:[%s236 + $0x1850] sm:$0xff] %v1793
                %v1795 = vld [vmem:[%s235 + $0x3098] sm:$0xff]
                %1796 = vst [vmem:[%s236 + $0x1858] sm:$0xff] %v1795
                %v1797 = vld [vmem:[%s235 + $0x30c0] sm:$0xff]
                %1798 = vst [vmem:[%s236 + $0x1860] sm:$0xff] %v1797
                %v1799 = vld [vmem:[%s235 + $0x30c8] sm:$0xff]
                %1800 = vst [vmem:[%s236 + $0x1868] sm:$0xff] %v1799
                %v1801 = vld [vmem:[%s235 + $0x30d0] sm:$0xff]
                %1802 = vst [vmem:[%s236 + $0x1870] sm:$0xff] %v1801
                %v1803 = vld [vmem:[%s235 + $0x30d8] sm:$0xff]
                %1804 = vst [vmem:[%s236 + $0x1878] sm:$0xff] %v1803
                %v1805 = vld [vmem:[%s235 + $0x3100] sm:$0xff]
                %1806 = vst [vmem:[%s236 + $0x1880] sm:$0xff] %v1805
                %v1807 = vld [vmem:[%s235 + $0x3108] sm:$0xff]
                %1808 = vst [vmem:[%s236 + $0x1888] sm:$0xff] %v1807
                %v1809 = vld [vmem:[%s235 + $0x3110] sm:$0xff]
                %1810 = vst [vmem:[%s236 + $0x1890] sm:$0xff] %v1809
                %v1811 = vld [vmem:[%s235 + $0x3118] sm:$0xff]
                %1812 = vst [vmem:[%s236 + $0x1898] sm:$0xff] %v1811
                %v1813 = vld [vmem:[%s235 + $0x3140] sm:$0xff]
                %1814 = vst [vmem:[%s236 + $0x18a0] sm:$0xff] %v1813
                %v1815 = vld [vmem:[%s235 + $0x3148] sm:$0xff]
                %1816 = vst [vmem:[%s236 + $0x18a8] sm:$0xff] %v1815
                %v1817 = vld [vmem:[%s235 + $0x3150] sm:$0xff]
                %1818 = vst [vmem:[%s236 + $0x18b0] sm:$0xff] %v1817
                %v1819 = vld [vmem:[%s235 + $0x3158] sm:$0xff]
                %1820 = vst [vmem:[%s236 + $0x18b8] sm:$0xff] %v1819
                %v1821 = vld [vmem:[%s235 + $0x3180] sm:$0xff]
                %1822 = vst [vmem:[%s236 + $0x18c0] sm:$0xff] %v1821
                %v1823 = vld [vmem:[%s235 + $0x3188] sm:$0xff]
                %1824 = vst [vmem:[%s236 + $0x18c8] sm:$0xff] %v1823
                %v1825 = vld [vmem:[%s235 + $0x3190] sm:$0xff]
                %1826 = vst [vmem:[%s236 + $0x18d0] sm:$0xff] %v1825
                %v1827 = vld [vmem:[%s235 + $0x3198] sm:$0xff]
                %1828 = vst [vmem:[%s236 + $0x18d8] sm:$0xff] %v1827
                %v1829 = vld [vmem:[%s235 + $0x31c0] sm:$0xff]
                %1830 = vst [vmem:[%s236 + $0x18e0] sm:$0xff] %v1829
                %v1831 = vld [vmem:[%s235 + $0x31c8] sm:$0xff]
                %1832 = vst [vmem:[%s236 + $0x18e8] sm:$0xff] %v1831
                %v1833 = vld [vmem:[%s235 + $0x31d0] sm:$0xff]
                %1834 = vst [vmem:[%s236 + $0x18f0] sm:$0xff] %v1833
                %v1835 = vld [vmem:[%s235 + $0x31d8] sm:$0xff]
                %1836 = vst [vmem:[%s236 + $0x18f8] sm:$0xff] %v1835
                %v1837 = vld [vmem:[%s235 + $0x3200] sm:$0xff]
                %1838 = vst [vmem:[%s236 + $0x1900] sm:$0xff] %v1837
                %v1839 = vld [vmem:[%s235 + $0x3208] sm:$0xff]
                %1840 = vst [vmem:[%s236 + $0x1908] sm:$0xff] %v1839
                %v1841 = vld [vmem:[%s235 + $0x3210] sm:$0xff]
                %1842 = vst [vmem:[%s236 + $0x1910] sm:$0xff] %v1841
                %v1843 = vld [vmem:[%s235 + $0x3218] sm:$0xff]
                %1844 = vst [vmem:[%s236 + $0x1918] sm:$0xff] %v1843
                %v1845 = vld [vmem:[%s235 + $0x3240] sm:$0xff]
                %1846 = vst [vmem:[%s236 + $0x1920] sm:$0xff] %v1845
                %v1847 = vld [vmem:[%s235 + $0x3248] sm:$0xff]
                %1848 = vst [vmem:[%s236 + $0x1928] sm:$0xff] %v1847
                %v1849 = vld [vmem:[%s235 + $0x3250] sm:$0xff]
                %1850 = vst [vmem:[%s236 + $0x1930] sm:$0xff] %v1849
                %v1851 = vld [vmem:[%s235 + $0x3258] sm:$0xff]
                %1852 = vst [vmem:[%s236 + $0x1938] sm:$0xff] %v1851
                %v1853 = vld [vmem:[%s235 + $0x3280] sm:$0xff]
                %1854 = vst [vmem:[%s236 + $0x1940] sm:$0xff] %v1853
                %v1855 = vld [vmem:[%s235 + $0x3288] sm:$0xff]
                %1856 = vst [vmem:[%s236 + $0x1948] sm:$0xff] %v1855
                %v1857 = vld [vmem:[%s235 + $0x3290] sm:$0xff]
                %1858 = vst [vmem:[%s236 + $0x1950] sm:$0xff] %v1857
                %v1859 = vld [vmem:[%s235 + $0x3298] sm:$0xff]
                %1860 = vst [vmem:[%s236 + $0x1958] sm:$0xff] %v1859
                %v1861 = vld [vmem:[%s235 + $0x32c0] sm:$0xff]
                %1862 = vst [vmem:[%s236 + $0x1960] sm:$0xff] %v1861
                %v1863 = vld [vmem:[%s235 + $0x32c8] sm:$0xff]
                %1864 = vst [vmem:[%s236 + $0x1968] sm:$0xff] %v1863
                %v1865 = vld [vmem:[%s235 + $0x32d0] sm:$0xff]
                %1866 = vst [vmem:[%s236 + $0x1970] sm:$0xff] %v1865
                %v1867 = vld [vmem:[%s235 + $0x32d8] sm:$0xff]
                %1868 = vst [vmem:[%s236 + $0x1978] sm:$0xff] %v1867
                %v1869 = vld [vmem:[%s235 + $0x3300] sm:$0xff]
                %1870 = vst [vmem:[%s236 + $0x1980] sm:$0xff] %v1869
                %v1871 = vld [vmem:[%s235 + $0x3308] sm:$0xff]
                %1872 = vst [vmem:[%s236 + $0x1988] sm:$0xff] %v1871
                %v1873 = vld [vmem:[%s235 + $0x3310] sm:$0xff]
                %1874 = vst [vmem:[%s236 + $0x1990] sm:$0xff] %v1873
                %v1875 = vld [vmem:[%s235 + $0x3318] sm:$0xff]
                %1876 = vst [vmem:[%s236 + $0x1998] sm:$0xff] %v1875
                %v1877 = vld [vmem:[%s235 + $0x3340] sm:$0xff]
                %1878 = vst [vmem:[%s236 + $0x19a0] sm:$0xff] %v1877
                %v1879 = vld [vmem:[%s235 + $0x3348] sm:$0xff]
                %1880 = vst [vmem:[%s236 + $0x19a8] sm:$0xff] %v1879
                %v1881 = vld [vmem:[%s235 + $0x3350] sm:$0xff]
                %1882 = vst [vmem:[%s236 + $0x19b0] sm:$0xff] %v1881
                %v1883 = vld [vmem:[%s235 + $0x3358] sm:$0xff]
                %1884 = vst [vmem:[%s236 + $0x19b8] sm:$0xff] %v1883
                %v1885 = vld [vmem:[%s235 + $0x3380] sm:$0xff]
                %1886 = vst [vmem:[%s236 + $0x19c0] sm:$0xff] %v1885
                %v1887 = vld [vmem:[%s235 + $0x3388] sm:$0xff]
                %1888 = vst [vmem:[%s236 + $0x19c8] sm:$0xff] %v1887
                %v1889 = vld [vmem:[%s235 + $0x3390] sm:$0xff]
                %1890 = vst [vmem:[%s236 + $0x19d0] sm:$0xff] %v1889
                %v1891 = vld [vmem:[%s235 + $0x3398] sm:$0xff]
                %1892 = vst [vmem:[%s236 + $0x19d8] sm:$0xff] %v1891
                %v1893 = vld [vmem:[%s235 + $0x33c0] sm:$0xff]
                %1894 = vst [vmem:[%s236 + $0x19e0] sm:$0xff] %v1893
                %v1895 = vld [vmem:[%s235 + $0x33c8] sm:$0xff]
                %1896 = vst [vmem:[%s236 + $0x19e8] sm:$0xff] %v1895
                %v1897 = vld [vmem:[%s235 + $0x33d0] sm:$0xff]
                %1898 = vst [vmem:[%s236 + $0x19f0] sm:$0xff] %v1897
                %v1899 = vld [vmem:[%s235 + $0x33d8] sm:$0xff]
                %1900 = vst [vmem:[%s236 + $0x19f8] sm:$0xff] %v1899
                %v1901 = vld [vmem:[%s235 + $0x3400] sm:$0xff]
                %1902 = vst [vmem:[%s236 + $0x1a00] sm:$0xff] %v1901
                %v1903 = vld [vmem:[%s235 + $0x3408] sm:$0xff]
                %1904 = vst [vmem:[%s236 + $0x1a08] sm:$0xff] %v1903
                %v1905 = vld [vmem:[%s235 + $0x3410] sm:$0xff]
                %1906 = vst [vmem:[%s236 + $0x1a10] sm:$0xff] %v1905
                %v1907 = vld [vmem:[%s235 + $0x3418] sm:$0xff]
                %1908 = vst [vmem:[%s236 + $0x1a18] sm:$0xff] %v1907
                %v1909 = vld [vmem:[%s235 + $0x3440] sm:$0xff]
                %1910 = vst [vmem:[%s236 + $0x1a20] sm:$0xff] %v1909
                %v1911 = vld [vmem:[%s235 + $0x3448] sm:$0xff]
                %1912 = vst [vmem:[%s236 + $0x1a28] sm:$0xff] %v1911
                %v1913 = vld [vmem:[%s235 + $0x3450] sm:$0xff]
                %1914 = vst [vmem:[%s236 + $0x1a30] sm:$0xff] %v1913
                %v1915 = vld [vmem:[%s235 + $0x3458] sm:$0xff]
                %1916 = vst [vmem:[%s236 + $0x1a38] sm:$0xff] %v1915
                %v1917 = vld [vmem:[%s235 + $0x3480] sm:$0xff]
                %1918 = vst [vmem:[%s236 + $0x1a40] sm:$0xff] %v1917
                %v1919 = vld [vmem:[%s235 + $0x3488] sm:$0xff]
                %1920 = vst [vmem:[%s236 + $0x1a48] sm:$0xff] %v1919
                %v1921 = vld [vmem:[%s235 + $0x3490] sm:$0xff]
                %1922 = vst [vmem:[%s236 + $0x1a50] sm:$0xff] %v1921
                %v1923 = vld [vmem:[%s235 + $0x3498] sm:$0xff]
                %1924 = vst [vmem:[%s236 + $0x1a58] sm:$0xff] %v1923
                %v1925 = vld [vmem:[%s235 + $0x34c0] sm:$0xff]
                %1926 = vst [vmem:[%s236 + $0x1a60] sm:$0xff] %v1925
                %v1927 = vld [vmem:[%s235 + $0x34c8] sm:$0xff]
                %1928 = vst [vmem:[%s236 + $0x1a68] sm:$0xff] %v1927
                %v1929 = vld [vmem:[%s235 + $0x34d0] sm:$0xff]
                %1930 = vst [vmem:[%s236 + $0x1a70] sm:$0xff] %v1929
                %v1931 = vld [vmem:[%s235 + $0x34d8] sm:$0xff]
                %1932 = vst [vmem:[%s236 + $0x1a78] sm:$0xff] %v1931
                %v1933 = vld [vmem:[%s235 + $0x3500] sm:$0xff]
                %1934 = vst [vmem:[%s236 + $0x1a80] sm:$0xff] %v1933
                %v1935 = vld [vmem:[%s235 + $0x3508] sm:$0xff]
                %1936 = vst [vmem:[%s236 + $0x1a88] sm:$0xff] %v1935
                %v1937 = vld [vmem:[%s235 + $0x3510] sm:$0xff]
                %1938 = vst [vmem:[%s236 + $0x1a90] sm:$0xff] %v1937
                %v1939 = vld [vmem:[%s235 + $0x3518] sm:$0xff]
                %1940 = vst [vmem:[%s236 + $0x1a98] sm:$0xff] %v1939
                %v1941 = vld [vmem:[%s235 + $0x3540] sm:$0xff]
                %1942 = vst [vmem:[%s236 + $0x1aa0] sm:$0xff] %v1941
                %v1943 = vld [vmem:[%s235 + $0x3548] sm:$0xff]
                %1944 = vst [vmem:[%s236 + $0x1aa8] sm:$0xff] %v1943
                %v1945 = vld [vmem:[%s235 + $0x3550] sm:$0xff]
                %1946 = vst [vmem:[%s236 + $0x1ab0] sm:$0xff] %v1945
                %v1947 = vld [vmem:[%s235 + $0x3558] sm:$0xff]
                %1948 = vst [vmem:[%s236 + $0x1ab8] sm:$0xff] %v1947
                %v1949 = vld [vmem:[%s235 + $0x3580] sm:$0xff]
                %1950 = vst [vmem:[%s236 + $0x1ac0] sm:$0xff] %v1949
                %v1951 = vld [vmem:[%s235 + $0x3588] sm:$0xff]
                %1952 = vst [vmem:[%s236 + $0x1ac8] sm:$0xff] %v1951
                %v1953 = vld [vmem:[%s235 + $0x3590] sm:$0xff]
                %1954 = vst [vmem:[%s236 + $0x1ad0] sm:$0xff] %v1953
                %v1955 = vld [vmem:[%s235 + $0x3598] sm:$0xff]
                %1956 = vst [vmem:[%s236 + $0x1ad8] sm:$0xff] %v1955
                %v1957 = vld [vmem:[%s235 + $0x35c0] sm:$0xff]
                %1958 = vst [vmem:[%s236 + $0x1ae0] sm:$0xff] %v1957
                %v1959 = vld [vmem:[%s235 + $0x35c8] sm:$0xff]
                %1960 = vst [vmem:[%s236 + $0x1ae8] sm:$0xff] %v1959
                %v1961 = vld [vmem:[%s235 + $0x35d0] sm:$0xff]
                %1962 = vst [vmem:[%s236 + $0x1af0] sm:$0xff] %v1961
                %v1963 = vld [vmem:[%s235 + $0x35d8] sm:$0xff]
                %1964 = vst [vmem:[%s236 + $0x1af8] sm:$0xff] %v1963
                %v1965 = vld [vmem:[%s235 + $0x3600] sm:$0xff]
                %1966 = vst [vmem:[%s236 + $0x1b00] sm:$0xff] %v1965
                %v1967 = vld [vmem:[%s235 + $0x3608] sm:$0xff]
                %1968 = vst [vmem:[%s236 + $0x1b08] sm:$0xff] %v1967
                %v1969 = vld [vmem:[%s235 + $0x3610] sm:$0xff]
                %1970 = vst [vmem:[%s236 + $0x1b10] sm:$0xff] %v1969
                %v1971 = vld [vmem:[%s235 + $0x3618] sm:$0xff]
                %1972 = vst [vmem:[%s236 + $0x1b18] sm:$0xff] %v1971
                %v1973 = vld [vmem:[%s235 + $0x3640] sm:$0xff]
                %1974 = vst [vmem:[%s236 + $0x1b20] sm:$0xff] %v1973
                %v1975 = vld [vmem:[%s235 + $0x3648] sm:$0xff]
                %1976 = vst [vmem:[%s236 + $0x1b28] sm:$0xff] %v1975
                %v1977 = vld [vmem:[%s235 + $0x3650] sm:$0xff]
                %1978 = vst [vmem:[%s236 + $0x1b30] sm:$0xff] %v1977
                %v1979 = vld [vmem:[%s235 + $0x3658] sm:$0xff]
                %1980 = vst [vmem:[%s236 + $0x1b38] sm:$0xff] %v1979
                %v1981 = vld [vmem:[%s235 + $0x3680] sm:$0xff]
                %1982 = vst [vmem:[%s236 + $0x1b40] sm:$0xff] %v1981
                %v1983 = vld [vmem:[%s235 + $0x3688] sm:$0xff]
                %1984 = vst [vmem:[%s236 + $0x1b48] sm:$0xff] %v1983
                %v1985 = vld [vmem:[%s235 + $0x3690] sm:$0xff]
                %1986 = vst [vmem:[%s236 + $0x1b50] sm:$0xff] %v1985
                %v1987 = vld [vmem:[%s235 + $0x3698] sm:$0xff]
                %1988 = vst [vmem:[%s236 + $0x1b58] sm:$0xff] %v1987
                %v1989 = vld [vmem:[%s235 + $0x36c0] sm:$0xff]
                %1990 = vst [vmem:[%s236 + $0x1b60] sm:$0xff] %v1989
                %v1991 = vld [vmem:[%s235 + $0x36c8] sm:$0xff]
                %1992 = vst [vmem:[%s236 + $0x1b68] sm:$0xff] %v1991
                %v1993 = vld [vmem:[%s235 + $0x36d0] sm:$0xff]
                %1994 = vst [vmem:[%s236 + $0x1b70] sm:$0xff] %v1993
                %v1995 = vld [vmem:[%s235 + $0x36d8] sm:$0xff]
                %1996 = vst [vmem:[%s236 + $0x1b78] sm:$0xff] %v1995
                %v1997 = vld [vmem:[%s235 + $0x3700] sm:$0xff]
                %1998 = vst [vmem:[%s236 + $0x1b80] sm:$0xff] %v1997
                %v1999 = vld [vmem:[%s235 + $0x3708] sm:$0xff]
                %2000 = vst [vmem:[%s236 + $0x1b88] sm:$0xff] %v1999
                %v2001 = vld [vmem:[%s235 + $0x3710] sm:$0xff]
                %2002 = vst [vmem:[%s236 + $0x1b90] sm:$0xff] %v2001
                %v2003 = vld [vmem:[%s235 + $0x3718] sm:$0xff]
                %2004 = vst [vmem:[%s236 + $0x1b98] sm:$0xff] %v2003
                %v2005 = vld [vmem:[%s235 + $0x3740] sm:$0xff]
                %2006 = vst [vmem:[%s236 + $0x1ba0] sm:$0xff] %v2005
                %v2007 = vld [vmem:[%s235 + $0x3748] sm:$0xff]
                %2008 = vst [vmem:[%s236 + $0x1ba8] sm:$0xff] %v2007
                %v2009 = vld [vmem:[%s235 + $0x3750] sm:$0xff]
                %2010 = vst [vmem:[%s236 + $0x1bb0] sm:$0xff] %v2009
                %v2011 = vld [vmem:[%s235 + $0x3758] sm:$0xff]
                %2012 = vst [vmem:[%s236 + $0x1bb8] sm:$0xff] %v2011
                %v2013 = vld [vmem:[%s235 + $0x3780] sm:$0xff]
                %2014 = vst [vmem:[%s236 + $0x1bc0] sm:$0xff] %v2013
                %v2015 = vld [vmem:[%s235 + $0x3788] sm:$0xff]
                %2016 = vst [vmem:[%s236 + $0x1bc8] sm:$0xff] %v2015
                %v2017 = vld [vmem:[%s235 + $0x3790] sm:$0xff]
                %2018 = vst [vmem:[%s236 + $0x1bd0] sm:$0xff] %v2017
                %v2019 = vld [vmem:[%s235 + $0x3798] sm:$0xff]
                %2020 = vst [vmem:[%s236 + $0x1bd8] sm:$0xff] %v2019
                %v2021 = vld [vmem:[%s235 + $0x37c0] sm:$0xff]
                %2022 = vst [vmem:[%s236 + $0x1be0] sm:$0xff] %v2021
                %v2023 = vld [vmem:[%s235 + $0x37c8] sm:$0xff]
                %2024 = vst [vmem:[%s236 + $0x1be8] sm:$0xff] %v2023
                %v2025 = vld [vmem:[%s235 + $0x37d0] sm:$0xff]
                %2026 = vst [vmem:[%s236 + $0x1bf0] sm:$0xff] %v2025
                %v2027 = vld [vmem:[%s235 + $0x37d8] sm:$0xff]
                %2028 = vst [vmem:[%s236 + $0x1bf8] sm:$0xff] %v2027
                %v2029 = vld [vmem:[%s235 + $0x3800] sm:$0xff]
                %2030 = vst [vmem:[%s236 + $0x1c00] sm:$0xff] %v2029
                %v2031 = vld [vmem:[%s235 + $0x3808] sm:$0xff]
                %2032 = vst [vmem:[%s236 + $0x1c08] sm:$0xff] %v2031
                %v2033 = vld [vmem:[%s235 + $0x3810] sm:$0xff]
                %2034 = vst [vmem:[%s236 + $0x1c10] sm:$0xff] %v2033
                %v2035 = vld [vmem:[%s235 + $0x3818] sm:$0xff]
                %2036 = vst [vmem:[%s236 + $0x1c18] sm:$0xff] %v2035
                %v2037 = vld [vmem:[%s235 + $0x3840] sm:$0xff]
                %2038 = vst [vmem:[%s236 + $0x1c20] sm:$0xff] %v2037
                %v2039 = vld [vmem:[%s235 + $0x3848] sm:$0xff]
                %2040 = vst [vmem:[%s236 + $0x1c28] sm:$0xff] %v2039
                %v2041 = vld [vmem:[%s235 + $0x3850] sm:$0xff]
                %2042 = vst [vmem:[%s236 + $0x1c30] sm:$0xff] %v2041
                %v2043 = vld [vmem:[%s235 + $0x3858] sm:$0xff]
                %2044 = vst [vmem:[%s236 + $0x1c38] sm:$0xff] %v2043
                %v2045 = vld [vmem:[%s235 + $0x3880] sm:$0xff]
                %2046 = vst [vmem:[%s236 + $0x1c40] sm:$0xff] %v2045
                %v2047 = vld [vmem:[%s235 + $0x3888] sm:$0xff]
                %2048 = vst [vmem:[%s236 + $0x1c48] sm:$0xff] %v2047
                %v2049 = vld [vmem:[%s235 + $0x3890] sm:$0xff]
                %2050 = vst [vmem:[%s236 + $0x1c50] sm:$0xff] %v2049
                %v2051 = vld [vmem:[%s235 + $0x3898] sm:$0xff]
                %2052 = vst [vmem:[%s236 + $0x1c58] sm:$0xff] %v2051
                %v2053 = vld [vmem:[%s235 + $0x38c0] sm:$0xff]
                %2054 = vst [vmem:[%s236 + $0x1c60] sm:$0xff] %v2053
                %v2055 = vld [vmem:[%s235 + $0x38c8] sm:$0xff]
                %2056 = vst [vmem:[%s236 + $0x1c68] sm:$0xff] %v2055
                %v2057 = vld [vmem:[%s235 + $0x38d0] sm:$0xff]
                %2058 = vst [vmem:[%s236 + $0x1c70] sm:$0xff] %v2057
                %v2059 = vld [vmem:[%s235 + $0x38d8] sm:$0xff]
                %2060 = vst [vmem:[%s236 + $0x1c78] sm:$0xff] %v2059
                %v2061 = vld [vmem:[%s235 + $0x3900] sm:$0xff]
                %2062 = vst [vmem:[%s236 + $0x1c80] sm:$0xff] %v2061
                %v2063 = vld [vmem:[%s235 + $0x3908] sm:$0xff]
                %2064 = vst [vmem:[%s236 + $0x1c88] sm:$0xff] %v2063
                %v2065 = vld [vmem:[%s235 + $0x3910] sm:$0xff]
                %2066 = vst [vmem:[%s236 + $0x1c90] sm:$0xff] %v2065
                %v2067 = vld [vmem:[%s235 + $0x3918] sm:$0xff]
                %2068 = vst [vmem:[%s236 + $0x1c98] sm:$0xff] %v2067
                %v2069 = vld [vmem:[%s235 + $0x3940] sm:$0xff]
                %2070 = vst [vmem:[%s236 + $0x1ca0] sm:$0xff] %v2069
                %v2071 = vld [vmem:[%s235 + $0x3948] sm:$0xff]
                %2072 = vst [vmem:[%s236 + $0x1ca8] sm:$0xff] %v2071
                %v2073 = vld [vmem:[%s235 + $0x3950] sm:$0xff]
                %2074 = vst [vmem:[%s236 + $0x1cb0] sm:$0xff] %v2073
                %v2075 = vld [vmem:[%s235 + $0x3958] sm:$0xff]
                %2076 = vst [vmem:[%s236 + $0x1cb8] sm:$0xff] %v2075
                %v2077 = vld [vmem:[%s235 + $0x3980] sm:$0xff]
                %2078 = vst [vmem:[%s236 + $0x1cc0] sm:$0xff] %v2077
                %v2079 = vld [vmem:[%s235 + $0x3988] sm:$0xff]
                %2080 = vst [vmem:[%s236 + $0x1cc8] sm:$0xff] %v2079
                %v2081 = vld [vmem:[%s235 + $0x3990] sm:$0xff]
                %2082 = vst [vmem:[%s236 + $0x1cd0] sm:$0xff] %v2081
                %v2083 = vld [vmem:[%s235 + $0x3998] sm:$0xff]
                %2084 = vst [vmem:[%s236 + $0x1cd8] sm:$0xff] %v2083
                %v2085 = vld [vmem:[%s235 + $0x39c0] sm:$0xff]
                %2086 = vst [vmem:[%s236 + $0x1ce0] sm:$0xff] %v2085
                %v2087 = vld [vmem:[%s235 + $0x39c8] sm:$0xff]
                %2088 = vst [vmem:[%s236 + $0x1ce8] sm:$0xff] %v2087
                %v2089 = vld [vmem:[%s235 + $0x39d0] sm:$0xff]
                %2090 = vst [vmem:[%s236 + $0x1cf0] sm:$0xff] %v2089
                %v2091 = vld [vmem:[%s235 + $0x39d8] sm:$0xff]
                %2092 = vst [vmem:[%s236 + $0x1cf8] sm:$0xff] %v2091
                %v2093 = vld [vmem:[%s235 + $0x3a00] sm:$0xff]
                %2094 = vst [vmem:[%s236 + $0x1d00] sm:$0xff] %v2093
                %v2095 = vld [vmem:[%s235 + $0x3a08] sm:$0xff]
                %2096 = vst [vmem:[%s236 + $0x1d08] sm:$0xff] %v2095
                %v2097 = vld [vmem:[%s235 + $0x3a10] sm:$0xff]
                %2098 = vst [vmem:[%s236 + $0x1d10] sm:$0xff] %v2097
                %v2099 = vld [vmem:[%s235 + $0x3a18] sm:$0xff]
                %2100 = vst [vmem:[%s236 + $0x1d18] sm:$0xff] %v2099
                %v2101 = vld [vmem:[%s235 + $0x3a40] sm:$0xff]
                %2102 = vst [vmem:[%s236 + $0x1d20] sm:$0xff] %v2101
                %v2103 = vld [vmem:[%s235 + $0x3a48] sm:$0xff]
                %2104 = vst [vmem:[%s236 + $0x1d28] sm:$0xff] %v2103
                %v2105 = vld [vmem:[%s235 + $0x3a50] sm:$0xff]
                %2106 = vst [vmem:[%s236 + $0x1d30] sm:$0xff] %v2105
                %v2107 = vld [vmem:[%s235 + $0x3a58] sm:$0xff]
                %2108 = vst [vmem:[%s236 + $0x1d38] sm:$0xff] %v2107
                %v2109 = vld [vmem:[%s235 + $0x3a80] sm:$0xff]
                %2110 = vst [vmem:[%s236 + $0x1d40] sm:$0xff] %v2109
                %v2111 = vld [vmem:[%s235 + $0x3a88] sm:$0xff]
                %2112 = vst [vmem:[%s236 + $0x1d48] sm:$0xff] %v2111
                %v2113 = vld [vmem:[%s235 + $0x3a90] sm:$0xff]
                %2114 = vst [vmem:[%s236 + $0x1d50] sm:$0xff] %v2113
                %v2115 = vld [vmem:[%s235 + $0x3a98] sm:$0xff]
                %2116 = vst [vmem:[%s236 + $0x1d58] sm:$0xff] %v2115
                %v2117 = vld [vmem:[%s235 + $0x3ac0] sm:$0xff]
                %2118 = vst [vmem:[%s236 + $0x1d60] sm:$0xff] %v2117
                %v2119 = vld [vmem:[%s235 + $0x3ac8] sm:$0xff]
                %2120 = vst [vmem:[%s236 + $0x1d68] sm:$0xff] %v2119
                %v2121 = vld [vmem:[%s235 + $0x3ad0] sm:$0xff]
                %2122 = vst [vmem:[%s236 + $0x1d70] sm:$0xff] %v2121
                %v2123 = vld [vmem:[%s235 + $0x3ad8] sm:$0xff]
                %2124 = vst [vmem:[%s236 + $0x1d78] sm:$0xff] %v2123
                %v2125 = vld [vmem:[%s235 + $0x3b00] sm:$0xff]
                %2126 = vst [vmem:[%s236 + $0x1d80] sm:$0xff] %v2125
                %v2127 = vld [vmem:[%s235 + $0x3b08] sm:$0xff]
                %2128 = vst [vmem:[%s236 + $0x1d88] sm:$0xff] %v2127
                %v2129 = vld [vmem:[%s235 + $0x3b10] sm:$0xff]
                %2130 = vst [vmem:[%s236 + $0x1d90] sm:$0xff] %v2129
                %v2131 = vld [vmem:[%s235 + $0x3b18] sm:$0xff]
                %2132 = vst [vmem:[%s236 + $0x1d98] sm:$0xff] %v2131
                %v2133 = vld [vmem:[%s235 + $0x3b40] sm:$0xff]
                %2134 = vst [vmem:[%s236 + $0x1da0] sm:$0xff] %v2133
                %v2135 = vld [vmem:[%s235 + $0x3b48] sm:$0xff]
                %2136 = vst [vmem:[%s236 + $0x1da8] sm:$0xff] %v2135
                %v2137 = vld [vmem:[%s235 + $0x3b50] sm:$0xff]
                %2138 = vst [vmem:[%s236 + $0x1db0] sm:$0xff] %v2137
                %v2139 = vld [vmem:[%s235 + $0x3b58] sm:$0xff]
                %2140 = vst [vmem:[%s236 + $0x1db8] sm:$0xff] %v2139
                %v2141 = vld [vmem:[%s235 + $0x3b80] sm:$0xff]
                %2142 = vst [vmem:[%s236 + $0x1dc0] sm:$0xff] %v2141
                %v2143 = vld [vmem:[%s235 + $0x3b88] sm:$0xff]
                %2144 = vst [vmem:[%s236 + $0x1dc8] sm:$0xff] %v2143
                %v2145 = vld [vmem:[%s235 + $0x3b90] sm:$0xff]
                %2146 = vst [vmem:[%s236 + $0x1dd0] sm:$0xff] %v2145
                %v2147 = vld [vmem:[%s235 + $0x3b98] sm:$0xff]
                %2148 = vst [vmem:[%s236 + $0x1dd8] sm:$0xff] %v2147
                %v2149 = vld [vmem:[%s235 + $0x3bc0] sm:$0xff]
                %2150 = vst [vmem:[%s236 + $0x1de0] sm:$0xff] %v2149
                %v2151 = vld [vmem:[%s235 + $0x3bc8] sm:$0xff]
                %2152 = vst [vmem:[%s236 + $0x1de8] sm:$0xff] %v2151
                %v2153 = vld [vmem:[%s235 + $0x3bd0] sm:$0xff]
                %2154 = vst [vmem:[%s236 + $0x1df0] sm:$0xff] %v2153
                %v2155 = vld [vmem:[%s235 + $0x3bd8] sm:$0xff]
                %2156 = vst [vmem:[%s236 + $0x1df8] sm:$0xff] %v2155
                %v2157 = vld [vmem:[%s235 + $0x3c00] sm:$0xff]
                %2158 = vst [vmem:[%s236 + $0x1e00] sm:$0xff] %v2157
                %v2159 = vld [vmem:[%s235 + $0x3c08] sm:$0xff]
                %2160 = vst [vmem:[%s236 + $0x1e08] sm:$0xff] %v2159
                %v2161 = vld [vmem:[%s235 + $0x3c10] sm:$0xff]
                %2162 = vst [vmem:[%s236 + $0x1e10] sm:$0xff] %v2161
                %v2163 = vld [vmem:[%s235 + $0x3c18] sm:$0xff]
                %2164 = vst [vmem:[%s236 + $0x1e18] sm:$0xff] %v2163
                %v2165 = vld [vmem:[%s235 + $0x3c40] sm:$0xff]
                %2166 = vst [vmem:[%s236 + $0x1e20] sm:$0xff] %v2165
                %v2167 = vld [vmem:[%s235 + $0x3c48] sm:$0xff]
                %2168 = vst [vmem:[%s236 + $0x1e28] sm:$0xff] %v2167
                %v2169 = vld [vmem:[%s235 + $0x3c50] sm:$0xff]
                %2170 = vst [vmem:[%s236 + $0x1e30] sm:$0xff] %v2169
                %v2171 = vld [vmem:[%s235 + $0x3c58] sm:$0xff]
                %2172 = vst [vmem:[%s236 + $0x1e38] sm:$0xff] %v2171
                %v2173 = vld [vmem:[%s235 + $0x3c80] sm:$0xff]
                %2174 = vst [vmem:[%s236 + $0x1e40] sm:$0xff] %v2173
                %v2175 = vld [vmem:[%s235 + $0x3c88] sm:$0xff]
                %2176 = vst [vmem:[%s236 + $0x1e48] sm:$0xff] %v2175
                %v2177 = vld [vmem:[%s235 + $0x3c90] sm:$0xff]
                %2178 = vst [vmem:[%s236 + $0x1e50] sm:$0xff] %v2177
                %v2179 = vld [vmem:[%s235 + $0x3c98] sm:$0xff]
                %2180 = vst [vmem:[%s236 + $0x1e58] sm:$0xff] %v2179
                %v2181 = vld [vmem:[%s235 + $0x3cc0] sm:$0xff]
                %2182 = vst [vmem:[%s236 + $0x1e60] sm:$0xff] %v2181
                %v2183 = vld [vmem:[%s235 + $0x3cc8] sm:$0xff]
                %2184 = vst [vmem:[%s236 + $0x1e68] sm:$0xff] %v2183
                %v2185 = vld [vmem:[%s235 + $0x3cd0] sm:$0xff]
                %2186 = vst [vmem:[%s236 + $0x1e70] sm:$0xff] %v2185
                %v2187 = vld [vmem:[%s235 + $0x3cd8] sm:$0xff]
                %2188 = vst [vmem:[%s236 + $0x1e78] sm:$0xff] %v2187
                %v2189 = vld [vmem:[%s235 + $0x3d00] sm:$0xff]
                %2190 = vst [vmem:[%s236 + $0x1e80] sm:$0xff] %v2189
                %v2191 = vld [vmem:[%s235 + $0x3d08] sm:$0xff]
                %2192 = vst [vmem:[%s236 + $0x1e88] sm:$0xff] %v2191
                %v2193 = vld [vmem:[%s235 + $0x3d10] sm:$0xff]
                %2194 = vst [vmem:[%s236 + $0x1e90] sm:$0xff] %v2193
                %v2195 = vld [vmem:[%s235 + $0x3d18] sm:$0xff]
                %2196 = vst [vmem:[%s236 + $0x1e98] sm:$0xff] %v2195
                %v2197 = vld [vmem:[%s235 + $0x3d40] sm:$0xff]
                %2198 = vst [vmem:[%s236 + $0x1ea0] sm:$0xff] %v2197
                %v2199 = vld [vmem:[%s235 + $0x3d48] sm:$0xff]
                %2200 = vst [vmem:[%s236 + $0x1ea8] sm:$0xff] %v2199
                %v2201 = vld [vmem:[%s235 + $0x3d50] sm:$0xff]
                %2202 = vst [vmem:[%s236 + $0x1eb0] sm:$0xff] %v2201
                %v2203 = vld [vmem:[%s235 + $0x3d58] sm:$0xff]
                %2204 = vst [vmem:[%s236 + $0x1eb8] sm:$0xff] %v2203
                %v2205 = vld [vmem:[%s235 + $0x3d80] sm:$0xff]
                %2206 = vst [vmem:[%s236 + $0x1ec0] sm:$0xff] %v2205
                %v2207 = vld [vmem:[%s235 + $0x3d88] sm:$0xff]
                %2208 = vst [vmem:[%s236 + $0x1ec8] sm:$0xff] %v2207
                %v2209 = vld [vmem:[%s235 + $0x3d90] sm:$0xff]
                %2210 = vst [vmem:[%s236 + $0x1ed0] sm:$0xff] %v2209
                %v2211 = vld [vmem:[%s235 + $0x3d98] sm:$0xff]
                %2212 = vst [vmem:[%s236 + $0x1ed8] sm:$0xff] %v2211
                %v2213 = vld [vmem:[%s235 + $0x3dc0] sm:$0xff]
                %2214 = vst [vmem:[%s236 + $0x1ee0] sm:$0xff] %v2213
                %v2215 = vld [vmem:[%s235 + $0x3dc8] sm:$0xff]
                %2216 = vst [vmem:[%s236 + $0x1ee8] sm:$0xff] %v2215
                %v2217 = vld [vmem:[%s235 + $0x3dd0] sm:$0xff]
                %2218 = vst [vmem:[%s236 + $0x1ef0] sm:$0xff] %v2217
                %v2219 = vld [vmem:[%s235 + $0x3dd8] sm:$0xff]
                %2220 = vst [vmem:[%s236 + $0x1ef8] sm:$0xff] %v2219
                %v2221 = vld [vmem:[%s235 + $0x3e00] sm:$0xff]
                %2222 = vst [vmem:[%s236 + $0x1f00] sm:$0xff] %v2221
                %v2223 = vld [vmem:[%s235 + $0x3e08] sm:$0xff]
                %2224 = vst [vmem:[%s236 + $0x1f08] sm:$0xff] %v2223
                %v2225 = vld [vmem:[%s235 + $0x3e10] sm:$0xff]
                %2226 = vst [vmem:[%s236 + $0x1f10] sm:$0xff] %v2225
                %v2227 = vld [vmem:[%s235 + $0x3e18] sm:$0xff]
                %2228 = vst [vmem:[%s236 + $0x1f18] sm:$0xff] %v2227
                %v2229 = vld [vmem:[%s235 + $0x3e40] sm:$0xff]
                %2230 = vst [vmem:[%s236 + $0x1f20] sm:$0xff] %v2229
                %v2231 = vld [vmem:[%s235 + $0x3e48] sm:$0xff]
                %2232 = vst [vmem:[%s236 + $0x1f28] sm:$0xff] %v2231
                %v2233 = vld [vmem:[%s235 + $0x3e50] sm:$0xff]
                %2234 = vst [vmem:[%s236 + $0x1f30] sm:$0xff] %v2233
                %v2235 = vld [vmem:[%s235 + $0x3e58] sm:$0xff]
                %2236 = vst [vmem:[%s236 + $0x1f38] sm:$0xff] %v2235
                %v2237 = vld [vmem:[%s235 + $0x3e80] sm:$0xff]
                %2238 = vst [vmem:[%s236 + $0x1f40] sm:$0xff] %v2237
                %v2239 = vld [vmem:[%s235 + $0x3e88] sm:$0xff]
                %2240 = vst [vmem:[%s236 + $0x1f48] sm:$0xff] %v2239
                %v2241 = vld [vmem:[%s235 + $0x3e90] sm:$0xff]
                %2242 = vst [vmem:[%s236 + $0x1f50] sm:$0xff] %v2241
                %v2243 = vld [vmem:[%s235 + $0x3e98] sm:$0xff]
                %2244 = vst [vmem:[%s236 + $0x1f58] sm:$0xff] %v2243
                %v2245 = vld [vmem:[%s235 + $0x3ec0] sm:$0xff]
                %2246 = vst [vmem:[%s236 + $0x1f60] sm:$0xff] %v2245
                %v2247 = vld [vmem:[%s235 + $0x3ec8] sm:$0xff]
                %2248 = vst [vmem:[%s236 + $0x1f68] sm:$0xff] %v2247
                %v2249 = vld [vmem:[%s235 + $0x3ed0] sm:$0xff]
                %2250 = vst [vmem:[%s236 + $0x1f70] sm:$0xff] %v2249
                %v2251 = vld [vmem:[%s235 + $0x3ed8] sm:$0xff]
                %2252 = vst [vmem:[%s236 + $0x1f78] sm:$0xff] %v2251
                %v2253 = vld [vmem:[%s235 + $0x3f00] sm:$0xff]
                %2254 = vst [vmem:[%s236 + $0x1f80] sm:$0xff] %v2253
                %v2255 = vld [vmem:[%s235 + $0x3f08] sm:$0xff]
                %2256 = vst [vmem:[%s236 + $0x1f88] sm:$0xff] %v2255
                %v2257 = vld [vmem:[%s235 + $0x3f10] sm:$0xff]
                %2258 = vst [vmem:[%s236 + $0x1f90] sm:$0xff] %v2257
                %v2259 = vld [vmem:[%s235 + $0x3f18] sm:$0xff]
                %2260 = vst [vmem:[%s236 + $0x1f98] sm:$0xff] %v2259
                %v2261 = vld [vmem:[%s235 + $0x3f40] sm:$0xff]
                %2262 = vst [vmem:[%s236 + $0x1fa0] sm:$0xff] %v2261
                %v2263 = vld [vmem:[%s235 + $0x3f48] sm:$0xff]
                %2264 = vst [vmem:[%s236 + $0x1fa8] sm:$0xff] %v2263
                %v2265 = vld [vmem:[%s235 + $0x3f50] sm:$0xff]
                %2266 = vst [vmem:[%s236 + $0x1fb0] sm:$0xff] %v2265
                %v2267 = vld [vmem:[%s235 + $0x3f58] sm:$0xff]
                %2268 = vst [vmem:[%s236 + $0x1fb8] sm:$0xff] %v2267
                %v2269 = vld [vmem:[%s235 + $0x3f80] sm:$0xff]
                %2270 = vst [vmem:[%s236 + $0x1fc0] sm:$0xff] %v2269
                %v2271 = vld [vmem:[%s235 + $0x3f88] sm:$0xff]
                %2272 = vst [vmem:[%s236 + $0x1fc8] sm:$0xff] %v2271
                %v2273 = vld [vmem:[%s235 + $0x3f90] sm:$0xff]
                %2274 = vst [vmem:[%s236 + $0x1fd0] sm:$0xff] %v2273
                %v2275 = vld [vmem:[%s235 + $0x3f98] sm:$0xff]
                %2276 = vst [vmem:[%s236 + $0x1fd8] sm:$0xff] %v2275
                %v2277 = vld [vmem:[%s235 + $0x3fc0] sm:$0xff]
                %2278 = vst [vmem:[%s236 + $0x1fe0] sm:$0xff] %v2277
                %v2279 = vld [vmem:[%s235 + $0x3fc8] sm:$0xff]
                %2280 = vst [vmem:[%s236 + $0x1fe8] sm:$0xff] %v2279
                %v2281 = vld [vmem:[%s235 + $0x3fd0] sm:$0xff]
                %2282 = vst [vmem:[%s236 + $0x1ff0] sm:$0xff] %v2281
                %v2283 = vld [vmem:[%s235 + $0x3fd8] sm:$0xff]
                %2284 = vst [vmem:[%s236 + $0x1ff8] sm:$0xff] %v2283
              $region41: #{embedding_image_nn.1} parent=35 // loop_footer
                %s234 = sadd.s32 1, %s230
              $region42: #{embedding_image_nn.1} parent=35 // loop_footer_branch
                %229 = sbr.rel target = $region38
              $region43: #{embedding_image_nn.1} parent=35 // loop_exit
                _
            $region36: #{embedding_image_nn.1} parent=31 // pred_fallthru
              _
            // Predicated region
            $region44: #{embedding_image_nn.1} parent=31 // pred_check
              _
            $region45: #{embedding_image_nn.1} parent=31 // pred_check_branch
              %2286 = sbr.rel target = $region47
            $region46: #{embedding_image_nn.1} parent=31 // pred_region
              _
            $region47: #{embedding_image_nn.1} parent=31 // pred_fallthru
              _
          $region32: #{embedding_image_nn.1} parent=27 // pred_fallthru
            _
          %2287 = vnop
        $region28: #{embedding_image_nn.1} parent=23 // pred_fallthru
          _
        // Predicated region
        $region48: #{embedding_image_nn.1} parent=23 // pred_check
          %p2288 = pneg %p100
        $region49: #{embedding_image_nn.1} parent=23 // pred_check_branch
          %2290 = sbr.rel (%p2288) target = $region51
        $region50: #{embedding_image_nn.1} parent=23 // pred_region
          %s2291 = sand.u32 %s19, 1
          %s2292 = scalar_lea.sflag [#allocation9], %s2291
          %s2293 = sand.u32 %s90, 1
          %s2294 = smul.addr %s2293, 8
          %s2295 = scalar_lea.vmem [#allocation8], %s2294
          %s2296 = smul.u32 8, %s26
          %s2298 = ssub.s32 128, 128
          %2299 = vsyncadd %s2292, %s2298
          %s2300 = smul.addr %s2296, 16
          %s2301 = scalar_lea.hbm %s2, %s2300
          %s2303 = sshll.u32 %s2295, 4
          %s2304 = int_to_ptr.vmem [resolvable:$true] %s2303
          %2306 = dma.hbm_to_vmem [thread:$0]  %s2301, 128, %s2304, %s2292
        $region51: #{embedding_image_nn.1} parent=23 // pred_fallthru
          _
        // Predicated region
        $region52: #{embedding_image_nn.1} parent=23 // pred_check
          %p2307 = pneg %p147
        $region53: #{embedding_image_nn.1} parent=23 // pred_check_branch
          %2309 = sbr.rel (%p2307) target = $region55
        $region54: #{embedding_image_nn.1} parent=23 // pred_region
          %s2310 = sand.u32 %s19, 1
          %s2311 = scalar_lea.sflag [#allocation9], %s2310
          %s2312 = sand.u32 %s137, 1
          %s2313 = smul.addr %s2312, 512
          %s2314 = scalar_lea.vmem [#allocation10], %s2313
          %s2315 = smul.u32 128, %s26
          %s2317 = ssub.s32 8192, 8192
          %2318 = vsyncadd %s2311, %s2317
          %s2319 = smul.addr %s2315, 64
          %s2320 = scalar_lea.hbm %s4, %s2319
          %s2321 = sshll.u32 %s2314, 4
          %s2322 = int_to_ptr.vmem [resolvable:$true] %s2321
          %2327 = dma.hbm_to_vmem [thread:$0]  %s2320, 8192, %s2322, %s2311, 64, 64, 4
        $region55: #{embedding_image_nn.1} parent=23 // pred_fallthru
          _
      $region24: #{embedding_image_nn.1} parent=5 // pred_fallthru
        _
      %p2328 = scmp.le.s32.totalorder 1, %s19
      %p2329 = scmp.lt.s32.totalorder %s19, 5
      %p2330 = pnand %p2328, %p2329
      %p2331 = pneg %p2330
      // Predicated region
      $region56: #{embedding_image_nn.1} parent=5 // pred_check
        _
      $region57: #{embedding_image_nn.1} parent=5 // pred_check_branch
        %2333 = sbr.rel (%p2330) target = $region59
      $region58: #{embedding_image_nn.1} parent=5 // pred_region
        %s2334 = ssub.s32 %s19, 1
        // Predicated region
        $region60: #{embedding_image_nn.1} parent=58 // pred_check
          %p2335 = pneg %p52
        $region61: #{embedding_image_nn.1} parent=58 // pred_check_branch
          %2337 = sbr.rel (%p2335) target = $region63
        $region62: #{embedding_image_nn.1} parent=58 // pred_region
          %2338 = dma.done [#allocation5], 2048
        $region63: #{embedding_image_nn.1} parent=58 // pred_fallthru
          _
        %s2339 = sand.u32 %s67, 1
        %s2340 = sand.u32 %s67, 1
        %s2341 = smul.addr %s2340, 8192
        %s2342 = scalar_lea.vmem [#allocation7], %s2341
        // Predicated region
        $region64: #{embedding_image_nn.1} parent=58 // pred_check
          %p2343 = pneg %p80
        $region65: #{embedding_image_nn.1} parent=58 // pred_check_branch
          %2345 = sbr.rel (%p2343) target = $region67
        $region66: #{embedding_image_nn.1} parent=58 // pred_region
          _
        $region67: #{embedding_image_nn.1} parent=58 // pred_fallthru
          _
        %s2346 = sand.u32 %s24, 1
        %s2347 = scalar_lea.sflag [#allocation9], %s2346
        %s2348 = sand.u32 %s93, 1
        %s2349 = smul.addr %s2348, 8
        %s2350 = scalar_lea.vmem [#allocation8], %s2349
        // Predicated region
        $region68: #{embedding_image_nn.1} parent=58 // pred_check
          %p2351 = pneg %p106
        $region69: #{embedding_image_nn.1} parent=58 // pred_check_branch
          %2353 = sbr.rel (%p2351) target = $region71
        $region70: #{embedding_image_nn.1} parent=58 // pred_region
          %2354 = dma.done %s2347, 128
        $region71: #{embedding_image_nn.1} parent=58 // pred_fallthru
          _
        %s2355 = sand.u32 %s24, 1
        %s2356 = scalar_lea.sflag [#allocation9], %s2355
        %s2357 = sand.u32 %s140, 1
        %s2358 = smul.addr %s2357, 512
        %s2359 = scalar_lea.vmem [#allocation10], %s2358
        // Predicated region
        $region72: #{embedding_image_nn.1} parent=58 // pred_check
          %p2360 = pneg %p153
        $region73: #{embedding_image_nn.1} parent=58 // pred_check_branch
          %2362 = sbr.rel (%p2360) target = $region75
        $region74: #{embedding_image_nn.1} parent=58 // pred_region
          %2363 = dma.done %s2356, 8192
        $region75: #{embedding_image_nn.1} parent=58 // pred_fallthru
          _
        %p2364 = pneg %p52
        %p2365 = pneg %p49
        %s2366 = sand.u32 %s67, 1
        %s2367 = sand.u32 %s67, 1
        %s2368 = smul.addr %s2367, 8192
        %s2369 = scalar_lea.vmem [#allocation7], %s2368
        %p2370 = pneg %p80
        %p2371 = pneg %p77
        %s2372 = sand.u32 %s24, 1
        %s2373 = scalar_lea.sflag [#allocation9], %s2372
        %s2374 = sand.u32 %s93, 1
        %s2375 = smul.addr %s2374, 8
        %s2376 = scalar_lea.vmem [#allocation8], %s2375
        %p2377 = pneg %p106
        %p2378 = pneg %p103
        %p2379 = pneg %p127
        %p2380 = pneg %p124
        %s2381 = sand.u32 %s24, 1
        %s2382 = scalar_lea.sflag [#allocation9], %s2381
        %s2383 = sand.u32 %s140, 1
        %s2384 = smul.addr %s2383, 512
        %s2385 = scalar_lea.vmem [#allocation10], %s2384
        %p2386 = pneg %p153
        %p2387 = pneg %p150
        %p2388 = pneg %p179
        %p2389 = pneg %p176
        %s2390 = sand.u32 %s166, 1
        %s2391 = scalar_lea.sflag [#allocation6], %s2390
        %s2392 = sand.u32 %s166, 1
        %s2393 = smul.addr %s2392, 8
        %s2394 = scalar_lea.vmem [#allocation11], %s2393
        %s2395 = smul.u32 256, %s29
        %s2396 = smul.u32 8, %s28
        %s2397 = smul.u32 8, %s28
        %s2398 = smul.u32 128, %s28
        %p2400 = scmp.eq.s32.totalorder %s29, 0
        // Predicated region
        $region76: #{embedding_image_nn.1} parent=58 // pred_check
          %p2401 = pneg %p2400
        $region77: #{embedding_image_nn.1} parent=58 // pred_check_branch
          %2403 = sbr.rel (%p2401) target = $region79
        $region78: #{embedding_image_nn.1} parent=58 // pred_region
          %2404 = vst [vmem:[#allocation2] sm:$0xff] 0.0
          %2405 = vst [vmem:[#allocation2 + $0x8] sm:$0xff] 0.0
          %2406 = vst [vmem:[#allocation2 + $0x10] sm:$0xff] 0.0
          %2407 = vst [vmem:[#allocation2 + $0x18] sm:$0xff] 0.0
          %2408 = vst [vmem:[#allocation2 + $0x20] sm:$0xff] 0.0
          %2409 = vst [vmem:[#allocation2 + $0x28] sm:$0xff] 0.0
          %2410 = vst [vmem:[#allocation2 + $0x30] sm:$0xff] 0.0
          %2411 = vst [vmem:[#allocation2 + $0x38] sm:$0xff] 0.0
        $region79: #{embedding_image_nn.1} parent=58 // pred_fallthru
          _
        %s2412 = smul.u32 %s29, 2048
        %s2413 = sshra.s32 %s2412, 7
        %s2414 = sand.u32 %s2412, 127
        %s2415 = smul.addr %s2413, 4
        %s2416 = scalar_lea.vmem [#allocation4], %s2415
        %v2417 = vld [vmem:[%s2416] sm:$0xff]
        %v2418 = vld [vmem:[%s2416 + $0x8] sm:$0xff]
        %v2419 = vld [vmem:[%s2416 + $0x10] sm:$0xff]
        %v2420 = vld [vmem:[%s2416 + $0x18] sm:$0xff]
        %v2421 = vld [vmem:[%s2416 + $0x20] sm:$0xff]
        %v2422 = vld [vmem:[%s2416 + $0x28] sm:$0xff]
        %v2423 = vld [vmem:[%s2416 + $0x30] sm:$0xff]
        %v2424 = vld [vmem:[%s2416 + $0x38] sm:$0xff]
        %v2425 = vld [vmem:[#allocation2] sm:$0xff]
        %v2426 = vld [vmem:[#allocation2 + $0x8] sm:$0xff]
        %v2427 = vld [vmem:[#allocation2 + $0x10] sm:$0xff]
        %v2428 = vld [vmem:[#allocation2 + $0x18] sm:$0xff]
        %v2429 = vld [vmem:[#allocation2 + $0x20] sm:$0xff]
        %v2430 = vld [vmem:[#allocation2 + $0x28] sm:$0xff]
        %v2431 = vld [vmem:[#allocation2 + $0x30] sm:$0xff]
        %v2432 = vld [vmem:[#allocation2 + $0x38] sm:$0xff]
        %v2433 = vld [vmem:[%s2342] sm:$0xff]
        %v2434 = vld [vmem:[%s2342 + $0x8] sm:$0xff]
        %v2435 = vld [vmem:[%s2342 + $0x10] sm:$0xff]
        %v2436 = vld [vmem:[%s2342 + $0x18] sm:$0xff]
        %v2437 = vld [vmem:[%s2342 + $0x20] sm:$0xff]
        %v2438 = vld [vmem:[%s2342 + $0x28] sm:$0xff]
        %v2439 = vld [vmem:[%s2342 + $0x30] sm:$0xff]
        %v2440 = vld [vmem:[%s2342 + $0x38] sm:$0xff]
        %v2441 = vld [vmem:[%s2342 + $0x40] sm:$0xff]
        %v2442 = vld [vmem:[%s2342 + $0x48] sm:$0xff]
        %v2443 = vld [vmem:[%s2342 + $0x50] sm:$0xff]
        %v2444 = vld [vmem:[%s2342 + $0x58] sm:$0xff]
        %v2445 = vld [vmem:[%s2342 + $0x60] sm:$0xff]
        %v2446 = vld [vmem:[%s2342 + $0x68] sm:$0xff]
        %v2447 = vld [vmem:[%s2342 + $0x70] sm:$0xff]
        %v2448 = vld [vmem:[%s2342 + $0x78] sm:$0xff]
        %v2449 = vld [vmem:[%s2342 + $0x80] sm:$0xff]
        %v2450 = vld [vmem:[%s2342 + $0x88] sm:$0xff]
        %v2451 = vld [vmem:[%s2342 + $0x90] sm:$0xff]
        %v2452 = vld [vmem:[%s2342 + $0x98] sm:$0xff]
        %v2453 = vld [vmem:[%s2342 + $0xa0] sm:$0xff]
        %v2454 = vld [vmem:[%s2342 + $0xa8] sm:$0xff]
        %v2455 = vld [vmem:[%s2342 + $0xb0] sm:$0xff]
        %v2456 = vld [vmem:[%s2342 + $0xb8] sm:$0xff]
        %v2457 = vld [vmem:[%s2342 + $0xc0] sm:$0xff]
        %v2458 = vld [vmem:[%s2342 + $0xc8] sm:$0xff]
        %v2459 = vld [vmem:[%s2342 + $0xd0] sm:$0xff]
        %v2460 = vld [vmem:[%s2342 + $0xd8] sm:$0xff]
        %v2461 = vld [vmem:[%s2342 + $0xe0] sm:$0xff]
        %v2462 = vld [vmem:[%s2342 + $0xe8] sm:$0xff]
        %v2463 = vld [vmem:[%s2342 + $0xf0] sm:$0xff]
        %v2464 = vld [vmem:[%s2342 + $0xf8] sm:$0xff]
        %v2465 = vld [vmem:[%s2342 + $0x100] sm:$0xff]
        %v2466 = vld [vmem:[%s2342 + $0x108] sm:$0xff]
        %v2467 = vld [vmem:[%s2342 + $0x110] sm:$0xff]
        %v2468 = vld [vmem:[%s2342 + $0x118] sm:$0xff]
        %v2469 = vld [vmem:[%s2342 + $0x120] sm:$0xff]
        %v2470 = vld [vmem:[%s2342 + $0x128] sm:$0xff]
        %v2471 = vld [vmem:[%s2342 + $0x130] sm:$0xff]
        %v2472 = vld [vmem:[%s2342 + $0x138] sm:$0xff]
        %v2473 = vld [vmem:[%s2342 + $0x140] sm:$0xff]
        %v2474 = vld [vmem:[%s2342 + $0x148] sm:$0xff]
        %v2475 = vld [vmem:[%s2342 + $0x150] sm:$0xff]
        %v2476 = vld [vmem:[%s2342 + $0x158] sm:$0xff]
        %v2477 = vld [vmem:[%s2342 + $0x160] sm:$0xff]
        %v2478 = vld [vmem:[%s2342 + $0x168] sm:$0xff]
        %v2479 = vld [vmem:[%s2342 + $0x170] sm:$0xff]
        %v2480 = vld [vmem:[%s2342 + $0x178] sm:$0xff]
        %v2481 = vld [vmem:[%s2342 + $0x180] sm:$0xff]
        %v2482 = vld [vmem:[%s2342 + $0x188] sm:$0xff]
        %v2483 = vld [vmem:[%s2342 + $0x190] sm:$0xff]
        %v2484 = vld [vmem:[%s2342 + $0x198] sm:$0xff]
        %v2485 = vld [vmem:[%s2342 + $0x1a0] sm:$0xff]
        %v2486 = vld [vmem:[%s2342 + $0x1a8] sm:$0xff]
        %v2487 = vld [vmem:[%s2342 + $0x1b0] sm:$0xff]
        %v2488 = vld [vmem:[%s2342 + $0x1b8] sm:$0xff]
        %v2489 = vld [vmem:[%s2342 + $0x1c0] sm:$0xff]
        %v2490 = vld [vmem:[%s2342 + $0x1c8] sm:$0xff]
        %v2491 = vld [vmem:[%s2342 + $0x1d0] sm:$0xff]
        %v2492 = vld [vmem:[%s2342 + $0x1d8] sm:$0xff]
        %v2493 = vld [vmem:[%s2342 + $0x1e0] sm:$0xff]
        %v2494 = vld [vmem:[%s2342 + $0x1e8] sm:$0xff]
        %v2495 = vld [vmem:[%s2342 + $0x1f0] sm:$0xff]
        %v2496 = vld [vmem:[%s2342 + $0x1f8] sm:$0xff]
        %v2497 = vld [vmem:[%s2342 + $0x200] sm:$0xff]
        %v2498 = vld [vmem:[%s2342 + $0x208] sm:$0xff]
        %v2499 = vld [vmem:[%s2342 + $0x210] sm:$0xff]
        %v2500 = vld [vmem:[%s2342 + $0x218] sm:$0xff]
        %v2501 = vld [vmem:[%s2342 + $0x220] sm:$0xff]
        %v2502 = vld [vmem:[%s2342 + $0x228] sm:$0xff]
        %v2503 = vld [vmem:[%s2342 + $0x230] sm:$0xff]
        %v2504 = vld [vmem:[%s2342 + $0x238] sm:$0xff]
        %v2505 = vld [vmem:[%s2342 + $0x240] sm:$0xff]
        %v2506 = vld [vmem:[%s2342 + $0x248] sm:$0xff]
        %v2507 = vld [vmem:[%s2342 + $0x250] sm:$0xff]
        %v2508 = vld [vmem:[%s2342 + $0x258] sm:$0xff]
        %v2509 = vld [vmem:[%s2342 + $0x260] sm:$0xff]
        %v2510 = vld [vmem:[%s2342 + $0x268] sm:$0xff]
        %v2511 = vld [vmem:[%s2342 + $0x270] sm:$0xff]
        %v2512 = vld [vmem:[%s2342 + $0x278] sm:$0xff]
        %v2513 = vld [vmem:[%s2342 + $0x280] sm:$0xff]
        %v2514 = vld [vmem:[%s2342 + $0x288] sm:$0xff]
        %v2515 = vld [vmem:[%s2342 + $0x290] sm:$0xff]
        %v2516 = vld [vmem:[%s2342 + $0x298] sm:$0xff]
        %v2517 = vld [vmem:[%s2342 + $0x2a0] sm:$0xff]
        %v2518 = vld [vmem:[%s2342 + $0x2a8] sm:$0xff]
        %v2519 = vld [vmem:[%s2342 + $0x2b0] sm:$0xff]
        %v2520 = vld [vmem:[%s2342 + $0x2b8] sm:$0xff]
        %v2521 = vld [vmem:[%s2342 + $0x2c0] sm:$0xff]
        %v2522 = vld [vmem:[%s2342 + $0x2c8] sm:$0xff]
        %v2523 = vld [vmem:[%s2342 + $0x2d0] sm:$0xff]
        %v2524 = vld [vmem:[%s2342 + $0x2d8] sm:$0xff]
        %v2525 = vld [vmem:[%s2342 + $0x2e0] sm:$0xff]
        %v2526 = vld [vmem:[%s2342 + $0x2e8] sm:$0xff]
        %v2527 = vld [vmem:[%s2342 + $0x2f0] sm:$0xff]
        %v2528 = vld [vmem:[%s2342 + $0x2f8] sm:$0xff]
        %v2529 = vld [vmem:[%s2342 + $0x300] sm:$0xff]
        %v2530 = vld [vmem:[%s2342 + $0x308] sm:$0xff]
        %v2531 = vld [vmem:[%s2342 + $0x310] sm:$0xff]
        %v2532 = vld [vmem:[%s2342 + $0x318] sm:$0xff]
        %v2533 = vld [vmem:[%s2342 + $0x320] sm:$0xff]
        %v2534 = vld [vmem:[%s2342 + $0x328] sm:$0xff]
        %v2535 = vld [vmem:[%s2342 + $0x330] sm:$0xff]
        %v2536 = vld [vmem:[%s2342 + $0x338] sm:$0xff]
        %v2537 = vld [vmem:[%s2342 + $0x340] sm:$0xff]
        %v2538 = vld [vmem:[%s2342 + $0x348] sm:$0xff]
        %v2539 = vld [vmem:[%s2342 + $0x350] sm:$0xff]
        %v2540 = vld [vmem:[%s2342 + $0x358] sm:$0xff]
        %v2541 = vld [vmem:[%s2342 + $0x360] sm:$0xff]
        %v2542 = vld [vmem:[%s2342 + $0x368] sm:$0xff]
        %v2543 = vld [vmem:[%s2342 + $0x370] sm:$0xff]
        %v2544 = vld [vmem:[%s2342 + $0x378] sm:$0xff]
        %v2545 = vld [vmem:[%s2342 + $0x380] sm:$0xff]
        %v2546 = vld [vmem:[%s2342 + $0x388] sm:$0xff]
        %v2547 = vld [vmem:[%s2342 + $0x390] sm:$0xff]
        %v2548 = vld [vmem:[%s2342 + $0x398] sm:$0xff]
        %v2549 = vld [vmem:[%s2342 + $0x3a0] sm:$0xff]
        %v2550 = vld [vmem:[%s2342 + $0x3a8] sm:$0xff]
        %v2551 = vld [vmem:[%s2342 + $0x3b0] sm:$0xff]
        %v2552 = vld [vmem:[%s2342 + $0x3b8] sm:$0xff]
        %v2553 = vld [vmem:[%s2342 + $0x3c0] sm:$0xff]
        %v2554 = vld [vmem:[%s2342 + $0x3c8] sm:$0xff]
        %v2555 = vld [vmem:[%s2342 + $0x3d0] sm:$0xff]
        %v2556 = vld [vmem:[%s2342 + $0x3d8] sm:$0xff]
        %v2557 = vld [vmem:[%s2342 + $0x3e0] sm:$0xff]
        %v2558 = vld [vmem:[%s2342 + $0x3e8] sm:$0xff]
        %v2559 = vld [vmem:[%s2342 + $0x3f0] sm:$0xff]
        %v2560 = vld [vmem:[%s2342 + $0x3f8] sm:$0xff]
        %v2561 = vld [vmem:[%s2342 + $0x400] sm:$0xff]
        %v2562 = vld [vmem:[%s2342 + $0x408] sm:$0xff]
        %v2563 = vld [vmem:[%s2342 + $0x410] sm:$0xff]
        %v2564 = vld [vmem:[%s2342 + $0x418] sm:$0xff]
        %v2565 = vld [vmem:[%s2342 + $0x420] sm:$0xff]
        %v2566 = vld [vmem:[%s2342 + $0x428] sm:$0xff]
        %v2567 = vld [vmem:[%s2342 + $0x430] sm:$0xff]
        %v2568 = vld [vmem:[%s2342 + $0x438] sm:$0xff]
        %v2569 = vld [vmem:[%s2342 + $0x440] sm:$0xff]
        %v2570 = vld [vmem:[%s2342 + $0x448] sm:$0xff]
        %v2571 = vld [vmem:[%s2342 + $0x450] sm:$0xff]
        %v2572 = vld [vmem:[%s2342 + $0x458] sm:$0xff]
        %v2573 = vld [vmem:[%s2342 + $0x460] sm:$0xff]
        %v2574 = vld [vmem:[%s2342 + $0x468] sm:$0xff]
        %v2575 = vld [vmem:[%s2342 + $0x470] sm:$0xff]
        %v2576 = vld [vmem:[%s2342 + $0x478] sm:$0xff]
        %v2577 = vld [vmem:[%s2342 + $0x480] sm:$0xff]
        %v2578 = vld [vmem:[%s2342 + $0x488] sm:$0xff]
        %v2579 = vld [vmem:[%s2342 + $0x490] sm:$0xff]
        %v2580 = vld [vmem:[%s2342 + $0x498] sm:$0xff]
        %v2581 = vld [vmem:[%s2342 + $0x4a0] sm:$0xff]
        %v2582 = vld [vmem:[%s2342 + $0x4a8] sm:$0xff]
        %v2583 = vld [vmem:[%s2342 + $0x4b0] sm:$0xff]
        %v2584 = vld [vmem:[%s2342 + $0x4b8] sm:$0xff]
        %v2585 = vld [vmem:[%s2342 + $0x4c0] sm:$0xff]
        %v2586 = vld [vmem:[%s2342 + $0x4c8] sm:$0xff]
        %v2587 = vld [vmem:[%s2342 + $0x4d0] sm:$0xff]
        %v2588 = vld [vmem:[%s2342 + $0x4d8] sm:$0xff]
        %v2589 = vld [vmem:[%s2342 + $0x4e0] sm:$0xff]
        %v2590 = vld [vmem:[%s2342 + $0x4e8] sm:$0xff]
        %v2591 = vld [vmem:[%s2342 + $0x4f0] sm:$0xff]
        %v2592 = vld [vmem:[%s2342 + $0x4f8] sm:$0xff]
        %v2593 = vld [vmem:[%s2342 + $0x500] sm:$0xff]
        %v2594 = vld [vmem:[%s2342 + $0x508] sm:$0xff]
        %v2595 = vld [vmem:[%s2342 + $0x510] sm:$0xff]
        %v2596 = vld [vmem:[%s2342 + $0x518] sm:$0xff]
        %v2597 = vld [vmem:[%s2342 + $0x520] sm:$0xff]
        %v2598 = vld [vmem:[%s2342 + $0x528] sm:$0xff]
        %v2599 = vld [vmem:[%s2342 + $0x530] sm:$0xff]
        %v2600 = vld [vmem:[%s2342 + $0x538] sm:$0xff]
        %v2601 = vld [vmem:[%s2342 + $0x540] sm:$0xff]
        %v2602 = vld [vmem:[%s2342 + $0x548] sm:$0xff]
        %v2603 = vld [vmem:[%s2342 + $0x550] sm:$0xff]
        %v2604 = vld [vmem:[%s2342 + $0x558] sm:$0xff]
        %v2605 = vld [vmem:[%s2342 + $0x560] sm:$0xff]
        %v2606 = vld [vmem:[%s2342 + $0x568] sm:$0xff]
        %v2607 = vld [vmem:[%s2342 + $0x570] sm:$0xff]
        %v2608 = vld [vmem:[%s2342 + $0x578] sm:$0xff]
        %v2609 = vld [vmem:[%s2342 + $0x580] sm:$0xff]
        %v2610 = vld [vmem:[%s2342 + $0x588] sm:$0xff]
        %v2611 = vld [vmem:[%s2342 + $0x590] sm:$0xff]
        %v2612 = vld [vmem:[%s2342 + $0x598] sm:$0xff]
        %v2613 = vld [vmem:[%s2342 + $0x5a0] sm:$0xff]
        %v2614 = vld [vmem:[%s2342 + $0x5a8] sm:$0xff]
        %v2615 = vld [vmem:[%s2342 + $0x5b0] sm:$0xff]
        %v2616 = vld [vmem:[%s2342 + $0x5b8] sm:$0xff]
        %v2617 = vld [vmem:[%s2342 + $0x5c0] sm:$0xff]
        %v2618 = vld [vmem:[%s2342 + $0x5c8] sm:$0xff]
        %v2619 = vld [vmem:[%s2342 + $0x5d0] sm:$0xff]
        %v2620 = vld [vmem:[%s2342 + $0x5d8] sm:$0xff]
        %v2621 = vld [vmem:[%s2342 + $0x5e0] sm:$0xff]
        %v2622 = vld [vmem:[%s2342 + $0x5e8] sm:$0xff]
        %v2623 = vld [vmem:[%s2342 + $0x5f0] sm:$0xff]
        %v2624 = vld [vmem:[%s2342 + $0x5f8] sm:$0xff]
        %v2625 = vld [vmem:[%s2342 + $0x600] sm:$0xff]
        %v2626 = vld [vmem:[%s2342 + $0x608] sm:$0xff]
        %v2627 = vld [vmem:[%s2342 + $0x610] sm:$0xff]
        %v2628 = vld [vmem:[%s2342 + $0x618] sm:$0xff]
        %v2629 = vld [vmem:[%s2342 + $0x620] sm:$0xff]
        %v2630 = vld [vmem:[%s2342 + $0x628] sm:$0xff]
        %v2631 = vld [vmem:[%s2342 + $0x630] sm:$0xff]
        %v2632 = vld [vmem:[%s2342 + $0x638] sm:$0xff]
        %v2633 = vld [vmem:[%s2342 + $0x640] sm:$0xff]
        %v2634 = vld [vmem:[%s2342 + $0x648] sm:$0xff]
        %v2635 = vld [vmem:[%s2342 + $0x650] sm:$0xff]
        %v2636 = vld [vmem:[%s2342 + $0x658] sm:$0xff]
        %v2637 = vld [vmem:[%s2342 + $0x660] sm:$0xff]
        %v2638 = vld [vmem:[%s2342 + $0x668] sm:$0xff]
        %v2639 = vld [vmem:[%s2342 + $0x670] sm:$0xff]
        %v2640 = vld [vmem:[%s2342 + $0x678] sm:$0xff]
        %v2641 = vld [vmem:[%s2342 + $0x680] sm:$0xff]
        %v2642 = vld [vmem:[%s2342 + $0x688] sm:$0xff]
        %v2643 = vld [vmem:[%s2342 + $0x690] sm:$0xff]
        %v2644 = vld [vmem:[%s2342 + $0x698] sm:$0xff]
        %v2645 = vld [vmem:[%s2342 + $0x6a0] sm:$0xff]
        %v2646 = vld [vmem:[%s2342 + $0x6a8] sm:$0xff]
        %v2647 = vld [vmem:[%s2342 + $0x6b0] sm:$0xff]
        %v2648 = vld [vmem:[%s2342 + $0x6b8] sm:$0xff]
        %v2649 = vld [vmem:[%s2342 + $0x6c0] sm:$0xff]
        %v2650 = vld [vmem:[%s2342 + $0x6c8] sm:$0xff]
        %v2651 = vld [vmem:[%s2342 + $0x6d0] sm:$0xff]
        %v2652 = vld [vmem:[%s2342 + $0x6d8] sm:$0xff]
        %v2653 = vld [vmem:[%s2342 + $0x6e0] sm:$0xff]
        %v2654 = vld [vmem:[%s2342 + $0x6e8] sm:$0xff]
        %v2655 = vld [vmem:[%s2342 + $0x6f0] sm:$0xff]
        %v2656 = vld [vmem:[%s2342 + $0x6f8] sm:$0xff]
        %v2657 = vld [vmem:[%s2342 + $0x700] sm:$0xff]
        %v2658 = vld [vmem:[%s2342 + $0x708] sm:$0xff]
        %v2659 = vld [vmem:[%s2342 + $0x710] sm:$0xff]
        %v2660 = vld [vmem:[%s2342 + $0x718] sm:$0xff]
        %v2661 = vld [vmem:[%s2342 + $0x720] sm:$0xff]
        %v2662 = vld [vmem:[%s2342 + $0x728] sm:$0xff]
        %v2663 = vld [vmem:[%s2342 + $0x730] sm:$0xff]
        %v2664 = vld [vmem:[%s2342 + $0x738] sm:$0xff]
        %v2665 = vld [vmem:[%s2342 + $0x740] sm:$0xff]
        %v2666 = vld [vmem:[%s2342 + $0x748] sm:$0xff]
        %v2667 = vld [vmem:[%s2342 + $0x750] sm:$0xff]
        %v2668 = vld [vmem:[%s2342 + $0x758] sm:$0xff]
        %v2669 = vld [vmem:[%s2342 + $0x760] sm:$0xff]
        %v2670 = vld [vmem:[%s2342 + $0x768] sm:$0xff]
        %v2671 = vld [vmem:[%s2342 + $0x770] sm:$0xff]
        %v2672 = vld [vmem:[%s2342 + $0x778] sm:$0xff]
        %v2673 = vld [vmem:[%s2342 + $0x780] sm:$0xff]
        %v2674 = vld [vmem:[%s2342 + $0x788] sm:$0xff]
        %v2675 = vld [vmem:[%s2342 + $0x790] sm:$0xff]
        %v2676 = vld [vmem:[%s2342 + $0x798] sm:$0xff]
        %v2677 = vld [vmem:[%s2342 + $0x7a0] sm:$0xff]
        %v2678 = vld [vmem:[%s2342 + $0x7a8] sm:$0xff]
        %v2679 = vld [vmem:[%s2342 + $0x7b0] sm:$0xff]
        %v2680 = vld [vmem:[%s2342 + $0x7b8] sm:$0xff]
        %v2681 = vld [vmem:[%s2342 + $0x7c0] sm:$0xff]
        %v2682 = vld [vmem:[%s2342 + $0x7c8] sm:$0xff]
        %v2683 = vld [vmem:[%s2342 + $0x7d0] sm:$0xff]
        %v2684 = vld [vmem:[%s2342 + $0x7d8] sm:$0xff]
        %v2685 = vld [vmem:[%s2342 + $0x7e0] sm:$0xff]
        %v2686 = vld [vmem:[%s2342 + $0x7e8] sm:$0xff]
        %v2687 = vld [vmem:[%s2342 + $0x7f0] sm:$0xff]
        %v2688 = vld [vmem:[%s2342 + $0x7f8] sm:$0xff]
        %v2689 = vld [vmem:[%s2342 + $0x800] sm:$0xff]
        %v2690 = vld [vmem:[%s2342 + $0x808] sm:$0xff]
        %v2691 = vld [vmem:[%s2342 + $0x810] sm:$0xff]
        %v2692 = vld [vmem:[%s2342 + $0x818] sm:$0xff]
        %v2693 = vld [vmem:[%s2342 + $0x820] sm:$0xff]
        %v2694 = vld [vmem:[%s2342 + $0x828] sm:$0xff]
        %v2695 = vld [vmem:[%s2342 + $0x830] sm:$0xff]
        %v2696 = vld [vmem:[%s2342 + $0x838] sm:$0xff]
        %v2697 = vld [vmem:[%s2342 + $0x840] sm:$0xff]
        %v2698 = vld [vmem:[%s2342 + $0x848] sm:$0xff]
        %v2699 = vld [vmem:[%s2342 + $0x850] sm:$0xff]
        %v2700 = vld [vmem:[%s2342 + $0x858] sm:$0xff]
        %v2701 = vld [vmem:[%s2342 + $0x860] sm:$0xff]
        %v2702 = vld [vmem:[%s2342 + $0x868] sm:$0xff]
        %v2703 = vld [vmem:[%s2342 + $0x870] sm:$0xff]
        %v2704 = vld [vmem:[%s2342 + $0x878] sm:$0xff]
        %v2705 = vld [vmem:[%s2342 + $0x880] sm:$0xff]
        %v2706 = vld [vmem:[%s2342 + $0x888] sm:$0xff]
        %v2707 = vld [vmem:[%s2342 + $0x890] sm:$0xff]
        %v2708 = vld [vmem:[%s2342 + $0x898] sm:$0xff]
        %v2709 = vld [vmem:[%s2342 + $0x8a0] sm:$0xff]
        %v2710 = vld [vmem:[%s2342 + $0x8a8] sm:$0xff]
        %v2711 = vld [vmem:[%s2342 + $0x8b0] sm:$0xff]
        %v2712 = vld [vmem:[%s2342 + $0x8b8] sm:$0xff]
        %v2713 = vld [vmem:[%s2342 + $0x8c0] sm:$0xff]
        %v2714 = vld [vmem:[%s2342 + $0x8c8] sm:$0xff]
        %v2715 = vld [vmem:[%s2342 + $0x8d0] sm:$0xff]
        %v2716 = vld [vmem:[%s2342 + $0x8d8] sm:$0xff]
        %v2717 = vld [vmem:[%s2342 + $0x8e0] sm:$0xff]
        %v2718 = vld [vmem:[%s2342 + $0x8e8] sm:$0xff]
        %v2719 = vld [vmem:[%s2342 + $0x8f0] sm:$0xff]
        %v2720 = vld [vmem:[%s2342 + $0x8f8] sm:$0xff]
        %v2721 = vld [vmem:[%s2342 + $0x900] sm:$0xff]
        %v2722 = vld [vmem:[%s2342 + $0x908] sm:$0xff]
        %v2723 = vld [vmem:[%s2342 + $0x910] sm:$0xff]
        %v2724 = vld [vmem:[%s2342 + $0x918] sm:$0xff]
        %v2725 = vld [vmem:[%s2342 + $0x920] sm:$0xff]
        %v2726 = vld [vmem:[%s2342 + $0x928] sm:$0xff]
        %v2727 = vld [vmem:[%s2342 + $0x930] sm:$0xff]
        %v2728 = vld [vmem:[%s2342 + $0x938] sm:$0xff]
        %v2729 = vld [vmem:[%s2342 + $0x940] sm:$0xff]
        %v2730 = vld [vmem:[%s2342 + $0x948] sm:$0xff]
        %v2731 = vld [vmem:[%s2342 + $0x950] sm:$0xff]
        %v2732 = vld [vmem:[%s2342 + $0x958] sm:$0xff]
        %v2733 = vld [vmem:[%s2342 + $0x960] sm:$0xff]
        %v2734 = vld [vmem:[%s2342 + $0x968] sm:$0xff]
        %v2735 = vld [vmem:[%s2342 + $0x970] sm:$0xff]
        %v2736 = vld [vmem:[%s2342 + $0x978] sm:$0xff]
        %v2737 = vld [vmem:[%s2342 + $0x980] sm:$0xff]
        %v2738 = vld [vmem:[%s2342 + $0x988] sm:$0xff]
        %v2739 = vld [vmem:[%s2342 + $0x990] sm:$0xff]
        %v2740 = vld [vmem:[%s2342 + $0x998] sm:$0xff]
        %v2741 = vld [vmem:[%s2342 + $0x9a0] sm:$0xff]
        %v2742 = vld [vmem:[%s2342 + $0x9a8] sm:$0xff]
        %v2743 = vld [vmem:[%s2342 + $0x9b0] sm:$0xff]
        %v2744 = vld [vmem:[%s2342 + $0x9b8] sm:$0xff]
        %v2745 = vld [vmem:[%s2342 + $0x9c0] sm:$0xff]
        %v2746 = vld [vmem:[%s2342 + $0x9c8] sm:$0xff]
        %v2747 = vld [vmem:[%s2342 + $0x9d0] sm:$0xff]
        %v2748 = vld [vmem:[%s2342 + $0x9d8] sm:$0xff]
        %v2749 = vld [vmem:[%s2342 + $0x9e0] sm:$0xff]
        %v2750 = vld [vmem:[%s2342 + $0x9e8] sm:$0xff]
        %v2751 = vld [vmem:[%s2342 + $0x9f0] sm:$0xff]
        %v2752 = vld [vmem:[%s2342 + $0x9f8] sm:$0xff]
        %v2753 = vld [vmem:[%s2342 + $0xa00] sm:$0xff]
        %v2754 = vld [vmem:[%s2342 + $0xa08] sm:$0xff]
        %v2755 = vld [vmem:[%s2342 + $0xa10] sm:$0xff]
        %v2756 = vld [vmem:[%s2342 + $0xa18] sm:$0xff]
        %v2757 = vld [vmem:[%s2342 + $0xa20] sm:$0xff]
        %v2758 = vld [vmem:[%s2342 + $0xa28] sm:$0xff]
        %v2759 = vld [vmem:[%s2342 + $0xa30] sm:$0xff]
        %v2760 = vld [vmem:[%s2342 + $0xa38] sm:$0xff]
        %v2761 = vld [vmem:[%s2342 + $0xa40] sm:$0xff]
        %v2762 = vld [vmem:[%s2342 + $0xa48] sm:$0xff]
        %v2763 = vld [vmem:[%s2342 + $0xa50] sm:$0xff]
        %v2764 = vld [vmem:[%s2342 + $0xa58] sm:$0xff]
        %v2765 = vld [vmem:[%s2342 + $0xa60] sm:$0xff]
        %v2766 = vld [vmem:[%s2342 + $0xa68] sm:$0xff]
        %v2767 = vld [vmem:[%s2342 + $0xa70] sm:$0xff]
        %v2768 = vld [vmem:[%s2342 + $0xa78] sm:$0xff]
        %v2769 = vld [vmem:[%s2342 + $0xa80] sm:$0xff]
        %v2770 = vld [vmem:[%s2342 + $0xa88] sm:$0xff]
        %v2771 = vld [vmem:[%s2342 + $0xa90] sm:$0xff]
        %v2772 = vld [vmem:[%s2342 + $0xa98] sm:$0xff]
        %v2773 = vld [vmem:[%s2342 + $0xaa0] sm:$0xff]
        %v2774 = vld [vmem:[%s2342 + $0xaa8] sm:$0xff]
        %v2775 = vld [vmem:[%s2342 + $0xab0] sm:$0xff]
        %v2776 = vld [vmem:[%s2342 + $0xab8] sm:$0xff]
        %v2777 = vld [vmem:[%s2342 + $0xac0] sm:$0xff]
        %v2778 = vld [vmem:[%s2342 + $0xac8] sm:$0xff]
        %v2779 = vld [vmem:[%s2342 + $0xad0] sm:$0xff]
        %v2780 = vld [vmem:[%s2342 + $0xad8] sm:$0xff]
        %v2781 = vld [vmem:[%s2342 + $0xae0] sm:$0xff]
        %v2782 = vld [vmem:[%s2342 + $0xae8] sm:$0xff]
        %v2783 = vld [vmem:[%s2342 + $0xaf0] sm:$0xff]
        %v2784 = vld [vmem:[%s2342 + $0xaf8] sm:$0xff]
        %v2785 = vld [vmem:[%s2342 + $0xb00] sm:$0xff]
        %v2786 = vld [vmem:[%s2342 + $0xb08] sm:$0xff]
        %v2787 = vld [vmem:[%s2342 + $0xb10] sm:$0xff]
        %v2788 = vld [vmem:[%s2342 + $0xb18] sm:$0xff]
        %v2789 = vld [vmem:[%s2342 + $0xb20] sm:$0xff]
        %v2790 = vld [vmem:[%s2342 + $0xb28] sm:$0xff]
        %v2791 = vld [vmem:[%s2342 + $0xb30] sm:$0xff]
        %v2792 = vld [vmem:[%s2342 + $0xb38] sm:$0xff]
        %v2793 = vld [vmem:[%s2342 + $0xb40] sm:$0xff]
        %v2794 = vld [vmem:[%s2342 + $0xb48] sm:$0xff]
        %v2795 = vld [vmem:[%s2342 + $0xb50] sm:$0xff]
        %v2796 = vld [vmem:[%s2342 + $0xb58] sm:$0xff]
        %v2797 = vld [vmem:[%s2342 + $0xb60] sm:$0xff]
        %v2798 = vld [vmem:[%s2342 + $0xb68] sm:$0xff]
        %v2799 = vld [vmem:[%s2342 + $0xb70] sm:$0xff]
        %v2800 = vld [vmem:[%s2342 + $0xb78] sm:$0xff]
        %v2801 = vld [vmem:[%s2342 + $0xb80] sm:$0xff]
        %v2802 = vld [vmem:[%s2342 + $0xb88] sm:$0xff]
        %v2803 = vld [vmem:[%s2342 + $0xb90] sm:$0xff]
        %v2804 = vld [vmem:[%s2342 + $0xb98] sm:$0xff]
        %v2805 = vld [vmem:[%s2342 + $0xba0] sm:$0xff]
        %v2806 = vld [vmem:[%s2342 + $0xba8] sm:$0xff]
        %v2807 = vld [vmem:[%s2342 + $0xbb0] sm:$0xff]
        %v2808 = vld [vmem:[%s2342 + $0xbb8] sm:$0xff]
        %v2809 = vld [vmem:[%s2342 + $0xbc0] sm:$0xff]
        %v2810 = vld [vmem:[%s2342 + $0xbc8] sm:$0xff]
        %v2811 = vld [vmem:[%s2342 + $0xbd0] sm:$0xff]
        %v2812 = vld [vmem:[%s2342 + $0xbd8] sm:$0xff]
        %v2813 = vld [vmem:[%s2342 + $0xbe0] sm:$0xff]
        %v2814 = vld [vmem:[%s2342 + $0xbe8] sm:$0xff]
        %v2815 = vld [vmem:[%s2342 + $0xbf0] sm:$0xff]
        %v2816 = vld [vmem:[%s2342 + $0xbf8] sm:$0xff]
        %v2817 = vld [vmem:[%s2342 + $0xc00] sm:$0xff]
        %v2818 = vld [vmem:[%s2342 + $0xc08] sm:$0xff]
        %v2819 = vld [vmem:[%s2342 + $0xc10] sm:$0xff]
        %v2820 = vld [vmem:[%s2342 + $0xc18] sm:$0xff]
        %v2821 = vld [vmem:[%s2342 + $0xc20] sm:$0xff]
        %v2822 = vld [vmem:[%s2342 + $0xc28] sm:$0xff]
        %v2823 = vld [vmem:[%s2342 + $0xc30] sm:$0xff]
        %v2824 = vld [vmem:[%s2342 + $0xc38] sm:$0xff]
        %v2825 = vld [vmem:[%s2342 + $0xc40] sm:$0xff]
        %v2826 = vld [vmem:[%s2342 + $0xc48] sm:$0xff]
        %v2827 = vld [vmem:[%s2342 + $0xc50] sm:$0xff]
        %v2828 = vld [vmem:[%s2342 + $0xc58] sm:$0xff]
        %v2829 = vld [vmem:[%s2342 + $0xc60] sm:$0xff]
        %v2830 = vld [vmem:[%s2342 + $0xc68] sm:$0xff]
        %v2831 = vld [vmem:[%s2342 + $0xc70] sm:$0xff]
        %v2832 = vld [vmem:[%s2342 + $0xc78] sm:$0xff]
        %v2833 = vld [vmem:[%s2342 + $0xc80] sm:$0xff]
        %v2834 = vld [vmem:[%s2342 + $0xc88] sm:$0xff]
        %v2835 = vld [vmem:[%s2342 + $0xc90] sm:$0xff]
        %v2836 = vld [vmem:[%s2342 + $0xc98] sm:$0xff]
        %v2837 = vld [vmem:[%s2342 + $0xca0] sm:$0xff]
        %v2838 = vld [vmem:[%s2342 + $0xca8] sm:$0xff]
        %v2839 = vld [vmem:[%s2342 + $0xcb0] sm:$0xff]
        %v2840 = vld [vmem:[%s2342 + $0xcb8] sm:$0xff]
        %v2841 = vld [vmem:[%s2342 + $0xcc0] sm:$0xff]
        %v2842 = vld [vmem:[%s2342 + $0xcc8] sm:$0xff]
        %v2843 = vld [vmem:[%s2342 + $0xcd0] sm:$0xff]
        %v2844 = vld [vmem:[%s2342 + $0xcd8] sm:$0xff]
        %v2845 = vld [vmem:[%s2342 + $0xce0] sm:$0xff]
        %v2846 = vld [vmem:[%s2342 + $0xce8] sm:$0xff]
        %v2847 = vld [vmem:[%s2342 + $0xcf0] sm:$0xff]
        %v2848 = vld [vmem:[%s2342 + $0xcf8] sm:$0xff]
        %v2849 = vld [vmem:[%s2342 + $0xd00] sm:$0xff]
        %v2850 = vld [vmem:[%s2342 + $0xd08] sm:$0xff]
        %v2851 = vld [vmem:[%s2342 + $0xd10] sm:$0xff]
        %v2852 = vld [vmem:[%s2342 + $0xd18] sm:$0xff]
        %v2853 = vld [vmem:[%s2342 + $0xd20] sm:$0xff]
        %v2854 = vld [vmem:[%s2342 + $0xd28] sm:$0xff]
        %v2855 = vld [vmem:[%s2342 + $0xd30] sm:$0xff]
        %v2856 = vld [vmem:[%s2342 + $0xd38] sm:$0xff]
        %v2857 = vld [vmem:[%s2342 + $0xd40] sm:$0xff]
        %v2858 = vld [vmem:[%s2342 + $0xd48] sm:$0xff]
        %v2859 = vld [vmem:[%s2342 + $0xd50] sm:$0xff]
        %v2860 = vld [vmem:[%s2342 + $0xd58] sm:$0xff]
        %v2861 = vld [vmem:[%s2342 + $0xd60] sm:$0xff]
        %v2862 = vld [vmem:[%s2342 + $0xd68] sm:$0xff]
        %v2863 = vld [vmem:[%s2342 + $0xd70] sm:$0xff]
        %v2864 = vld [vmem:[%s2342 + $0xd78] sm:$0xff]
        %v2865 = vld [vmem:[%s2342 + $0xd80] sm:$0xff]
        %v2866 = vld [vmem:[%s2342 + $0xd88] sm:$0xff]
        %v2867 = vld [vmem:[%s2342 + $0xd90] sm:$0xff]
        %v2868 = vld [vmem:[%s2342 + $0xd98] sm:$0xff]
        %v2869 = vld [vmem:[%s2342 + $0xda0] sm:$0xff]
        %v2870 = vld [vmem:[%s2342 + $0xda8] sm:$0xff]
        %v2871 = vld [vmem:[%s2342 + $0xdb0] sm:$0xff]
        %v2872 = vld [vmem:[%s2342 + $0xdb8] sm:$0xff]
        %v2873 = vld [vmem:[%s2342 + $0xdc0] sm:$0xff]
        %v2874 = vld [vmem:[%s2342 + $0xdc8] sm:$0xff]
        %v2875 = vld [vmem:[%s2342 + $0xdd0] sm:$0xff]
        %v2876 = vld [vmem:[%s2342 + $0xdd8] sm:$0xff]
        %v2877 = vld [vmem:[%s2342 + $0xde0] sm:$0xff]
        %v2878 = vld [vmem:[%s2342 + $0xde8] sm:$0xff]
        %v2879 = vld [vmem:[%s2342 + $0xdf0] sm:$0xff]
        %v2880 = vld [vmem:[%s2342 + $0xdf8] sm:$0xff]
        %v2881 = vld [vmem:[%s2342 + $0xe00] sm:$0xff]
        %v2882 = vld [vmem:[%s2342 + $0xe08] sm:$0xff]
        %v2883 = vld [vmem:[%s2342 + $0xe10] sm:$0xff]
        %v2884 = vld [vmem:[%s2342 + $0xe18] sm:$0xff]
        %v2885 = vld [vmem:[%s2342 + $0xe20] sm:$0xff]
        %v2886 = vld [vmem:[%s2342 + $0xe28] sm:$0xff]
        %v2887 = vld [vmem:[%s2342 + $0xe30] sm:$0xff]
        %v2888 = vld [vmem:[%s2342 + $0xe38] sm:$0xff]
        %v2889 = vld [vmem:[%s2342 + $0xe40] sm:$0xff]
        %v2890 = vld [vmem:[%s2342 + $0xe48] sm:$0xff]
        %v2891 = vld [vmem:[%s2342 + $0xe50] sm:$0xff]
        %v2892 = vld [vmem:[%s2342 + $0xe58] sm:$0xff]
        %v2893 = vld [vmem:[%s2342 + $0xe60] sm:$0xff]
        %v2894 = vld [vmem:[%s2342 + $0xe68] sm:$0xff]
        %v2895 = vld [vmem:[%s2342 + $0xe70] sm:$0xff]
        %v2896 = vld [vmem:[%s2342 + $0xe78] sm:$0xff]
        %v2897 = vld [vmem:[%s2342 + $0xe80] sm:$0xff]
        %v2898 = vld [vmem:[%s2342 + $0xe88] sm:$0xff]
        %v2899 = vld [vmem:[%s2342 + $0xe90] sm:$0xff]
        %v2900 = vld [vmem:[%s2342 + $0xe98] sm:$0xff]
        %v2901 = vld [vmem:[%s2342 + $0xea0] sm:$0xff]
        %v2902 = vld [vmem:[%s2342 + $0xea8] sm:$0xff]
        %v2903 = vld [vmem:[%s2342 + $0xeb0] sm:$0xff]
        %v2904 = vld [vmem:[%s2342 + $0xeb8] sm:$0xff]
        %v2905 = vld [vmem:[%s2342 + $0xec0] sm:$0xff]
        %v2906 = vld [vmem:[%s2342 + $0xec8] sm:$0xff]
        %v2907 = vld [vmem:[%s2342 + $0xed0] sm:$0xff]
        %v2908 = vld [vmem:[%s2342 + $0xed8] sm:$0xff]
        %v2909 = vld [vmem:[%s2342 + $0xee0] sm:$0xff]
        %v2910 = vld [vmem:[%s2342 + $0xee8] sm:$0xff]
        %v2911 = vld [vmem:[%s2342 + $0xef0] sm:$0xff]
        %v2912 = vld [vmem:[%s2342 + $0xef8] sm:$0xff]
        %v2913 = vld [vmem:[%s2342 + $0xf00] sm:$0xff]
        %v2914 = vld [vmem:[%s2342 + $0xf08] sm:$0xff]
        %v2915 = vld [vmem:[%s2342 + $0xf10] sm:$0xff]
        %v2916 = vld [vmem:[%s2342 + $0xf18] sm:$0xff]
        %v2917 = vld [vmem:[%s2342 + $0xf20] sm:$0xff]
        %v2918 = vld [vmem:[%s2342 + $0xf28] sm:$0xff]
        %v2919 = vld [vmem:[%s2342 + $0xf30] sm:$0xff]
        %v2920 = vld [vmem:[%s2342 + $0xf38] sm:$0xff]
        %v2921 = vld [vmem:[%s2342 + $0xf40] sm:$0xff]
        %v2922 = vld [vmem:[%s2342 + $0xf48] sm:$0xff]
        %v2923 = vld [vmem:[%s2342 + $0xf50] sm:$0xff]
        %v2924 = vld [vmem:[%s2342 + $0xf58] sm:$0xff]
        %v2925 = vld [vmem:[%s2342 + $0xf60] sm:$0xff]
        %v2926 = vld [vmem:[%s2342 + $0xf68] sm:$0xff]
        %v2927 = vld [vmem:[%s2342 + $0xf70] sm:$0xff]
        %v2928 = vld [vmem:[%s2342 + $0xf78] sm:$0xff]
        %v2929 = vld [vmem:[%s2342 + $0xf80] sm:$0xff]
        %v2930 = vld [vmem:[%s2342 + $0xf88] sm:$0xff]
        %v2931 = vld [vmem:[%s2342 + $0xf90] sm:$0xff]
        %v2932 = vld [vmem:[%s2342 + $0xf98] sm:$0xff]
        %v2933 = vld [vmem:[%s2342 + $0xfa0] sm:$0xff]
        %v2934 = vld [vmem:[%s2342 + $0xfa8] sm:$0xff]
        %v2935 = vld [vmem:[%s2342 + $0xfb0] sm:$0xff]
        %v2936 = vld [vmem:[%s2342 + $0xfb8] sm:$0xff]
        %v2937 = vld [vmem:[%s2342 + $0xfc0] sm:$0xff]
        %v2938 = vld [vmem:[%s2342 + $0xfc8] sm:$0xff]
        %v2939 = vld [vmem:[%s2342 + $0xfd0] sm:$0xff]
        %v2940 = vld [vmem:[%s2342 + $0xfd8] sm:$0xff]
        %v2941 = vld [vmem:[%s2342 + $0xfe0] sm:$0xff]
        %v2942 = vld [vmem:[%s2342 + $0xfe8] sm:$0xff]
        %v2943 = vld [vmem:[%s2342 + $0xff0] sm:$0xff]
        %v2944 = vld [vmem:[%s2342 + $0xff8] sm:$0xff]
        %v2945 = vld [vmem:[%s2342 + $0x1000] sm:$0xff]
        %v2946 = vld [vmem:[%s2342 + $0x1008] sm:$0xff]
        %v2947 = vld [vmem:[%s2342 + $0x1010] sm:$0xff]
        %v2948 = vld [vmem:[%s2342 + $0x1018] sm:$0xff]
        %v2949 = vld [vmem:[%s2342 + $0x1020] sm:$0xff]
        %v2950 = vld [vmem:[%s2342 + $0x1028] sm:$0xff]
        %v2951 = vld [vmem:[%s2342 + $0x1030] sm:$0xff]
        %v2952 = vld [vmem:[%s2342 + $0x1038] sm:$0xff]
        %v2953 = vld [vmem:[%s2342 + $0x1040] sm:$0xff]
        %v2954 = vld [vmem:[%s2342 + $0x1048] sm:$0xff]
        %v2955 = vld [vmem:[%s2342 + $0x1050] sm:$0xff]
        %v2956 = vld [vmem:[%s2342 + $0x1058] sm:$0xff]
        %v2957 = vld [vmem:[%s2342 + $0x1060] sm:$0xff]
        %v2958 = vld [vmem:[%s2342 + $0x1068] sm:$0xff]
        %v2959 = vld [vmem:[%s2342 + $0x1070] sm:$0xff]
        %v2960 = vld [vmem:[%s2342 + $0x1078] sm:$0xff]
        %v2961 = vld [vmem:[%s2342 + $0x1080] sm:$0xff]
        %v2962 = vld [vmem:[%s2342 + $0x1088] sm:$0xff]
        %v2963 = vld [vmem:[%s2342 + $0x1090] sm:$0xff]
        %v2964 = vld [vmem:[%s2342 + $0x1098] sm:$0xff]
        %v2965 = vld [vmem:[%s2342 + $0x10a0] sm:$0xff]
        %v2966 = vld [vmem:[%s2342 + $0x10a8] sm:$0xff]
        %v2967 = vld [vmem:[%s2342 + $0x10b0] sm:$0xff]
        %v2968 = vld [vmem:[%s2342 + $0x10b8] sm:$0xff]
        %v2969 = vld [vmem:[%s2342 + $0x10c0] sm:$0xff]
        %v2970 = vld [vmem:[%s2342 + $0x10c8] sm:$0xff]
        %v2971 = vld [vmem:[%s2342 + $0x10d0] sm:$0xff]
        %v2972 = vld [vmem:[%s2342 + $0x10d8] sm:$0xff]
        %v2973 = vld [vmem:[%s2342 + $0x10e0] sm:$0xff]
        %v2974 = vld [vmem:[%s2342 + $0x10e8] sm:$0xff]
        %v2975 = vld [vmem:[%s2342 + $0x10f0] sm:$0xff]
        %v2976 = vld [vmem:[%s2342 + $0x10f8] sm:$0xff]
        %v2977 = vld [vmem:[%s2342 + $0x1100] sm:$0xff]
        %v2978 = vld [vmem:[%s2342 + $0x1108] sm:$0xff]
        %v2979 = vld [vmem:[%s2342 + $0x1110] sm:$0xff]
        %v2980 = vld [vmem:[%s2342 + $0x1118] sm:$0xff]
        %v2981 = vld [vmem:[%s2342 + $0x1120] sm:$0xff]
        %v2982 = vld [vmem:[%s2342 + $0x1128] sm:$0xff]
        %v2983 = vld [vmem:[%s2342 + $0x1130] sm:$0xff]
        %v2984 = vld [vmem:[%s2342 + $0x1138] sm:$0xff]
        %v2985 = vld [vmem:[%s2342 + $0x1140] sm:$0xff]
        %v2986 = vld [vmem:[%s2342 + $0x1148] sm:$0xff]
        %v2987 = vld [vmem:[%s2342 + $0x1150] sm:$0xff]
        %v2988 = vld [vmem:[%s2342 + $0x1158] sm:$0xff]
        %v2989 = vld [vmem:[%s2342 + $0x1160] sm:$0xff]
        %v2990 = vld [vmem:[%s2342 + $0x1168] sm:$0xff]
        %v2991 = vld [vmem:[%s2342 + $0x1170] sm:$0xff]
        %v2992 = vld [vmem:[%s2342 + $0x1178] sm:$0xff]
        %v2993 = vld [vmem:[%s2342 + $0x1180] sm:$0xff]
        %v2994 = vld [vmem:[%s2342 + $0x1188] sm:$0xff]
        %v2995 = vld [vmem:[%s2342 + $0x1190] sm:$0xff]
        %v2996 = vld [vmem:[%s2342 + $0x1198] sm:$0xff]
        %v2997 = vld [vmem:[%s2342 + $0x11a0] sm:$0xff]
        %v2998 = vld [vmem:[%s2342 + $0x11a8] sm:$0xff]
        %v2999 = vld [vmem:[%s2342 + $0x11b0] sm:$0xff]
        %v3000 = vld [vmem:[%s2342 + $0x11b8] sm:$0xff]
        %v3001 = vld [vmem:[%s2342 + $0x11c0] sm:$0xff]
        %v3002 = vld [vmem:[%s2342 + $0x11c8] sm:$0xff]
        %v3003 = vld [vmem:[%s2342 + $0x11d0] sm:$0xff]
        %v3004 = vld [vmem:[%s2342 + $0x11d8] sm:$0xff]
        %v3005 = vld [vmem:[%s2342 + $0x11e0] sm:$0xff]
        %v3006 = vld [vmem:[%s2342 + $0x11e8] sm:$0xff]
        %v3007 = vld [vmem:[%s2342 + $0x11f0] sm:$0xff]
        %v3008 = vld [vmem:[%s2342 + $0x11f8] sm:$0xff]
        %v3009 = vld [vmem:[%s2342 + $0x1200] sm:$0xff]
        %v3010 = vld [vmem:[%s2342 + $0x1208] sm:$0xff]
        %v3011 = vld [vmem:[%s2342 + $0x1210] sm:$0xff]
        %v3012 = vld [vmem:[%s2342 + $0x1218] sm:$0xff]
        %v3013 = vld [vmem:[%s2342 + $0x1220] sm:$0xff]
        %v3014 = vld [vmem:[%s2342 + $0x1228] sm:$0xff]
        %v3015 = vld [vmem:[%s2342 + $0x1230] sm:$0xff]
        %v3016 = vld [vmem:[%s2342 + $0x1238] sm:$0xff]
        %v3017 = vld [vmem:[%s2342 + $0x1240] sm:$0xff]
        %v3018 = vld [vmem:[%s2342 + $0x1248] sm:$0xff]
        %v3019 = vld [vmem:[%s2342 + $0x1250] sm:$0xff]
        %v3020 = vld [vmem:[%s2342 + $0x1258] sm:$0xff]
        %v3021 = vld [vmem:[%s2342 + $0x1260] sm:$0xff]
        %v3022 = vld [vmem:[%s2342 + $0x1268] sm:$0xff]
        %v3023 = vld [vmem:[%s2342 + $0x1270] sm:$0xff]
        %v3024 = vld [vmem:[%s2342 + $0x1278] sm:$0xff]
        %v3025 = vld [vmem:[%s2342 + $0x1280] sm:$0xff]
        %v3026 = vld [vmem:[%s2342 + $0x1288] sm:$0xff]
        %v3027 = vld [vmem:[%s2342 + $0x1290] sm:$0xff]
        %v3028 = vld [vmem:[%s2342 + $0x1298] sm:$0xff]
        %v3029 = vld [vmem:[%s2342 + $0x12a0] sm:$0xff]
        %v3030 = vld [vmem:[%s2342 + $0x12a8] sm:$0xff]
        %v3031 = vld [vmem:[%s2342 + $0x12b0] sm:$0xff]
        %v3032 = vld [vmem:[%s2342 + $0x12b8] sm:$0xff]
        %v3033 = vld [vmem:[%s2342 + $0x12c0] sm:$0xff]
        %v3034 = vld [vmem:[%s2342 + $0x12c8] sm:$0xff]
        %v3035 = vld [vmem:[%s2342 + $0x12d0] sm:$0xff]
        %v3036 = vld [vmem:[%s2342 + $0x12d8] sm:$0xff]
        %v3037 = vld [vmem:[%s2342 + $0x12e0] sm:$0xff]
        %v3038 = vld [vmem:[%s2342 + $0x12e8] sm:$0xff]
        %v3039 = vld [vmem:[%s2342 + $0x12f0] sm:$0xff]
        %v3040 = vld [vmem:[%s2342 + $0x12f8] sm:$0xff]
        %v3041 = vld [vmem:[%s2342 + $0x1300] sm:$0xff]
        %v3042 = vld [vmem:[%s2342 + $0x1308] sm:$0xff]
        %v3043 = vld [vmem:[%s2342 + $0x1310] sm:$0xff]
        %v3044 = vld [vmem:[%s2342 + $0x1318] sm:$0xff]
        %v3045 = vld [vmem:[%s2342 + $0x1320] sm:$0xff]
        %v3046 = vld [vmem:[%s2342 + $0x1328] sm:$0xff]
        %v3047 = vld [vmem:[%s2342 + $0x1330] sm:$0xff]
        %v3048 = vld [vmem:[%s2342 + $0x1338] sm:$0xff]
        %v3049 = vld [vmem:[%s2342 + $0x1340] sm:$0xff]
        %v3050 = vld [vmem:[%s2342 + $0x1348] sm:$0xff]
        %v3051 = vld [vmem:[%s2342 + $0x1350] sm:$0xff]
        %v3052 = vld [vmem:[%s2342 + $0x1358] sm:$0xff]
        %v3053 = vld [vmem:[%s2342 + $0x1360] sm:$0xff]
        %v3054 = vld [vmem:[%s2342 + $0x1368] sm:$0xff]
        %v3055 = vld [vmem:[%s2342 + $0x1370] sm:$0xff]
        %v3056 = vld [vmem:[%s2342 + $0x1378] sm:$0xff]
        %v3057 = vld [vmem:[%s2342 + $0x1380] sm:$0xff]
        %v3058 = vld [vmem:[%s2342 + $0x1388] sm:$0xff]
        %v3059 = vld [vmem:[%s2342 + $0x1390] sm:$0xff]
        %v3060 = vld [vmem:[%s2342 + $0x1398] sm:$0xff]
        %v3061 = vld [vmem:[%s2342 + $0x13a0] sm:$0xff]
        %v3062 = vld [vmem:[%s2342 + $0x13a8] sm:$0xff]
        %v3063 = vld [vmem:[%s2342 + $0x13b0] sm:$0xff]
        %v3064 = vld [vmem:[%s2342 + $0x13b8] sm:$0xff]
        %v3065 = vld [vmem:[%s2342 + $0x13c0] sm:$0xff]
        %v3066 = vld [vmem:[%s2342 + $0x13c8] sm:$0xff]
        %v3067 = vld [vmem:[%s2342 + $0x13d0] sm:$0xff]
        %v3068 = vld [vmem:[%s2342 + $0x13d8] sm:$0xff]
        %v3069 = vld [vmem:[%s2342 + $0x13e0] sm:$0xff]
        %v3070 = vld [vmem:[%s2342 + $0x13e8] sm:$0xff]
        %v3071 = vld [vmem:[%s2342 + $0x13f0] sm:$0xff]
        %v3072 = vld [vmem:[%s2342 + $0x13f8] sm:$0xff]
        %v3073 = vld [vmem:[%s2342 + $0x1400] sm:$0xff]
        %v3074 = vld [vmem:[%s2342 + $0x1408] sm:$0xff]
        %v3075 = vld [vmem:[%s2342 + $0x1410] sm:$0xff]
        %v3076 = vld [vmem:[%s2342 + $0x1418] sm:$0xff]
        %v3077 = vld [vmem:[%s2342 + $0x1420] sm:$0xff]
        %v3078 = vld [vmem:[%s2342 + $0x1428] sm:$0xff]
        %v3079 = vld [vmem:[%s2342 + $0x1430] sm:$0xff]
        %v3080 = vld [vmem:[%s2342 + $0x1438] sm:$0xff]
        %v3081 = vld [vmem:[%s2342 + $0x1440] sm:$0xff]
        %v3082 = vld [vmem:[%s2342 + $0x1448] sm:$0xff]
        %v3083 = vld [vmem:[%s2342 + $0x1450] sm:$0xff]
        %v3084 = vld [vmem:[%s2342 + $0x1458] sm:$0xff]
        %v3085 = vld [vmem:[%s2342 + $0x1460] sm:$0xff]
        %v3086 = vld [vmem:[%s2342 + $0x1468] sm:$0xff]
        %v3087 = vld [vmem:[%s2342 + $0x1470] sm:$0xff]
        %v3088 = vld [vmem:[%s2342 + $0x1478] sm:$0xff]
        %v3089 = vld [vmem:[%s2342 + $0x1480] sm:$0xff]
        %v3090 = vld [vmem:[%s2342 + $0x1488] sm:$0xff]
        %v3091 = vld [vmem:[%s2342 + $0x1490] sm:$0xff]
        %v3092 = vld [vmem:[%s2342 + $0x1498] sm:$0xff]
        %v3093 = vld [vmem:[%s2342 + $0x14a0] sm:$0xff]
        %v3094 = vld [vmem:[%s2342 + $0x14a8] sm:$0xff]
        %v3095 = vld [vmem:[%s2342 + $0x14b0] sm:$0xff]
        %v3096 = vld [vmem:[%s2342 + $0x14b8] sm:$0xff]
        %v3097 = vld [vmem:[%s2342 + $0x14c0] sm:$0xff]
        %v3098 = vld [vmem:[%s2342 + $0x14c8] sm:$0xff]
        %v3099 = vld [vmem:[%s2342 + $0x14d0] sm:$0xff]
        %v3100 = vld [vmem:[%s2342 + $0x14d8] sm:$0xff]
        %v3101 = vld [vmem:[%s2342 + $0x14e0] sm:$0xff]
        %v3102 = vld [vmem:[%s2342 + $0x14e8] sm:$0xff]
        %v3103 = vld [vmem:[%s2342 + $0x14f0] sm:$0xff]
        %v3104 = vld [vmem:[%s2342 + $0x14f8] sm:$0xff]
        %v3105 = vld [vmem:[%s2342 + $0x1500] sm:$0xff]
        %v3106 = vld [vmem:[%s2342 + $0x1508] sm:$0xff]
        %v3107 = vld [vmem:[%s2342 + $0x1510] sm:$0xff]
        %v3108 = vld [vmem:[%s2342 + $0x1518] sm:$0xff]
        %v3109 = vld [vmem:[%s2342 + $0x1520] sm:$0xff]
        %v3110 = vld [vmem:[%s2342 + $0x1528] sm:$0xff]
        %v3111 = vld [vmem:[%s2342 + $0x1530] sm:$0xff]
        %v3112 = vld [vmem:[%s2342 + $0x1538] sm:$0xff]
        %v3113 = vld [vmem:[%s2342 + $0x1540] sm:$0xff]
        %v3114 = vld [vmem:[%s2342 + $0x1548] sm:$0xff]
        %v3115 = vld [vmem:[%s2342 + $0x1550] sm:$0xff]
        %v3116 = vld [vmem:[%s2342 + $0x1558] sm:$0xff]
        %v3117 = vld [vmem:[%s2342 + $0x1560] sm:$0xff]
        %v3118 = vld [vmem:[%s2342 + $0x1568] sm:$0xff]
        %v3119 = vld [vmem:[%s2342 + $0x1570] sm:$0xff]
        %v3120 = vld [vmem:[%s2342 + $0x1578] sm:$0xff]
        %v3121 = vld [vmem:[%s2342 + $0x1580] sm:$0xff]
        %v3122 = vld [vmem:[%s2342 + $0x1588] sm:$0xff]
        %v3123 = vld [vmem:[%s2342 + $0x1590] sm:$0xff]
        %v3124 = vld [vmem:[%s2342 + $0x1598] sm:$0xff]
        %v3125 = vld [vmem:[%s2342 + $0x15a0] sm:$0xff]
        %v3126 = vld [vmem:[%s2342 + $0x15a8] sm:$0xff]
        %v3127 = vld [vmem:[%s2342 + $0x15b0] sm:$0xff]
        %v3128 = vld [vmem:[%s2342 + $0x15b8] sm:$0xff]
        %v3129 = vld [vmem:[%s2342 + $0x15c0] sm:$0xff]
        %v3130 = vld [vmem:[%s2342 + $0x15c8] sm:$0xff]
        %v3131 = vld [vmem:[%s2342 + $0x15d0] sm:$0xff]
        %v3132 = vld [vmem:[%s2342 + $0x15d8] sm:$0xff]
        %v3133 = vld [vmem:[%s2342 + $0x15e0] sm:$0xff]
        %v3134 = vld [vmem:[%s2342 + $0x15e8] sm:$0xff]
        %v3135 = vld [vmem:[%s2342 + $0x15f0] sm:$0xff]
        %v3136 = vld [vmem:[%s2342 + $0x15f8] sm:$0xff]
        %v3137 = vld [vmem:[%s2342 + $0x1600] sm:$0xff]
        %v3138 = vld [vmem:[%s2342 + $0x1608] sm:$0xff]
        %v3139 = vld [vmem:[%s2342 + $0x1610] sm:$0xff]
        %v3140 = vld [vmem:[%s2342 + $0x1618] sm:$0xff]
        %v3141 = vld [vmem:[%s2342 + $0x1620] sm:$0xff]
        %v3142 = vld [vmem:[%s2342 + $0x1628] sm:$0xff]
        %v3143 = vld [vmem:[%s2342 + $0x1630] sm:$0xff]
        %v3144 = vld [vmem:[%s2342 + $0x1638] sm:$0xff]
        %v3145 = vld [vmem:[%s2342 + $0x1640] sm:$0xff]
        %v3146 = vld [vmem:[%s2342 + $0x1648] sm:$0xff]
        %v3147 = vld [vmem:[%s2342 + $0x1650] sm:$0xff]
        %v3148 = vld [vmem:[%s2342 + $0x1658] sm:$0xff]
        %v3149 = vld [vmem:[%s2342 + $0x1660] sm:$0xff]
        %v3150 = vld [vmem:[%s2342 + $0x1668] sm:$0xff]
        %v3151 = vld [vmem:[%s2342 + $0x1670] sm:$0xff]
        %v3152 = vld [vmem:[%s2342 + $0x1678] sm:$0xff]
        %v3153 = vld [vmem:[%s2342 + $0x1680] sm:$0xff]
        %v3154 = vld [vmem:[%s2342 + $0x1688] sm:$0xff]
        %v3155 = vld [vmem:[%s2342 + $0x1690] sm:$0xff]
        %v3156 = vld [vmem:[%s2342 + $0x1698] sm:$0xff]
        %v3157 = vld [vmem:[%s2342 + $0x16a0] sm:$0xff]
        %v3158 = vld [vmem:[%s2342 + $0x16a8] sm:$0xff]
        %v3159 = vld [vmem:[%s2342 + $0x16b0] sm:$0xff]
        %v3160 = vld [vmem:[%s2342 + $0x16b8] sm:$0xff]
        %v3161 = vld [vmem:[%s2342 + $0x16c0] sm:$0xff]
        %v3162 = vld [vmem:[%s2342 + $0x16c8] sm:$0xff]
        %v3163 = vld [vmem:[%s2342 + $0x16d0] sm:$0xff]
        %v3164 = vld [vmem:[%s2342 + $0x16d8] sm:$0xff]
        %v3165 = vld [vmem:[%s2342 + $0x16e0] sm:$0xff]
        %v3166 = vld [vmem:[%s2342 + $0x16e8] sm:$0xff]
        %v3167 = vld [vmem:[%s2342 + $0x16f0] sm:$0xff]
        %v3168 = vld [vmem:[%s2342 + $0x16f8] sm:$0xff]
        %v3169 = vld [vmem:[%s2342 + $0x1700] sm:$0xff]
        %v3170 = vld [vmem:[%s2342 + $0x1708] sm:$0xff]
        %v3171 = vld [vmem:[%s2342 + $0x1710] sm:$0xff]
        %v3172 = vld [vmem:[%s2342 + $0x1718] sm:$0xff]
        %v3173 = vld [vmem:[%s2342 + $0x1720] sm:$0xff]
        %v3174 = vld [vmem:[%s2342 + $0x1728] sm:$0xff]
        %v3175 = vld [vmem:[%s2342 + $0x1730] sm:$0xff]
        %v3176 = vld [vmem:[%s2342 + $0x1738] sm:$0xff]
        %v3177 = vld [vmem:[%s2342 + $0x1740] sm:$0xff]
        %v3178 = vld [vmem:[%s2342 + $0x1748] sm:$0xff]
        %v3179 = vld [vmem:[%s2342 + $0x1750] sm:$0xff]
        %v3180 = vld [vmem:[%s2342 + $0x1758] sm:$0xff]
        %v3181 = vld [vmem:[%s2342 + $0x1760] sm:$0xff]
        %v3182 = vld [vmem:[%s2342 + $0x1768] sm:$0xff]
        %v3183 = vld [vmem:[%s2342 + $0x1770] sm:$0xff]
        %v3184 = vld [vmem:[%s2342 + $0x1778] sm:$0xff]
        %v3185 = vld [vmem:[%s2342 + $0x1780] sm:$0xff]
        %v3186 = vld [vmem:[%s2342 + $0x1788] sm:$0xff]
        %v3187 = vld [vmem:[%s2342 + $0x1790] sm:$0xff]
        %v3188 = vld [vmem:[%s2342 + $0x1798] sm:$0xff]
        %v3189 = vld [vmem:[%s2342 + $0x17a0] sm:$0xff]
        %v3190 = vld [vmem:[%s2342 + $0x17a8] sm:$0xff]
        %v3191 = vld [vmem:[%s2342 + $0x17b0] sm:$0xff]
        %v3192 = vld [vmem:[%s2342 + $0x17b8] sm:$0xff]
        %v3193 = vld [vmem:[%s2342 + $0x17c0] sm:$0xff]
        %v3194 = vld [vmem:[%s2342 + $0x17c8] sm:$0xff]
        %v3195 = vld [vmem:[%s2342 + $0x17d0] sm:$0xff]
        %v3196 = vld [vmem:[%s2342 + $0x17d8] sm:$0xff]
        %v3197 = vld [vmem:[%s2342 + $0x17e0] sm:$0xff]
        %v3198 = vld [vmem:[%s2342 + $0x17e8] sm:$0xff]
        %v3199 = vld [vmem:[%s2342 + $0x17f0] sm:$0xff]
        %v3200 = vld [vmem:[%s2342 + $0x17f8] sm:$0xff]
        %v3201 = vld [vmem:[%s2342 + $0x1800] sm:$0xff]
        %v3202 = vld [vmem:[%s2342 + $0x1808] sm:$0xff]
        %v3203 = vld [vmem:[%s2342 + $0x1810] sm:$0xff]
        %v3204 = vld [vmem:[%s2342 + $0x1818] sm:$0xff]
        %v3205 = vld [vmem:[%s2342 + $0x1820] sm:$0xff]
        %v3206 = vld [vmem:[%s2342 + $0x1828] sm:$0xff]
        %v3207 = vld [vmem:[%s2342 + $0x1830] sm:$0xff]
        %v3208 = vld [vmem:[%s2342 + $0x1838] sm:$0xff]
        %v3209 = vld [vmem:[%s2342 + $0x1840] sm:$0xff]
        %v3210 = vld [vmem:[%s2342 + $0x1848] sm:$0xff]
        %v3211 = vld [vmem:[%s2342 + $0x1850] sm:$0xff]
        %v3212 = vld [vmem:[%s2342 + $0x1858] sm:$0xff]
        %v3213 = vld [vmem:[%s2342 + $0x1860] sm:$0xff]
        %v3214 = vld [vmem:[%s2342 + $0x1868] sm:$0xff]
        %v3215 = vld [vmem:[%s2342 + $0x1870] sm:$0xff]
        %v3216 = vld [vmem:[%s2342 + $0x1878] sm:$0xff]
        %v3217 = vld [vmem:[%s2342 + $0x1880] sm:$0xff]
        %v3218 = vld [vmem:[%s2342 + $0x1888] sm:$0xff]
        %v3219 = vld [vmem:[%s2342 + $0x1890] sm:$0xff]
        %v3220 = vld [vmem:[%s2342 + $0x1898] sm:$0xff]
        %v3221 = vld [vmem:[%s2342 + $0x18a0] sm:$0xff]
        %v3222 = vld [vmem:[%s2342 + $0x18a8] sm:$0xff]
        %v3223 = vld [vmem:[%s2342 + $0x18b0] sm:$0xff]
        %v3224 = vld [vmem:[%s2342 + $0x18b8] sm:$0xff]
        %v3225 = vld [vmem:[%s2342 + $0x18c0] sm:$0xff]
        %v3226 = vld [vmem:[%s2342 + $0x18c8] sm:$0xff]
        %v3227 = vld [vmem:[%s2342 + $0x18d0] sm:$0xff]
        %v3228 = vld [vmem:[%s2342 + $0x18d8] sm:$0xff]
        %v3229 = vld [vmem:[%s2342 + $0x18e0] sm:$0xff]
        %v3230 = vld [vmem:[%s2342 + $0x18e8] sm:$0xff]
        %v3231 = vld [vmem:[%s2342 + $0x18f0] sm:$0xff]
        %v3232 = vld [vmem:[%s2342 + $0x18f8] sm:$0xff]
        %v3233 = vld [vmem:[%s2342 + $0x1900] sm:$0xff]
        %v3234 = vld [vmem:[%s2342 + $0x1908] sm:$0xff]
        %v3235 = vld [vmem:[%s2342 + $0x1910] sm:$0xff]
        %v3236 = vld [vmem:[%s2342 + $0x1918] sm:$0xff]
        %v3237 = vld [vmem:[%s2342 + $0x1920] sm:$0xff]
        %v3238 = vld [vmem:[%s2342 + $0x1928] sm:$0xff]
        %v3239 = vld [vmem:[%s2342 + $0x1930] sm:$0xff]
        %v3240 = vld [vmem:[%s2342 + $0x1938] sm:$0xff]
        %v3241 = vld [vmem:[%s2342 + $0x1940] sm:$0xff]
        %v3242 = vld [vmem:[%s2342 + $0x1948] sm:$0xff]
        %v3243 = vld [vmem:[%s2342 + $0x1950] sm:$0xff]
        %v3244 = vld [vmem:[%s2342 + $0x1958] sm:$0xff]
        %v3245 = vld [vmem:[%s2342 + $0x1960] sm:$0xff]
        %v3246 = vld [vmem:[%s2342 + $0x1968] sm:$0xff]
        %v3247 = vld [vmem:[%s2342 + $0x1970] sm:$0xff]
        %v3248 = vld [vmem:[%s2342 + $0x1978] sm:$0xff]
        %v3249 = vld [vmem:[%s2342 + $0x1980] sm:$0xff]
        %v3250 = vld [vmem:[%s2342 + $0x1988] sm:$0xff]
        %v3251 = vld [vmem:[%s2342 + $0x1990] sm:$0xff]
        %v3252 = vld [vmem:[%s2342 + $0x1998] sm:$0xff]
        %v3253 = vld [vmem:[%s2342 + $0x19a0] sm:$0xff]
        %v3254 = vld [vmem:[%s2342 + $0x19a8] sm:$0xff]
        %v3255 = vld [vmem:[%s2342 + $0x19b0] sm:$0xff]
        %v3256 = vld [vmem:[%s2342 + $0x19b8] sm:$0xff]
        %v3257 = vld [vmem:[%s2342 + $0x19c0] sm:$0xff]
        %v3258 = vld [vmem:[%s2342 + $0x19c8] sm:$0xff]
        %v3259 = vld [vmem:[%s2342 + $0x19d0] sm:$0xff]
        %v3260 = vld [vmem:[%s2342 + $0x19d8] sm:$0xff]
        %v3261 = vld [vmem:[%s2342 + $0x19e0] sm:$0xff]
        %v3262 = vld [vmem:[%s2342 + $0x19e8] sm:$0xff]
        %v3263 = vld [vmem:[%s2342 + $0x19f0] sm:$0xff]
        %v3264 = vld [vmem:[%s2342 + $0x19f8] sm:$0xff]
        %v3265 = vld [vmem:[%s2342 + $0x1a00] sm:$0xff]
        %v3266 = vld [vmem:[%s2342 + $0x1a08] sm:$0xff]
        %v3267 = vld [vmem:[%s2342 + $0x1a10] sm:$0xff]
        %v3268 = vld [vmem:[%s2342 + $0x1a18] sm:$0xff]
        %v3269 = vld [vmem:[%s2342 + $0x1a20] sm:$0xff]
        %v3270 = vld [vmem:[%s2342 + $0x1a28] sm:$0xff]
        %v3271 = vld [vmem:[%s2342 + $0x1a30] sm:$0xff]
        %v3272 = vld [vmem:[%s2342 + $0x1a38] sm:$0xff]
        %v3273 = vld [vmem:[%s2342 + $0x1a40] sm:$0xff]
        %v3274 = vld [vmem:[%s2342 + $0x1a48] sm:$0xff]
        %v3275 = vld [vmem:[%s2342 + $0x1a50] sm:$0xff]
        %v3276 = vld [vmem:[%s2342 + $0x1a58] sm:$0xff]
        %v3277 = vld [vmem:[%s2342 + $0x1a60] sm:$0xff]
        %v3278 = vld [vmem:[%s2342 + $0x1a68] sm:$0xff]
        %v3279 = vld [vmem:[%s2342 + $0x1a70] sm:$0xff]
        %v3280 = vld [vmem:[%s2342 + $0x1a78] sm:$0xff]
        %v3281 = vld [vmem:[%s2342 + $0x1a80] sm:$0xff]
        %v3282 = vld [vmem:[%s2342 + $0x1a88] sm:$0xff]
        %v3283 = vld [vmem:[%s2342 + $0x1a90] sm:$0xff]
        %v3284 = vld [vmem:[%s2342 + $0x1a98] sm:$0xff]
        %v3285 = vld [vmem:[%s2342 + $0x1aa0] sm:$0xff]
        %v3286 = vld [vmem:[%s2342 + $0x1aa8] sm:$0xff]
        %v3287 = vld [vmem:[%s2342 + $0x1ab0] sm:$0xff]
        %v3288 = vld [vmem:[%s2342 + $0x1ab8] sm:$0xff]
        %v3289 = vld [vmem:[%s2342 + $0x1ac0] sm:$0xff]
        %v3290 = vld [vmem:[%s2342 + $0x1ac8] sm:$0xff]
        %v3291 = vld [vmem:[%s2342 + $0x1ad0] sm:$0xff]
        %v3292 = vld [vmem:[%s2342 + $0x1ad8] sm:$0xff]
        %v3293 = vld [vmem:[%s2342 + $0x1ae0] sm:$0xff]
        %v3294 = vld [vmem:[%s2342 + $0x1ae8] sm:$0xff]
        %v3295 = vld [vmem:[%s2342 + $0x1af0] sm:$0xff]
        %v3296 = vld [vmem:[%s2342 + $0x1af8] sm:$0xff]
        %v3297 = vld [vmem:[%s2342 + $0x1b00] sm:$0xff]
        %v3298 = vld [vmem:[%s2342 + $0x1b08] sm:$0xff]
        %v3299 = vld [vmem:[%s2342 + $0x1b10] sm:$0xff]
        %v3300 = vld [vmem:[%s2342 + $0x1b18] sm:$0xff]
        %v3301 = vld [vmem:[%s2342 + $0x1b20] sm:$0xff]
        %v3302 = vld [vmem:[%s2342 + $0x1b28] sm:$0xff]
        %v3303 = vld [vmem:[%s2342 + $0x1b30] sm:$0xff]
        %v3304 = vld [vmem:[%s2342 + $0x1b38] sm:$0xff]
        %v3305 = vld [vmem:[%s2342 + $0x1b40] sm:$0xff]
        %v3306 = vld [vmem:[%s2342 + $0x1b48] sm:$0xff]
        %v3307 = vld [vmem:[%s2342 + $0x1b50] sm:$0xff]
        %v3308 = vld [vmem:[%s2342 + $0x1b58] sm:$0xff]
        %v3309 = vld [vmem:[%s2342 + $0x1b60] sm:$0xff]
        %v3310 = vld [vmem:[%s2342 + $0x1b68] sm:$0xff]
        %v3311 = vld [vmem:[%s2342 + $0x1b70] sm:$0xff]
        %v3312 = vld [vmem:[%s2342 + $0x1b78] sm:$0xff]
        %v3313 = vld [vmem:[%s2342 + $0x1b80] sm:$0xff]
        %v3314 = vld [vmem:[%s2342 + $0x1b88] sm:$0xff]
        %v3315 = vld [vmem:[%s2342 + $0x1b90] sm:$0xff]
        %v3316 = vld [vmem:[%s2342 + $0x1b98] sm:$0xff]
        %v3317 = vld [vmem:[%s2342 + $0x1ba0] sm:$0xff]
        %v3318 = vld [vmem:[%s2342 + $0x1ba8] sm:$0xff]
        %v3319 = vld [vmem:[%s2342 + $0x1bb0] sm:$0xff]
        %v3320 = vld [vmem:[%s2342 + $0x1bb8] sm:$0xff]
        %v3321 = vld [vmem:[%s2342 + $0x1bc0] sm:$0xff]
        %v3322 = vld [vmem:[%s2342 + $0x1bc8] sm:$0xff]
        %v3323 = vld [vmem:[%s2342 + $0x1bd0] sm:$0xff]
        %v3324 = vld [vmem:[%s2342 + $0x1bd8] sm:$0xff]
        %v3325 = vld [vmem:[%s2342 + $0x1be0] sm:$0xff]
        %v3326 = vld [vmem:[%s2342 + $0x1be8] sm:$0xff]
        %v3327 = vld [vmem:[%s2342 + $0x1bf0] sm:$0xff]
        %v3328 = vld [vmem:[%s2342 + $0x1bf8] sm:$0xff]
        %v3329 = vld [vmem:[%s2342 + $0x1c00] sm:$0xff]
        %v3330 = vld [vmem:[%s2342 + $0x1c08] sm:$0xff]
        %v3331 = vld [vmem:[%s2342 + $0x1c10] sm:$0xff]
        %v3332 = vld [vmem:[%s2342 + $0x1c18] sm:$0xff]
        %v3333 = vld [vmem:[%s2342 + $0x1c20] sm:$0xff]
        %v3334 = vld [vmem:[%s2342 + $0x1c28] sm:$0xff]
        %v3335 = vld [vmem:[%s2342 + $0x1c30] sm:$0xff]
        %v3336 = vld [vmem:[%s2342 + $0x1c38] sm:$0xff]
        %v3337 = vld [vmem:[%s2342 + $0x1c40] sm:$0xff]
        %v3338 = vld [vmem:[%s2342 + $0x1c48] sm:$0xff]
        %v3339 = vld [vmem:[%s2342 + $0x1c50] sm:$0xff]
        %v3340 = vld [vmem:[%s2342 + $0x1c58] sm:$0xff]
        %v3341 = vld [vmem:[%s2342 + $0x1c60] sm:$0xff]
        %v3342 = vld [vmem:[%s2342 + $0x1c68] sm:$0xff]
        %v3343 = vld [vmem:[%s2342 + $0x1c70] sm:$0xff]
        %v3344 = vld [vmem:[%s2342 + $0x1c78] sm:$0xff]
        %v3345 = vld [vmem:[%s2342 + $0x1c80] sm:$0xff]
        %v3346 = vld [vmem:[%s2342 + $0x1c88] sm:$0xff]
        %v3347 = vld [vmem:[%s2342 + $0x1c90] sm:$0xff]
        %v3348 = vld [vmem:[%s2342 + $0x1c98] sm:$0xff]
        %v3349 = vld [vmem:[%s2342 + $0x1ca0] sm:$0xff]
        %v3350 = vld [vmem:[%s2342 + $0x1ca8] sm:$0xff]
        %v3351 = vld [vmem:[%s2342 + $0x1cb0] sm:$0xff]
        %v3352 = vld [vmem:[%s2342 + $0x1cb8] sm:$0xff]
        %v3353 = vld [vmem:[%s2342 + $0x1cc0] sm:$0xff]
        %v3354 = vld [vmem:[%s2342 + $0x1cc8] sm:$0xff]
        %v3355 = vld [vmem:[%s2342 + $0x1cd0] sm:$0xff]
        %v3356 = vld [vmem:[%s2342 + $0x1cd8] sm:$0xff]
        %v3357 = vld [vmem:[%s2342 + $0x1ce0] sm:$0xff]
        %v3358 = vld [vmem:[%s2342 + $0x1ce8] sm:$0xff]
        %v3359 = vld [vmem:[%s2342 + $0x1cf0] sm:$0xff]
        %v3360 = vld [vmem:[%s2342 + $0x1cf8] sm:$0xff]
        %v3361 = vld [vmem:[%s2342 + $0x1d00] sm:$0xff]
        %v3362 = vld [vmem:[%s2342 + $0x1d08] sm:$0xff]
        %v3363 = vld [vmem:[%s2342 + $0x1d10] sm:$0xff]
        %v3364 = vld [vmem:[%s2342 + $0x1d18] sm:$0xff]
        %v3365 = vld [vmem:[%s2342 + $0x1d20] sm:$0xff]
        %v3366 = vld [vmem:[%s2342 + $0x1d28] sm:$0xff]
        %v3367 = vld [vmem:[%s2342 + $0x1d30] sm:$0xff]
        %v3368 = vld [vmem:[%s2342 + $0x1d38] sm:$0xff]
        %v3369 = vld [vmem:[%s2342 + $0x1d40] sm:$0xff]
        %v3370 = vld [vmem:[%s2342 + $0x1d48] sm:$0xff]
        %v3371 = vld [vmem:[%s2342 + $0x1d50] sm:$0xff]
        %v3372 = vld [vmem:[%s2342 + $0x1d58] sm:$0xff]
        %v3373 = vld [vmem:[%s2342 + $0x1d60] sm:$0xff]
        %v3374 = vld [vmem:[%s2342 + $0x1d68] sm:$0xff]
        %v3375 = vld [vmem:[%s2342 + $0x1d70] sm:$0xff]
        %v3376 = vld [vmem:[%s2342 + $0x1d78] sm:$0xff]
        %v3377 = vld [vmem:[%s2342 + $0x1d80] sm:$0xff]
        %v3378 = vld [vmem:[%s2342 + $0x1d88] sm:$0xff]
        %v3379 = vld [vmem:[%s2342 + $0x1d90] sm:$0xff]
        %v3380 = vld [vmem:[%s2342 + $0x1d98] sm:$0xff]
        %v3381 = vld [vmem:[%s2342 + $0x1da0] sm:$0xff]
        %v3382 = vld [vmem:[%s2342 + $0x1da8] sm:$0xff]
        %v3383 = vld [vmem:[%s2342 + $0x1db0] sm:$0xff]
        %v3384 = vld [vmem:[%s2342 + $0x1db8] sm:$0xff]
        %v3385 = vld [vmem:[%s2342 + $0x1dc0] sm:$0xff]
        %v3386 = vld [vmem:[%s2342 + $0x1dc8] sm:$0xff]
        %v3387 = vld [vmem:[%s2342 + $0x1dd0] sm:$0xff]
        %v3388 = vld [vmem:[%s2342 + $0x1dd8] sm:$0xff]
        %v3389 = vld [vmem:[%s2342 + $0x1de0] sm:$0xff]
        %v3390 = vld [vmem:[%s2342 + $0x1de8] sm:$0xff]
        %v3391 = vld [vmem:[%s2342 + $0x1df0] sm:$0xff]
        %v3392 = vld [vmem:[%s2342 + $0x1df8] sm:$0xff]
        %v3393 = vld [vmem:[%s2342 + $0x1e00] sm:$0xff]
        %v3394 = vld [vmem:[%s2342 + $0x1e08] sm:$0xff]
        %v3395 = vld [vmem:[%s2342 + $0x1e10] sm:$0xff]
        %v3396 = vld [vmem:[%s2342 + $0x1e18] sm:$0xff]
        %v3397 = vld [vmem:[%s2342 + $0x1e20] sm:$0xff]
        %v3398 = vld [vmem:[%s2342 + $0x1e28] sm:$0xff]
        %v3399 = vld [vmem:[%s2342 + $0x1e30] sm:$0xff]
        %v3400 = vld [vmem:[%s2342 + $0x1e38] sm:$0xff]
        %v3401 = vld [vmem:[%s2342 + $0x1e40] sm:$0xff]
        %v3402 = vld [vmem:[%s2342 + $0x1e48] sm:$0xff]
        %v3403 = vld [vmem:[%s2342 + $0x1e50] sm:$0xff]
        %v3404 = vld [vmem:[%s2342 + $0x1e58] sm:$0xff]
        %v3405 = vld [vmem:[%s2342 + $0x1e60] sm:$0xff]
        %v3406 = vld [vmem:[%s2342 + $0x1e68] sm:$0xff]
        %v3407 = vld [vmem:[%s2342 + $0x1e70] sm:$0xff]
        %v3408 = vld [vmem:[%s2342 + $0x1e78] sm:$0xff]
        %v3409 = vld [vmem:[%s2342 + $0x1e80] sm:$0xff]
        %v3410 = vld [vmem:[%s2342 + $0x1e88] sm:$0xff]
        %v3411 = vld [vmem:[%s2342 + $0x1e90] sm:$0xff]
        %v3412 = vld [vmem:[%s2342 + $0x1e98] sm:$0xff]
        %v3413 = vld [vmem:[%s2342 + $0x1ea0] sm:$0xff]
        %v3414 = vld [vmem:[%s2342 + $0x1ea8] sm:$0xff]
        %v3415 = vld [vmem:[%s2342 + $0x1eb0] sm:$0xff]
        %v3416 = vld [vmem:[%s2342 + $0x1eb8] sm:$0xff]
        %v3417 = vld [vmem:[%s2342 + $0x1ec0] sm:$0xff]
        %v3418 = vld [vmem:[%s2342 + $0x1ec8] sm:$0xff]
        %v3419 = vld [vmem:[%s2342 + $0x1ed0] sm:$0xff]
        %v3420 = vld [vmem:[%s2342 + $0x1ed8] sm:$0xff]
        %v3421 = vld [vmem:[%s2342 + $0x1ee0] sm:$0xff]
        %v3422 = vld [vmem:[%s2342 + $0x1ee8] sm:$0xff]
        %v3423 = vld [vmem:[%s2342 + $0x1ef0] sm:$0xff]
        %v3424 = vld [vmem:[%s2342 + $0x1ef8] sm:$0xff]
        %v3425 = vld [vmem:[%s2342 + $0x1f00] sm:$0xff]
        %v3426 = vld [vmem:[%s2342 + $0x1f08] sm:$0xff]
        %v3427 = vld [vmem:[%s2342 + $0x1f10] sm:$0xff]
        %v3428 = vld [vmem:[%s2342 + $0x1f18] sm:$0xff]
        %v3429 = vld [vmem:[%s2342 + $0x1f20] sm:$0xff]
        %v3430 = vld [vmem:[%s2342 + $0x1f28] sm:$0xff]
        %v3431 = vld [vmem:[%s2342 + $0x1f30] sm:$0xff]
        %v3432 = vld [vmem:[%s2342 + $0x1f38] sm:$0xff]
        %v3433 = vld [vmem:[%s2342 + $0x1f40] sm:$0xff]
        %v3434 = vld [vmem:[%s2342 + $0x1f48] sm:$0xff]
        %v3435 = vld [vmem:[%s2342 + $0x1f50] sm:$0xff]
        %v3436 = vld [vmem:[%s2342 + $0x1f58] sm:$0xff]
        %v3437 = vld [vmem:[%s2342 + $0x1f60] sm:$0xff]
        %v3438 = vld [vmem:[%s2342 + $0x1f68] sm:$0xff]
        %v3439 = vld [vmem:[%s2342 + $0x1f70] sm:$0xff]
        %v3440 = vld [vmem:[%s2342 + $0x1f78] sm:$0xff]
        %v3441 = vld [vmem:[%s2342 + $0x1f80] sm:$0xff]
        %v3442 = vld [vmem:[%s2342 + $0x1f88] sm:$0xff]
        %v3443 = vld [vmem:[%s2342 + $0x1f90] sm:$0xff]
        %v3444 = vld [vmem:[%s2342 + $0x1f98] sm:$0xff]
        %v3445 = vld [vmem:[%s2342 + $0x1fa0] sm:$0xff]
        %v3446 = vld [vmem:[%s2342 + $0x1fa8] sm:$0xff]
        %v3447 = vld [vmem:[%s2342 + $0x1fb0] sm:$0xff]
        %v3448 = vld [vmem:[%s2342 + $0x1fb8] sm:$0xff]
        %v3449 = vld [vmem:[%s2342 + $0x1fc0] sm:$0xff]
        %v3450 = vld [vmem:[%s2342 + $0x1fc8] sm:$0xff]
        %v3451 = vld [vmem:[%s2342 + $0x1fd0] sm:$0xff]
        %v3452 = vld [vmem:[%s2342 + $0x1fd8] sm:$0xff]
        %v3453 = vld [vmem:[%s2342 + $0x1fe0] sm:$0xff]
        %v3454 = vld [vmem:[%s2342 + $0x1fe8] sm:$0xff]
        %v3455 = vld [vmem:[%s2342 + $0x1ff0] sm:$0xff]
        %v3456 = vld [vmem:[%s2342 + $0x1ff8] sm:$0xff]
        %v3465 = vunpack.c.l.b16 %v2417
        %v3466 = vunpack.c.h.b16 %v2417
        %v3467 = vunpack.c.l.b16 %v2418
        %v3468 = vunpack.c.h.b16 %v2418
        %v3469 = vunpack.c.l.b16 %v2419
        %v3470 = vunpack.c.h.b16 %v2419
        %v3471 = vunpack.c.l.b16 %v2420
        %v3472 = vunpack.c.h.b16 %v2420
        %v3473 = vunpack.c.l.b16 %v2421
        %v3474 = vunpack.c.h.b16 %v2421
        %v3475 = vunpack.c.l.b16 %v2422
        %v3476 = vunpack.c.h.b16 %v2422
        %v3477 = vunpack.c.l.b16 %v2423
        %v3478 = vunpack.c.h.b16 %v2423
        %v3479 = vunpack.c.l.b16 %v2424
        %v3480 = vunpack.c.h.b16 %v2424
        %v3481 = vpack.c.b16 %v3465, %v3465
        %v3482 = vpack.c.b16 %v3466, %v3466
        %v3483 = vpack.c.b16 %v3467, %v3467
        %v3484 = vpack.c.b16 %v3468, %v3468
        %v3485 = vpack.c.b16 %v3469, %v3469
        %v3486 = vpack.c.b16 %v3470, %v3470
        %v3487 = vpack.c.b16 %v3471, %v3471
        %v3488 = vpack.c.b16 %v3472, %v3472
        %v3489 = vpack.c.b16 %v3473, %v3473
        %v3490 = vpack.c.b16 %v3474, %v3474
        %v3491 = vpack.c.b16 %v3475, %v3475
        %v3492 = vpack.c.b16 %v3476, %v3476
        %v3493 = vpack.c.b16 %v3477, %v3477
        %v3494 = vpack.c.b16 %v3478, %v3478
        %v3495 = vpack.c.b16 %v3479, %v3479
        %v3496 = vpack.c.b16 %v3480, %v3480
        %v4537 = vunpack.c.l.b16 %v2433
        %v4538 = vunpack.c.h.b16 %v2433
        %v4539 = vunpack.c.l.b16 %v2434
        %v4540 = vunpack.c.h.b16 %v2434
        %v4541 = vunpack.c.l.b16 %v2435
        %v4542 = vunpack.c.h.b16 %v2435
        %v4543 = vunpack.c.l.b16 %v2436
        %v4544 = vunpack.c.h.b16 %v2436
        %v4545 = vunpack.c.l.b16 %v2437
        %v4546 = vunpack.c.h.b16 %v2437
        %v4547 = vunpack.c.l.b16 %v2438
        %v4548 = vunpack.c.h.b16 %v2438
        %v4549 = vunpack.c.l.b16 %v2439
        %v4550 = vunpack.c.h.b16 %v2439
        %v4551 = vunpack.c.l.b16 %v2440
        %v4552 = vunpack.c.h.b16 %v2440
        %v4553 = vunpack.c.l.b16 %v2441
        %v4554 = vunpack.c.h.b16 %v2441
        %v4555 = vunpack.c.l.b16 %v2442
        %v4556 = vunpack.c.h.b16 %v2442
        %v4557 = vunpack.c.l.b16 %v2443
        %v4558 = vunpack.c.h.b16 %v2443
        %v4559 = vunpack.c.l.b16 %v2444
        %v4560 = vunpack.c.h.b16 %v2444
        %v4561 = vunpack.c.l.b16 %v2445
        %v4562 = vunpack.c.h.b16 %v2445
        %v4563 = vunpack.c.l.b16 %v2446
        %v4564 = vunpack.c.h.b16 %v2446
        %v4565 = vunpack.c.l.b16 %v2447
        %v4566 = vunpack.c.h.b16 %v2447
        %v4567 = vunpack.c.l.b16 %v2448
        %v4568 = vunpack.c.h.b16 %v2448
        %v4569 = vunpack.c.l.b16 %v2449
        %v4570 = vunpack.c.h.b16 %v2449
        %v4571 = vunpack.c.l.b16 %v2450
        %v4572 = vunpack.c.h.b16 %v2450
        %v4573 = vunpack.c.l.b16 %v2451
        %v4574 = vunpack.c.h.b16 %v2451
        %v4575 = vunpack.c.l.b16 %v2452
        %v4576 = vunpack.c.h.b16 %v2452
        %v4577 = vunpack.c.l.b16 %v2453
        %v4578 = vunpack.c.h.b16 %v2453
        %v4579 = vunpack.c.l.b16 %v2454
        %v4580 = vunpack.c.h.b16 %v2454
        %v4581 = vunpack.c.l.b16 %v2455
        %v4582 = vunpack.c.h.b16 %v2455
        %v4583 = vunpack.c.l.b16 %v2456
        %v4584 = vunpack.c.h.b16 %v2456
        %v4585 = vunpack.c.l.b16 %v2457
        %v4586 = vunpack.c.h.b16 %v2457
        %v4587 = vunpack.c.l.b16 %v2458
        %v4588 = vunpack.c.h.b16 %v2458
        %v4589 = vunpack.c.l.b16 %v2459
        %v4590 = vunpack.c.h.b16 %v2459
        %v4591 = vunpack.c.l.b16 %v2460
        %v4592 = vunpack.c.h.b16 %v2460
        %v4593 = vunpack.c.l.b16 %v2461
        %v4594 = vunpack.c.h.b16 %v2461
        %v4595 = vunpack.c.l.b16 %v2462
        %v4596 = vunpack.c.h.b16 %v2462
        %v4597 = vunpack.c.l.b16 %v2463
        %v4598 = vunpack.c.h.b16 %v2463
        %v4599 = vunpack.c.l.b16 %v2464
        %v4600 = vunpack.c.h.b16 %v2464
        %v4601 = vunpack.c.l.b16 %v2465
        %v4602 = vunpack.c.h.b16 %v2465
        %v4603 = vunpack.c.l.b16 %v2466
        %v4604 = vunpack.c.h.b16 %v2466
        %v4605 = vunpack.c.l.b16 %v2467
        %v4606 = vunpack.c.h.b16 %v2467
        %v4607 = vunpack.c.l.b16 %v2468
        %v4608 = vunpack.c.h.b16 %v2468
        %v4609 = vunpack.c.l.b16 %v2469
        %v4610 = vunpack.c.h.b16 %v2469
        %v4611 = vunpack.c.l.b16 %v2470
        %v4612 = vunpack.c.h.b16 %v2470
        %v4613 = vunpack.c.l.b16 %v2471
        %v4614 = vunpack.c.h.b16 %v2471
        %v4615 = vunpack.c.l.b16 %v2472
        %v4616 = vunpack.c.h.b16 %v2472
        %v4617 = vunpack.c.l.b16 %v2473
        %v4618 = vunpack.c.h.b16 %v2473
        %v4619 = vunpack.c.l.b16 %v2474
        %v4620 = vunpack.c.h.b16 %v2474
        %v4621 = vunpack.c.l.b16 %v2475
        %v4622 = vunpack.c.h.b16 %v2475
        %v4623 = vunpack.c.l.b16 %v2476
        %v4624 = vunpack.c.h.b16 %v2476
        %v4625 = vunpack.c.l.b16 %v2477
        %v4626 = vunpack.c.h.b16 %v2477
        %v4627 = vunpack.c.l.b16 %v2478
        %v4628 = vunpack.c.h.b16 %v2478
        %v4629 = vunpack.c.l.b16 %v2479
        %v4630 = vunpack.c.h.b16 %v2479
        %v4631 = vunpack.c.l.b16 %v2480
        %v4632 = vunpack.c.h.b16 %v2480
        %v4633 = vunpack.c.l.b16 %v2481
        %v4634 = vunpack.c.h.b16 %v2481
        %v4635 = vunpack.c.l.b16 %v2482
        %v4636 = vunpack.c.h.b16 %v2482
        %v4637 = vunpack.c.l.b16 %v2483
        %v4638 = vunpack.c.h.b16 %v2483
        %v4639 = vunpack.c.l.b16 %v2484
        %v4640 = vunpack.c.h.b16 %v2484
        %v4641 = vunpack.c.l.b16 %v2485
        %v4642 = vunpack.c.h.b16 %v2485
        %v4643 = vunpack.c.l.b16 %v2486
        %v4644 = vunpack.c.h.b16 %v2486
        %v4645 = vunpack.c.l.b16 %v2487
        %v4646 = vunpack.c.h.b16 %v2487
        %v4647 = vunpack.c.l.b16 %v2488
        %v4648 = vunpack.c.h.b16 %v2488
        %v4649 = vunpack.c.l.b16 %v2489
        %v4650 = vunpack.c.h.b16 %v2489
        %v4651 = vunpack.c.l.b16 %v2490
        %v4652 = vunpack.c.h.b16 %v2490
        %v4653 = vunpack.c.l.b16 %v2491
        %v4654 = vunpack.c.h.b16 %v2491
        %v4655 = vunpack.c.l.b16 %v2492
        %v4656 = vunpack.c.h.b16 %v2492
        %v4657 = vunpack.c.l.b16 %v2493
        %v4658 = vunpack.c.h.b16 %v2493
        %v4659 = vunpack.c.l.b16 %v2494
        %v4660 = vunpack.c.h.b16 %v2494
        %v4661 = vunpack.c.l.b16 %v2495
        %v4662 = vunpack.c.h.b16 %v2495
        %v4663 = vunpack.c.l.b16 %v2496
        %v4664 = vunpack.c.h.b16 %v2496
        %v4665 = vunpack.c.l.b16 %v2497
        %v4666 = vunpack.c.h.b16 %v2497
        %v4667 = vunpack.c.l.b16 %v2498
        %v4668 = vunpack.c.h.b16 %v2498
        %v4669 = vunpack.c.l.b16 %v2499
        %v4670 = vunpack.c.h.b16 %v2499
        %v4671 = vunpack.c.l.b16 %v2500
        %v4672 = vunpack.c.h.b16 %v2500
        %v4673 = vunpack.c.l.b16 %v2501
        %v4674 = vunpack.c.h.b16 %v2501
        %v4675 = vunpack.c.l.b16 %v2502
        %v4676 = vunpack.c.h.b16 %v2502
        %v4677 = vunpack.c.l.b16 %v2503
        %v4678 = vunpack.c.h.b16 %v2503
        %v4679 = vunpack.c.l.b16 %v2504
        %v4680 = vunpack.c.h.b16 %v2504
        %v4681 = vunpack.c.l.b16 %v2505
        %v4682 = vunpack.c.h.b16 %v2505
        %v4683 = vunpack.c.l.b16 %v2506
        %v4684 = vunpack.c.h.b16 %v2506
        %v4685 = vunpack.c.l.b16 %v2507
        %v4686 = vunpack.c.h.b16 %v2507
        %v4687 = vunpack.c.l.b16 %v2508
        %v4688 = vunpack.c.h.b16 %v2508
        %v4689 = vunpack.c.l.b16 %v2509
        %v4690 = vunpack.c.h.b16 %v2509
        %v4691 = vunpack.c.l.b16 %v2510
        %v4692 = vunpack.c.h.b16 %v2510
        %v4693 = vunpack.c.l.b16 %v2511
        %v4694 = vunpack.c.h.b16 %v2511
        %v4695 = vunpack.c.l.b16 %v2512
        %v4696 = vunpack.c.h.b16 %v2512
        %v4697 = vunpack.c.l.b16 %v2513
        %v4698 = vunpack.c.h.b16 %v2513
        %v4699 = vunpack.c.l.b16 %v2514
        %v4700 = vunpack.c.h.b16 %v2514
        %v4701 = vunpack.c.l.b16 %v2515
        %v4702 = vunpack.c.h.b16 %v2515
        %v4703 = vunpack.c.l.b16 %v2516
        %v4704 = vunpack.c.h.b16 %v2516
        %v4705 = vunpack.c.l.b16 %v2517
        %v4706 = vunpack.c.h.b16 %v2517
        %v4707 = vunpack.c.l.b16 %v2518
        %v4708 = vunpack.c.h.b16 %v2518
        %v4709 = vunpack.c.l.b16 %v2519
        %v4710 = vunpack.c.h.b16 %v2519
        %v4711 = vunpack.c.l.b16 %v2520
        %v4712 = vunpack.c.h.b16 %v2520
        %v4713 = vunpack.c.l.b16 %v2521
        %v4714 = vunpack.c.h.b16 %v2521
        %v4715 = vunpack.c.l.b16 %v2522
        %v4716 = vunpack.c.h.b16 %v2522
        %v4717 = vunpack.c.l.b16 %v2523
        %v4718 = vunpack.c.h.b16 %v2523
        %v4719 = vunpack.c.l.b16 %v2524
        %v4720 = vunpack.c.h.b16 %v2524
        %v4721 = vunpack.c.l.b16 %v2525
        %v4722 = vunpack.c.h.b16 %v2525
        %v4723 = vunpack.c.l.b16 %v2526
        %v4724 = vunpack.c.h.b16 %v2526
        %v4725 = vunpack.c.l.b16 %v2527
        %v4726 = vunpack.c.h.b16 %v2527
        %v4727 = vunpack.c.l.b16 %v2528
        %v4728 = vunpack.c.h.b16 %v2528
        %v4729 = vunpack.c.l.b16 %v2529
        %v4730 = vunpack.c.h.b16 %v2529
        %v4731 = vunpack.c.l.b16 %v2530
        %v4732 = vunpack.c.h.b16 %v2530
        %v4733 = vunpack.c.l.b16 %v2531
        %v4734 = vunpack.c.h.b16 %v2531
        %v4735 = vunpack.c.l.b16 %v2532
        %v4736 = vunpack.c.h.b16 %v2532
        %v4737 = vunpack.c.l.b16 %v2533
        %v4738 = vunpack.c.h.b16 %v2533
        %v4739 = vunpack.c.l.b16 %v2534
        %v4740 = vunpack.c.h.b16 %v2534
        %v4741 = vunpack.c.l.b16 %v2535
        %v4742 = vunpack.c.h.b16 %v2535
        %v4743 = vunpack.c.l.b16 %v2536
        %v4744 = vunpack.c.h.b16 %v2536
        %v4745 = vunpack.c.l.b16 %v2537
        %v4746 = vunpack.c.h.b16 %v2537
        %v4747 = vunpack.c.l.b16 %v2538
        %v4748 = vunpack.c.h.b16 %v2538
        %v4749 = vunpack.c.l.b16 %v2539
        %v4750 = vunpack.c.h.b16 %v2539
        %v4751 = vunpack.c.l.b16 %v2540
        %v4752 = vunpack.c.h.b16 %v2540
        %v4753 = vunpack.c.l.b16 %v2541
        %v4754 = vunpack.c.h.b16 %v2541
        %v4755 = vunpack.c.l.b16 %v2542
        %v4756 = vunpack.c.h.b16 %v2542
        %v4757 = vunpack.c.l.b16 %v2543
        %v4758 = vunpack.c.h.b16 %v2543
        %v4759 = vunpack.c.l.b16 %v2544
        %v4760 = vunpack.c.h.b16 %v2544
        %v4761 = vunpack.c.l.b16 %v2545
        %v4762 = vunpack.c.h.b16 %v2545
        %v4763 = vunpack.c.l.b16 %v2546
        %v4764 = vunpack.c.h.b16 %v2546
        %v4765 = vunpack.c.l.b16 %v2547
        %v4766 = vunpack.c.h.b16 %v2547
        %v4767 = vunpack.c.l.b16 %v2548
        %v4768 = vunpack.c.h.b16 %v2548
        %v4769 = vunpack.c.l.b16 %v2549
        %v4770 = vunpack.c.h.b16 %v2549
        %v4771 = vunpack.c.l.b16 %v2550
        %v4772 = vunpack.c.h.b16 %v2550
        %v4773 = vunpack.c.l.b16 %v2551
        %v4774 = vunpack.c.h.b16 %v2551
        %v4775 = vunpack.c.l.b16 %v2552
        %v4776 = vunpack.c.h.b16 %v2552
        %v4777 = vunpack.c.l.b16 %v2553
        %v4778 = vunpack.c.h.b16 %v2553
        %v4779 = vunpack.c.l.b16 %v2554
        %v4780 = vunpack.c.h.b16 %v2554
        %v4781 = vunpack.c.l.b16 %v2555
        %v4782 = vunpack.c.h.b16 %v2555
        %v4783 = vunpack.c.l.b16 %v2556
        %v4784 = vunpack.c.h.b16 %v2556
        %v4785 = vunpack.c.l.b16 %v2557
        %v4786 = vunpack.c.h.b16 %v2557
        %v4787 = vunpack.c.l.b16 %v2558
        %v4788 = vunpack.c.h.b16 %v2558
        %v4789 = vunpack.c.l.b16 %v2559
        %v4790 = vunpack.c.h.b16 %v2559
        %v4791 = vunpack.c.l.b16 %v2560
        %v4792 = vunpack.c.h.b16 %v2560
        %v4793 = vunpack.c.l.b16 %v2561
        %v4794 = vunpack.c.h.b16 %v2561
        %v4795 = vunpack.c.l.b16 %v2562
        %v4796 = vunpack.c.h.b16 %v2562
        %v4797 = vunpack.c.l.b16 %v2563
        %v4798 = vunpack.c.h.b16 %v2563
        %v4799 = vunpack.c.l.b16 %v2564
        %v4800 = vunpack.c.h.b16 %v2564
        %v4801 = vunpack.c.l.b16 %v2565
        %v4802 = vunpack.c.h.b16 %v2565
        %v4803 = vunpack.c.l.b16 %v2566
        %v4804 = vunpack.c.h.b16 %v2566
        %v4805 = vunpack.c.l.b16 %v2567
        %v4806 = vunpack.c.h.b16 %v2567
        %v4807 = vunpack.c.l.b16 %v2568
        %v4808 = vunpack.c.h.b16 %v2568
        %v4809 = vunpack.c.l.b16 %v2569
        %v4810 = vunpack.c.h.b16 %v2569
        %v4811 = vunpack.c.l.b16 %v2570
        %v4812 = vunpack.c.h.b16 %v2570
        %v4813 = vunpack.c.l.b16 %v2571
        %v4814 = vunpack.c.h.b16 %v2571
        %v4815 = vunpack.c.l.b16 %v2572
        %v4816 = vunpack.c.h.b16 %v2572
        %v4817 = vunpack.c.l.b16 %v2573
        %v4818 = vunpack.c.h.b16 %v2573
        %v4819 = vunpack.c.l.b16 %v2574
        %v4820 = vunpack.c.h.b16 %v2574
        %v4821 = vunpack.c.l.b16 %v2575
        %v4822 = vunpack.c.h.b16 %v2575
        %v4823 = vunpack.c.l.b16 %v2576
        %v4824 = vunpack.c.h.b16 %v2576
        %v4825 = vunpack.c.l.b16 %v2577
        %v4826 = vunpack.c.h.b16 %v2577
        %v4827 = vunpack.c.l.b16 %v2578
        %v4828 = vunpack.c.h.b16 %v2578
        %v4829 = vunpack.c.l.b16 %v2579
        %v4830 = vunpack.c.h.b16 %v2579
        %v4831 = vunpack.c.l.b16 %v2580
        %v4832 = vunpack.c.h.b16 %v2580
        %v4833 = vunpack.c.l.b16 %v2581
        %v4834 = vunpack.c.h.b16 %v2581
        %v4835 = vunpack.c.l.b16 %v2582
        %v4836 = vunpack.c.h.b16 %v2582
        %v4837 = vunpack.c.l.b16 %v2583
        %v4838 = vunpack.c.h.b16 %v2583
        %v4839 = vunpack.c.l.b16 %v2584
        %v4840 = vunpack.c.h.b16 %v2584
        %v4841 = vunpack.c.l.b16 %v2585
        %v4842 = vunpack.c.h.b16 %v2585
        %v4843 = vunpack.c.l.b16 %v2586
        %v4844 = vunpack.c.h.b16 %v2586
        %v4845 = vunpack.c.l.b16 %v2587
        %v4846 = vunpack.c.h.b16 %v2587
        %v4847 = vunpack.c.l.b16 %v2588
        %v4848 = vunpack.c.h.b16 %v2588
        %v4849 = vunpack.c.l.b16 %v2589
        %v4850 = vunpack.c.h.b16 %v2589
        %v4851 = vunpack.c.l.b16 %v2590
        %v4852 = vunpack.c.h.b16 %v2590
        %v4853 = vunpack.c.l.b16 %v2591
        %v4854 = vunpack.c.h.b16 %v2591
        %v4855 = vunpack.c.l.b16 %v2592
        %v4856 = vunpack.c.h.b16 %v2592
        %v4857 = vunpack.c.l.b16 %v2593
        %v4858 = vunpack.c.h.b16 %v2593
        %v4859 = vunpack.c.l.b16 %v2594
        %v4860 = vunpack.c.h.b16 %v2594
        %v4861 = vunpack.c.l.b16 %v2595
        %v4862 = vunpack.c.h.b16 %v2595
        %v4863 = vunpack.c.l.b16 %v2596
        %v4864 = vunpack.c.h.b16 %v2596
        %v4865 = vunpack.c.l.b16 %v2597
        %v4866 = vunpack.c.h.b16 %v2597
        %v4867 = vunpack.c.l.b16 %v2598
        %v4868 = vunpack.c.h.b16 %v2598
        %v4869 = vunpack.c.l.b16 %v2599
        %v4870 = vunpack.c.h.b16 %v2599
        %v4871 = vunpack.c.l.b16 %v2600
        %v4872 = vunpack.c.h.b16 %v2600
        %v4873 = vunpack.c.l.b16 %v2601
        %v4874 = vunpack.c.h.b16 %v2601
        %v4875 = vunpack.c.l.b16 %v2602
        %v4876 = vunpack.c.h.b16 %v2602
        %v4877 = vunpack.c.l.b16 %v2603
        %v4878 = vunpack.c.h.b16 %v2603
        %v4879 = vunpack.c.l.b16 %v2604
        %v4880 = vunpack.c.h.b16 %v2604
        %v4881 = vunpack.c.l.b16 %v2605
        %v4882 = vunpack.c.h.b16 %v2605
        %v4883 = vunpack.c.l.b16 %v2606
        %v4884 = vunpack.c.h.b16 %v2606
        %v4885 = vunpack.c.l.b16 %v2607
        %v4886 = vunpack.c.h.b16 %v2607
        %v4887 = vunpack.c.l.b16 %v2608
        %v4888 = vunpack.c.h.b16 %v2608
        %v4889 = vunpack.c.l.b16 %v2609
        %v4890 = vunpack.c.h.b16 %v2609
        %v4891 = vunpack.c.l.b16 %v2610
        %v4892 = vunpack.c.h.b16 %v2610
        %v4893 = vunpack.c.l.b16 %v2611
        %v4894 = vunpack.c.h.b16 %v2611
        %v4895 = vunpack.c.l.b16 %v2612
        %v4896 = vunpack.c.h.b16 %v2612
        %v4897 = vunpack.c.l.b16 %v2613
        %v4898 = vunpack.c.h.b16 %v2613
        %v4899 = vunpack.c.l.b16 %v2614
        %v4900 = vunpack.c.h.b16 %v2614
        %v4901 = vunpack.c.l.b16 %v2615
        %v4902 = vunpack.c.h.b16 %v2615
        %v4903 = vunpack.c.l.b16 %v2616
        %v4904 = vunpack.c.h.b16 %v2616
        %v4905 = vunpack.c.l.b16 %v2617
        %v4906 = vunpack.c.h.b16 %v2617
        %v4907 = vunpack.c.l.b16 %v2618
        %v4908 = vunpack.c.h.b16 %v2618
        %v4909 = vunpack.c.l.b16 %v2619
        %v4910 = vunpack.c.h.b16 %v2619
        %v4911 = vunpack.c.l.b16 %v2620
        %v4912 = vunpack.c.h.b16 %v2620
        %v4913 = vunpack.c.l.b16 %v2621
        %v4914 = vunpack.c.h.b16 %v2621
        %v4915 = vunpack.c.l.b16 %v2622
        %v4916 = vunpack.c.h.b16 %v2622
        %v4917 = vunpack.c.l.b16 %v2623
        %v4918 = vunpack.c.h.b16 %v2623
        %v4919 = vunpack.c.l.b16 %v2624
        %v4920 = vunpack.c.h.b16 %v2624
        %v4921 = vunpack.c.l.b16 %v2625
        %v4922 = vunpack.c.h.b16 %v2625
        %v4923 = vunpack.c.l.b16 %v2626
        %v4924 = vunpack.c.h.b16 %v2626
        %v4925 = vunpack.c.l.b16 %v2627
        %v4926 = vunpack.c.h.b16 %v2627
        %v4927 = vunpack.c.l.b16 %v2628
        %v4928 = vunpack.c.h.b16 %v2628
        %v4929 = vunpack.c.l.b16 %v2629
        %v4930 = vunpack.c.h.b16 %v2629
        %v4931 = vunpack.c.l.b16 %v2630
        %v4932 = vunpack.c.h.b16 %v2630
        %v4933 = vunpack.c.l.b16 %v2631
        %v4934 = vunpack.c.h.b16 %v2631
        %v4935 = vunpack.c.l.b16 %v2632
        %v4936 = vunpack.c.h.b16 %v2632
        %v4937 = vunpack.c.l.b16 %v2633
        %v4938 = vunpack.c.h.b16 %v2633
        %v4939 = vunpack.c.l.b16 %v2634
        %v4940 = vunpack.c.h.b16 %v2634
        %v4941 = vunpack.c.l.b16 %v2635
        %v4942 = vunpack.c.h.b16 %v2635
        %v4943 = vunpack.c.l.b16 %v2636
        %v4944 = vunpack.c.h.b16 %v2636
        %v4945 = vunpack.c.l.b16 %v2637
        %v4946 = vunpack.c.h.b16 %v2637
        %v4947 = vunpack.c.l.b16 %v2638
        %v4948 = vunpack.c.h.b16 %v2638
        %v4949 = vunpack.c.l.b16 %v2639
        %v4950 = vunpack.c.h.b16 %v2639
        %v4951 = vunpack.c.l.b16 %v2640
        %v4952 = vunpack.c.h.b16 %v2640
        %v4953 = vunpack.c.l.b16 %v2641
        %v4954 = vunpack.c.h.b16 %v2641
        %v4955 = vunpack.c.l.b16 %v2642
        %v4956 = vunpack.c.h.b16 %v2642
        %v4957 = vunpack.c.l.b16 %v2643
        %v4958 = vunpack.c.h.b16 %v2643
        %v4959 = vunpack.c.l.b16 %v2644
        %v4960 = vunpack.c.h.b16 %v2644
        %v4961 = vunpack.c.l.b16 %v2645
        %v4962 = vunpack.c.h.b16 %v2645
        %v4963 = vunpack.c.l.b16 %v2646
        %v4964 = vunpack.c.h.b16 %v2646
        %v4965 = vunpack.c.l.b16 %v2647
        %v4966 = vunpack.c.h.b16 %v2647
        %v4967 = vunpack.c.l.b16 %v2648
        %v4968 = vunpack.c.h.b16 %v2648
        %v4969 = vunpack.c.l.b16 %v2649
        %v4970 = vunpack.c.h.b16 %v2649
        %v4971 = vunpack.c.l.b16 %v2650
        %v4972 = vunpack.c.h.b16 %v2650
        %v4973 = vunpack.c.l.b16 %v2651
        %v4974 = vunpack.c.h.b16 %v2651
        %v4975 = vunpack.c.l.b16 %v2652
        %v4976 = vunpack.c.h.b16 %v2652
        %v4977 = vunpack.c.l.b16 %v2653
        %v4978 = vunpack.c.h.b16 %v2653
        %v4979 = vunpack.c.l.b16 %v2654
        %v4980 = vunpack.c.h.b16 %v2654
        %v4981 = vunpack.c.l.b16 %v2655
        %v4982 = vunpack.c.h.b16 %v2655
        %v4983 = vunpack.c.l.b16 %v2656
        %v4984 = vunpack.c.h.b16 %v2656
        %v4985 = vunpack.c.l.b16 %v2657
        %v4986 = vunpack.c.h.b16 %v2657
        %v4987 = vunpack.c.l.b16 %v2658
        %v4988 = vunpack.c.h.b16 %v2658
        %v4989 = vunpack.c.l.b16 %v2659
        %v4990 = vunpack.c.h.b16 %v2659
        %v4991 = vunpack.c.l.b16 %v2660
        %v4992 = vunpack.c.h.b16 %v2660
        %v4993 = vunpack.c.l.b16 %v2661
        %v4994 = vunpack.c.h.b16 %v2661
        %v4995 = vunpack.c.l.b16 %v2662
        %v4996 = vunpack.c.h.b16 %v2662
        %v4997 = vunpack.c.l.b16 %v2663
        %v4998 = vunpack.c.h.b16 %v2663
        %v4999 = vunpack.c.l.b16 %v2664
        %v5000 = vunpack.c.h.b16 %v2664
        %v5001 = vunpack.c.l.b16 %v2665
        %v5002 = vunpack.c.h.b16 %v2665
        %v5003 = vunpack.c.l.b16 %v2666
        %v5004 = vunpack.c.h.b16 %v2666
        %v5005 = vunpack.c.l.b16 %v2667
        %v5006 = vunpack.c.h.b16 %v2667
        %v5007 = vunpack.c.l.b16 %v2668
        %v5008 = vunpack.c.h.b16 %v2668
        %v5009 = vunpack.c.l.b16 %v2669
        %v5010 = vunpack.c.h.b16 %v2669
        %v5011 = vunpack.c.l.b16 %v2670
        %v5012 = vunpack.c.h.b16 %v2670
        %v5013 = vunpack.c.l.b16 %v2671
        %v5014 = vunpack.c.h.b16 %v2671
        %v5015 = vunpack.c.l.b16 %v2672
        %v5016 = vunpack.c.h.b16 %v2672
        %v5017 = vunpack.c.l.b16 %v2673
        %v5018 = vunpack.c.h.b16 %v2673
        %v5019 = vunpack.c.l.b16 %v2674
        %v5020 = vunpack.c.h.b16 %v2674
        %v5021 = vunpack.c.l.b16 %v2675
        %v5022 = vunpack.c.h.b16 %v2675
        %v5023 = vunpack.c.l.b16 %v2676
        %v5024 = vunpack.c.h.b16 %v2676
        %v5025 = vunpack.c.l.b16 %v2677
        %v5026 = vunpack.c.h.b16 %v2677
        %v5027 = vunpack.c.l.b16 %v2678
        %v5028 = vunpack.c.h.b16 %v2678
        %v5029 = vunpack.c.l.b16 %v2679
        %v5030 = vunpack.c.h.b16 %v2679
        %v5031 = vunpack.c.l.b16 %v2680
        %v5032 = vunpack.c.h.b16 %v2680
        %v5033 = vunpack.c.l.b16 %v2681
        %v5034 = vunpack.c.h.b16 %v2681
        %v5035 = vunpack.c.l.b16 %v2682
        %v5036 = vunpack.c.h.b16 %v2682
        %v5037 = vunpack.c.l.b16 %v2683
        %v5038 = vunpack.c.h.b16 %v2683
        %v5039 = vunpack.c.l.b16 %v2684
        %v5040 = vunpack.c.h.b16 %v2684
        %v5041 = vunpack.c.l.b16 %v2685
        %v5042 = vunpack.c.h.b16 %v2685
        %v5043 = vunpack.c.l.b16 %v2686
        %v5044 = vunpack.c.h.b16 %v2686
        %v5045 = vunpack.c.l.b16 %v2687
        %v5046 = vunpack.c.h.b16 %v2687
        %v5047 = vunpack.c.l.b16 %v2688
        %v5048 = vunpack.c.h.b16 %v2688
        %v5049 = vunpack.c.l.b16 %v2689
        %v5050 = vunpack.c.h.b16 %v2689
        %v5051 = vunpack.c.l.b16 %v2690
        %v5052 = vunpack.c.h.b16 %v2690
        %v5053 = vunpack.c.l.b16 %v2691
        %v5054 = vunpack.c.h.b16 %v2691
        %v5055 = vunpack.c.l.b16 %v2692
        %v5056 = vunpack.c.h.b16 %v2692
        %v5057 = vunpack.c.l.b16 %v2693
        %v5058 = vunpack.c.h.b16 %v2693
        %v5059 = vunpack.c.l.b16 %v2694
        %v5060 = vunpack.c.h.b16 %v2694
        %v5061 = vunpack.c.l.b16 %v2695
        %v5062 = vunpack.c.h.b16 %v2695
        %v5063 = vunpack.c.l.b16 %v2696
        %v5064 = vunpack.c.h.b16 %v2696
        %v5065 = vunpack.c.l.b16 %v2697
        %v5066 = vunpack.c.h.b16 %v2697
        %v5067 = vunpack.c.l.b16 %v2698
        %v5068 = vunpack.c.h.b16 %v2698
        %v5069 = vunpack.c.l.b16 %v2699
        %v5070 = vunpack.c.h.b16 %v2699
        %v5071 = vunpack.c.l.b16 %v2700
        %v5072 = vunpack.c.h.b16 %v2700
        %v5073 = vunpack.c.l.b16 %v2701
        %v5074 = vunpack.c.h.b16 %v2701
        %v5075 = vunpack.c.l.b16 %v2702
        %v5076 = vunpack.c.h.b16 %v2702
        %v5077 = vunpack.c.l.b16 %v2703
        %v5078 = vunpack.c.h.b16 %v2703
        %v5079 = vunpack.c.l.b16 %v2704
        %v5080 = vunpack.c.h.b16 %v2704
        %v5081 = vunpack.c.l.b16 %v2705
        %v5082 = vunpack.c.h.b16 %v2705
        %v5083 = vunpack.c.l.b16 %v2706
        %v5084 = vunpack.c.h.b16 %v2706
        %v5085 = vunpack.c.l.b16 %v2707
        %v5086 = vunpack.c.h.b16 %v2707
        %v5087 = vunpack.c.l.b16 %v2708
        %v5088 = vunpack.c.h.b16 %v2708
        %v5089 = vunpack.c.l.b16 %v2709
        %v5090 = vunpack.c.h.b16 %v2709
        %v5091 = vunpack.c.l.b16 %v2710
        %v5092 = vunpack.c.h.b16 %v2710
        %v5093 = vunpack.c.l.b16 %v2711
        %v5094 = vunpack.c.h.b16 %v2711
        %v5095 = vunpack.c.l.b16 %v2712
        %v5096 = vunpack.c.h.b16 %v2712
        %v5097 = vunpack.c.l.b16 %v2713
        %v5098 = vunpack.c.h.b16 %v2713
        %v5099 = vunpack.c.l.b16 %v2714
        %v5100 = vunpack.c.h.b16 %v2714
        %v5101 = vunpack.c.l.b16 %v2715
        %v5102 = vunpack.c.h.b16 %v2715
        %v5103 = vunpack.c.l.b16 %v2716
        %v5104 = vunpack.c.h.b16 %v2716
        %v5105 = vunpack.c.l.b16 %v2717
        %v5106 = vunpack.c.h.b16 %v2717
        %v5107 = vunpack.c.l.b16 %v2718
        %v5108 = vunpack.c.h.b16 %v2718
        %v5109 = vunpack.c.l.b16 %v2719
        %v5110 = vunpack.c.h.b16 %v2719
        %v5111 = vunpack.c.l.b16 %v2720
        %v5112 = vunpack.c.h.b16 %v2720
        %v5113 = vunpack.c.l.b16 %v2721
        %v5114 = vunpack.c.h.b16 %v2721
        %v5115 = vunpack.c.l.b16 %v2722
        %v5116 = vunpack.c.h.b16 %v2722
        %v5117 = vunpack.c.l.b16 %v2723
        %v5118 = vunpack.c.h.b16 %v2723
        %v5119 = vunpack.c.l.b16 %v2724
        %v5120 = vunpack.c.h.b16 %v2724
        %v5121 = vunpack.c.l.b16 %v2725
        %v5122 = vunpack.c.h.b16 %v2725
        %v5123 = vunpack.c.l.b16 %v2726
        %v5124 = vunpack.c.h.b16 %v2726
        %v5125 = vunpack.c.l.b16 %v2727
        %v5126 = vunpack.c.h.b16 %v2727
        %v5127 = vunpack.c.l.b16 %v2728
        %v5128 = vunpack.c.h.b16 %v2728
        %v5129 = vunpack.c.l.b16 %v2729
        %v5130 = vunpack.c.h.b16 %v2729
        %v5131 = vunpack.c.l.b16 %v2730
        %v5132 = vunpack.c.h.b16 %v2730
        %v5133 = vunpack.c.l.b16 %v2731
        %v5134 = vunpack.c.h.b16 %v2731
        %v5135 = vunpack.c.l.b16 %v2732
        %v5136 = vunpack.c.h.b16 %v2732
        %v5137 = vunpack.c.l.b16 %v2733
        %v5138 = vunpack.c.h.b16 %v2733
        %v5139 = vunpack.c.l.b16 %v2734
        %v5140 = vunpack.c.h.b16 %v2734
        %v5141 = vunpack.c.l.b16 %v2735
        %v5142 = vunpack.c.h.b16 %v2735
        %v5143 = vunpack.c.l.b16 %v2736
        %v5144 = vunpack.c.h.b16 %v2736
        %v5145 = vunpack.c.l.b16 %v2737
        %v5146 = vunpack.c.h.b16 %v2737
        %v5147 = vunpack.c.l.b16 %v2738
        %v5148 = vunpack.c.h.b16 %v2738
        %v5149 = vunpack.c.l.b16 %v2739
        %v5150 = vunpack.c.h.b16 %v2739
        %v5151 = vunpack.c.l.b16 %v2740
        %v5152 = vunpack.c.h.b16 %v2740
        %v5153 = vunpack.c.l.b16 %v2741
        %v5154 = vunpack.c.h.b16 %v2741
        %v5155 = vunpack.c.l.b16 %v2742
        %v5156 = vunpack.c.h.b16 %v2742
        %v5157 = vunpack.c.l.b16 %v2743
        %v5158 = vunpack.c.h.b16 %v2743
        %v5159 = vunpack.c.l.b16 %v2744
        %v5160 = vunpack.c.h.b16 %v2744
        %v5161 = vunpack.c.l.b16 %v2745
        %v5162 = vunpack.c.h.b16 %v2745
        %v5163 = vunpack.c.l.b16 %v2746
        %v5164 = vunpack.c.h.b16 %v2746
        %v5165 = vunpack.c.l.b16 %v2747
        %v5166 = vunpack.c.h.b16 %v2747
        %v5167 = vunpack.c.l.b16 %v2748
        %v5168 = vunpack.c.h.b16 %v2748
        %v5169 = vunpack.c.l.b16 %v2749
        %v5170 = vunpack.c.h.b16 %v2749
        %v5171 = vunpack.c.l.b16 %v2750
        %v5172 = vunpack.c.h.b16 %v2750
        %v5173 = vunpack.c.l.b16 %v2751
        %v5174 = vunpack.c.h.b16 %v2751
        %v5175 = vunpack.c.l.b16 %v2752
        %v5176 = vunpack.c.h.b16 %v2752
        %v5177 = vunpack.c.l.b16 %v2753
        %v5178 = vunpack.c.h.b16 %v2753
        %v5179 = vunpack.c.l.b16 %v2754
        %v5180 = vunpack.c.h.b16 %v2754
        %v5181 = vunpack.c.l.b16 %v2755
        %v5182 = vunpack.c.h.b16 %v2755
        %v5183 = vunpack.c.l.b16 %v2756
        %v5184 = vunpack.c.h.b16 %v2756
        %v5185 = vunpack.c.l.b16 %v2757
        %v5186 = vunpack.c.h.b16 %v2757
        %v5187 = vunpack.c.l.b16 %v2758
        %v5188 = vunpack.c.h.b16 %v2758
        %v5189 = vunpack.c.l.b16 %v2759
        %v5190 = vunpack.c.h.b16 %v2759
        %v5191 = vunpack.c.l.b16 %v2760
        %v5192 = vunpack.c.h.b16 %v2760
        %v5193 = vunpack.c.l.b16 %v2761
        %v5194 = vunpack.c.h.b16 %v2761
        %v5195 = vunpack.c.l.b16 %v2762
        %v5196 = vunpack.c.h.b16 %v2762
        %v5197 = vunpack.c.l.b16 %v2763
        %v5198 = vunpack.c.h.b16 %v2763
        %v5199 = vunpack.c.l.b16 %v2764
        %v5200 = vunpack.c.h.b16 %v2764
        %v5201 = vunpack.c.l.b16 %v2765
        %v5202 = vunpack.c.h.b16 %v2765
        %v5203 = vunpack.c.l.b16 %v2766
        %v5204 = vunpack.c.h.b16 %v2766
        %v5205 = vunpack.c.l.b16 %v2767
        %v5206 = vunpack.c.h.b16 %v2767
        %v5207 = vunpack.c.l.b16 %v2768
        %v5208 = vunpack.c.h.b16 %v2768
        %v5209 = vunpack.c.l.b16 %v2769
        %v5210 = vunpack.c.h.b16 %v2769
        %v5211 = vunpack.c.l.b16 %v2770
        %v5212 = vunpack.c.h.b16 %v2770
        %v5213 = vunpack.c.l.b16 %v2771
        %v5214 = vunpack.c.h.b16 %v2771
        %v5215 = vunpack.c.l.b16 %v2772
        %v5216 = vunpack.c.h.b16 %v2772
        %v5217 = vunpack.c.l.b16 %v2773
        %v5218 = vunpack.c.h.b16 %v2773
        %v5219 = vunpack.c.l.b16 %v2774
        %v5220 = vunpack.c.h.b16 %v2774
        %v5221 = vunpack.c.l.b16 %v2775
        %v5222 = vunpack.c.h.b16 %v2775
        %v5223 = vunpack.c.l.b16 %v2776
        %v5224 = vunpack.c.h.b16 %v2776
        %v5225 = vunpack.c.l.b16 %v2777
        %v5226 = vunpack.c.h.b16 %v2777
        %v5227 = vunpack.c.l.b16 %v2778
        %v5228 = vunpack.c.h.b16 %v2778
        %v5229 = vunpack.c.l.b16 %v2779
        %v5230 = vunpack.c.h.b16 %v2779
        %v5231 = vunpack.c.l.b16 %v2780
        %v5232 = vunpack.c.h.b16 %v2780
        %v5233 = vunpack.c.l.b16 %v2781
        %v5234 = vunpack.c.h.b16 %v2781
        %v5235 = vunpack.c.l.b16 %v2782
        %v5236 = vunpack.c.h.b16 %v2782
        %v5237 = vunpack.c.l.b16 %v2783
        %v5238 = vunpack.c.h.b16 %v2783
        %v5239 = vunpack.c.l.b16 %v2784
        %v5240 = vunpack.c.h.b16 %v2784
        %v5241 = vunpack.c.l.b16 %v2785
        %v5242 = vunpack.c.h.b16 %v2785
        %v5243 = vunpack.c.l.b16 %v2786
        %v5244 = vunpack.c.h.b16 %v2786
        %v5245 = vunpack.c.l.b16 %v2787
        %v5246 = vunpack.c.h.b16 %v2787
        %v5247 = vunpack.c.l.b16 %v2788
        %v5248 = vunpack.c.h.b16 %v2788
        %v5249 = vunpack.c.l.b16 %v2789
        %v5250 = vunpack.c.h.b16 %v2789
        %v5251 = vunpack.c.l.b16 %v2790
        %v5252 = vunpack.c.h.b16 %v2790
        %v5253 = vunpack.c.l.b16 %v2791
        %v5254 = vunpack.c.h.b16 %v2791
        %v5255 = vunpack.c.l.b16 %v2792
        %v5256 = vunpack.c.h.b16 %v2792
        %v5257 = vunpack.c.l.b16 %v2793
        %v5258 = vunpack.c.h.b16 %v2793
        %v5259 = vunpack.c.l.b16 %v2794
        %v5260 = vunpack.c.h.b16 %v2794
        %v5261 = vunpack.c.l.b16 %v2795
        %v5262 = vunpack.c.h.b16 %v2795
        %v5263 = vunpack.c.l.b16 %v2796
        %v5264 = vunpack.c.h.b16 %v2796
        %v5265 = vunpack.c.l.b16 %v2797
        %v5266 = vunpack.c.h.b16 %v2797
        %v5267 = vunpack.c.l.b16 %v2798
        %v5268 = vunpack.c.h.b16 %v2798
        %v5269 = vunpack.c.l.b16 %v2799
        %v5270 = vunpack.c.h.b16 %v2799
        %v5271 = vunpack.c.l.b16 %v2800
        %v5272 = vunpack.c.h.b16 %v2800
        %v5273 = vunpack.c.l.b16 %v2801
        %v5274 = vunpack.c.h.b16 %v2801
        %v5275 = vunpack.c.l.b16 %v2802
        %v5276 = vunpack.c.h.b16 %v2802
        %v5277 = vunpack.c.l.b16 %v2803
        %v5278 = vunpack.c.h.b16 %v2803
        %v5279 = vunpack.c.l.b16 %v2804
        %v5280 = vunpack.c.h.b16 %v2804
        %v5281 = vunpack.c.l.b16 %v2805
        %v5282 = vunpack.c.h.b16 %v2805
        %v5283 = vunpack.c.l.b16 %v2806
        %v5284 = vunpack.c.h.b16 %v2806
        %v5285 = vunpack.c.l.b16 %v2807
        %v5286 = vunpack.c.h.b16 %v2807
        %v5287 = vunpack.c.l.b16 %v2808
        %v5288 = vunpack.c.h.b16 %v2808
        %v5289 = vunpack.c.l.b16 %v2809
        %v5290 = vunpack.c.h.b16 %v2809
        %v5291 = vunpack.c.l.b16 %v2810
        %v5292 = vunpack.c.h.b16 %v2810
        %v5293 = vunpack.c.l.b16 %v2811
        %v5294 = vunpack.c.h.b16 %v2811
        %v5295 = vunpack.c.l.b16 %v2812
        %v5296 = vunpack.c.h.b16 %v2812
        %v5297 = vunpack.c.l.b16 %v2813
        %v5298 = vunpack.c.h.b16 %v2813
        %v5299 = vunpack.c.l.b16 %v2814
        %v5300 = vunpack.c.h.b16 %v2814
        %v5301 = vunpack.c.l.b16 %v2815
        %v5302 = vunpack.c.h.b16 %v2815
        %v5303 = vunpack.c.l.b16 %v2816
        %v5304 = vunpack.c.h.b16 %v2816
        %v5305 = vunpack.c.l.b16 %v2817
        %v5306 = vunpack.c.h.b16 %v2817
        %v5307 = vunpack.c.l.b16 %v2818
        %v5308 = vunpack.c.h.b16 %v2818
        %v5309 = vunpack.c.l.b16 %v2819
        %v5310 = vunpack.c.h.b16 %v2819
        %v5311 = vunpack.c.l.b16 %v2820
        %v5312 = vunpack.c.h.b16 %v2820
        %v5313 = vunpack.c.l.b16 %v2821
        %v5314 = vunpack.c.h.b16 %v2821
        %v5315 = vunpack.c.l.b16 %v2822
        %v5316 = vunpack.c.h.b16 %v2822
        %v5317 = vunpack.c.l.b16 %v2823
        %v5318 = vunpack.c.h.b16 %v2823
        %v5319 = vunpack.c.l.b16 %v2824
        %v5320 = vunpack.c.h.b16 %v2824
        %v5321 = vunpack.c.l.b16 %v2825
        %v5322 = vunpack.c.h.b16 %v2825
        %v5323 = vunpack.c.l.b16 %v2826
        %v5324 = vunpack.c.h.b16 %v2826
        %v5325 = vunpack.c.l.b16 %v2827
        %v5326 = vunpack.c.h.b16 %v2827
        %v5327 = vunpack.c.l.b16 %v2828
        %v5328 = vunpack.c.h.b16 %v2828
        %v5329 = vunpack.c.l.b16 %v2829
        %v5330 = vunpack.c.h.b16 %v2829
        %v5331 = vunpack.c.l.b16 %v2830
        %v5332 = vunpack.c.h.b16 %v2830
        %v5333 = vunpack.c.l.b16 %v2831
        %v5334 = vunpack.c.h.b16 %v2831
        %v5335 = vunpack.c.l.b16 %v2832
        %v5336 = vunpack.c.h.b16 %v2832
        %v5337 = vunpack.c.l.b16 %v2833
        %v5338 = vunpack.c.h.b16 %v2833
        %v5339 = vunpack.c.l.b16 %v2834
        %v5340 = vunpack.c.h.b16 %v2834
        %v5341 = vunpack.c.l.b16 %v2835
        %v5342 = vunpack.c.h.b16 %v2835
        %v5343 = vunpack.c.l.b16 %v2836
        %v5344 = vunpack.c.h.b16 %v2836
        %v5345 = vunpack.c.l.b16 %v2837
        %v5346 = vunpack.c.h.b16 %v2837
        %v5347 = vunpack.c.l.b16 %v2838
        %v5348 = vunpack.c.h.b16 %v2838
        %v5349 = vunpack.c.l.b16 %v2839
        %v5350 = vunpack.c.h.b16 %v2839
        %v5351 = vunpack.c.l.b16 %v2840
        %v5352 = vunpack.c.h.b16 %v2840
        %v5353 = vunpack.c.l.b16 %v2841
        %v5354 = vunpack.c.h.b16 %v2841
        %v5355 = vunpack.c.l.b16 %v2842
        %v5356 = vunpack.c.h.b16 %v2842
        %v5357 = vunpack.c.l.b16 %v2843
        %v5358 = vunpack.c.h.b16 %v2843
        %v5359 = vunpack.c.l.b16 %v2844
        %v5360 = vunpack.c.h.b16 %v2844
        %v5361 = vunpack.c.l.b16 %v2845
        %v5362 = vunpack.c.h.b16 %v2845
        %v5363 = vunpack.c.l.b16 %v2846
        %v5364 = vunpack.c.h.b16 %v2846
        %v5365 = vunpack.c.l.b16 %v2847
        %v5366 = vunpack.c.h.b16 %v2847
        %v5367 = vunpack.c.l.b16 %v2848
        %v5368 = vunpack.c.h.b16 %v2848
        %v5369 = vunpack.c.l.b16 %v2849
        %v5370 = vunpack.c.h.b16 %v2849
        %v5371 = vunpack.c.l.b16 %v2850
        %v5372 = vunpack.c.h.b16 %v2850
        %v5373 = vunpack.c.l.b16 %v2851
        %v5374 = vunpack.c.h.b16 %v2851
        %v5375 = vunpack.c.l.b16 %v2852
        %v5376 = vunpack.c.h.b16 %v2852
        %v5377 = vunpack.c.l.b16 %v2853
        %v5378 = vunpack.c.h.b16 %v2853
        %v5379 = vunpack.c.l.b16 %v2854
        %v5380 = vunpack.c.h.b16 %v2854
        %v5381 = vunpack.c.l.b16 %v2855
        %v5382 = vunpack.c.h.b16 %v2855
        %v5383 = vunpack.c.l.b16 %v2856
        %v5384 = vunpack.c.h.b16 %v2856
        %v5385 = vunpack.c.l.b16 %v2857
        %v5386 = vunpack.c.h.b16 %v2857
        %v5387 = vunpack.c.l.b16 %v2858
        %v5388 = vunpack.c.h.b16 %v2858
        %v5389 = vunpack.c.l.b16 %v2859
        %v5390 = vunpack.c.h.b16 %v2859
        %v5391 = vunpack.c.l.b16 %v2860
        %v5392 = vunpack.c.h.b16 %v2860
        %v5393 = vunpack.c.l.b16 %v2861
        %v5394 = vunpack.c.h.b16 %v2861
        %v5395 = vunpack.c.l.b16 %v2862
        %v5396 = vunpack.c.h.b16 %v2862
        %v5397 = vunpack.c.l.b16 %v2863
        %v5398 = vunpack.c.h.b16 %v2863
        %v5399 = vunpack.c.l.b16 %v2864
        %v5400 = vunpack.c.h.b16 %v2864
        %v5401 = vunpack.c.l.b16 %v2865
        %v5402 = vunpack.c.h.b16 %v2865
        %v5403 = vunpack.c.l.b16 %v2866
        %v5404 = vunpack.c.h.b16 %v2866
        %v5405 = vunpack.c.l.b16 %v2867
        %v5406 = vunpack.c.h.b16 %v2867
        %v5407 = vunpack.c.l.b16 %v2868
        %v5408 = vunpack.c.h.b16 %v2868
        %v5409 = vunpack.c.l.b16 %v2869
        %v5410 = vunpack.c.h.b16 %v2869
        %v5411 = vunpack.c.l.b16 %v2870
        %v5412 = vunpack.c.h.b16 %v2870
        %v5413 = vunpack.c.l.b16 %v2871
        %v5414 = vunpack.c.h.b16 %v2871
        %v5415 = vunpack.c.l.b16 %v2872
        %v5416 = vunpack.c.h.b16 %v2872
        %v5417 = vunpack.c.l.b16 %v2873
        %v5418 = vunpack.c.h.b16 %v2873
        %v5419 = vunpack.c.l.b16 %v2874
        %v5420 = vunpack.c.h.b16 %v2874
        %v5421 = vunpack.c.l.b16 %v2875
        %v5422 = vunpack.c.h.b16 %v2875
        %v5423 = vunpack.c.l.b16 %v2876
        %v5424 = vunpack.c.h.b16 %v2876
        %v5425 = vunpack.c.l.b16 %v2877
        %v5426 = vunpack.c.h.b16 %v2877
        %v5427 = vunpack.c.l.b16 %v2878
        %v5428 = vunpack.c.h.b16 %v2878
        %v5429 = vunpack.c.l.b16 %v2879
        %v5430 = vunpack.c.h.b16 %v2879
        %v5431 = vunpack.c.l.b16 %v2880
        %v5432 = vunpack.c.h.b16 %v2880
        %v5433 = vunpack.c.l.b16 %v2881
        %v5434 = vunpack.c.h.b16 %v2881
        %v5435 = vunpack.c.l.b16 %v2882
        %v5436 = vunpack.c.h.b16 %v2882
        %v5437 = vunpack.c.l.b16 %v2883
        %v5438 = vunpack.c.h.b16 %v2883
        %v5439 = vunpack.c.l.b16 %v2884
        %v5440 = vunpack.c.h.b16 %v2884
        %v5441 = vunpack.c.l.b16 %v2885
        %v5442 = vunpack.c.h.b16 %v2885
        %v5443 = vunpack.c.l.b16 %v2886
        %v5444 = vunpack.c.h.b16 %v2886
        %v5445 = vunpack.c.l.b16 %v2887
        %v5446 = vunpack.c.h.b16 %v2887
        %v5447 = vunpack.c.l.b16 %v2888
        %v5448 = vunpack.c.h.b16 %v2888
        %v5449 = vunpack.c.l.b16 %v2889
        %v5450 = vunpack.c.h.b16 %v2889
        %v5451 = vunpack.c.l.b16 %v2890
        %v5452 = vunpack.c.h.b16 %v2890
        %v5453 = vunpack.c.l.b16 %v2891
        %v5454 = vunpack.c.h.b16 %v2891
        %v5455 = vunpack.c.l.b16 %v2892
        %v5456 = vunpack.c.h.b16 %v2892
        %v5457 = vunpack.c.l.b16 %v2893
        %v5458 = vunpack.c.h.b16 %v2893
        %v5459 = vunpack.c.l.b16 %v2894
        %v5460 = vunpack.c.h.b16 %v2894
        %v5461 = vunpack.c.l.b16 %v2895
        %v5462 = vunpack.c.h.b16 %v2895
        %v5463 = vunpack.c.l.b16 %v2896
        %v5464 = vunpack.c.h.b16 %v2896
        %v5465 = vunpack.c.l.b16 %v2897
        %v5466 = vunpack.c.h.b16 %v2897
        %v5467 = vunpack.c.l.b16 %v2898
        %v5468 = vunpack.c.h.b16 %v2898
        %v5469 = vunpack.c.l.b16 %v2899
        %v5470 = vunpack.c.h.b16 %v2899
        %v5471 = vunpack.c.l.b16 %v2900
        %v5472 = vunpack.c.h.b16 %v2900
        %v5473 = vunpack.c.l.b16 %v2901
        %v5474 = vunpack.c.h.b16 %v2901
        %v5475 = vunpack.c.l.b16 %v2902
        %v5476 = vunpack.c.h.b16 %v2902
        %v5477 = vunpack.c.l.b16 %v2903
        %v5478 = vunpack.c.h.b16 %v2903
        %v5479 = vunpack.c.l.b16 %v2904
        %v5480 = vunpack.c.h.b16 %v2904
        %v5481 = vunpack.c.l.b16 %v2905
        %v5482 = vunpack.c.h.b16 %v2905
        %v5483 = vunpack.c.l.b16 %v2906
        %v5484 = vunpack.c.h.b16 %v2906
        %v5485 = vunpack.c.l.b16 %v2907
        %v5486 = vunpack.c.h.b16 %v2907
        %v5487 = vunpack.c.l.b16 %v2908
        %v5488 = vunpack.c.h.b16 %v2908
        %v5489 = vunpack.c.l.b16 %v2909
        %v5490 = vunpack.c.h.b16 %v2909
        %v5491 = vunpack.c.l.b16 %v2910
        %v5492 = vunpack.c.h.b16 %v2910
        %v5493 = vunpack.c.l.b16 %v2911
        %v5494 = vunpack.c.h.b16 %v2911
        %v5495 = vunpack.c.l.b16 %v2912
        %v5496 = vunpack.c.h.b16 %v2912
        %v5497 = vunpack.c.l.b16 %v2913
        %v5498 = vunpack.c.h.b16 %v2913
        %v5499 = vunpack.c.l.b16 %v2914
        %v5500 = vunpack.c.h.b16 %v2914
        %v5501 = vunpack.c.l.b16 %v2915
        %v5502 = vunpack.c.h.b16 %v2915
        %v5503 = vunpack.c.l.b16 %v2916
        %v5504 = vunpack.c.h.b16 %v2916
        %v5505 = vunpack.c.l.b16 %v2917
        %v5506 = vunpack.c.h.b16 %v2917
        %v5507 = vunpack.c.l.b16 %v2918
        %v5508 = vunpack.c.h.b16 %v2918
        %v5509 = vunpack.c.l.b16 %v2919
        %v5510 = vunpack.c.h.b16 %v2919
        %v5511 = vunpack.c.l.b16 %v2920
        %v5512 = vunpack.c.h.b16 %v2920
        %v5513 = vunpack.c.l.b16 %v2921
        %v5514 = vunpack.c.h.b16 %v2921
        %v5515 = vunpack.c.l.b16 %v2922
        %v5516 = vunpack.c.h.b16 %v2922
        %v5517 = vunpack.c.l.b16 %v2923
        %v5518 = vunpack.c.h.b16 %v2923
        %v5519 = vunpack.c.l.b16 %v2924
        %v5520 = vunpack.c.h.b16 %v2924
        %v5521 = vunpack.c.l.b16 %v2925
        %v5522 = vunpack.c.h.b16 %v2925
        %v5523 = vunpack.c.l.b16 %v2926
        %v5524 = vunpack.c.h.b16 %v2926
        %v5525 = vunpack.c.l.b16 %v2927
        %v5526 = vunpack.c.h.b16 %v2927
        %v5527 = vunpack.c.l.b16 %v2928
        %v5528 = vunpack.c.h.b16 %v2928
        %v5529 = vunpack.c.l.b16 %v2929
        %v5530 = vunpack.c.h.b16 %v2929
        %v5531 = vunpack.c.l.b16 %v2930
        %v5532 = vunpack.c.h.b16 %v2930
        %v5533 = vunpack.c.l.b16 %v2931
        %v5534 = vunpack.c.h.b16 %v2931
        %v5535 = vunpack.c.l.b16 %v2932
        %v5536 = vunpack.c.h.b16 %v2932
        %v5537 = vunpack.c.l.b16 %v2933
        %v5538 = vunpack.c.h.b16 %v2933
        %v5539 = vunpack.c.l.b16 %v2934
        %v5540 = vunpack.c.h.b16 %v2934
        %v5541 = vunpack.c.l.b16 %v2935
        %v5542 = vunpack.c.h.b16 %v2935
        %v5543 = vunpack.c.l.b16 %v2936
        %v5544 = vunpack.c.h.b16 %v2936
        %v5545 = vunpack.c.l.b16 %v2937
        %v5546 = vunpack.c.h.b16 %v2937
        %v5547 = vunpack.c.l.b16 %v2938
        %v5548 = vunpack.c.h.b16 %v2938
        %v5549 = vunpack.c.l.b16 %v2939
        %v5550 = vunpack.c.h.b16 %v2939
        %v5551 = vunpack.c.l.b16 %v2940
        %v5552 = vunpack.c.h.b16 %v2940
        %v5553 = vunpack.c.l.b16 %v2941
        %v5554 = vunpack.c.h.b16 %v2941
        %v5555 = vunpack.c.l.b16 %v2942
        %v5556 = vunpack.c.h.b16 %v2942
        %v5557 = vunpack.c.l.b16 %v2943
        %v5558 = vunpack.c.h.b16 %v2943
        %v5559 = vunpack.c.l.b16 %v2944
        %v5560 = vunpack.c.h.b16 %v2944
        %v5561 = vunpack.c.l.b16 %v2945
        %v5562 = vunpack.c.h.b16 %v2945
        %v5563 = vunpack.c.l.b16 %v2946
        %v5564 = vunpack.c.h.b16 %v2946
        %v5565 = vunpack.c.l.b16 %v2947
        %v5566 = vunpack.c.h.b16 %v2947
        %v5567 = vunpack.c.l.b16 %v2948
        %v5568 = vunpack.c.h.b16 %v2948
        %v5569 = vunpack.c.l.b16 %v2949
        %v5570 = vunpack.c.h.b16 %v2949
        %v5571 = vunpack.c.l.b16 %v2950
        %v5572 = vunpack.c.h.b16 %v2950
        %v5573 = vunpack.c.l.b16 %v2951
        %v5574 = vunpack.c.h.b16 %v2951
        %v5575 = vunpack.c.l.b16 %v2952
        %v5576 = vunpack.c.h.b16 %v2952
        %v5577 = vunpack.c.l.b16 %v2953
        %v5578 = vunpack.c.h.b16 %v2953
        %v5579 = vunpack.c.l.b16 %v2954
        %v5580 = vunpack.c.h.b16 %v2954
        %v5581 = vunpack.c.l.b16 %v2955
        %v5582 = vunpack.c.h.b16 %v2955
        %v5583 = vunpack.c.l.b16 %v2956
        %v5584 = vunpack.c.h.b16 %v2956
        %v5585 = vunpack.c.l.b16 %v2957
        %v5586 = vunpack.c.h.b16 %v2957
        %v5587 = vunpack.c.l.b16 %v2958
        %v5588 = vunpack.c.h.b16 %v2958
        %v5589 = vunpack.c.l.b16 %v2959
        %v5590 = vunpack.c.h.b16 %v2959
        %v5591 = vunpack.c.l.b16 %v2960
        %v5592 = vunpack.c.h.b16 %v2960
        %v5593 = vunpack.c.l.b16 %v2961
        %v5594 = vunpack.c.h.b16 %v2961
        %v5595 = vunpack.c.l.b16 %v2962
        %v5596 = vunpack.c.h.b16 %v2962
        %v5597 = vunpack.c.l.b16 %v2963
        %v5598 = vunpack.c.h.b16 %v2963
        %v5599 = vunpack.c.l.b16 %v2964
        %v5600 = vunpack.c.h.b16 %v2964
        %v5601 = vunpack.c.l.b16 %v2965
        %v5602 = vunpack.c.h.b16 %v2965
        %v5603 = vunpack.c.l.b16 %v2966
        %v5604 = vunpack.c.h.b16 %v2966
        %v5605 = vunpack.c.l.b16 %v2967
        %v5606 = vunpack.c.h.b16 %v2967
        %v5607 = vunpack.c.l.b16 %v2968
        %v5608 = vunpack.c.h.b16 %v2968
        %v5609 = vunpack.c.l.b16 %v2969
        %v5610 = vunpack.c.h.b16 %v2969
        %v5611 = vunpack.c.l.b16 %v2970
        %v5612 = vunpack.c.h.b16 %v2970
        %v5613 = vunpack.c.l.b16 %v2971
        %v5614 = vunpack.c.h.b16 %v2971
        %v5615 = vunpack.c.l.b16 %v2972
        %v5616 = vunpack.c.h.b16 %v2972
        %v5617 = vunpack.c.l.b16 %v2973
        %v5618 = vunpack.c.h.b16 %v2973
        %v5619 = vunpack.c.l.b16 %v2974
        %v5620 = vunpack.c.h.b16 %v2974
        %v5621 = vunpack.c.l.b16 %v2975
        %v5622 = vunpack.c.h.b16 %v2975
        %v5623 = vunpack.c.l.b16 %v2976
        %v5624 = vunpack.c.h.b16 %v2976
        %v5625 = vunpack.c.l.b16 %v2977
        %v5626 = vunpack.c.h.b16 %v2977
        %v5627 = vunpack.c.l.b16 %v2978
        %v5628 = vunpack.c.h.b16 %v2978
        %v5629 = vunpack.c.l.b16 %v2979
        %v5630 = vunpack.c.h.b16 %v2979
        %v5631 = vunpack.c.l.b16 %v2980
        %v5632 = vunpack.c.h.b16 %v2980
        %v5633 = vunpack.c.l.b16 %v2981
        %v5634 = vunpack.c.h.b16 %v2981
        %v5635 = vunpack.c.l.b16 %v2982
        %v5636 = vunpack.c.h.b16 %v2982
        %v5637 = vunpack.c.l.b16 %v2983
        %v5638 = vunpack.c.h.b16 %v2983
        %v5639 = vunpack.c.l.b16 %v2984
        %v5640 = vunpack.c.h.b16 %v2984
        %v5641 = vunpack.c.l.b16 %v2985
        %v5642 = vunpack.c.h.b16 %v2985
        %v5643 = vunpack.c.l.b16 %v2986
        %v5644 = vunpack.c.h.b16 %v2986
        %v5645 = vunpack.c.l.b16 %v2987
        %v5646 = vunpack.c.h.b16 %v2987
        %v5647 = vunpack.c.l.b16 %v2988
        %v5648 = vunpack.c.h.b16 %v2988
        %v5649 = vunpack.c.l.b16 %v2989
        %v5650 = vunpack.c.h.b16 %v2989
        %v5651 = vunpack.c.l.b16 %v2990
        %v5652 = vunpack.c.h.b16 %v2990
        %v5653 = vunpack.c.l.b16 %v2991
        %v5654 = vunpack.c.h.b16 %v2991
        %v5655 = vunpack.c.l.b16 %v2992
        %v5656 = vunpack.c.h.b16 %v2992
        %v5657 = vunpack.c.l.b16 %v2993
        %v5658 = vunpack.c.h.b16 %v2993
        %v5659 = vunpack.c.l.b16 %v2994
        %v5660 = vunpack.c.h.b16 %v2994
        %v5661 = vunpack.c.l.b16 %v2995
        %v5662 = vunpack.c.h.b16 %v2995
        %v5663 = vunpack.c.l.b16 %v2996
        %v5664 = vunpack.c.h.b16 %v2996
        %v5665 = vunpack.c.l.b16 %v2997
        %v5666 = vunpack.c.h.b16 %v2997
        %v5667 = vunpack.c.l.b16 %v2998
        %v5668 = vunpack.c.h.b16 %v2998
        %v5669 = vunpack.c.l.b16 %v2999
        %v5670 = vunpack.c.h.b16 %v2999
        %v5671 = vunpack.c.l.b16 %v3000
        %v5672 = vunpack.c.h.b16 %v3000
        %v5673 = vunpack.c.l.b16 %v3001
        %v5674 = vunpack.c.h.b16 %v3001
        %v5675 = vunpack.c.l.b16 %v3002
        %v5676 = vunpack.c.h.b16 %v3002
        %v5677 = vunpack.c.l.b16 %v3003
        %v5678 = vunpack.c.h.b16 %v3003
        %v5679 = vunpack.c.l.b16 %v3004
        %v5680 = vunpack.c.h.b16 %v3004
        %v5681 = vunpack.c.l.b16 %v3005
        %v5682 = vunpack.c.h.b16 %v3005
        %v5683 = vunpack.c.l.b16 %v3006
        %v5684 = vunpack.c.h.b16 %v3006
        %v5685 = vunpack.c.l.b16 %v3007
        %v5686 = vunpack.c.h.b16 %v3007
        %v5687 = vunpack.c.l.b16 %v3008
        %v5688 = vunpack.c.h.b16 %v3008
        %v5689 = vunpack.c.l.b16 %v3009
        %v5690 = vunpack.c.h.b16 %v3009
        %v5691 = vunpack.c.l.b16 %v3010
        %v5692 = vunpack.c.h.b16 %v3010
        %v5693 = vunpack.c.l.b16 %v3011
        %v5694 = vunpack.c.h.b16 %v3011
        %v5695 = vunpack.c.l.b16 %v3012
        %v5696 = vunpack.c.h.b16 %v3012
        %v5697 = vunpack.c.l.b16 %v3013
        %v5698 = vunpack.c.h.b16 %v3013
        %v5699 = vunpack.c.l.b16 %v3014
        %v5700 = vunpack.c.h.b16 %v3014
        %v5701 = vunpack.c.l.b16 %v3015
        %v5702 = vunpack.c.h.b16 %v3015
        %v5703 = vunpack.c.l.b16 %v3016
        %v5704 = vunpack.c.h.b16 %v3016
        %v5705 = vunpack.c.l.b16 %v3017
        %v5706 = vunpack.c.h.b16 %v3017
        %v5707 = vunpack.c.l.b16 %v3018
        %v5708 = vunpack.c.h.b16 %v3018
        %v5709 = vunpack.c.l.b16 %v3019
        %v5710 = vunpack.c.h.b16 %v3019
        %v5711 = vunpack.c.l.b16 %v3020
        %v5712 = vunpack.c.h.b16 %v3020
        %v5713 = vunpack.c.l.b16 %v3021
        %v5714 = vunpack.c.h.b16 %v3021
        %v5715 = vunpack.c.l.b16 %v3022
        %v5716 = vunpack.c.h.b16 %v3022
        %v5717 = vunpack.c.l.b16 %v3023
        %v5718 = vunpack.c.h.b16 %v3023
        %v5719 = vunpack.c.l.b16 %v3024
        %v5720 = vunpack.c.h.b16 %v3024
        %v5721 = vunpack.c.l.b16 %v3025
        %v5722 = vunpack.c.h.b16 %v3025
        %v5723 = vunpack.c.l.b16 %v3026
        %v5724 = vunpack.c.h.b16 %v3026
        %v5725 = vunpack.c.l.b16 %v3027
        %v5726 = vunpack.c.h.b16 %v3027
        %v5727 = vunpack.c.l.b16 %v3028
        %v5728 = vunpack.c.h.b16 %v3028
        %v5729 = vunpack.c.l.b16 %v3029
        %v5730 = vunpack.c.h.b16 %v3029
        %v5731 = vunpack.c.l.b16 %v3030
        %v5732 = vunpack.c.h.b16 %v3030
        %v5733 = vunpack.c.l.b16 %v3031
        %v5734 = vunpack.c.h.b16 %v3031
        %v5735 = vunpack.c.l.b16 %v3032
        %v5736 = vunpack.c.h.b16 %v3032
        %v5737 = vunpack.c.l.b16 %v3033
        %v5738 = vunpack.c.h.b16 %v3033
        %v5739 = vunpack.c.l.b16 %v3034
        %v5740 = vunpack.c.h.b16 %v3034
        %v5741 = vunpack.c.l.b16 %v3035
        %v5742 = vunpack.c.h.b16 %v3035
        %v5743 = vunpack.c.l.b16 %v3036
        %v5744 = vunpack.c.h.b16 %v3036
        %v5745 = vunpack.c.l.b16 %v3037
        %v5746 = vunpack.c.h.b16 %v3037
        %v5747 = vunpack.c.l.b16 %v3038
        %v5748 = vunpack.c.h.b16 %v3038
        %v5749 = vunpack.c.l.b16 %v3039
        %v5750 = vunpack.c.h.b16 %v3039
        %v5751 = vunpack.c.l.b16 %v3040
        %v5752 = vunpack.c.h.b16 %v3040
        %v5753 = vunpack.c.l.b16 %v3041
        %v5754 = vunpack.c.h.b16 %v3041
        %v5755 = vunpack.c.l.b16 %v3042
        %v5756 = vunpack.c.h.b16 %v3042
        %v5757 = vunpack.c.l.b16 %v3043
        %v5758 = vunpack.c.h.b16 %v3043
        %v5759 = vunpack.c.l.b16 %v3044
        %v5760 = vunpack.c.h.b16 %v3044
        %v5761 = vunpack.c.l.b16 %v3045
        %v5762 = vunpack.c.h.b16 %v3045
        %v5763 = vunpack.c.l.b16 %v3046
        %v5764 = vunpack.c.h.b16 %v3046
        %v5765 = vunpack.c.l.b16 %v3047
        %v5766 = vunpack.c.h.b16 %v3047
        %v5767 = vunpack.c.l.b16 %v3048
        %v5768 = vunpack.c.h.b16 %v3048
        %v5769 = vunpack.c.l.b16 %v3049
        %v5770 = vunpack.c.h.b16 %v3049
        %v5771 = vunpack.c.l.b16 %v3050
        %v5772 = vunpack.c.h.b16 %v3050
        %v5773 = vunpack.c.l.b16 %v3051
        %v5774 = vunpack.c.h.b16 %v3051
        %v5775 = vunpack.c.l.b16 %v3052
        %v5776 = vunpack.c.h.b16 %v3052
        %v5777 = vunpack.c.l.b16 %v3053
        %v5778 = vunpack.c.h.b16 %v3053
        %v5779 = vunpack.c.l.b16 %v3054
        %v5780 = vunpack.c.h.b16 %v3054
        %v5781 = vunpack.c.l.b16 %v3055
        %v5782 = vunpack.c.h.b16 %v3055
        %v5783 = vunpack.c.l.b16 %v3056
        %v5784 = vunpack.c.h.b16 %v3056
        %v5785 = vunpack.c.l.b16 %v3057
        %v5786 = vunpack.c.h.b16 %v3057
        %v5787 = vunpack.c.l.b16 %v3058
        %v5788 = vunpack.c.h.b16 %v3058
        %v5789 = vunpack.c.l.b16 %v3059
        %v5790 = vunpack.c.h.b16 %v3059
        %v5791 = vunpack.c.l.b16 %v3060
        %v5792 = vunpack.c.h.b16 %v3060
        %v5793 = vunpack.c.l.b16 %v3061
        %v5794 = vunpack.c.h.b16 %v3061
        %v5795 = vunpack.c.l.b16 %v3062
        %v5796 = vunpack.c.h.b16 %v3062
        %v5797 = vunpack.c.l.b16 %v3063
        %v5798 = vunpack.c.h.b16 %v3063
        %v5799 = vunpack.c.l.b16 %v3064
        %v5800 = vunpack.c.h.b16 %v3064
        %v5801 = vunpack.c.l.b16 %v3065
        %v5802 = vunpack.c.h.b16 %v3065
        %v5803 = vunpack.c.l.b16 %v3066
        %v5804 = vunpack.c.h.b16 %v3066
        %v5805 = vunpack.c.l.b16 %v3067
        %v5806 = vunpack.c.h.b16 %v3067
        %v5807 = vunpack.c.l.b16 %v3068
        %v5808 = vunpack.c.h.b16 %v3068
        %v5809 = vunpack.c.l.b16 %v3069
        %v5810 = vunpack.c.h.b16 %v3069
        %v5811 = vunpack.c.l.b16 %v3070
        %v5812 = vunpack.c.h.b16 %v3070
        %v5813 = vunpack.c.l.b16 %v3071
        %v5814 = vunpack.c.h.b16 %v3071
        %v5815 = vunpack.c.l.b16 %v3072
        %v5816 = vunpack.c.h.b16 %v3072
        %v5817 = vunpack.c.l.b16 %v3073
        %v5818 = vunpack.c.h.b16 %v3073
        %v5819 = vunpack.c.l.b16 %v3074
        %v5820 = vunpack.c.h.b16 %v3074
        %v5821 = vunpack.c.l.b16 %v3075
        %v5822 = vunpack.c.h.b16 %v3075
        %v5823 = vunpack.c.l.b16 %v3076
        %v5824 = vunpack.c.h.b16 %v3076
        %v5825 = vunpack.c.l.b16 %v3077
        %v5826 = vunpack.c.h.b16 %v3077
        %v5827 = vunpack.c.l.b16 %v3078
        %v5828 = vunpack.c.h.b16 %v3078
        %v5829 = vunpack.c.l.b16 %v3079
        %v5830 = vunpack.c.h.b16 %v3079
        %v5831 = vunpack.c.l.b16 %v3080
        %v5832 = vunpack.c.h.b16 %v3080
        %v5833 = vunpack.c.l.b16 %v3081
        %v5834 = vunpack.c.h.b16 %v3081
        %v5835 = vunpack.c.l.b16 %v3082
        %v5836 = vunpack.c.h.b16 %v3082
        %v5837 = vunpack.c.l.b16 %v3083
        %v5838 = vunpack.c.h.b16 %v3083
        %v5839 = vunpack.c.l.b16 %v3084
        %v5840 = vunpack.c.h.b16 %v3084
        %v5841 = vunpack.c.l.b16 %v3085
        %v5842 = vunpack.c.h.b16 %v3085
        %v5843 = vunpack.c.l.b16 %v3086
        %v5844 = vunpack.c.h.b16 %v3086
        %v5845 = vunpack.c.l.b16 %v3087
        %v5846 = vunpack.c.h.b16 %v3087
        %v5847 = vunpack.c.l.b16 %v3088
        %v5848 = vunpack.c.h.b16 %v3088
        %v5849 = vunpack.c.l.b16 %v3089
        %v5850 = vunpack.c.h.b16 %v3089
        %v5851 = vunpack.c.l.b16 %v3090
        %v5852 = vunpack.c.h.b16 %v3090
        %v5853 = vunpack.c.l.b16 %v3091
        %v5854 = vunpack.c.h.b16 %v3091
        %v5855 = vunpack.c.l.b16 %v3092
        %v5856 = vunpack.c.h.b16 %v3092
        %v5857 = vunpack.c.l.b16 %v3093
        %v5858 = vunpack.c.h.b16 %v3093
        %v5859 = vunpack.c.l.b16 %v3094
        %v5860 = vunpack.c.h.b16 %v3094
        %v5861 = vunpack.c.l.b16 %v3095
        %v5862 = vunpack.c.h.b16 %v3095
        %v5863 = vunpack.c.l.b16 %v3096
        %v5864 = vunpack.c.h.b16 %v3096
        %v5865 = vunpack.c.l.b16 %v3097
        %v5866 = vunpack.c.h.b16 %v3097
        %v5867 = vunpack.c.l.b16 %v3098
        %v5868 = vunpack.c.h.b16 %v3098
        %v5869 = vunpack.c.l.b16 %v3099
        %v5870 = vunpack.c.h.b16 %v3099
        %v5871 = vunpack.c.l.b16 %v3100
        %v5872 = vunpack.c.h.b16 %v3100
        %v5873 = vunpack.c.l.b16 %v3101
        %v5874 = vunpack.c.h.b16 %v3101
        %v5875 = vunpack.c.l.b16 %v3102
        %v5876 = vunpack.c.h.b16 %v3102
        %v5877 = vunpack.c.l.b16 %v3103
        %v5878 = vunpack.c.h.b16 %v3103
        %v5879 = vunpack.c.l.b16 %v3104
        %v5880 = vunpack.c.h.b16 %v3104
        %v5881 = vunpack.c.l.b16 %v3105
        %v5882 = vunpack.c.h.b16 %v3105
        %v5883 = vunpack.c.l.b16 %v3106
        %v5884 = vunpack.c.h.b16 %v3106
        %v5885 = vunpack.c.l.b16 %v3107
        %v5886 = vunpack.c.h.b16 %v3107
        %v5887 = vunpack.c.l.b16 %v3108
        %v5888 = vunpack.c.h.b16 %v3108
        %v5889 = vunpack.c.l.b16 %v3109
        %v5890 = vunpack.c.h.b16 %v3109
        %v5891 = vunpack.c.l.b16 %v3110
        %v5892 = vunpack.c.h.b16 %v3110
        %v5893 = vunpack.c.l.b16 %v3111
        %v5894 = vunpack.c.h.b16 %v3111
        %v5895 = vunpack.c.l.b16 %v3112
        %v5896 = vunpack.c.h.b16 %v3112
        %v5897 = vunpack.c.l.b16 %v3113
        %v5898 = vunpack.c.h.b16 %v3113
        %v5899 = vunpack.c.l.b16 %v3114
        %v5900 = vunpack.c.h.b16 %v3114
        %v5901 = vunpack.c.l.b16 %v3115
        %v5902 = vunpack.c.h.b16 %v3115
        %v5903 = vunpack.c.l.b16 %v3116
        %v5904 = vunpack.c.h.b16 %v3116
        %v5905 = vunpack.c.l.b16 %v3117
        %v5906 = vunpack.c.h.b16 %v3117
        %v5907 = vunpack.c.l.b16 %v3118
        %v5908 = vunpack.c.h.b16 %v3118
        %v5909 = vunpack.c.l.b16 %v3119
        %v5910 = vunpack.c.h.b16 %v3119
        %v5911 = vunpack.c.l.b16 %v3120
        %v5912 = vunpack.c.h.b16 %v3120
        %v5913 = vunpack.c.l.b16 %v3121
        %v5914 = vunpack.c.h.b16 %v3121
        %v5915 = vunpack.c.l.b16 %v3122
        %v5916 = vunpack.c.h.b16 %v3122
        %v5917 = vunpack.c.l.b16 %v3123
        %v5918 = vunpack.c.h.b16 %v3123
        %v5919 = vunpack.c.l.b16 %v3124
        %v5920 = vunpack.c.h.b16 %v3124
        %v5921 = vunpack.c.l.b16 %v3125
        %v5922 = vunpack.c.h.b16 %v3125
        %v5923 = vunpack.c.l.b16 %v3126
        %v5924 = vunpack.c.h.b16 %v3126
        %v5925 = vunpack.c.l.b16 %v3127
        %v5926 = vunpack.c.h.b16 %v3127
        %v5927 = vunpack.c.l.b16 %v3128
        %v5928 = vunpack.c.h.b16 %v3128
        %v5929 = vunpack.c.l.b16 %v3129
        %v5930 = vunpack.c.h.b16 %v3129
        %v5931 = vunpack.c.l.b16 %v3130
        %v5932 = vunpack.c.h.b16 %v3130
        %v5933 = vunpack.c.l.b16 %v3131
        %v5934 = vunpack.c.h.b16 %v3131
        %v5935 = vunpack.c.l.b16 %v3132
        %v5936 = vunpack.c.h.b16 %v3132
        %v5937 = vunpack.c.l.b16 %v3133
        %v5938 = vunpack.c.h.b16 %v3133
        %v5939 = vunpack.c.l.b16 %v3134
        %v5940 = vunpack.c.h.b16 %v3134
        %v5941 = vunpack.c.l.b16 %v3135
        %v5942 = vunpack.c.h.b16 %v3135
        %v5943 = vunpack.c.l.b16 %v3136
        %v5944 = vunpack.c.h.b16 %v3136
        %v5945 = vunpack.c.l.b16 %v3137
        %v5946 = vunpack.c.h.b16 %v3137
        %v5947 = vunpack.c.l.b16 %v3138
        %v5948 = vunpack.c.h.b16 %v3138
        %v5949 = vunpack.c.l.b16 %v3139
        %v5950 = vunpack.c.h.b16 %v3139
        %v5951 = vunpack.c.l.b16 %v3140
        %v5952 = vunpack.c.h.b16 %v3140
        %v5953 = vunpack.c.l.b16 %v3141
        %v5954 = vunpack.c.h.b16 %v3141
        %v5955 = vunpack.c.l.b16 %v3142
        %v5956 = vunpack.c.h.b16 %v3142
        %v5957 = vunpack.c.l.b16 %v3143
        %v5958 = vunpack.c.h.b16 %v3143
        %v5959 = vunpack.c.l.b16 %v3144
        %v5960 = vunpack.c.h.b16 %v3144
        %v5961 = vunpack.c.l.b16 %v3145
        %v5962 = vunpack.c.h.b16 %v3145
        %v5963 = vunpack.c.l.b16 %v3146
        %v5964 = vunpack.c.h.b16 %v3146
        %v5965 = vunpack.c.l.b16 %v3147
        %v5966 = vunpack.c.h.b16 %v3147
        %v5967 = vunpack.c.l.b16 %v3148
        %v5968 = vunpack.c.h.b16 %v3148
        %v5969 = vunpack.c.l.b16 %v3149
        %v5970 = vunpack.c.h.b16 %v3149
        %v5971 = vunpack.c.l.b16 %v3150
        %v5972 = vunpack.c.h.b16 %v3150
        %v5973 = vunpack.c.l.b16 %v3151
        %v5974 = vunpack.c.h.b16 %v3151
        %v5975 = vunpack.c.l.b16 %v3152
        %v5976 = vunpack.c.h.b16 %v3152
        %v5977 = vunpack.c.l.b16 %v3153
        %v5978 = vunpack.c.h.b16 %v3153
        %v5979 = vunpack.c.l.b16 %v3154
        %v5980 = vunpack.c.h.b16 %v3154
        %v5981 = vunpack.c.l.b16 %v3155
        %v5982 = vunpack.c.h.b16 %v3155
        %v5983 = vunpack.c.l.b16 %v3156
        %v5984 = vunpack.c.h.b16 %v3156
        %v5985 = vunpack.c.l.b16 %v3157
        %v5986 = vunpack.c.h.b16 %v3157
        %v5987 = vunpack.c.l.b16 %v3158
        %v5988 = vunpack.c.h.b16 %v3158
        %v5989 = vunpack.c.l.b16 %v3159
        %v5990 = vunpack.c.h.b16 %v3159
        %v5991 = vunpack.c.l.b16 %v3160
        %v5992 = vunpack.c.h.b16 %v3160
        %v5993 = vunpack.c.l.b16 %v3161
        %v5994 = vunpack.c.h.b16 %v3161
        %v5995 = vunpack.c.l.b16 %v3162
        %v5996 = vunpack.c.h.b16 %v3162
        %v5997 = vunpack.c.l.b16 %v3163
        %v5998 = vunpack.c.h.b16 %v3163
        %v5999 = vunpack.c.l.b16 %v3164
        %v6000 = vunpack.c.h.b16 %v3164
        %v6001 = vunpack.c.l.b16 %v3165
        %v6002 = vunpack.c.h.b16 %v3165
        %v6003 = vunpack.c.l.b16 %v3166
        %v6004 = vunpack.c.h.b16 %v3166
        %v6005 = vunpack.c.l.b16 %v3167
        %v6006 = vunpack.c.h.b16 %v3167
        %v6007 = vunpack.c.l.b16 %v3168
        %v6008 = vunpack.c.h.b16 %v3168
        %v6009 = vunpack.c.l.b16 %v3169
        %v6010 = vunpack.c.h.b16 %v3169
        %v6011 = vunpack.c.l.b16 %v3170
        %v6012 = vunpack.c.h.b16 %v3170
        %v6013 = vunpack.c.l.b16 %v3171
        %v6014 = vunpack.c.h.b16 %v3171
        %v6015 = vunpack.c.l.b16 %v3172
        %v6016 = vunpack.c.h.b16 %v3172
        %v6017 = vunpack.c.l.b16 %v3173
        %v6018 = vunpack.c.h.b16 %v3173
        %v6019 = vunpack.c.l.b16 %v3174
        %v6020 = vunpack.c.h.b16 %v3174
        %v6021 = vunpack.c.l.b16 %v3175
        %v6022 = vunpack.c.h.b16 %v3175
        %v6023 = vunpack.c.l.b16 %v3176
        %v6024 = vunpack.c.h.b16 %v3176
        %v6025 = vunpack.c.l.b16 %v3177
        %v6026 = vunpack.c.h.b16 %v3177
        %v6027 = vunpack.c.l.b16 %v3178
        %v6028 = vunpack.c.h.b16 %v3178
        %v6029 = vunpack.c.l.b16 %v3179
        %v6030 = vunpack.c.h.b16 %v3179
        %v6031 = vunpack.c.l.b16 %v3180
        %v6032 = vunpack.c.h.b16 %v3180
        %v6033 = vunpack.c.l.b16 %v3181
        %v6034 = vunpack.c.h.b16 %v3181
        %v6035 = vunpack.c.l.b16 %v3182
        %v6036 = vunpack.c.h.b16 %v3182
        %v6037 = vunpack.c.l.b16 %v3183
        %v6038 = vunpack.c.h.b16 %v3183
        %v6039 = vunpack.c.l.b16 %v3184
        %v6040 = vunpack.c.h.b16 %v3184
        %v6041 = vunpack.c.l.b16 %v3185
        %v6042 = vunpack.c.h.b16 %v3185
        %v6043 = vunpack.c.l.b16 %v3186
        %v6044 = vunpack.c.h.b16 %v3186
        %v6045 = vunpack.c.l.b16 %v3187
        %v6046 = vunpack.c.h.b16 %v3187
        %v6047 = vunpack.c.l.b16 %v3188
        %v6048 = vunpack.c.h.b16 %v3188
        %v6049 = vunpack.c.l.b16 %v3189
        %v6050 = vunpack.c.h.b16 %v3189
        %v6051 = vunpack.c.l.b16 %v3190
        %v6052 = vunpack.c.h.b16 %v3190
        %v6053 = vunpack.c.l.b16 %v3191
        %v6054 = vunpack.c.h.b16 %v3191
        %v6055 = vunpack.c.l.b16 %v3192
        %v6056 = vunpack.c.h.b16 %v3192
        %v6057 = vunpack.c.l.b16 %v3193
        %v6058 = vunpack.c.h.b16 %v3193
        %v6059 = vunpack.c.l.b16 %v3194
        %v6060 = vunpack.c.h.b16 %v3194
        %v6061 = vunpack.c.l.b16 %v3195
        %v6062 = vunpack.c.h.b16 %v3195
        %v6063 = vunpack.c.l.b16 %v3196
        %v6064 = vunpack.c.h.b16 %v3196
        %v6065 = vunpack.c.l.b16 %v3197
        %v6066 = vunpack.c.h.b16 %v3197
        %v6067 = vunpack.c.l.b16 %v3198
        %v6068 = vunpack.c.h.b16 %v3198
        %v6069 = vunpack.c.l.b16 %v3199
        %v6070 = vunpack.c.h.b16 %v3199
        %v6071 = vunpack.c.l.b16 %v3200
        %v6072 = vunpack.c.h.b16 %v3200
        %v6073 = vunpack.c.l.b16 %v3201
        %v6074 = vunpack.c.h.b16 %v3201
        %v6075 = vunpack.c.l.b16 %v3202
        %v6076 = vunpack.c.h.b16 %v3202
        %v6077 = vunpack.c.l.b16 %v3203
        %v6078 = vunpack.c.h.b16 %v3203
        %v6079 = vunpack.c.l.b16 %v3204
        %v6080 = vunpack.c.h.b16 %v3204
        %v6081 = vunpack.c.l.b16 %v3205
        %v6082 = vunpack.c.h.b16 %v3205
        %v6083 = vunpack.c.l.b16 %v3206
        %v6084 = vunpack.c.h.b16 %v3206
        %v6085 = vunpack.c.l.b16 %v3207
        %v6086 = vunpack.c.h.b16 %v3207
        %v6087 = vunpack.c.l.b16 %v3208
        %v6088 = vunpack.c.h.b16 %v3208
        %v6089 = vunpack.c.l.b16 %v3209
        %v6090 = vunpack.c.h.b16 %v3209
        %v6091 = vunpack.c.l.b16 %v3210
        %v6092 = vunpack.c.h.b16 %v3210
        %v6093 = vunpack.c.l.b16 %v3211
        %v6094 = vunpack.c.h.b16 %v3211
        %v6095 = vunpack.c.l.b16 %v3212
        %v6096 = vunpack.c.h.b16 %v3212
        %v6097 = vunpack.c.l.b16 %v3213
        %v6098 = vunpack.c.h.b16 %v3213
        %v6099 = vunpack.c.l.b16 %v3214
        %v6100 = vunpack.c.h.b16 %v3214
        %v6101 = vunpack.c.l.b16 %v3215
        %v6102 = vunpack.c.h.b16 %v3215
        %v6103 = vunpack.c.l.b16 %v3216
        %v6104 = vunpack.c.h.b16 %v3216
        %v6105 = vunpack.c.l.b16 %v3217
        %v6106 = vunpack.c.h.b16 %v3217
        %v6107 = vunpack.c.l.b16 %v3218
        %v6108 = vunpack.c.h.b16 %v3218
        %v6109 = vunpack.c.l.b16 %v3219
        %v6110 = vunpack.c.h.b16 %v3219
        %v6111 = vunpack.c.l.b16 %v3220
        %v6112 = vunpack.c.h.b16 %v3220
        %v6113 = vunpack.c.l.b16 %v3221
        %v6114 = vunpack.c.h.b16 %v3221
        %v6115 = vunpack.c.l.b16 %v3222
        %v6116 = vunpack.c.h.b16 %v3222
        %v6117 = vunpack.c.l.b16 %v3223
        %v6118 = vunpack.c.h.b16 %v3223
        %v6119 = vunpack.c.l.b16 %v3224
        %v6120 = vunpack.c.h.b16 %v3224
        %v6121 = vunpack.c.l.b16 %v3225
        %v6122 = vunpack.c.h.b16 %v3225
        %v6123 = vunpack.c.l.b16 %v3226
        %v6124 = vunpack.c.h.b16 %v3226
        %v6125 = vunpack.c.l.b16 %v3227
        %v6126 = vunpack.c.h.b16 %v3227
        %v6127 = vunpack.c.l.b16 %v3228
        %v6128 = vunpack.c.h.b16 %v3228
        %v6129 = vunpack.c.l.b16 %v3229
        %v6130 = vunpack.c.h.b16 %v3229
        %v6131 = vunpack.c.l.b16 %v3230
        %v6132 = vunpack.c.h.b16 %v3230
        %v6133 = vunpack.c.l.b16 %v3231
        %v6134 = vunpack.c.h.b16 %v3231
        %v6135 = vunpack.c.l.b16 %v3232
        %v6136 = vunpack.c.h.b16 %v3232
        %v6137 = vunpack.c.l.b16 %v3233
        %v6138 = vunpack.c.h.b16 %v3233
        %v6139 = vunpack.c.l.b16 %v3234
        %v6140 = vunpack.c.h.b16 %v3234
        %v6141 = vunpack.c.l.b16 %v3235
        %v6142 = vunpack.c.h.b16 %v3235
        %v6143 = vunpack.c.l.b16 %v3236
        %v6144 = vunpack.c.h.b16 %v3236
        %v6145 = vunpack.c.l.b16 %v3237
        %v6146 = vunpack.c.h.b16 %v3237
        %v6147 = vunpack.c.l.b16 %v3238
        %v6148 = vunpack.c.h.b16 %v3238
        %v6149 = vunpack.c.l.b16 %v3239
        %v6150 = vunpack.c.h.b16 %v3239
        %v6151 = vunpack.c.l.b16 %v3240
        %v6152 = vunpack.c.h.b16 %v3240
        %v6153 = vunpack.c.l.b16 %v3241
        %v6154 = vunpack.c.h.b16 %v3241
        %v6155 = vunpack.c.l.b16 %v3242
        %v6156 = vunpack.c.h.b16 %v3242
        %v6157 = vunpack.c.l.b16 %v3243
        %v6158 = vunpack.c.h.b16 %v3243
        %v6159 = vunpack.c.l.b16 %v3244
        %v6160 = vunpack.c.h.b16 %v3244
        %v6161 = vunpack.c.l.b16 %v3245
        %v6162 = vunpack.c.h.b16 %v3245
        %v6163 = vunpack.c.l.b16 %v3246
        %v6164 = vunpack.c.h.b16 %v3246
        %v6165 = vunpack.c.l.b16 %v3247
        %v6166 = vunpack.c.h.b16 %v3247
        %v6167 = vunpack.c.l.b16 %v3248
        %v6168 = vunpack.c.h.b16 %v3248
        %v6169 = vunpack.c.l.b16 %v3249
        %v6170 = vunpack.c.h.b16 %v3249
        %v6171 = vunpack.c.l.b16 %v3250
        %v6172 = vunpack.c.h.b16 %v3250
        %v6173 = vunpack.c.l.b16 %v3251
        %v6174 = vunpack.c.h.b16 %v3251
        %v6175 = vunpack.c.l.b16 %v3252
        %v6176 = vunpack.c.h.b16 %v3252
        %v6177 = vunpack.c.l.b16 %v3253
        %v6178 = vunpack.c.h.b16 %v3253
        %v6179 = vunpack.c.l.b16 %v3254
        %v6180 = vunpack.c.h.b16 %v3254
        %v6181 = vunpack.c.l.b16 %v3255
        %v6182 = vunpack.c.h.b16 %v3255
        %v6183 = vunpack.c.l.b16 %v3256
        %v6184 = vunpack.c.h.b16 %v3256
        %v6185 = vunpack.c.l.b16 %v3257
        %v6186 = vunpack.c.h.b16 %v3257
        %v6187 = vunpack.c.l.b16 %v3258
        %v6188 = vunpack.c.h.b16 %v3258
        %v6189 = vunpack.c.l.b16 %v3259
        %v6190 = vunpack.c.h.b16 %v3259
        %v6191 = vunpack.c.l.b16 %v3260
        %v6192 = vunpack.c.h.b16 %v3260
        %v6193 = vunpack.c.l.b16 %v3261
        %v6194 = vunpack.c.h.b16 %v3261
        %v6195 = vunpack.c.l.b16 %v3262
        %v6196 = vunpack.c.h.b16 %v3262
        %v6197 = vunpack.c.l.b16 %v3263
        %v6198 = vunpack.c.h.b16 %v3263
        %v6199 = vunpack.c.l.b16 %v3264
        %v6200 = vunpack.c.h.b16 %v3264
        %v6201 = vunpack.c.l.b16 %v3265
        %v6202 = vunpack.c.h.b16 %v3265
        %v6203 = vunpack.c.l.b16 %v3266
        %v6204 = vunpack.c.h.b16 %v3266
        %v6205 = vunpack.c.l.b16 %v3267
        %v6206 = vunpack.c.h.b16 %v3267
        %v6207 = vunpack.c.l.b16 %v3268
        %v6208 = vunpack.c.h.b16 %v3268
        %v6209 = vunpack.c.l.b16 %v3269
        %v6210 = vunpack.c.h.b16 %v3269
        %v6211 = vunpack.c.l.b16 %v3270
        %v6212 = vunpack.c.h.b16 %v3270
        %v6213 = vunpack.c.l.b16 %v3271
        %v6214 = vunpack.c.h.b16 %v3271
        %v6215 = vunpack.c.l.b16 %v3272
        %v6216 = vunpack.c.h.b16 %v3272
        %v6217 = vunpack.c.l.b16 %v3273
        %v6218 = vunpack.c.h.b16 %v3273
        %v6219 = vunpack.c.l.b16 %v3274
        %v6220 = vunpack.c.h.b16 %v3274
        %v6221 = vunpack.c.l.b16 %v3275
        %v6222 = vunpack.c.h.b16 %v3275
        %v6223 = vunpack.c.l.b16 %v3276
        %v6224 = vunpack.c.h.b16 %v3276
        %v6225 = vunpack.c.l.b16 %v3277
        %v6226 = vunpack.c.h.b16 %v3277
        %v6227 = vunpack.c.l.b16 %v3278
        %v6228 = vunpack.c.h.b16 %v3278
        %v6229 = vunpack.c.l.b16 %v3279
        %v6230 = vunpack.c.h.b16 %v3279
        %v6231 = vunpack.c.l.b16 %v3280
        %v6232 = vunpack.c.h.b16 %v3280
        %v6233 = vunpack.c.l.b16 %v3281
        %v6234 = vunpack.c.h.b16 %v3281
        %v6235 = vunpack.c.l.b16 %v3282
        %v6236 = vunpack.c.h.b16 %v3282
        %v6237 = vunpack.c.l.b16 %v3283
        %v6238 = vunpack.c.h.b16 %v3283
        %v6239 = vunpack.c.l.b16 %v3284
        %v6240 = vunpack.c.h.b16 %v3284
        %v6241 = vunpack.c.l.b16 %v3285
        %v6242 = vunpack.c.h.b16 %v3285
        %v6243 = vunpack.c.l.b16 %v3286
        %v6244 = vunpack.c.h.b16 %v3286
        %v6245 = vunpack.c.l.b16 %v3287
        %v6246 = vunpack.c.h.b16 %v3287
        %v6247 = vunpack.c.l.b16 %v3288
        %v6248 = vunpack.c.h.b16 %v3288
        %v6249 = vunpack.c.l.b16 %v3289
        %v6250 = vunpack.c.h.b16 %v3289
        %v6251 = vunpack.c.l.b16 %v3290
        %v6252 = vunpack.c.h.b16 %v3290
        %v6253 = vunpack.c.l.b16 %v3291
        %v6254 = vunpack.c.h.b16 %v3291
        %v6255 = vunpack.c.l.b16 %v3292
        %v6256 = vunpack.c.h.b16 %v3292
        %v6257 = vunpack.c.l.b16 %v3293
        %v6258 = vunpack.c.h.b16 %v3293
        %v6259 = vunpack.c.l.b16 %v3294
        %v6260 = vunpack.c.h.b16 %v3294
        %v6261 = vunpack.c.l.b16 %v3295
        %v6262 = vunpack.c.h.b16 %v3295
        %v6263 = vunpack.c.l.b16 %v3296
        %v6264 = vunpack.c.h.b16 %v3296
        %v6265 = vunpack.c.l.b16 %v3297
        %v6266 = vunpack.c.h.b16 %v3297
        %v6267 = vunpack.c.l.b16 %v3298
        %v6268 = vunpack.c.h.b16 %v3298
        %v6269 = vunpack.c.l.b16 %v3299
        %v6270 = vunpack.c.h.b16 %v3299
        %v6271 = vunpack.c.l.b16 %v3300
        %v6272 = vunpack.c.h.b16 %v3300
        %v6273 = vunpack.c.l.b16 %v3301
        %v6274 = vunpack.c.h.b16 %v3301
        %v6275 = vunpack.c.l.b16 %v3302
        %v6276 = vunpack.c.h.b16 %v3302
        %v6277 = vunpack.c.l.b16 %v3303
        %v6278 = vunpack.c.h.b16 %v3303
        %v6279 = vunpack.c.l.b16 %v3304
        %v6280 = vunpack.c.h.b16 %v3304
        %v6281 = vunpack.c.l.b16 %v3305
        %v6282 = vunpack.c.h.b16 %v3305
        %v6283 = vunpack.c.l.b16 %v3306
        %v6284 = vunpack.c.h.b16 %v3306
        %v6285 = vunpack.c.l.b16 %v3307
        %v6286 = vunpack.c.h.b16 %v3307
        %v6287 = vunpack.c.l.b16 %v3308
        %v6288 = vunpack.c.h.b16 %v3308
        %v6289 = vunpack.c.l.b16 %v3309
        %v6290 = vunpack.c.h.b16 %v3309
        %v6291 = vunpack.c.l.b16 %v3310
        %v6292 = vunpack.c.h.b16 %v3310
        %v6293 = vunpack.c.l.b16 %v3311
        %v6294 = vunpack.c.h.b16 %v3311
        %v6295 = vunpack.c.l.b16 %v3312
        %v6296 = vunpack.c.h.b16 %v3312
        %v6297 = vunpack.c.l.b16 %v3313
        %v6298 = vunpack.c.h.b16 %v3313
        %v6299 = vunpack.c.l.b16 %v3314
        %v6300 = vunpack.c.h.b16 %v3314
        %v6301 = vunpack.c.l.b16 %v3315
        %v6302 = vunpack.c.h.b16 %v3315
        %v6303 = vunpack.c.l.b16 %v3316
        %v6304 = vunpack.c.h.b16 %v3316
        %v6305 = vunpack.c.l.b16 %v3317
        %v6306 = vunpack.c.h.b16 %v3317
        %v6307 = vunpack.c.l.b16 %v3318
        %v6308 = vunpack.c.h.b16 %v3318
        %v6309 = vunpack.c.l.b16 %v3319
        %v6310 = vunpack.c.h.b16 %v3319
        %v6311 = vunpack.c.l.b16 %v3320
        %v6312 = vunpack.c.h.b16 %v3320
        %v6313 = vunpack.c.l.b16 %v3321
        %v6314 = vunpack.c.h.b16 %v3321
        %v6315 = vunpack.c.l.b16 %v3322
        %v6316 = vunpack.c.h.b16 %v3322
        %v6317 = vunpack.c.l.b16 %v3323
        %v6318 = vunpack.c.h.b16 %v3323
        %v6319 = vunpack.c.l.b16 %v3324
        %v6320 = vunpack.c.h.b16 %v3324
        %v6321 = vunpack.c.l.b16 %v3325
        %v6322 = vunpack.c.h.b16 %v3325
        %v6323 = vunpack.c.l.b16 %v3326
        %v6324 = vunpack.c.h.b16 %v3326
        %v6325 = vunpack.c.l.b16 %v3327
        %v6326 = vunpack.c.h.b16 %v3327
        %v6327 = vunpack.c.l.b16 %v3328
        %v6328 = vunpack.c.h.b16 %v3328
        %v6329 = vunpack.c.l.b16 %v3329
        %v6330 = vunpack.c.h.b16 %v3329
        %v6331 = vunpack.c.l.b16 %v3330
        %v6332 = vunpack.c.h.b16 %v3330
        %v6333 = vunpack.c.l.b16 %v3331
        %v6334 = vunpack.c.h.b16 %v3331
        %v6335 = vunpack.c.l.b16 %v3332
        %v6336 = vunpack.c.h.b16 %v3332
        %v6337 = vunpack.c.l.b16 %v3333
        %v6338 = vunpack.c.h.b16 %v3333
        %v6339 = vunpack.c.l.b16 %v3334
        %v6340 = vunpack.c.h.b16 %v3334
        %v6341 = vunpack.c.l.b16 %v3335
        %v6342 = vunpack.c.h.b16 %v3335
        %v6343 = vunpack.c.l.b16 %v3336
        %v6344 = vunpack.c.h.b16 %v3336
        %v6345 = vunpack.c.l.b16 %v3337
        %v6346 = vunpack.c.h.b16 %v3337
        %v6347 = vunpack.c.l.b16 %v3338
        %v6348 = vunpack.c.h.b16 %v3338
        %v6349 = vunpack.c.l.b16 %v3339
        %v6350 = vunpack.c.h.b16 %v3339
        %v6351 = vunpack.c.l.b16 %v3340
        %v6352 = vunpack.c.h.b16 %v3340
        %v6353 = vunpack.c.l.b16 %v3341
        %v6354 = vunpack.c.h.b16 %v3341
        %v6355 = vunpack.c.l.b16 %v3342
        %v6356 = vunpack.c.h.b16 %v3342
        %v6357 = vunpack.c.l.b16 %v3343
        %v6358 = vunpack.c.h.b16 %v3343
        %v6359 = vunpack.c.l.b16 %v3344
        %v6360 = vunpack.c.h.b16 %v3344
        %v6361 = vunpack.c.l.b16 %v3345
        %v6362 = vunpack.c.h.b16 %v3345
        %v6363 = vunpack.c.l.b16 %v3346
        %v6364 = vunpack.c.h.b16 %v3346
        %v6365 = vunpack.c.l.b16 %v3347
        %v6366 = vunpack.c.h.b16 %v3347
        %v6367 = vunpack.c.l.b16 %v3348
        %v6368 = vunpack.c.h.b16 %v3348
        %v6369 = vunpack.c.l.b16 %v3349
        %v6370 = vunpack.c.h.b16 %v3349
        %v6371 = vunpack.c.l.b16 %v3350
        %v6372 = vunpack.c.h.b16 %v3350
        %v6373 = vunpack.c.l.b16 %v3351
        %v6374 = vunpack.c.h.b16 %v3351
        %v6375 = vunpack.c.l.b16 %v3352
        %v6376 = vunpack.c.h.b16 %v3352
        %v6377 = vunpack.c.l.b16 %v3353
        %v6378 = vunpack.c.h.b16 %v3353
        %v6379 = vunpack.c.l.b16 %v3354
        %v6380 = vunpack.c.h.b16 %v3354
        %v6381 = vunpack.c.l.b16 %v3355
        %v6382 = vunpack.c.h.b16 %v3355
        %v6383 = vunpack.c.l.b16 %v3356
        %v6384 = vunpack.c.h.b16 %v3356
        %v6385 = vunpack.c.l.b16 %v3357
        %v6386 = vunpack.c.h.b16 %v3357
        %v6387 = vunpack.c.l.b16 %v3358
        %v6388 = vunpack.c.h.b16 %v3358
        %v6389 = vunpack.c.l.b16 %v3359
        %v6390 = vunpack.c.h.b16 %v3359
        %v6391 = vunpack.c.l.b16 %v3360
        %v6392 = vunpack.c.h.b16 %v3360
        %v6393 = vunpack.c.l.b16 %v3361
        %v6394 = vunpack.c.h.b16 %v3361
        %v6395 = vunpack.c.l.b16 %v3362
        %v6396 = vunpack.c.h.b16 %v3362
        %v6397 = vunpack.c.l.b16 %v3363
        %v6398 = vunpack.c.h.b16 %v3363
        %v6399 = vunpack.c.l.b16 %v3364
        %v6400 = vunpack.c.h.b16 %v3364
        %v6401 = vunpack.c.l.b16 %v3365
        %v6402 = vunpack.c.h.b16 %v3365
        %v6403 = vunpack.c.l.b16 %v3366
        %v6404 = vunpack.c.h.b16 %v3366
        %v6405 = vunpack.c.l.b16 %v3367
        %v6406 = vunpack.c.h.b16 %v3367
        %v6407 = vunpack.c.l.b16 %v3368
        %v6408 = vunpack.c.h.b16 %v3368
        %v6409 = vunpack.c.l.b16 %v3369
        %v6410 = vunpack.c.h.b16 %v3369
        %v6411 = vunpack.c.l.b16 %v3370
        %v6412 = vunpack.c.h.b16 %v3370
        %v6413 = vunpack.c.l.b16 %v3371
        %v6414 = vunpack.c.h.b16 %v3371
        %v6415 = vunpack.c.l.b16 %v3372
        %v6416 = vunpack.c.h.b16 %v3372
        %v6417 = vunpack.c.l.b16 %v3373
        %v6418 = vunpack.c.h.b16 %v3373
        %v6419 = vunpack.c.l.b16 %v3374
        %v6420 = vunpack.c.h.b16 %v3374
        %v6421 = vunpack.c.l.b16 %v3375
        %v6422 = vunpack.c.h.b16 %v3375
        %v6423 = vunpack.c.l.b16 %v3376
        %v6424 = vunpack.c.h.b16 %v3376
        %v6425 = vunpack.c.l.b16 %v3377
        %v6426 = vunpack.c.h.b16 %v3377
        %v6427 = vunpack.c.l.b16 %v3378
        %v6428 = vunpack.c.h.b16 %v3378
        %v6429 = vunpack.c.l.b16 %v3379
        %v6430 = vunpack.c.h.b16 %v3379
        %v6431 = vunpack.c.l.b16 %v3380
        %v6432 = vunpack.c.h.b16 %v3380
        %v6433 = vunpack.c.l.b16 %v3381
        %v6434 = vunpack.c.h.b16 %v3381
        %v6435 = vunpack.c.l.b16 %v3382
        %v6436 = vunpack.c.h.b16 %v3382
        %v6437 = vunpack.c.l.b16 %v3383
        %v6438 = vunpack.c.h.b16 %v3383
        %v6439 = vunpack.c.l.b16 %v3384
        %v6440 = vunpack.c.h.b16 %v3384
        %v6441 = vunpack.c.l.b16 %v3385
        %v6442 = vunpack.c.h.b16 %v3385
        %v6443 = vunpack.c.l.b16 %v3386
        %v6444 = vunpack.c.h.b16 %v3386
        %v6445 = vunpack.c.l.b16 %v3387
        %v6446 = vunpack.c.h.b16 %v3387
        %v6447 = vunpack.c.l.b16 %v3388
        %v6448 = vunpack.c.h.b16 %v3388
        %v6449 = vunpack.c.l.b16 %v3389
        %v6450 = vunpack.c.h.b16 %v3389
        %v6451 = vunpack.c.l.b16 %v3390
        %v6452 = vunpack.c.h.b16 %v3390
        %v6453 = vunpack.c.l.b16 %v3391
        %v6454 = vunpack.c.h.b16 %v3391
        %v6455 = vunpack.c.l.b16 %v3392
        %v6456 = vunpack.c.h.b16 %v3392
        %v6457 = vunpack.c.l.b16 %v3393
        %v6458 = vunpack.c.h.b16 %v3393
        %v6459 = vunpack.c.l.b16 %v3394
        %v6460 = vunpack.c.h.b16 %v3394
        %v6461 = vunpack.c.l.b16 %v3395
        %v6462 = vunpack.c.h.b16 %v3395
        %v6463 = vunpack.c.l.b16 %v3396
        %v6464 = vunpack.c.h.b16 %v3396
        %v6465 = vunpack.c.l.b16 %v3397
        %v6466 = vunpack.c.h.b16 %v3397
        %v6467 = vunpack.c.l.b16 %v3398
        %v6468 = vunpack.c.h.b16 %v3398
        %v6469 = vunpack.c.l.b16 %v3399
        %v6470 = vunpack.c.h.b16 %v3399
        %v6471 = vunpack.c.l.b16 %v3400
        %v6472 = vunpack.c.h.b16 %v3400
        %v6473 = vunpack.c.l.b16 %v3401
        %v6474 = vunpack.c.h.b16 %v3401
        %v6475 = vunpack.c.l.b16 %v3402
        %v6476 = vunpack.c.h.b16 %v3402
        %v6477 = vunpack.c.l.b16 %v3403
        %v6478 = vunpack.c.h.b16 %v3403
        %v6479 = vunpack.c.l.b16 %v3404
        %v6480 = vunpack.c.h.b16 %v3404
        %v6481 = vunpack.c.l.b16 %v3405
        %v6482 = vunpack.c.h.b16 %v3405
        %v6483 = vunpack.c.l.b16 %v3406
        %v6484 = vunpack.c.h.b16 %v3406
        %v6485 = vunpack.c.l.b16 %v3407
        %v6486 = vunpack.c.h.b16 %v3407
        %v6487 = vunpack.c.l.b16 %v3408
        %v6488 = vunpack.c.h.b16 %v3408
        %v6489 = vunpack.c.l.b16 %v3409
        %v6490 = vunpack.c.h.b16 %v3409
        %v6491 = vunpack.c.l.b16 %v3410
        %v6492 = vunpack.c.h.b16 %v3410
        %v6493 = vunpack.c.l.b16 %v3411
        %v6494 = vunpack.c.h.b16 %v3411
        %v6495 = vunpack.c.l.b16 %v3412
        %v6496 = vunpack.c.h.b16 %v3412
        %v6497 = vunpack.c.l.b16 %v3413
        %v6498 = vunpack.c.h.b16 %v3413
        %v6499 = vunpack.c.l.b16 %v3414
        %v6500 = vunpack.c.h.b16 %v3414
        %v6501 = vunpack.c.l.b16 %v3415
        %v6502 = vunpack.c.h.b16 %v3415
        %v6503 = vunpack.c.l.b16 %v3416
        %v6504 = vunpack.c.h.b16 %v3416
        %v6505 = vunpack.c.l.b16 %v3417
        %v6506 = vunpack.c.h.b16 %v3417
        %v6507 = vunpack.c.l.b16 %v3418
        %v6508 = vunpack.c.h.b16 %v3418
        %v6509 = vunpack.c.l.b16 %v3419
        %v6510 = vunpack.c.h.b16 %v3419
        %v6511 = vunpack.c.l.b16 %v3420
        %v6512 = vunpack.c.h.b16 %v3420
        %v6513 = vunpack.c.l.b16 %v3421
        %v6514 = vunpack.c.h.b16 %v3421
        %v6515 = vunpack.c.l.b16 %v3422
        %v6516 = vunpack.c.h.b16 %v3422
        %v6517 = vunpack.c.l.b16 %v3423
        %v6518 = vunpack.c.h.b16 %v3423
        %v6519 = vunpack.c.l.b16 %v3424
        %v6520 = vunpack.c.h.b16 %v3424
        %v6521 = vunpack.c.l.b16 %v3425
        %v6522 = vunpack.c.h.b16 %v3425
        %v6523 = vunpack.c.l.b16 %v3426
        %v6524 = vunpack.c.h.b16 %v3426
        %v6525 = vunpack.c.l.b16 %v3427
        %v6526 = vunpack.c.h.b16 %v3427
        %v6527 = vunpack.c.l.b16 %v3428
        %v6528 = vunpack.c.h.b16 %v3428
        %v6529 = vunpack.c.l.b16 %v3429
        %v6530 = vunpack.c.h.b16 %v3429
        %v6531 = vunpack.c.l.b16 %v3430
        %v6532 = vunpack.c.h.b16 %v3430
        %v6533 = vunpack.c.l.b16 %v3431
        %v6534 = vunpack.c.h.b16 %v3431
        %v6535 = vunpack.c.l.b16 %v3432
        %v6536 = vunpack.c.h.b16 %v3432
        %v6537 = vunpack.c.l.b16 %v3433
        %v6538 = vunpack.c.h.b16 %v3433
        %v6539 = vunpack.c.l.b16 %v3434
        %v6540 = vunpack.c.h.b16 %v3434
        %v6541 = vunpack.c.l.b16 %v3435
        %v6542 = vunpack.c.h.b16 %v3435
        %v6543 = vunpack.c.l.b16 %v3436
        %v6544 = vunpack.c.h.b16 %v3436
        %v6545 = vunpack.c.l.b16 %v3437
        %v6546 = vunpack.c.h.b16 %v3437
        %v6547 = vunpack.c.l.b16 %v3438
        %v6548 = vunpack.c.h.b16 %v3438
        %v6549 = vunpack.c.l.b16 %v3439
        %v6550 = vunpack.c.h.b16 %v3439
        %v6551 = vunpack.c.l.b16 %v3440
        %v6552 = vunpack.c.h.b16 %v3440
        %v6553 = vunpack.c.l.b16 %v3441
        %v6554 = vunpack.c.h.b16 %v3441
        %v6555 = vunpack.c.l.b16 %v3442
        %v6556 = vunpack.c.h.b16 %v3442
        %v6557 = vunpack.c.l.b16 %v3443
        %v6558 = vunpack.c.h.b16 %v3443
        %v6559 = vunpack.c.l.b16 %v3444
        %v6560 = vunpack.c.h.b16 %v3444
        %v6561 = vunpack.c.l.b16 %v3445
        %v6562 = vunpack.c.h.b16 %v3445
        %v6563 = vunpack.c.l.b16 %v3446
        %v6564 = vunpack.c.h.b16 %v3446
        %v6565 = vunpack.c.l.b16 %v3447
        %v6566 = vunpack.c.h.b16 %v3447
        %v6567 = vunpack.c.l.b16 %v3448
        %v6568 = vunpack.c.h.b16 %v3448
        %v6569 = vunpack.c.l.b16 %v3449
        %v6570 = vunpack.c.h.b16 %v3449
        %v6571 = vunpack.c.l.b16 %v3450
        %v6572 = vunpack.c.h.b16 %v3450
        %v6573 = vunpack.c.l.b16 %v3451
        %v6574 = vunpack.c.h.b16 %v3451
        %v6575 = vunpack.c.l.b16 %v3452
        %v6576 = vunpack.c.h.b16 %v3452
        %v6577 = vunpack.c.l.b16 %v3453
        %v6578 = vunpack.c.h.b16 %v3453
        %v6579 = vunpack.c.l.b16 %v3454
        %v6580 = vunpack.c.h.b16 %v3454
        %v6581 = vunpack.c.l.b16 %v3455
        %v6582 = vunpack.c.h.b16 %v3455
        %v6583 = vunpack.c.l.b16 %v3456
        %v6584 = vunpack.c.h.b16 %v3456
        %v6585 = vpack.c.b16 %v4545, %v4537
        %v6586 = vpack.c.b16 %v4546, %v4538
        %v6587 = vpack.c.b16 %v4547, %v4539
        %v6588 = vpack.c.b16 %v4548, %v4540
        %v6589 = vpack.c.b16 %v4549, %v4541
        %v6590 = vpack.c.b16 %v4550, %v4542
        %v6591 = vpack.c.b16 %v4551, %v4543
        %v6592 = vpack.c.b16 %v4552, %v4544
        %v6593 = vpack.c.b16 %v4561, %v4553
        %v6594 = vpack.c.b16 %v4562, %v4554
        %v6595 = vpack.c.b16 %v4563, %v4555
        %v6596 = vpack.c.b16 %v4564, %v4556
        %v6597 = vpack.c.b16 %v4565, %v4557
        %v6598 = vpack.c.b16 %v4566, %v4558
        %v6599 = vpack.c.b16 %v4567, %v4559
        %v6600 = vpack.c.b16 %v4568, %v4560
        %v6601 = vpack.c.b16 %v4577, %v4569
        %v6602 = vpack.c.b16 %v4578, %v4570
        %v6603 = vpack.c.b16 %v4579, %v4571
        %v6604 = vpack.c.b16 %v4580, %v4572
        %v6605 = vpack.c.b16 %v4581, %v4573
        %v6606 = vpack.c.b16 %v4582, %v4574
        %v6607 = vpack.c.b16 %v4583, %v4575
        %v6608 = vpack.c.b16 %v4584, %v4576
        %v6609 = vpack.c.b16 %v4593, %v4585
        %v6610 = vpack.c.b16 %v4594, %v4586
        %v6611 = vpack.c.b16 %v4595, %v4587
        %v6612 = vpack.c.b16 %v4596, %v4588
        %v6613 = vpack.c.b16 %v4597, %v4589
        %v6614 = vpack.c.b16 %v4598, %v4590
        %v6615 = vpack.c.b16 %v4599, %v4591
        %v6616 = vpack.c.b16 %v4600, %v4592
        %v6617 = vpack.c.b16 %v4609, %v4601
        %v6618 = vpack.c.b16 %v4610, %v4602
        %v6619 = vpack.c.b16 %v4611, %v4603
        %v6620 = vpack.c.b16 %v4612, %v4604
        %v6621 = vpack.c.b16 %v4613, %v4605
        %v6622 = vpack.c.b16 %v4614, %v4606
        %v6623 = vpack.c.b16 %v4615, %v4607
        %v6624 = vpack.c.b16 %v4616, %v4608
        %v6625 = vpack.c.b16 %v4625, %v4617
        %v6626 = vpack.c.b16 %v4626, %v4618
        %v6627 = vpack.c.b16 %v4627, %v4619
        %v6628 = vpack.c.b16 %v4628, %v4620
        %v6629 = vpack.c.b16 %v4629, %v4621
        %v6630 = vpack.c.b16 %v4630, %v4622
        %v6631 = vpack.c.b16 %v4631, %v4623
        %v6632 = vpack.c.b16 %v4632, %v4624
        %v6633 = vpack.c.b16 %v4641, %v4633
        %v6634 = vpack.c.b16 %v4642, %v4634
        %v6635 = vpack.c.b16 %v4643, %v4635
        %v6636 = vpack.c.b16 %v4644, %v4636
        %v6637 = vpack.c.b16 %v4645, %v4637
        %v6638 = vpack.c.b16 %v4646, %v4638
        %v6639 = vpack.c.b16 %v4647, %v4639
        %v6640 = vpack.c.b16 %v4648, %v4640
        %v6641 = vpack.c.b16 %v4657, %v4649
        %v6642 = vpack.c.b16 %v4658, %v4650
        %v6643 = vpack.c.b16 %v4659, %v4651
        %v6644 = vpack.c.b16 %v4660, %v4652
        %v6645 = vpack.c.b16 %v4661, %v4653
        %v6646 = vpack.c.b16 %v4662, %v4654
        %v6647 = vpack.c.b16 %v4663, %v4655
        %v6648 = vpack.c.b16 %v4664, %v4656
        %v6649 = vpack.c.b16 %v4673, %v4665
        %v6650 = vpack.c.b16 %v4674, %v4666
        %v6651 = vpack.c.b16 %v4675, %v4667
        %v6652 = vpack.c.b16 %v4676, %v4668
        %v6653 = vpack.c.b16 %v4677, %v4669
        %v6654 = vpack.c.b16 %v4678, %v4670
        %v6655 = vpack.c.b16 %v4679, %v4671
        %v6656 = vpack.c.b16 %v4680, %v4672
        %v6657 = vpack.c.b16 %v4689, %v4681
        %v6658 = vpack.c.b16 %v4690, %v4682
        %v6659 = vpack.c.b16 %v4691, %v4683
        %v6660 = vpack.c.b16 %v4692, %v4684
        %v6661 = vpack.c.b16 %v4693, %v4685
        %v6662 = vpack.c.b16 %v4694, %v4686
        %v6663 = vpack.c.b16 %v4695, %v4687
        %v6664 = vpack.c.b16 %v4696, %v4688
        %v6665 = vpack.c.b16 %v4705, %v4697
        %v6666 = vpack.c.b16 %v4706, %v4698
        %v6667 = vpack.c.b16 %v4707, %v4699
        %v6668 = vpack.c.b16 %v4708, %v4700
        %v6669 = vpack.c.b16 %v4709, %v4701
        %v6670 = vpack.c.b16 %v4710, %v4702
        %v6671 = vpack.c.b16 %v4711, %v4703
        %v6672 = vpack.c.b16 %v4712, %v4704
        %v6673 = vpack.c.b16 %v4721, %v4713
        %v6674 = vpack.c.b16 %v4722, %v4714
        %v6675 = vpack.c.b16 %v4723, %v4715
        %v6676 = vpack.c.b16 %v4724, %v4716
        %v6677 = vpack.c.b16 %v4725, %v4717
        %v6678 = vpack.c.b16 %v4726, %v4718
        %v6679 = vpack.c.b16 %v4727, %v4719
        %v6680 = vpack.c.b16 %v4728, %v4720
        %v6681 = vpack.c.b16 %v4737, %v4729
        %v6682 = vpack.c.b16 %v4738, %v4730
        %v6683 = vpack.c.b16 %v4739, %v4731
        %v6684 = vpack.c.b16 %v4740, %v4732
        %v6685 = vpack.c.b16 %v4741, %v4733
        %v6686 = vpack.c.b16 %v4742, %v4734
        %v6687 = vpack.c.b16 %v4743, %v4735
        %v6688 = vpack.c.b16 %v4744, %v4736
        %v6689 = vpack.c.b16 %v4753, %v4745
        %v6690 = vpack.c.b16 %v4754, %v4746
        %v6691 = vpack.c.b16 %v4755, %v4747
        %v6692 = vpack.c.b16 %v4756, %v4748
        %v6693 = vpack.c.b16 %v4757, %v4749
        %v6694 = vpack.c.b16 %v4758, %v4750
        %v6695 = vpack.c.b16 %v4759, %v4751
        %v6696 = vpack.c.b16 %v4760, %v4752
        %v6697 = vpack.c.b16 %v4769, %v4761
        %v6698 = vpack.c.b16 %v4770, %v4762
        %v6699 = vpack.c.b16 %v4771, %v4763
        %v6700 = vpack.c.b16 %v4772, %v4764
        %v6701 = vpack.c.b16 %v4773, %v4765
        %v6702 = vpack.c.b16 %v4774, %v4766
        %v6703 = vpack.c.b16 %v4775, %v4767
        %v6704 = vpack.c.b16 %v4776, %v4768
        %v6705 = vpack.c.b16 %v4785, %v4777
        %v6706 = vpack.c.b16 %v4786, %v4778
        %v6707 = vpack.c.b16 %v4787, %v4779
        %v6708 = vpack.c.b16 %v4788, %v4780
        %v6709 = vpack.c.b16 %v4789, %v4781
        %v6710 = vpack.c.b16 %v4790, %v4782
        %v6711 = vpack.c.b16 %v4791, %v4783
        %v6712 = vpack.c.b16 %v4792, %v4784
        %v6713 = vpack.c.b16 %v4801, %v4793
        %v6714 = vpack.c.b16 %v4802, %v4794
        %v6715 = vpack.c.b16 %v4803, %v4795
        %v6716 = vpack.c.b16 %v4804, %v4796
        %v6717 = vpack.c.b16 %v4805, %v4797
        %v6718 = vpack.c.b16 %v4806, %v4798
        %v6719 = vpack.c.b16 %v4807, %v4799
        %v6720 = vpack.c.b16 %v4808, %v4800
        %v6721 = vpack.c.b16 %v4817, %v4809
        %v6722 = vpack.c.b16 %v4818, %v4810
        %v6723 = vpack.c.b16 %v4819, %v4811
        %v6724 = vpack.c.b16 %v4820, %v4812
        %v6725 = vpack.c.b16 %v4821, %v4813
        %v6726 = vpack.c.b16 %v4822, %v4814
        %v6727 = vpack.c.b16 %v4823, %v4815
        %v6728 = vpack.c.b16 %v4824, %v4816
        %v6729 = vpack.c.b16 %v4833, %v4825
        %v6730 = vpack.c.b16 %v4834, %v4826
        %v6731 = vpack.c.b16 %v4835, %v4827
        %v6732 = vpack.c.b16 %v4836, %v4828
        %v6733 = vpack.c.b16 %v4837, %v4829
        %v6734 = vpack.c.b16 %v4838, %v4830
        %v6735 = vpack.c.b16 %v4839, %v4831
        %v6736 = vpack.c.b16 %v4840, %v4832
        %v6737 = vpack.c.b16 %v4849, %v4841
        %v6738 = vpack.c.b16 %v4850, %v4842
        %v6739 = vpack.c.b16 %v4851, %v4843
        %v6740 = vpack.c.b16 %v4852, %v4844
        %v6741 = vpack.c.b16 %v4853, %v4845
        %v6742 = vpack.c.b16 %v4854, %v4846
        %v6743 = vpack.c.b16 %v4855, %v4847
        %v6744 = vpack.c.b16 %v4856, %v4848
        %v6745 = vpack.c.b16 %v4865, %v4857
        %v6746 = vpack.c.b16 %v4866, %v4858
        %v6747 = vpack.c.b16 %v4867, %v4859
        %v6748 = vpack.c.b16 %v4868, %v4860
        %v6749 = vpack.c.b16 %v4869, %v4861
        %v6750 = vpack.c.b16 %v4870, %v4862
        %v6751 = vpack.c.b16 %v4871, %v4863
        %v6752 = vpack.c.b16 %v4872, %v4864
        %v6753 = vpack.c.b16 %v4881, %v4873
        %v6754 = vpack.c.b16 %v4882, %v4874
        %v6755 = vpack.c.b16 %v4883, %v4875
        %v6756 = vpack.c.b16 %v4884, %v4876
        %v6757 = vpack.c.b16 %v4885, %v4877
        %v6758 = vpack.c.b16 %v4886, %v4878
        %v6759 = vpack.c.b16 %v4887, %v4879
        %v6760 = vpack.c.b16 %v4888, %v4880
        %v6761 = vpack.c.b16 %v4897, %v4889
        %v6762 = vpack.c.b16 %v4898, %v4890
        %v6763 = vpack.c.b16 %v4899, %v4891
        %v6764 = vpack.c.b16 %v4900, %v4892
        %v6765 = vpack.c.b16 %v4901, %v4893
        %v6766 = vpack.c.b16 %v4902, %v4894
        %v6767 = vpack.c.b16 %v4903, %v4895
        %v6768 = vpack.c.b16 %v4904, %v4896
        %v6769 = vpack.c.b16 %v4913, %v4905
        %v6770 = vpack.c.b16 %v4914, %v4906
        %v6771 = vpack.c.b16 %v4915, %v4907
        %v6772 = vpack.c.b16 %v4916, %v4908
        %v6773 = vpack.c.b16 %v4917, %v4909
        %v6774 = vpack.c.b16 %v4918, %v4910
        %v6775 = vpack.c.b16 %v4919, %v4911
        %v6776 = vpack.c.b16 %v4920, %v4912
        %v6777 = vpack.c.b16 %v4929, %v4921
        %v6778 = vpack.c.b16 %v4930, %v4922
        %v6779 = vpack.c.b16 %v4931, %v4923
        %v6780 = vpack.c.b16 %v4932, %v4924
        %v6781 = vpack.c.b16 %v4933, %v4925
        %v6782 = vpack.c.b16 %v4934, %v4926
        %v6783 = vpack.c.b16 %v4935, %v4927
        %v6784 = vpack.c.b16 %v4936, %v4928
        %v6785 = vpack.c.b16 %v4945, %v4937
        %v6786 = vpack.c.b16 %v4946, %v4938
        %v6787 = vpack.c.b16 %v4947, %v4939
        %v6788 = vpack.c.b16 %v4948, %v4940
        %v6789 = vpack.c.b16 %v4949, %v4941
        %v6790 = vpack.c.b16 %v4950, %v4942
        %v6791 = vpack.c.b16 %v4951, %v4943
        %v6792 = vpack.c.b16 %v4952, %v4944
        %v6793 = vpack.c.b16 %v4961, %v4953
        %v6794 = vpack.c.b16 %v4962, %v4954
        %v6795 = vpack.c.b16 %v4963, %v4955
        %v6796 = vpack.c.b16 %v4964, %v4956
        %v6797 = vpack.c.b16 %v4965, %v4957
        %v6798 = vpack.c.b16 %v4966, %v4958
        %v6799 = vpack.c.b16 %v4967, %v4959
        %v6800 = vpack.c.b16 %v4968, %v4960
        %v6801 = vpack.c.b16 %v4977, %v4969
        %v6802 = vpack.c.b16 %v4978, %v4970
        %v6803 = vpack.c.b16 %v4979, %v4971
        %v6804 = vpack.c.b16 %v4980, %v4972
        %v6805 = vpack.c.b16 %v4981, %v4973
        %v6806 = vpack.c.b16 %v4982, %v4974
        %v6807 = vpack.c.b16 %v4983, %v4975
        %v6808 = vpack.c.b16 %v4984, %v4976
        %v6809 = vpack.c.b16 %v4993, %v4985
        %v6810 = vpack.c.b16 %v4994, %v4986
        %v6811 = vpack.c.b16 %v4995, %v4987
        %v6812 = vpack.c.b16 %v4996, %v4988
        %v6813 = vpack.c.b16 %v4997, %v4989
        %v6814 = vpack.c.b16 %v4998, %v4990
        %v6815 = vpack.c.b16 %v4999, %v4991
        %v6816 = vpack.c.b16 %v5000, %v4992
        %v6817 = vpack.c.b16 %v5009, %v5001
        %v6818 = vpack.c.b16 %v5010, %v5002
        %v6819 = vpack.c.b16 %v5011, %v5003
        %v6820 = vpack.c.b16 %v5012, %v5004
        %v6821 = vpack.c.b16 %v5013, %v5005
        %v6822 = vpack.c.b16 %v5014, %v5006
        %v6823 = vpack.c.b16 %v5015, %v5007
        %v6824 = vpack.c.b16 %v5016, %v5008
        %v6825 = vpack.c.b16 %v5025, %v5017
        %v6826 = vpack.c.b16 %v5026, %v5018
        %v6827 = vpack.c.b16 %v5027, %v5019
        %v6828 = vpack.c.b16 %v5028, %v5020
        %v6829 = vpack.c.b16 %v5029, %v5021
        %v6830 = vpack.c.b16 %v5030, %v5022
        %v6831 = vpack.c.b16 %v5031, %v5023
        %v6832 = vpack.c.b16 %v5032, %v5024
        %v6833 = vpack.c.b16 %v5041, %v5033
        %v6834 = vpack.c.b16 %v5042, %v5034
        %v6835 = vpack.c.b16 %v5043, %v5035
        %v6836 = vpack.c.b16 %v5044, %v5036
        %v6837 = vpack.c.b16 %v5045, %v5037
        %v6838 = vpack.c.b16 %v5046, %v5038
        %v6839 = vpack.c.b16 %v5047, %v5039
        %v6840 = vpack.c.b16 %v5048, %v5040
        %v6841 = vpack.c.b16 %v5057, %v5049
        %v6842 = vpack.c.b16 %v5058, %v5050
        %v6843 = vpack.c.b16 %v5059, %v5051
        %v6844 = vpack.c.b16 %v5060, %v5052
        %v6845 = vpack.c.b16 %v5061, %v5053
        %v6846 = vpack.c.b16 %v5062, %v5054
        %v6847 = vpack.c.b16 %v5063, %v5055
        %v6848 = vpack.c.b16 %v5064, %v5056
        %v6849 = vpack.c.b16 %v5073, %v5065
        %v6850 = vpack.c.b16 %v5074, %v5066
        %v6851 = vpack.c.b16 %v5075, %v5067
        %v6852 = vpack.c.b16 %v5076, %v5068
        %v6853 = vpack.c.b16 %v5077, %v5069
        %v6854 = vpack.c.b16 %v5078, %v5070
        %v6855 = vpack.c.b16 %v5079, %v5071
        %v6856 = vpack.c.b16 %v5080, %v5072
        %v6857 = vpack.c.b16 %v5089, %v5081
        %v6858 = vpack.c.b16 %v5090, %v5082
        %v6859 = vpack.c.b16 %v5091, %v5083
        %v6860 = vpack.c.b16 %v5092, %v5084
        %v6861 = vpack.c.b16 %v5093, %v5085
        %v6862 = vpack.c.b16 %v5094, %v5086
        %v6863 = vpack.c.b16 %v5095, %v5087
        %v6864 = vpack.c.b16 %v5096, %v5088
        %v6865 = vpack.c.b16 %v5105, %v5097
        %v6866 = vpack.c.b16 %v5106, %v5098
        %v6867 = vpack.c.b16 %v5107, %v5099
        %v6868 = vpack.c.b16 %v5108, %v5100
        %v6869 = vpack.c.b16 %v5109, %v5101
        %v6870 = vpack.c.b16 %v5110, %v5102
        %v6871 = vpack.c.b16 %v5111, %v5103
        %v6872 = vpack.c.b16 %v5112, %v5104
        %v6873 = vpack.c.b16 %v5121, %v5113
        %v6874 = vpack.c.b16 %v5122, %v5114
        %v6875 = vpack.c.b16 %v5123, %v5115
        %v6876 = vpack.c.b16 %v5124, %v5116
        %v6877 = vpack.c.b16 %v5125, %v5117
        %v6878 = vpack.c.b16 %v5126, %v5118
        %v6879 = vpack.c.b16 %v5127, %v5119
        %v6880 = vpack.c.b16 %v5128, %v5120
        %v6881 = vpack.c.b16 %v5137, %v5129
        %v6882 = vpack.c.b16 %v5138, %v5130
        %v6883 = vpack.c.b16 %v5139, %v5131
        %v6884 = vpack.c.b16 %v5140, %v5132
        %v6885 = vpack.c.b16 %v5141, %v5133
        %v6886 = vpack.c.b16 %v5142, %v5134
        %v6887 = vpack.c.b16 %v5143, %v5135
        %v6888 = vpack.c.b16 %v5144, %v5136
        %v6889 = vpack.c.b16 %v5153, %v5145
        %v6890 = vpack.c.b16 %v5154, %v5146
        %v6891 = vpack.c.b16 %v5155, %v5147
        %v6892 = vpack.c.b16 %v5156, %v5148
        %v6893 = vpack.c.b16 %v5157, %v5149
        %v6894 = vpack.c.b16 %v5158, %v5150
        %v6895 = vpack.c.b16 %v5159, %v5151
        %v6896 = vpack.c.b16 %v5160, %v5152
        %v6897 = vpack.c.b16 %v5169, %v5161
        %v6898 = vpack.c.b16 %v5170, %v5162
        %v6899 = vpack.c.b16 %v5171, %v5163
        %v6900 = vpack.c.b16 %v5172, %v5164
        %v6901 = vpack.c.b16 %v5173, %v5165
        %v6902 = vpack.c.b16 %v5174, %v5166
        %v6903 = vpack.c.b16 %v5175, %v5167
        %v6904 = vpack.c.b16 %v5176, %v5168
        %v6905 = vpack.c.b16 %v5185, %v5177
        %v6906 = vpack.c.b16 %v5186, %v5178
        %v6907 = vpack.c.b16 %v5187, %v5179
        %v6908 = vpack.c.b16 %v5188, %v5180
        %v6909 = vpack.c.b16 %v5189, %v5181
        %v6910 = vpack.c.b16 %v5190, %v5182
        %v6911 = vpack.c.b16 %v5191, %v5183
        %v6912 = vpack.c.b16 %v5192, %v5184
        %v6913 = vpack.c.b16 %v5201, %v5193
        %v6914 = vpack.c.b16 %v5202, %v5194
        %v6915 = vpack.c.b16 %v5203, %v5195
        %v6916 = vpack.c.b16 %v5204, %v5196
        %v6917 = vpack.c.b16 %v5205, %v5197
        %v6918 = vpack.c.b16 %v5206, %v5198
        %v6919 = vpack.c.b16 %v5207, %v5199
        %v6920 = vpack.c.b16 %v5208, %v5200
        %v6921 = vpack.c.b16 %v5217, %v5209
        %v6922 = vpack.c.b16 %v5218, %v5210
        %v6923 = vpack.c.b16 %v5219, %v5211
        %v6924 = vpack.c.b16 %v5220, %v5212
        %v6925 = vpack.c.b16 %v5221, %v5213
        %v6926 = vpack.c.b16 %v5222, %v5214
        %v6927 = vpack.c.b16 %v5223, %v5215
        %v6928 = vpack.c.b16 %v5224, %v5216
        %v6929 = vpack.c.b16 %v5233, %v5225
        %v6930 = vpack.c.b16 %v5234, %v5226
        %v6931 = vpack.c.b16 %v5235, %v5227
        %v6932 = vpack.c.b16 %v5236, %v5228
        %v6933 = vpack.c.b16 %v5237, %v5229
        %v6934 = vpack.c.b16 %v5238, %v5230
        %v6935 = vpack.c.b16 %v5239, %v5231
        %v6936 = vpack.c.b16 %v5240, %v5232
        %v6937 = vpack.c.b16 %v5249, %v5241
        %v6938 = vpack.c.b16 %v5250, %v5242
        %v6939 = vpack.c.b16 %v5251, %v5243
        %v6940 = vpack.c.b16 %v5252, %v5244
        %v6941 = vpack.c.b16 %v5253, %v5245
        %v6942 = vpack.c.b16 %v5254, %v5246
        %v6943 = vpack.c.b16 %v5255, %v5247
        %v6944 = vpack.c.b16 %v5256, %v5248
        %v6945 = vpack.c.b16 %v5265, %v5257
        %v6946 = vpack.c.b16 %v5266, %v5258
        %v6947 = vpack.c.b16 %v5267, %v5259
        %v6948 = vpack.c.b16 %v5268, %v5260
        %v6949 = vpack.c.b16 %v5269, %v5261
        %v6950 = vpack.c.b16 %v5270, %v5262
        %v6951 = vpack.c.b16 %v5271, %v5263
        %v6952 = vpack.c.b16 %v5272, %v5264
        %v6953 = vpack.c.b16 %v5281, %v5273
        %v6954 = vpack.c.b16 %v5282, %v5274
        %v6955 = vpack.c.b16 %v5283, %v5275
        %v6956 = vpack.c.b16 %v5284, %v5276
        %v6957 = vpack.c.b16 %v5285, %v5277
        %v6958 = vpack.c.b16 %v5286, %v5278
        %v6959 = vpack.c.b16 %v5287, %v5279
        %v6960 = vpack.c.b16 %v5288, %v5280
        %v6961 = vpack.c.b16 %v5297, %v5289
        %v6962 = vpack.c.b16 %v5298, %v5290
        %v6963 = vpack.c.b16 %v5299, %v5291
        %v6964 = vpack.c.b16 %v5300, %v5292
        %v6965 = vpack.c.b16 %v5301, %v5293
        %v6966 = vpack.c.b16 %v5302, %v5294
        %v6967 = vpack.c.b16 %v5303, %v5295
        %v6968 = vpack.c.b16 %v5304, %v5296
        %v6969 = vpack.c.b16 %v5313, %v5305
        %v6970 = vpack.c.b16 %v5314, %v5306
        %v6971 = vpack.c.b16 %v5315, %v5307
        %v6972 = vpack.c.b16 %v5316, %v5308
        %v6973 = vpack.c.b16 %v5317, %v5309
        %v6974 = vpack.c.b16 %v5318, %v5310
        %v6975 = vpack.c.b16 %v5319, %v5311
        %v6976 = vpack.c.b16 %v5320, %v5312
        %v6977 = vpack.c.b16 %v5329, %v5321
        %v6978 = vpack.c.b16 %v5330, %v5322
        %v6979 = vpack.c.b16 %v5331, %v5323
        %v6980 = vpack.c.b16 %v5332, %v5324
        %v6981 = vpack.c.b16 %v5333, %v5325
        %v6982 = vpack.c.b16 %v5334, %v5326
        %v6983 = vpack.c.b16 %v5335, %v5327
        %v6984 = vpack.c.b16 %v5336, %v5328
        %v6985 = vpack.c.b16 %v5345, %v5337
        %v6986 = vpack.c.b16 %v5346, %v5338
        %v6987 = vpack.c.b16 %v5347, %v5339
        %v6988 = vpack.c.b16 %v5348, %v5340
        %v6989 = vpack.c.b16 %v5349, %v5341
        %v6990 = vpack.c.b16 %v5350, %v5342
        %v6991 = vpack.c.b16 %v5351, %v5343
        %v6992 = vpack.c.b16 %v5352, %v5344
        %v6993 = vpack.c.b16 %v5361, %v5353
        %v6994 = vpack.c.b16 %v5362, %v5354
        %v6995 = vpack.c.b16 %v5363, %v5355
        %v6996 = vpack.c.b16 %v5364, %v5356
        %v6997 = vpack.c.b16 %v5365, %v5357
        %v6998 = vpack.c.b16 %v5366, %v5358
        %v6999 = vpack.c.b16 %v5367, %v5359
        %v7000 = vpack.c.b16 %v5368, %v5360
        %v7001 = vpack.c.b16 %v5377, %v5369
        %v7002 = vpack.c.b16 %v5378, %v5370
        %v7003 = vpack.c.b16 %v5379, %v5371
        %v7004 = vpack.c.b16 %v5380, %v5372
        %v7005 = vpack.c.b16 %v5381, %v5373
        %v7006 = vpack.c.b16 %v5382, %v5374
        %v7007 = vpack.c.b16 %v5383, %v5375
        %v7008 = vpack.c.b16 %v5384, %v5376
        %v7009 = vpack.c.b16 %v5393, %v5385
        %v7010 = vpack.c.b16 %v5394, %v5386
        %v7011 = vpack.c.b16 %v5395, %v5387
        %v7012 = vpack.c.b16 %v5396, %v5388
        %v7013 = vpack.c.b16 %v5397, %v5389
        %v7014 = vpack.c.b16 %v5398, %v5390
        %v7015 = vpack.c.b16 %v5399, %v5391
        %v7016 = vpack.c.b16 %v5400, %v5392
        %v7017 = vpack.c.b16 %v5409, %v5401
        %v7018 = vpack.c.b16 %v5410, %v5402
        %v7019 = vpack.c.b16 %v5411, %v5403
        %v7020 = vpack.c.b16 %v5412, %v5404
        %v7021 = vpack.c.b16 %v5413, %v5405
        %v7022 = vpack.c.b16 %v5414, %v5406
        %v7023 = vpack.c.b16 %v5415, %v5407
        %v7024 = vpack.c.b16 %v5416, %v5408
        %v7025 = vpack.c.b16 %v5425, %v5417
        %v7026 = vpack.c.b16 %v5426, %v5418
        %v7027 = vpack.c.b16 %v5427, %v5419
        %v7028 = vpack.c.b16 %v5428, %v5420
        %v7029 = vpack.c.b16 %v5429, %v5421
        %v7030 = vpack.c.b16 %v5430, %v5422
        %v7031 = vpack.c.b16 %v5431, %v5423
        %v7032 = vpack.c.b16 %v5432, %v5424
        %v7033 = vpack.c.b16 %v5441, %v5433
        %v7034 = vpack.c.b16 %v5442, %v5434
        %v7035 = vpack.c.b16 %v5443, %v5435
        %v7036 = vpack.c.b16 %v5444, %v5436
        %v7037 = vpack.c.b16 %v5445, %v5437
        %v7038 = vpack.c.b16 %v5446, %v5438
        %v7039 = vpack.c.b16 %v5447, %v5439
        %v7040 = vpack.c.b16 %v5448, %v5440
        %v7041 = vpack.c.b16 %v5457, %v5449
        %v7042 = vpack.c.b16 %v5458, %v5450
        %v7043 = vpack.c.b16 %v5459, %v5451
        %v7044 = vpack.c.b16 %v5460, %v5452
        %v7045 = vpack.c.b16 %v5461, %v5453
        %v7046 = vpack.c.b16 %v5462, %v5454
        %v7047 = vpack.c.b16 %v5463, %v5455
        %v7048 = vpack.c.b16 %v5464, %v5456
        %v7049 = vpack.c.b16 %v5473, %v5465
        %v7050 = vpack.c.b16 %v5474, %v5466
        %v7051 = vpack.c.b16 %v5475, %v5467
        %v7052 = vpack.c.b16 %v5476, %v5468
        %v7053 = vpack.c.b16 %v5477, %v5469
        %v7054 = vpack.c.b16 %v5478, %v5470
        %v7055 = vpack.c.b16 %v5479, %v5471
        %v7056 = vpack.c.b16 %v5480, %v5472
        %v7057 = vpack.c.b16 %v5489, %v5481
        %v7058 = vpack.c.b16 %v5490, %v5482
        %v7059 = vpack.c.b16 %v5491, %v5483
        %v7060 = vpack.c.b16 %v5492, %v5484
        %v7061 = vpack.c.b16 %v5493, %v5485
        %v7062 = vpack.c.b16 %v5494, %v5486
        %v7063 = vpack.c.b16 %v5495, %v5487
        %v7064 = vpack.c.b16 %v5496, %v5488
        %v7065 = vpack.c.b16 %v5505, %v5497
        %v7066 = vpack.c.b16 %v5506, %v5498
        %v7067 = vpack.c.b16 %v5507, %v5499
        %v7068 = vpack.c.b16 %v5508, %v5500
        %v7069 = vpack.c.b16 %v5509, %v5501
        %v7070 = vpack.c.b16 %v5510, %v5502
        %v7071 = vpack.c.b16 %v5511, %v5503
        %v7072 = vpack.c.b16 %v5512, %v5504
        %v7073 = vpack.c.b16 %v5521, %v5513
        %v7074 = vpack.c.b16 %v5522, %v5514
        %v7075 = vpack.c.b16 %v5523, %v5515
        %v7076 = vpack.c.b16 %v5524, %v5516
        %v7077 = vpack.c.b16 %v5525, %v5517
        %v7078 = vpack.c.b16 %v5526, %v5518
        %v7079 = vpack.c.b16 %v5527, %v5519
        %v7080 = vpack.c.b16 %v5528, %v5520
        %v7081 = vpack.c.b16 %v5537, %v5529
        %v7082 = vpack.c.b16 %v5538, %v5530
        %v7083 = vpack.c.b16 %v5539, %v5531
        %v7084 = vpack.c.b16 %v5540, %v5532
        %v7085 = vpack.c.b16 %v5541, %v5533
        %v7086 = vpack.c.b16 %v5542, %v5534
        %v7087 = vpack.c.b16 %v5543, %v5535
        %v7088 = vpack.c.b16 %v5544, %v5536
        %v7089 = vpack.c.b16 %v5553, %v5545
        %v7090 = vpack.c.b16 %v5554, %v5546
        %v7091 = vpack.c.b16 %v5555, %v5547
        %v7092 = vpack.c.b16 %v5556, %v5548
        %v7093 = vpack.c.b16 %v5557, %v5549
        %v7094 = vpack.c.b16 %v5558, %v5550
        %v7095 = vpack.c.b16 %v5559, %v5551
        %v7096 = vpack.c.b16 %v5560, %v5552
        %v7097 = vpack.c.b16 %v5569, %v5561
        %v7098 = vpack.c.b16 %v5570, %v5562
        %v7099 = vpack.c.b16 %v5571, %v5563
        %v7100 = vpack.c.b16 %v5572, %v5564
        %v7101 = vpack.c.b16 %v5573, %v5565
        %v7102 = vpack.c.b16 %v5574, %v5566
        %v7103 = vpack.c.b16 %v5575, %v5567
        %v7104 = vpack.c.b16 %v5576, %v5568
        %v7105 = vpack.c.b16 %v5585, %v5577
        %v7106 = vpack.c.b16 %v5586, %v5578
        %v7107 = vpack.c.b16 %v5587, %v5579
        %v7108 = vpack.c.b16 %v5588, %v5580
        %v7109 = vpack.c.b16 %v5589, %v5581
        %v7110 = vpack.c.b16 %v5590, %v5582
        %v7111 = vpack.c.b16 %v5591, %v5583
        %v7112 = vpack.c.b16 %v5592, %v5584
        %v7113 = vpack.c.b16 %v5601, %v5593
        %v7114 = vpack.c.b16 %v5602, %v5594
        %v7115 = vpack.c.b16 %v5603, %v5595
        %v7116 = vpack.c.b16 %v5604, %v5596
        %v7117 = vpack.c.b16 %v5605, %v5597
        %v7118 = vpack.c.b16 %v5606, %v5598
        %v7119 = vpack.c.b16 %v5607, %v5599
        %v7120 = vpack.c.b16 %v5608, %v5600
        %v7121 = vpack.c.b16 %v5617, %v5609
        %v7122 = vpack.c.b16 %v5618, %v5610
        %v7123 = vpack.c.b16 %v5619, %v5611
        %v7124 = vpack.c.b16 %v5620, %v5612
        %v7125 = vpack.c.b16 %v5621, %v5613
        %v7126 = vpack.c.b16 %v5622, %v5614
        %v7127 = vpack.c.b16 %v5623, %v5615
        %v7128 = vpack.c.b16 %v5624, %v5616
        %v7129 = vpack.c.b16 %v5633, %v5625
        %v7130 = vpack.c.b16 %v5634, %v5626
        %v7131 = vpack.c.b16 %v5635, %v5627
        %v7132 = vpack.c.b16 %v5636, %v5628
        %v7133 = vpack.c.b16 %v5637, %v5629
        %v7134 = vpack.c.b16 %v5638, %v5630
        %v7135 = vpack.c.b16 %v5639, %v5631
        %v7136 = vpack.c.b16 %v5640, %v5632
        %v7137 = vpack.c.b16 %v5649, %v5641
        %v7138 = vpack.c.b16 %v5650, %v5642
        %v7139 = vpack.c.b16 %v5651, %v5643
        %v7140 = vpack.c.b16 %v5652, %v5644
        %v7141 = vpack.c.b16 %v5653, %v5645
        %v7142 = vpack.c.b16 %v5654, %v5646
        %v7143 = vpack.c.b16 %v5655, %v5647
        %v7144 = vpack.c.b16 %v5656, %v5648
        %v7145 = vpack.c.b16 %v5665, %v5657
        %v7146 = vpack.c.b16 %v5666, %v5658
        %v7147 = vpack.c.b16 %v5667, %v5659
        %v7148 = vpack.c.b16 %v5668, %v5660
        %v7149 = vpack.c.b16 %v5669, %v5661
        %v7150 = vpack.c.b16 %v5670, %v5662
        %v7151 = vpack.c.b16 %v5671, %v5663
        %v7152 = vpack.c.b16 %v5672, %v5664
        %v7153 = vpack.c.b16 %v5681, %v5673
        %v7154 = vpack.c.b16 %v5682, %v5674
        %v7155 = vpack.c.b16 %v5683, %v5675
        %v7156 = vpack.c.b16 %v5684, %v5676
        %v7157 = vpack.c.b16 %v5685, %v5677
        %v7158 = vpack.c.b16 %v5686, %v5678
        %v7159 = vpack.c.b16 %v5687, %v5679
        %v7160 = vpack.c.b16 %v5688, %v5680
        %v7161 = vpack.c.b16 %v5697, %v5689
        %v7162 = vpack.c.b16 %v5698, %v5690
        %v7163 = vpack.c.b16 %v5699, %v5691
        %v7164 = vpack.c.b16 %v5700, %v5692
        %v7165 = vpack.c.b16 %v5701, %v5693
        %v7166 = vpack.c.b16 %v5702, %v5694
        %v7167 = vpack.c.b16 %v5703, %v5695
        %v7168 = vpack.c.b16 %v5704, %v5696
        %v7169 = vpack.c.b16 %v5713, %v5705
        %v7170 = vpack.c.b16 %v5714, %v5706
        %v7171 = vpack.c.b16 %v5715, %v5707
        %v7172 = vpack.c.b16 %v5716, %v5708
        %v7173 = vpack.c.b16 %v5717, %v5709
        %v7174 = vpack.c.b16 %v5718, %v5710
        %v7175 = vpack.c.b16 %v5719, %v5711
        %v7176 = vpack.c.b16 %v5720, %v5712
        %v7177 = vpack.c.b16 %v5729, %v5721
        %v7178 = vpack.c.b16 %v5730, %v5722
        %v7179 = vpack.c.b16 %v5731, %v5723
        %v7180 = vpack.c.b16 %v5732, %v5724
        %v7181 = vpack.c.b16 %v5733, %v5725
        %v7182 = vpack.c.b16 %v5734, %v5726
        %v7183 = vpack.c.b16 %v5735, %v5727
        %v7184 = vpack.c.b16 %v5736, %v5728
        %v7185 = vpack.c.b16 %v5745, %v5737
        %v7186 = vpack.c.b16 %v5746, %v5738
        %v7187 = vpack.c.b16 %v5747, %v5739
        %v7188 = vpack.c.b16 %v5748, %v5740
        %v7189 = vpack.c.b16 %v5749, %v5741
        %v7190 = vpack.c.b16 %v5750, %v5742
        %v7191 = vpack.c.b16 %v5751, %v5743
        %v7192 = vpack.c.b16 %v5752, %v5744
        %v7193 = vpack.c.b16 %v5761, %v5753
        %v7194 = vpack.c.b16 %v5762, %v5754
        %v7195 = vpack.c.b16 %v5763, %v5755
        %v7196 = vpack.c.b16 %v5764, %v5756
        %v7197 = vpack.c.b16 %v5765, %v5757
        %v7198 = vpack.c.b16 %v5766, %v5758
        %v7199 = vpack.c.b16 %v5767, %v5759
        %v7200 = vpack.c.b16 %v5768, %v5760
        %v7201 = vpack.c.b16 %v5777, %v5769
        %v7202 = vpack.c.b16 %v5778, %v5770
        %v7203 = vpack.c.b16 %v5779, %v5771
        %v7204 = vpack.c.b16 %v5780, %v5772
        %v7205 = vpack.c.b16 %v5781, %v5773
        %v7206 = vpack.c.b16 %v5782, %v5774
        %v7207 = vpack.c.b16 %v5783, %v5775
        %v7208 = vpack.c.b16 %v5784, %v5776
        %v7209 = vpack.c.b16 %v5793, %v5785
        %v7210 = vpack.c.b16 %v5794, %v5786
        %v7211 = vpack.c.b16 %v5795, %v5787
        %v7212 = vpack.c.b16 %v5796, %v5788
        %v7213 = vpack.c.b16 %v5797, %v5789
        %v7214 = vpack.c.b16 %v5798, %v5790
        %v7215 = vpack.c.b16 %v5799, %v5791
        %v7216 = vpack.c.b16 %v5800, %v5792
        %v7217 = vpack.c.b16 %v5809, %v5801
        %v7218 = vpack.c.b16 %v5810, %v5802
        %v7219 = vpack.c.b16 %v5811, %v5803
        %v7220 = vpack.c.b16 %v5812, %v5804
        %v7221 = vpack.c.b16 %v5813, %v5805
        %v7222 = vpack.c.b16 %v5814, %v5806
        %v7223 = vpack.c.b16 %v5815, %v5807
        %v7224 = vpack.c.b16 %v5816, %v5808
        %v7225 = vpack.c.b16 %v5825, %v5817
        %v7226 = vpack.c.b16 %v5826, %v5818
        %v7227 = vpack.c.b16 %v5827, %v5819
        %v7228 = vpack.c.b16 %v5828, %v5820
        %v7229 = vpack.c.b16 %v5829, %v5821
        %v7230 = vpack.c.b16 %v5830, %v5822
        %v7231 = vpack.c.b16 %v5831, %v5823
        %v7232 = vpack.c.b16 %v5832, %v5824
        %v7233 = vpack.c.b16 %v5841, %v5833
        %v7234 = vpack.c.b16 %v5842, %v5834
        %v7235 = vpack.c.b16 %v5843, %v5835
        %v7236 = vpack.c.b16 %v5844, %v5836
        %v7237 = vpack.c.b16 %v5845, %v5837
        %v7238 = vpack.c.b16 %v5846, %v5838
        %v7239 = vpack.c.b16 %v5847, %v5839
        %v7240 = vpack.c.b16 %v5848, %v5840
        %v7241 = vpack.c.b16 %v5857, %v5849
        %v7242 = vpack.c.b16 %v5858, %v5850
        %v7243 = vpack.c.b16 %v5859, %v5851
        %v7244 = vpack.c.b16 %v5860, %v5852
        %v7245 = vpack.c.b16 %v5861, %v5853
        %v7246 = vpack.c.b16 %v5862, %v5854
        %v7247 = vpack.c.b16 %v5863, %v5855
        %v7248 = vpack.c.b16 %v5864, %v5856
        %v7249 = vpack.c.b16 %v5873, %v5865
        %v7250 = vpack.c.b16 %v5874, %v5866
        %v7251 = vpack.c.b16 %v5875, %v5867
        %v7252 = vpack.c.b16 %v5876, %v5868
        %v7253 = vpack.c.b16 %v5877, %v5869
        %v7254 = vpack.c.b16 %v5878, %v5870
        %v7255 = vpack.c.b16 %v5879, %v5871
        %v7256 = vpack.c.b16 %v5880, %v5872
        %v7257 = vpack.c.b16 %v5889, %v5881
        %v7258 = vpack.c.b16 %v5890, %v5882
        %v7259 = vpack.c.b16 %v5891, %v5883
        %v7260 = vpack.c.b16 %v5892, %v5884
        %v7261 = vpack.c.b16 %v5893, %v5885
        %v7262 = vpack.c.b16 %v5894, %v5886
        %v7263 = vpack.c.b16 %v5895, %v5887
        %v7264 = vpack.c.b16 %v5896, %v5888
        %v7265 = vpack.c.b16 %v5905, %v5897
        %v7266 = vpack.c.b16 %v5906, %v5898
        %v7267 = vpack.c.b16 %v5907, %v5899
        %v7268 = vpack.c.b16 %v5908, %v5900
        %v7269 = vpack.c.b16 %v5909, %v5901
        %v7270 = vpack.c.b16 %v5910, %v5902
        %v7271 = vpack.c.b16 %v5911, %v5903
        %v7272 = vpack.c.b16 %v5912, %v5904
        %v7273 = vpack.c.b16 %v5921, %v5913
        %v7274 = vpack.c.b16 %v5922, %v5914
        %v7275 = vpack.c.b16 %v5923, %v5915
        %v7276 = vpack.c.b16 %v5924, %v5916
        %v7277 = vpack.c.b16 %v5925, %v5917
        %v7278 = vpack.c.b16 %v5926, %v5918
        %v7279 = vpack.c.b16 %v5927, %v5919
        %v7280 = vpack.c.b16 %v5928, %v5920
        %v7281 = vpack.c.b16 %v5937, %v5929
        %v7282 = vpack.c.b16 %v5938, %v5930
        %v7283 = vpack.c.b16 %v5939, %v5931
        %v7284 = vpack.c.b16 %v5940, %v5932
        %v7285 = vpack.c.b16 %v5941, %v5933
        %v7286 = vpack.c.b16 %v5942, %v5934
        %v7287 = vpack.c.b16 %v5943, %v5935
        %v7288 = vpack.c.b16 %v5944, %v5936
        %v7289 = vpack.c.b16 %v5953, %v5945
        %v7290 = vpack.c.b16 %v5954, %v5946
        %v7291 = vpack.c.b16 %v5955, %v5947
        %v7292 = vpack.c.b16 %v5956, %v5948
        %v7293 = vpack.c.b16 %v5957, %v5949
        %v7294 = vpack.c.b16 %v5958, %v5950
        %v7295 = vpack.c.b16 %v5959, %v5951
        %v7296 = vpack.c.b16 %v5960, %v5952
        %v7297 = vpack.c.b16 %v5969, %v5961
        %v7298 = vpack.c.b16 %v5970, %v5962
        %v7299 = vpack.c.b16 %v5971, %v5963
        %v7300 = vpack.c.b16 %v5972, %v5964
        %v7301 = vpack.c.b16 %v5973, %v5965
        %v7302 = vpack.c.b16 %v5974, %v5966
        %v7303 = vpack.c.b16 %v5975, %v5967
        %v7304 = vpack.c.b16 %v5976, %v5968
        %v7305 = vpack.c.b16 %v5985, %v5977
        %v7306 = vpack.c.b16 %v5986, %v5978
        %v7307 = vpack.c.b16 %v5987, %v5979
        %v7308 = vpack.c.b16 %v5988, %v5980
        %v7309 = vpack.c.b16 %v5989, %v5981
        %v7310 = vpack.c.b16 %v5990, %v5982
        %v7311 = vpack.c.b16 %v5991, %v5983
        %v7312 = vpack.c.b16 %v5992, %v5984
        %v7313 = vpack.c.b16 %v6001, %v5993
        %v7314 = vpack.c.b16 %v6002, %v5994
        %v7315 = vpack.c.b16 %v6003, %v5995
        %v7316 = vpack.c.b16 %v6004, %v5996
        %v7317 = vpack.c.b16 %v6005, %v5997
        %v7318 = vpack.c.b16 %v6006, %v5998
        %v7319 = vpack.c.b16 %v6007, %v5999
        %v7320 = vpack.c.b16 %v6008, %v6000
        %v7321 = vpack.c.b16 %v6017, %v6009
        %v7322 = vpack.c.b16 %v6018, %v6010
        %v7323 = vpack.c.b16 %v6019, %v6011
        %v7324 = vpack.c.b16 %v6020, %v6012
        %v7325 = vpack.c.b16 %v6021, %v6013
        %v7326 = vpack.c.b16 %v6022, %v6014
        %v7327 = vpack.c.b16 %v6023, %v6015
        %v7328 = vpack.c.b16 %v6024, %v6016
        %v7329 = vpack.c.b16 %v6033, %v6025
        %v7330 = vpack.c.b16 %v6034, %v6026
        %v7331 = vpack.c.b16 %v6035, %v6027
        %v7332 = vpack.c.b16 %v6036, %v6028
        %v7333 = vpack.c.b16 %v6037, %v6029
        %v7334 = vpack.c.b16 %v6038, %v6030
        %v7335 = vpack.c.b16 %v6039, %v6031
        %v7336 = vpack.c.b16 %v6040, %v6032
        %v7337 = vpack.c.b16 %v6049, %v6041
        %v7338 = vpack.c.b16 %v6050, %v6042
        %v7339 = vpack.c.b16 %v6051, %v6043
        %v7340 = vpack.c.b16 %v6052, %v6044
        %v7341 = vpack.c.b16 %v6053, %v6045
        %v7342 = vpack.c.b16 %v6054, %v6046
        %v7343 = vpack.c.b16 %v6055, %v6047
        %v7344 = vpack.c.b16 %v6056, %v6048
        %v7345 = vpack.c.b16 %v6065, %v6057
        %v7346 = vpack.c.b16 %v6066, %v6058
        %v7347 = vpack.c.b16 %v6067, %v6059
        %v7348 = vpack.c.b16 %v6068, %v6060
        %v7349 = vpack.c.b16 %v6069, %v6061
        %v7350 = vpack.c.b16 %v6070, %v6062
        %v7351 = vpack.c.b16 %v6071, %v6063
        %v7352 = vpack.c.b16 %v6072, %v6064
        %v7353 = vpack.c.b16 %v6081, %v6073
        %v7354 = vpack.c.b16 %v6082, %v6074
        %v7355 = vpack.c.b16 %v6083, %v6075
        %v7356 = vpack.c.b16 %v6084, %v6076
        %v7357 = vpack.c.b16 %v6085, %v6077
        %v7358 = vpack.c.b16 %v6086, %v6078
        %v7359 = vpack.c.b16 %v6087, %v6079
        %v7360 = vpack.c.b16 %v6088, %v6080
        %v7361 = vpack.c.b16 %v6097, %v6089
        %v7362 = vpack.c.b16 %v6098, %v6090
        %v7363 = vpack.c.b16 %v6099, %v6091
        %v7364 = vpack.c.b16 %v6100, %v6092
        %v7365 = vpack.c.b16 %v6101, %v6093
        %v7366 = vpack.c.b16 %v6102, %v6094
        %v7367 = vpack.c.b16 %v6103, %v6095
        %v7368 = vpack.c.b16 %v6104, %v6096
        %v7369 = vpack.c.b16 %v6113, %v6105
        %v7370 = vpack.c.b16 %v6114, %v6106
        %v7371 = vpack.c.b16 %v6115, %v6107
        %v7372 = vpack.c.b16 %v6116, %v6108
        %v7373 = vpack.c.b16 %v6117, %v6109
        %v7374 = vpack.c.b16 %v6118, %v6110
        %v7375 = vpack.c.b16 %v6119, %v6111
        %v7376 = vpack.c.b16 %v6120, %v6112
        %v7377 = vpack.c.b16 %v6129, %v6121
        %v7378 = vpack.c.b16 %v6130, %v6122
        %v7379 = vpack.c.b16 %v6131, %v6123
        %v7380 = vpack.c.b16 %v6132, %v6124
        %v7381 = vpack.c.b16 %v6133, %v6125
        %v7382 = vpack.c.b16 %v6134, %v6126
        %v7383 = vpack.c.b16 %v6135, %v6127
        %v7384 = vpack.c.b16 %v6136, %v6128
        %v7385 = vpack.c.b16 %v6145, %v6137
        %v7386 = vpack.c.b16 %v6146, %v6138
        %v7387 = vpack.c.b16 %v6147, %v6139
        %v7388 = vpack.c.b16 %v6148, %v6140
        %v7389 = vpack.c.b16 %v6149, %v6141
        %v7390 = vpack.c.b16 %v6150, %v6142
        %v7391 = vpack.c.b16 %v6151, %v6143
        %v7392 = vpack.c.b16 %v6152, %v6144
        %v7393 = vpack.c.b16 %v6161, %v6153
        %v7394 = vpack.c.b16 %v6162, %v6154
        %v7395 = vpack.c.b16 %v6163, %v6155
        %v7396 = vpack.c.b16 %v6164, %v6156
        %v7397 = vpack.c.b16 %v6165, %v6157
        %v7398 = vpack.c.b16 %v6166, %v6158
        %v7399 = vpack.c.b16 %v6167, %v6159
        %v7400 = vpack.c.b16 %v6168, %v6160
        %v7401 = vpack.c.b16 %v6177, %v6169
        %v7402 = vpack.c.b16 %v6178, %v6170
        %v7403 = vpack.c.b16 %v6179, %v6171
        %v7404 = vpack.c.b16 %v6180, %v6172
        %v7405 = vpack.c.b16 %v6181, %v6173
        %v7406 = vpack.c.b16 %v6182, %v6174
        %v7407 = vpack.c.b16 %v6183, %v6175
        %v7408 = vpack.c.b16 %v6184, %v6176
        %v7409 = vpack.c.b16 %v6193, %v6185
        %v7410 = vpack.c.b16 %v6194, %v6186
        %v7411 = vpack.c.b16 %v6195, %v6187
        %v7412 = vpack.c.b16 %v6196, %v6188
        %v7413 = vpack.c.b16 %v6197, %v6189
        %v7414 = vpack.c.b16 %v6198, %v6190
        %v7415 = vpack.c.b16 %v6199, %v6191
        %v7416 = vpack.c.b16 %v6200, %v6192
        %v7417 = vpack.c.b16 %v6209, %v6201
        %v7418 = vpack.c.b16 %v6210, %v6202
        %v7419 = vpack.c.b16 %v6211, %v6203
        %v7420 = vpack.c.b16 %v6212, %v6204
        %v7421 = vpack.c.b16 %v6213, %v6205
        %v7422 = vpack.c.b16 %v6214, %v6206
        %v7423 = vpack.c.b16 %v6215, %v6207
        %v7424 = vpack.c.b16 %v6216, %v6208
        %v7425 = vpack.c.b16 %v6225, %v6217
        %v7426 = vpack.c.b16 %v6226, %v6218
        %v7427 = vpack.c.b16 %v6227, %v6219
        %v7428 = vpack.c.b16 %v6228, %v6220
        %v7429 = vpack.c.b16 %v6229, %v6221
        %v7430 = vpack.c.b16 %v6230, %v6222
        %v7431 = vpack.c.b16 %v6231, %v6223
        %v7432 = vpack.c.b16 %v6232, %v6224
        %v7433 = vpack.c.b16 %v6241, %v6233
        %v7434 = vpack.c.b16 %v6242, %v6234
        %v7435 = vpack.c.b16 %v6243, %v6235
        %v7436 = vpack.c.b16 %v6244, %v6236
        %v7437 = vpack.c.b16 %v6245, %v6237
        %v7438 = vpack.c.b16 %v6246, %v6238
        %v7439 = vpack.c.b16 %v6247, %v6239
        %v7440 = vpack.c.b16 %v6248, %v6240
        %v7441 = vpack.c.b16 %v6257, %v6249
        %v7442 = vpack.c.b16 %v6258, %v6250
        %v7443 = vpack.c.b16 %v6259, %v6251
        %v7444 = vpack.c.b16 %v6260, %v6252
        %v7445 = vpack.c.b16 %v6261, %v6253
        %v7446 = vpack.c.b16 %v6262, %v6254
        %v7447 = vpack.c.b16 %v6263, %v6255
        %v7448 = vpack.c.b16 %v6264, %v6256
        %v7449 = vpack.c.b16 %v6273, %v6265
        %v7450 = vpack.c.b16 %v6274, %v6266
        %v7451 = vpack.c.b16 %v6275, %v6267
        %v7452 = vpack.c.b16 %v6276, %v6268
        %v7453 = vpack.c.b16 %v6277, %v6269
        %v7454 = vpack.c.b16 %v6278, %v6270
        %v7455 = vpack.c.b16 %v6279, %v6271
        %v7456 = vpack.c.b16 %v6280, %v6272
        %v7457 = vpack.c.b16 %v6289, %v6281
        %v7458 = vpack.c.b16 %v6290, %v6282
        %v7459 = vpack.c.b16 %v6291, %v6283
        %v7460 = vpack.c.b16 %v6292, %v6284
        %v7461 = vpack.c.b16 %v6293, %v6285
        %v7462 = vpack.c.b16 %v6294, %v6286
        %v7463 = vpack.c.b16 %v6295, %v6287
        %v7464 = vpack.c.b16 %v6296, %v6288
        %v7465 = vpack.c.b16 %v6305, %v6297
        %v7466 = vpack.c.b16 %v6306, %v6298
        %v7467 = vpack.c.b16 %v6307, %v6299
        %v7468 = vpack.c.b16 %v6308, %v6300
        %v7469 = vpack.c.b16 %v6309, %v6301
        %v7470 = vpack.c.b16 %v6310, %v6302
        %v7471 = vpack.c.b16 %v6311, %v6303
        %v7472 = vpack.c.b16 %v6312, %v6304
        %v7473 = vpack.c.b16 %v6321, %v6313
        %v7474 = vpack.c.b16 %v6322, %v6314
        %v7475 = vpack.c.b16 %v6323, %v6315
        %v7476 = vpack.c.b16 %v6324, %v6316
        %v7477 = vpack.c.b16 %v6325, %v6317
        %v7478 = vpack.c.b16 %v6326, %v6318
        %v7479 = vpack.c.b16 %v6327, %v6319
        %v7480 = vpack.c.b16 %v6328, %v6320
        %v7481 = vpack.c.b16 %v6337, %v6329
        %v7482 = vpack.c.b16 %v6338, %v6330
        %v7483 = vpack.c.b16 %v6339, %v6331
        %v7484 = vpack.c.b16 %v6340, %v6332
        %v7485 = vpack.c.b16 %v6341, %v6333
        %v7486 = vpack.c.b16 %v6342, %v6334
        %v7487 = vpack.c.b16 %v6343, %v6335
        %v7488 = vpack.c.b16 %v6344, %v6336
        %v7489 = vpack.c.b16 %v6353, %v6345
        %v7490 = vpack.c.b16 %v6354, %v6346
        %v7491 = vpack.c.b16 %v6355, %v6347
        %v7492 = vpack.c.b16 %v6356, %v6348
        %v7493 = vpack.c.b16 %v6357, %v6349
        %v7494 = vpack.c.b16 %v6358, %v6350
        %v7495 = vpack.c.b16 %v6359, %v6351
        %v7496 = vpack.c.b16 %v6360, %v6352
        %v7497 = vpack.c.b16 %v6369, %v6361
        %v7498 = vpack.c.b16 %v6370, %v6362
        %v7499 = vpack.c.b16 %v6371, %v6363
        %v7500 = vpack.c.b16 %v6372, %v6364
        %v7501 = vpack.c.b16 %v6373, %v6365
        %v7502 = vpack.c.b16 %v6374, %v6366
        %v7503 = vpack.c.b16 %v6375, %v6367
        %v7504 = vpack.c.b16 %v6376, %v6368
        %v7505 = vpack.c.b16 %v6385, %v6377
        %v7506 = vpack.c.b16 %v6386, %v6378
        %v7507 = vpack.c.b16 %v6387, %v6379
        %v7508 = vpack.c.b16 %v6388, %v6380
        %v7509 = vpack.c.b16 %v6389, %v6381
        %v7510 = vpack.c.b16 %v6390, %v6382
        %v7511 = vpack.c.b16 %v6391, %v6383
        %v7512 = vpack.c.b16 %v6392, %v6384
        %v7513 = vpack.c.b16 %v6401, %v6393
        %v7514 = vpack.c.b16 %v6402, %v6394
        %v7515 = vpack.c.b16 %v6403, %v6395
        %v7516 = vpack.c.b16 %v6404, %v6396
        %v7517 = vpack.c.b16 %v6405, %v6397
        %v7518 = vpack.c.b16 %v6406, %v6398
        %v7519 = vpack.c.b16 %v6407, %v6399
        %v7520 = vpack.c.b16 %v6408, %v6400
        %v7521 = vpack.c.b16 %v6417, %v6409
        %v7522 = vpack.c.b16 %v6418, %v6410
        %v7523 = vpack.c.b16 %v6419, %v6411
        %v7524 = vpack.c.b16 %v6420, %v6412
        %v7525 = vpack.c.b16 %v6421, %v6413
        %v7526 = vpack.c.b16 %v6422, %v6414
        %v7527 = vpack.c.b16 %v6423, %v6415
        %v7528 = vpack.c.b16 %v6424, %v6416
        %v7529 = vpack.c.b16 %v6433, %v6425
        %v7530 = vpack.c.b16 %v6434, %v6426
        %v7531 = vpack.c.b16 %v6435, %v6427
        %v7532 = vpack.c.b16 %v6436, %v6428
        %v7533 = vpack.c.b16 %v6437, %v6429
        %v7534 = vpack.c.b16 %v6438, %v6430
        %v7535 = vpack.c.b16 %v6439, %v6431
        %v7536 = vpack.c.b16 %v6440, %v6432
        %v7537 = vpack.c.b16 %v6449, %v6441
        %v7538 = vpack.c.b16 %v6450, %v6442
        %v7539 = vpack.c.b16 %v6451, %v6443
        %v7540 = vpack.c.b16 %v6452, %v6444
        %v7541 = vpack.c.b16 %v6453, %v6445
        %v7542 = vpack.c.b16 %v6454, %v6446
        %v7543 = vpack.c.b16 %v6455, %v6447
        %v7544 = vpack.c.b16 %v6456, %v6448
        %v7545 = vpack.c.b16 %v6465, %v6457
        %v7546 = vpack.c.b16 %v6466, %v6458
        %v7547 = vpack.c.b16 %v6467, %v6459
        %v7548 = vpack.c.b16 %v6468, %v6460
        %v7549 = vpack.c.b16 %v6469, %v6461
        %v7550 = vpack.c.b16 %v6470, %v6462
        %v7551 = vpack.c.b16 %v6471, %v6463
        %v7552 = vpack.c.b16 %v6472, %v6464
        %v7553 = vpack.c.b16 %v6481, %v6473
        %v7554 = vpack.c.b16 %v6482, %v6474
        %v7555 = vpack.c.b16 %v6483, %v6475
        %v7556 = vpack.c.b16 %v6484, %v6476
        %v7557 = vpack.c.b16 %v6485, %v6477
        %v7558 = vpack.c.b16 %v6486, %v6478
        %v7559 = vpack.c.b16 %v6487, %v6479
        %v7560 = vpack.c.b16 %v6488, %v6480
        %v7561 = vpack.c.b16 %v6497, %v6489
        %v7562 = vpack.c.b16 %v6498, %v6490
        %v7563 = vpack.c.b16 %v6499, %v6491
        %v7564 = vpack.c.b16 %v6500, %v6492
        %v7565 = vpack.c.b16 %v6501, %v6493
        %v7566 = vpack.c.b16 %v6502, %v6494
        %v7567 = vpack.c.b16 %v6503, %v6495
        %v7568 = vpack.c.b16 %v6504, %v6496
        %v7569 = vpack.c.b16 %v6513, %v6505
        %v7570 = vpack.c.b16 %v6514, %v6506
        %v7571 = vpack.c.b16 %v6515, %v6507
        %v7572 = vpack.c.b16 %v6516, %v6508
        %v7573 = vpack.c.b16 %v6517, %v6509
        %v7574 = vpack.c.b16 %v6518, %v6510
        %v7575 = vpack.c.b16 %v6519, %v6511
        %v7576 = vpack.c.b16 %v6520, %v6512
        %v7577 = vpack.c.b16 %v6529, %v6521
        %v7578 = vpack.c.b16 %v6530, %v6522
        %v7579 = vpack.c.b16 %v6531, %v6523
        %v7580 = vpack.c.b16 %v6532, %v6524
        %v7581 = vpack.c.b16 %v6533, %v6525
        %v7582 = vpack.c.b16 %v6534, %v6526
        %v7583 = vpack.c.b16 %v6535, %v6527
        %v7584 = vpack.c.b16 %v6536, %v6528
        %v7585 = vpack.c.b16 %v6545, %v6537
        %v7586 = vpack.c.b16 %v6546, %v6538
        %v7587 = vpack.c.b16 %v6547, %v6539
        %v7588 = vpack.c.b16 %v6548, %v6540
        %v7589 = vpack.c.b16 %v6549, %v6541
        %v7590 = vpack.c.b16 %v6550, %v6542
        %v7591 = vpack.c.b16 %v6551, %v6543
        %v7592 = vpack.c.b16 %v6552, %v6544
        %v7593 = vpack.c.b16 %v6561, %v6553
        %v7594 = vpack.c.b16 %v6562, %v6554
        %v7595 = vpack.c.b16 %v6563, %v6555
        %v7596 = vpack.c.b16 %v6564, %v6556
        %v7597 = vpack.c.b16 %v6565, %v6557
        %v7598 = vpack.c.b16 %v6566, %v6558
        %v7599 = vpack.c.b16 %v6567, %v6559
        %v7600 = vpack.c.b16 %v6568, %v6560
        %v7601 = vpack.c.b16 %v6577, %v6569
        %v7602 = vpack.c.b16 %v6578, %v6570
        %v7603 = vpack.c.b16 %v6579, %v6571
        %v7604 = vpack.c.b16 %v6580, %v6572
        %v7605 = vpack.c.b16 %v6581, %v6573
        %v7606 = vpack.c.b16 %v6582, %v6574
        %v7607 = vpack.c.b16 %v6583, %v6575
        %v7608 = vpack.c.b16 %v6584, %v6576
        %8633 = vmatprep.subr.bf16.mxu0 %v6586
        %8634 = vmatpush1.bf16.msra.mxu0 %v6585
        %8635 = vmatprep.subr.bf16.mxu0 %v6594
        %8636 = vmatpush1.bf16.msra.mxu0 %v6593
        %8637 = vmatprep.subr.bf16.mxu0 %v6602
        %8638 = vmatpush1.bf16.msra.mxu0 %v6601
        %8639 = vmatprep.subr.bf16.mxu0 %v6610
        %8640 = vmatpush1.bf16.msra.mxu0 %v6609
        %8641 = vmatprep.subr.bf16.mxu0 %v6618
        %8642 = vmatpush1.bf16.msra.mxu0 %v6617
        %8643 = vmatprep.subr.bf16.mxu0 %v6626
        %8644 = vmatpush1.bf16.msra.mxu0 %v6625
        %8645 = vmatprep.subr.bf16.mxu0 %v6634
        %8646 = vmatpush1.bf16.msra.mxu0 %v6633
        %8647 = vmatprep.subr.bf16.mxu0 %v6642
        %8648 = vmatpush1.bf16.msra.mxu0 %v6641
        %8649 = vmatprep.subr.bf16.mxu0 %v6650
        %8650 = vmatpush1.bf16.msra.mxu0 %v6649
        %8651 = vmatprep.subr.bf16.mxu0 %v6658
        %8652 = vmatpush1.bf16.msra.mxu0 %v6657
        %8653 = vmatprep.subr.bf16.mxu0 %v6666
        %8654 = vmatpush1.bf16.msra.mxu0 %v6665
        %8655 = vmatprep.subr.bf16.mxu0 %v6674
        %8656 = vmatpush1.bf16.msra.mxu0 %v6673
        %8657 = vmatprep.subr.bf16.mxu0 %v6682
        %8658 = vmatpush1.bf16.msra.mxu0 %v6681
        %8659 = vmatprep.subr.bf16.mxu0 %v6690
        %8660 = vmatpush1.bf16.msra.mxu0 %v6689
        %8661 = vmatprep.subr.bf16.mxu0 %v6698
        %8662 = vmatpush1.bf16.msra.mxu0 %v6697
        %8663 = vmatprep.subr.bf16.mxu0 %v6706
        %8664 = vmatpush1.bf16.msra.mxu0 %v6705
        %8665 = vmatprep.mubr.bf16.mxu0 %v3482
        %8666 = vmatmul.mubr.bf16.gmra.mrb[0].mxu0 %v3481
        %v8667 = vpop.f32.mrb[0].mxu0
        %v8668 = vadd.f32 0.0, %v8667
        %v8669 = vpop.f32.mrb[0].mxu0
        %v8670 = vadd.f32 0.0, %v8669
        %v8671 = vpop.f32.mrb[0].mxu0
        %v8672 = vpop.f32.mrb[0].mxu0
        %8673 = vdwg.mxu0
        %8674 = vmatprep.subr.bf16.mxu0 %v6714
        %8675 = vmatpush1.bf16.msra.mxu0 %v6713
        %8676 = vmatprep.subr.bf16.mxu0 %v6722
        %8677 = vmatpush1.bf16.msra.mxu0 %v6721
        %8678 = vmatprep.subr.bf16.mxu0 %v6730
        %8679 = vmatpush1.bf16.msra.mxu0 %v6729
        %8680 = vmatprep.subr.bf16.mxu0 %v6738
        %8681 = vmatpush1.bf16.msra.mxu0 %v6737
        %8682 = vmatprep.subr.bf16.mxu0 %v6746
        %8683 = vmatpush1.bf16.msra.mxu0 %v6745
        %8684 = vmatprep.subr.bf16.mxu0 %v6754
        %8685 = vmatpush1.bf16.msra.mxu0 %v6753
        %8686 = vmatprep.subr.bf16.mxu0 %v6762
        %8687 = vmatpush1.bf16.msra.mxu0 %v6761
        %8688 = vmatprep.subr.bf16.mxu0 %v6770
        %8689 = vmatpush1.bf16.msra.mxu0 %v6769
        %8690 = vmatprep.subr.bf16.mxu0 %v6778
        %8691 = vmatpush1.bf16.msra.mxu0 %v6777
        %8692 = vmatprep.subr.bf16.mxu0 %v6786
        %8693 = vmatpush1.bf16.msra.mxu0 %v6785
        %8694 = vmatprep.subr.bf16.mxu0 %v6794
        %8695 = vmatpush1.bf16.msra.mxu0 %v6793
        %8696 = vmatprep.subr.bf16.mxu0 %v6802
        %8697 = vmatpush1.bf16.msra.mxu0 %v6801
        %8698 = vmatprep.subr.bf16.mxu0 %v6810
        %8699 = vmatpush1.bf16.msra.mxu0 %v6809
        %8700 = vmatprep.subr.bf16.mxu0 %v6818
        %8701 = vmatpush1.bf16.msra.mxu0 %v6817
        %8702 = vmatprep.subr.bf16.mxu0 %v6826
        %8703 = vmatpush1.bf16.msra.mxu0 %v6825
        %8704 = vmatprep.subr.bf16.mxu0 %v6834
        %8705 = vmatpush1.bf16.msra.mxu0 %v6833
        %8706 = vmatprep.mubr.bf16.mxu0 %v3484
        %8707 = vmatmul.mubr.bf16.gmra.mrb[0].mxu0 %v3483
        %v8708 = vpop.f32.mrb[0].mxu0
        %v8709 = vadd.f32 %v8668, %v8708
        %v8710 = vpop.f32.mrb[0].mxu0
        %v8711 = vadd.f32 %v8670, %v8710
        %v8712 = vpop.f32.mrb[0].mxu0
        %v8713 = vpop.f32.mrb[0].mxu0
        %8714 = vdwg.mxu0
        %8715 = vmatprep.subr.bf16.mxu0 %v6842
        %8716 = vmatpush1.bf16.msra.mxu0 %v6841
        %8717 = vmatprep.subr.bf16.mxu0 %v6850
        %8718 = vmatpush1.bf16.msra.mxu0 %v6849
        %8719 = vmatprep.subr.bf16.mxu0 %v6858
        %8720 = vmatpush1.bf16.msra.mxu0 %v6857
        %8721 = vmatprep.subr.bf16.mxu0 %v6866
        %8722 = vmatpush1.bf16.msra.mxu0 %v6865
        %8723 = vmatprep.subr.bf16.mxu0 %v6874
        %8724 = vmatpush1.bf16.msra.mxu0 %v6873
        %8725 = vmatprep.subr.bf16.mxu0 %v6882
        %8726 = vmatpush1.bf16.msra.mxu0 %v6881
        %8727 = vmatprep.subr.bf16.mxu0 %v6890
        %8728 = vmatpush1.bf16.msra.mxu0 %v6889
        %8729 = vmatprep.subr.bf16.mxu0 %v6898
        %8730 = vmatpush1.bf16.msra.mxu0 %v6897
        %8731 = vmatprep.subr.bf16.mxu0 %v6906
        %8732 = vmatpush1.bf16.msra.mxu0 %v6905
        %8733 = vmatprep.subr.bf16.mxu0 %v6914
        %8734 = vmatpush1.bf16.msra.mxu0 %v6913
        %8735 = vmatprep.subr.bf16.mxu0 %v6922
        %8736 = vmatpush1.bf16.msra.mxu0 %v6921
        %8737 = vmatprep.subr.bf16.mxu0 %v6930
        %8738 = vmatpush1.bf16.msra.mxu0 %v6929
        %8739 = vmatprep.subr.bf16.mxu0 %v6938
        %8740 = vmatpush1.bf16.msra.mxu0 %v6937
        %8741 = vmatprep.subr.bf16.mxu0 %v6946
        %8742 = vmatpush1.bf16.msra.mxu0 %v6945
        %8743 = vmatprep.subr.bf16.mxu0 %v6954
        %8744 = vmatpush1.bf16.msra.mxu0 %v6953
        %8745 = vmatprep.subr.bf16.mxu0 %v6962
        %8746 = vmatpush1.bf16.msra.mxu0 %v6961
        %8747 = vmatprep.mubr.bf16.mxu0 %v3486
        %8748 = vmatmul.mubr.bf16.gmra.mrb[0].mxu0 %v3485
        %v8749 = vpop.f32.mrb[0].mxu0
        %v8750 = vadd.f32 %v8709, %v8749
        %v8751 = vpop.f32.mrb[0].mxu0
        %v8752 = vadd.f32 %v8711, %v8751
        %v8753 = vpop.f32.mrb[0].mxu0
        %v8754 = vpop.f32.mrb[0].mxu0
        %8755 = vdwg.mxu0
        %8756 = vmatprep.subr.bf16.mxu0 %v6970
        %8757 = vmatpush1.bf16.msra.mxu0 %v6969
        %8758 = vmatprep.subr.bf16.mxu0 %v6978
        %8759 = vmatpush1.bf16.msra.mxu0 %v6977
        %8760 = vmatprep.subr.bf16.mxu0 %v6986
        %8761 = vmatpush1.bf16.msra.mxu0 %v6985
        %8762 = vmatprep.subr.bf16.mxu0 %v6994
        %8763 = vmatpush1.bf16.msra.mxu0 %v6993
        %8764 = vmatprep.subr.bf16.mxu0 %v7002
        %8765 = vmatpush1.bf16.msra.mxu0 %v7001
        %8766 = vmatprep.subr.bf16.mxu0 %v7010
        %8767 = vmatpush1.bf16.msra.mxu0 %v7009
        %8768 = vmatprep.subr.bf16.mxu0 %v7018
        %8769 = vmatpush1.bf16.msra.mxu0 %v7017
        %8770 = vmatprep.subr.bf16.mxu0 %v7026
        %8771 = vmatpush1.bf16.msra.mxu0 %v7025
        %8772 = vmatprep.subr.bf16.mxu0 %v7034
        %8773 = vmatpush1.bf16.msra.mxu0 %v7033
        %8774 = vmatprep.subr.bf16.mxu0 %v7042
        %8775 = vmatpush1.bf16.msra.mxu0 %v7041
        %8776 = vmatprep.subr.bf16.mxu0 %v7050
        %8777 = vmatpush1.bf16.msra.mxu0 %v7049
        %8778 = vmatprep.subr.bf16.mxu0 %v7058
        %8779 = vmatpush1.bf16.msra.mxu0 %v7057
        %8780 = vmatprep.subr.bf16.mxu0 %v7066
        %8781 = vmatpush1.bf16.msra.mxu0 %v7065
        %8782 = vmatprep.subr.bf16.mxu0 %v7074
        %8783 = vmatpush1.bf16.msra.mxu0 %v7073
        %8784 = vmatprep.subr.bf16.mxu0 %v7082
        %8785 = vmatpush1.bf16.msra.mxu0 %v7081
        %8786 = vmatprep.subr.bf16.mxu0 %v7090
        %8787 = vmatpush1.bf16.msra.mxu0 %v7089
        %8788 = vmatprep.mubr.bf16.mxu0 %v3488
        %8789 = vmatmul.mubr.bf16.gmra.mrb[0].mxu0 %v3487
        %v8790 = vpop.f32.mrb[0].mxu0
        %v8791 = vadd.f32 %v8750, %v8790
        %v8792 = vpop.f32.mrb[0].mxu0
        %v8793 = vadd.f32 %v8752, %v8792
        %v8794 = vpop.f32.mrb[0].mxu0
        %v8795 = vpop.f32.mrb[0].mxu0
        %8796 = vdwg.mxu0
        %8797 = vmatprep.subr.bf16.mxu0 %v7098
        %8798 = vmatpush1.bf16.msra.mxu0 %v7097
        %8799 = vmatprep.subr.bf16.mxu0 %v7106
        %8800 = vmatpush1.bf16.msra.mxu0 %v7105
        %8801 = vmatprep.subr.bf16.mxu0 %v7114
        %8802 = vmatpush1.bf16.msra.mxu0 %v7113
        %8803 = vmatprep.subr.bf16.mxu0 %v7122
        %8804 = vmatpush1.bf16.msra.mxu0 %v7121
        %8805 = vmatprep.subr.bf16.mxu0 %v7130
        %8806 = vmatpush1.bf16.msra.mxu0 %v7129
        %8807 = vmatprep.subr.bf16.mxu0 %v7138
        %8808 = vmatpush1.bf16.msra.mxu0 %v7137
        %8809 = vmatprep.subr.bf16.mxu0 %v7146
        %8810 = vmatpush1.bf16.msra.mxu0 %v7145
        %8811 = vmatprep.subr.bf16.mxu0 %v7154
        %8812 = vmatpush1.bf16.msra.mxu0 %v7153
        %8813 = vmatprep.subr.bf16.mxu0 %v7162
        %8814 = vmatpush1.bf16.msra.mxu0 %v7161
        %8815 = vmatprep.subr.bf16.mxu0 %v7170
        %8816 = vmatpush1.bf16.msra.mxu0 %v7169
        %8817 = vmatprep.subr.bf16.mxu0 %v7178
        %8818 = vmatpush1.bf16.msra.mxu0 %v7177
        %8819 = vmatprep.subr.bf16.mxu0 %v7186
        %8820 = vmatpush1.bf16.msra.mxu0 %v7185
        %8821 = vmatprep.subr.bf16.mxu0 %v7194
        %8822 = vmatpush1.bf16.msra.mxu0 %v7193
        %8823 = vmatprep.subr.bf16.mxu0 %v7202
        %8824 = vmatpush1.bf16.msra.mxu0 %v7201
        %8825 = vmatprep.subr.bf16.mxu0 %v7210
        %8826 = vmatpush1.bf16.msra.mxu0 %v7209
        %8827 = vmatprep.subr.bf16.mxu0 %v7218
        %8828 = vmatpush1.bf16.msra.mxu0 %v7217
        %8829 = vmatprep.mubr.bf16.mxu0 %v3490
        %8830 = vmatmul.mubr.bf16.gmra.mrb[0].mxu0 %v3489
        %v8831 = vpop.f32.mrb[0].mxu0
        %v8832 = vadd.f32 %v8791, %v8831
        %v8833 = vpop.f32.mrb[0].mxu0
        %v8834 = vadd.f32 %v8793, %v8833
        %v8835 = vpop.f32.mrb[0].mxu0
        %v8836 = vpop.f32.mrb[0].mxu0
        %8837 = vdwg.mxu0
        %8838 = vmatprep.subr.bf16.mxu0 %v7226
        %8839 = vmatpush1.bf16.msra.mxu0 %v7225
        %8840 = vmatprep.subr.bf16.mxu0 %v7234
        %8841 = vmatpush1.bf16.msra.mxu0 %v7233
        %8842 = vmatprep.subr.bf16.mxu0 %v7242
        %8843 = vmatpush1.bf16.msra.mxu0 %v7241
        %8844 = vmatprep.subr.bf16.mxu0 %v7250
        %8845 = vmatpush1.bf16.msra.mxu0 %v7249
        %8846 = vmatprep.subr.bf16.mxu0 %v7258
        %8847 = vmatpush1.bf16.msra.mxu0 %v7257
        %8848 = vmatprep.subr.bf16.mxu0 %v7266
        %8849 = vmatpush1.bf16.msra.mxu0 %v7265
        %8850 = vmatprep.subr.bf16.mxu0 %v7274
        %8851 = vmatpush1.bf16.msra.mxu0 %v7273
        %8852 = vmatprep.subr.bf16.mxu0 %v7282
        %8853 = vmatpush1.bf16.msra.mxu0 %v7281
        %8854 = vmatprep.subr.bf16.mxu0 %v7290
        %8855 = vmatpush1.bf16.msra.mxu0 %v7289
        %8856 = vmatprep.subr.bf16.mxu0 %v7298
        %8857 = vmatpush1.bf16.msra.mxu0 %v7297
        %8858 = vmatprep.subr.bf16.mxu0 %v7306
        %8859 = vmatpush1.bf16.msra.mxu0 %v7305
        %8860 = vmatprep.subr.bf16.mxu0 %v7314
        %8861 = vmatpush1.bf16.msra.mxu0 %v7313
        %8862 = vmatprep.subr.bf16.mxu0 %v7322
        %8863 = vmatpush1.bf16.msra.mxu0 %v7321
        %8864 = vmatprep.subr.bf16.mxu0 %v7330
        %8865 = vmatpush1.bf16.msra.mxu0 %v7329
        %8866 = vmatprep.subr.bf16.mxu0 %v7338
        %8867 = vmatpush1.bf16.msra.mxu0 %v7337
        %8868 = vmatprep.subr.bf16.mxu0 %v7346
        %8869 = vmatpush1.bf16.msra.mxu0 %v7345
        %8870 = vmatprep.mubr.bf16.mxu0 %v3492
        %8871 = vmatmul.mubr.bf16.gmra.mrb[0].mxu0 %v3491
        %v8872 = vpop.f32.mrb[0].mxu0
        %v8873 = vadd.f32 %v8832, %v8872
        %v8874 = vpop.f32.mrb[0].mxu0
        %v8875 = vadd.f32 %v8834, %v8874
        %v8876 = vpop.f32.mrb[0].mxu0
        %v8877 = vpop.f32.mrb[0].mxu0
        %8878 = vdwg.mxu0
        %8879 = vmatprep.subr.bf16.mxu0 %v7354
        %8880 = vmatpush1.bf16.msra.mxu0 %v7353
        %8881 = vmatprep.subr.bf16.mxu0 %v7362
        %8882 = vmatpush1.bf16.msra.mxu0 %v7361
        %8883 = vmatprep.subr.bf16.mxu0 %v7370
        %8884 = vmatpush1.bf16.msra.mxu0 %v7369
        %8885 = vmatprep.subr.bf16.mxu0 %v7378
        %8886 = vmatpush1.bf16.msra.mxu0 %v7377
        %8887 = vmatprep.subr.bf16.mxu0 %v7386
        %8888 = vmatpush1.bf16.msra.mxu0 %v7385
        %8889 = vmatprep.subr.bf16.mxu0 %v7394
        %8890 = vmatpush1.bf16.msra.mxu0 %v7393
        %8891 = vmatprep.subr.bf16.mxu0 %v7402
        %8892 = vmatpush1.bf16.msra.mxu0 %v7401
        %8893 = vmatprep.subr.bf16.mxu0 %v7410
        %8894 = vmatpush1.bf16.msra.mxu0 %v7409
        %8895 = vmatprep.subr.bf16.mxu0 %v7418
        %8896 = vmatpush1.bf16.msra.mxu0 %v7417
        %8897 = vmatprep.subr.bf16.mxu0 %v7426
        %8898 = vmatpush1.bf16.msra.mxu0 %v7425
        %8899 = vmatprep.subr.bf16.mxu0 %v7434
        %8900 = vmatpush1.bf16.msra.mxu0 %v7433
        %8901 = vmatprep.subr.bf16.mxu0 %v7442
        %8902 = vmatpush1.bf16.msra.mxu0 %v7441
        %8903 = vmatprep.subr.bf16.mxu0 %v7450
        %8904 = vmatpush1.bf16.msra.mxu0 %v7449
        %8905 = vmatprep.subr.bf16.mxu0 %v7458
        %8906 = vmatpush1.bf16.msra.mxu0 %v7457
        %8907 = vmatprep.subr.bf16.mxu0 %v7466
        %8908 = vmatpush1.bf16.msra.mxu0 %v7465
        %8909 = vmatprep.subr.bf16.mxu0 %v7474
        %8910 = vmatpush1.bf16.msra.mxu0 %v7473
        %8911 = vmatprep.mubr.bf16.mxu0 %v3494
        %8912 = vmatmul.mubr.bf16.gmra.mrb[0].mxu0 %v3493
        %v8913 = vpop.f32.mrb[0].mxu0
        %v8914 = vadd.f32 %v8873, %v8913
        %v8915 = vpop.f32.mrb[0].mxu0
        %v8916 = vadd.f32 %v8875, %v8915
        %v8917 = vpop.f32.mrb[0].mxu0
        %v8918 = vpop.f32.mrb[0].mxu0
        %8919 = vdwg.mxu0
        %8920 = vmatprep.subr.bf16.mxu0 %v7482
        %8921 = vmatpush1.bf16.msra.mxu0 %v7481
        %8922 = vmatprep.subr.bf16.mxu0 %v7490
        %8923 = vmatpush1.bf16.msra.mxu0 %v7489
        %8924 = vmatprep.subr.bf16.mxu0 %v7498
        %8925 = vmatpush1.bf16.msra.mxu0 %v7497
        %8926 = vmatprep.subr.bf16.mxu0 %v7506
        %8927 = vmatpush1.bf16.msra.mxu0 %v7505
        %8928 = vmatprep.subr.bf16.mxu0 %v7514
        %8929 = vmatpush1.bf16.msra.mxu0 %v7513
        %8930 = vmatprep.subr.bf16.mxu0 %v7522
        %8931 = vmatpush1.bf16.msra.mxu0 %v7521
        %8932 = vmatprep.subr.bf16.mxu0 %v7530
        %8933 = vmatpush1.bf16.msra.mxu0 %v7529
        %8934 = vmatprep.subr.bf16.mxu0 %v7538
        %8935 = vmatpush1.bf16.msra.mxu0 %v7537
        %8936 = vmatprep.subr.bf16.mxu0 %v7546
        %8937 = vmatpush1.bf16.msra.mxu0 %v7545
        %8938 = vmatprep.subr.bf16.mxu0 %v7554
        %8939 = vmatpush1.bf16.msra.mxu0 %v7553
        %8940 = vmatprep.subr.bf16.mxu0 %v7562
        %8941 = vmatpush1.bf16.msra.mxu0 %v7561
        %8942 = vmatprep.subr.bf16.mxu0 %v7570
        %8943 = vmatpush1.bf16.msra.mxu0 %v7569
        %8944 = vmatprep.subr.bf16.mxu0 %v7578
        %8945 = vmatpush1.bf16.msra.mxu0 %v7577
        %8946 = vmatprep.subr.bf16.mxu0 %v7586
        %8947 = vmatpush1.bf16.msra.mxu0 %v7585
        %8948 = vmatprep.subr.bf16.mxu0 %v7594
        %8949 = vmatpush1.bf16.msra.mxu0 %v7593
        %8950 = vmatprep.subr.bf16.mxu0 %v7602
        %8951 = vmatpush1.bf16.msra.mxu0 %v7601
        %8952 = vmatprep.mubr.bf16.mxu0 %v3496
        %8953 = vmatmul.mubr.bf16.gmra.mrb[0].mxu0 %v3495
        %v8954 = vpop.f32.mrb[0].mxu0
        %v8955 = vadd.f32 %v8914, %v8954
        %v8956 = vpop.f32.mrb[0].mxu0
        %v8957 = vadd.f32 %v8916, %v8956
        %v8958 = vpop.f32.mrb[0].mxu0
        %v8959 = vpop.f32.mrb[0].mxu0
        %8960 = vdwg.mxu0
        %8961 = vmatprep.subr.bf16.mxu0 %v6588
        %8962 = vmatpush1.bf16.msra.mxu0 %v6587
        %8963 = vmatprep.subr.bf16.mxu0 %v6596
        %8964 = vmatpush1.bf16.msra.mxu0 %v6595
        %8965 = vmatprep.subr.bf16.mxu0 %v6604
        %8966 = vmatpush1.bf16.msra.mxu0 %v6603
        %8967 = vmatprep.subr.bf16.mxu0 %v6612
        %8968 = vmatpush1.bf16.msra.mxu0 %v6611
        %8969 = vmatprep.subr.bf16.mxu0 %v6620
        %8970 = vmatpush1.bf16.msra.mxu0 %v6619
        %8971 = vmatprep.subr.bf16.mxu0 %v6628
        %8972 = vmatpush1.bf16.msra.mxu0 %v6627
        %8973 = vmatprep.subr.bf16.mxu0 %v6636
        %8974 = vmatpush1.bf16.msra.mxu0 %v6635
        %8975 = vmatprep.subr.bf16.mxu0 %v6644
        %8976 = vmatpush1.bf16.msra.mxu0 %v6643
        %8977 = vmatprep.subr.bf16.mxu0 %v6652
        %8978 = vmatpush1.bf16.msra.mxu0 %v6651
        %8979 = vmatprep.subr.bf16.mxu0 %v6660
        %8980 = vmatpush1.bf16.msra.mxu0 %v6659
        %8981 = vmatprep.subr.bf16.mxu0 %v6668
        %8982 = vmatpush1.bf16.msra.mxu0 %v6667
        %8983 = vmatprep.subr.bf16.mxu0 %v6676
        %8984 = vmatpush1.bf16.msra.mxu0 %v6675
        %8985 = vmatprep.subr.bf16.mxu0 %v6684
        %8986 = vmatpush1.bf16.msra.mxu0 %v6683
        %8987 = vmatprep.subr.bf16.mxu0 %v6692
        %8988 = vmatpush1.bf16.msra.mxu0 %v6691
        %8989 = vmatprep.subr.bf16.mxu0 %v6700
        %8990 = vmatpush1.bf16.msra.mxu0 %v6699
        %8991 = vmatprep.subr.bf16.mxu0 %v6708
        %8992 = vmatpush1.bf16.msra.mxu0 %v6707
        %8993 = vmatprep.mubr.bf16.mxu0 %v3482
        %8994 = vmatmul.mubr.bf16.gmra.mrb[0].mxu0 %v3481
        %v8995 = vpop.f32.mrb[0].mxu0
        %v8996 = vadd.f32 0.0, %v8995
        %v8997 = vpop.f32.mrb[0].mxu0
        %v8998 = vadd.f32 0.0, %v8997
        %v8999 = vpop.f32.mrb[0].mxu0
        %v9000 = vpop.f32.mrb[0].mxu0
        %9001 = vdwg.mxu0
        %9002 = vmatprep.subr.bf16.mxu0 %v6716
        %9003 = vmatpush1.bf16.msra.mxu0 %v6715
        %9004 = vmatprep.subr.bf16.mxu0 %v6724
        %9005 = vmatpush1.bf16.msra.mxu0 %v6723
        %9006 = vmatprep.subr.bf16.mxu0 %v6732
        %9007 = vmatpush1.bf16.msra.mxu0 %v6731
        %9008 = vmatprep.subr.bf16.mxu0 %v6740
        %9009 = vmatpush1.bf16.msra.mxu0 %v6739
        %9010 = vmatprep.subr.bf16.mxu0 %v6748
        %9011 = vmatpush1.bf16.msra.mxu0 %v6747
        %9012 = vmatprep.subr.bf16.mxu0 %v6756
        %9013 = vmatpush1.bf16.msra.mxu0 %v6755
        %9014 = vmatprep.subr.bf16.mxu0 %v6764
        %9015 = vmatpush1.bf16.msra.mxu0 %v6763
        %9016 = vmatprep.subr.bf16.mxu0 %v6772
        %9017 = vmatpush1.bf16.msra.mxu0 %v6771
        %9018 = vmatprep.subr.bf16.mxu0 %v6780
        %9019 = vmatpush1.bf16.msra.mxu0 %v6779
        %9020 = vmatprep.subr.bf16.mxu0 %v6788
        %9021 = vmatpush1.bf16.msra.mxu0 %v6787
        %9022 = vmatprep.subr.bf16.mxu0 %v6796
        %9023 = vmatpush1.bf16.msra.mxu0 %v6795
        %9024 = vmatprep.subr.bf16.mxu0 %v6804
        %9025 = vmatpush1.bf16.msra.mxu0 %v6803
        %9026 = vmatprep.subr.bf16.mxu0 %v6812
        %9027 = vmatpush1.bf16.msra.mxu0 %v6811
        %9028 = vmatprep.subr.bf16.mxu0 %v6820
        %9029 = vmatpush1.bf16.msra.mxu0 %v6819
        %9030 = vmatprep.subr.bf16.mxu0 %v6828
        %9031 = vmatpush1.bf16.msra.mxu0 %v6827
        %9032 = vmatprep.subr.bf16.mxu0 %v6836
        %9033 = vmatpush1.bf16.msra.mxu0 %v6835
        %9034 = vmatprep.mubr.bf16.mxu0 %v3484
        %9035 = vmatmul.mubr.bf16.gmra.mrb[0].mxu0 %v3483
        %v9036 = vpop.f32.mrb[0].mxu0
        %v9037 = vadd.f32 %v8996, %v9036
        %v9038 = vpop.f32.mrb[0].mxu0
        %v9039 = vadd.f32 %v8998, %v9038
        %v9040 = vpop.f32.mrb[0].mxu0
        %v9041 = vpop.f32.mrb[0].mxu0
        %9042 = vdwg.mxu0
        %9043 = vmatprep.subr.bf16.mxu0 %v6844
        %9044 = vmatpush1.bf16.msra.mxu0 %v6843
        %9045 = vmatprep.subr.bf16.mxu0 %v6852
        %9046 = vmatpush1.bf16.msra.mxu0 %v6851
        %9047 = vmatprep.subr.bf16.mxu0 %v6860
        %9048 = vmatpush1.bf16.msra.mxu0 %v6859
        %9049 = vmatprep.subr.bf16.mxu0 %v6868
        %9050 = vmatpush1.bf16.msra.mxu0 %v6867
        %9051 = vmatprep.subr.bf16.mxu0 %v6876
        %9052 = vmatpush1.bf16.msra.mxu0 %v6875
        %9053 = vmatprep.subr.bf16.mxu0 %v6884
        %9054 = vmatpush1.bf16.msra.mxu0 %v6883
        %9055 = vmatprep.subr.bf16.mxu0 %v6892
        %9056 = vmatpush1.bf16.msra.mxu0 %v6891
        %9057 = vmatprep.subr.bf16.mxu0 %v6900
        %9058 = vmatpush1.bf16.msra.mxu0 %v6899
        %9059 = vmatprep.subr.bf16.mxu0 %v6908
        %9060 = vmatpush1.bf16.msra.mxu0 %v6907
        %9061 = vmatprep.subr.bf16.mxu0 %v6916
        %9062 = vmatpush1.bf16.msra.mxu0 %v6915
        %9063 = vmatprep.subr.bf16.mxu0 %v6924
        %9064 = vmatpush1.bf16.msra.mxu0 %v6923
        %9065 = vmatprep.subr.bf16.mxu0 %v6932
        %9066 = vmatpush1.bf16.msra.mxu0 %v6931
        %9067 = vmatprep.subr.bf16.mxu0 %v6940
        %9068 = vmatpush1.bf16.msra.mxu0 %v6939
        %9069 = vmatprep.subr.bf16.mxu0 %v6948
        %9070 = vmatpush1.bf16.msra.mxu0 %v6947
        %9071 = vmatprep.subr.bf16.mxu0 %v6956
        %9072 = vmatpush1.bf16.msra.mxu0 %v6955
        %9073 = vmatprep.subr.bf16.mxu0 %v6964
        %9074 = vmatpush1.bf16.msra.mxu0 %v6963
        %9075 = vmatprep.mubr.bf16.mxu0 %v3486
        %9076 = vmatmul.mubr.bf16.gmra.mrb[0].mxu0 %v3485
        %v9077 = vpop.f32.mrb[0].mxu0
        %v9078 = vadd.f32 %v9037, %v9077
        %v9079 = vpop.f32.mrb[0].mxu0
        %v9080 = vadd.f32 %v9039, %v9079
        %v9081 = vpop.f32.mrb[0].mxu0
        %v9082 = vpop.f32.mrb[0].mxu0
        %9083 = vdwg.mxu0
        %9084 = vmatprep.subr.bf16.mxu0 %v6972
        %9085 = vmatpush1.bf16.msra.mxu0 %v6971
        %9086 = vmatprep.subr.bf16.mxu0 %v6980
        %9087 = vmatpush1.bf16.msra.mxu0 %v6979
        %9088 = vmatprep.subr.bf16.mxu0 %v6988
        %9089 = vmatpush1.bf16.msra.mxu0 %v6987
        %9090 = vmatprep.subr.bf16.mxu0 %v6996
        %9091 = vmatpush1.bf16.msra.mxu0 %v6995
        %9092 = vmatprep.subr.bf16.mxu0 %v7004
        %9093 = vmatpush1.bf16.msra.mxu0 %v7003
        %9094 = vmatprep.subr.bf16.mxu0 %v7012
        %9095 = vmatpush1.bf16.msra.mxu0 %v7011
        %9096 = vmatprep.subr.bf16.mxu0 %v7020
        %9097 = vmatpush1.bf16.msra.mxu0 %v7019
        %9098 = vmatprep.subr.bf16.mxu0 %v7028
        %9099 = vmatpush1.bf16.msra.mxu0 %v7027
        %9100 = vmatprep.subr.bf16.mxu0 %v7036
        %9101 = vmatpush1.bf16.msra.mxu0 %v7035
        %9102 = vmatprep.subr.bf16.mxu0 %v7044
        %9103 = vmatpush1.bf16.msra.mxu0 %v7043
        %9104 = vmatprep.subr.bf16.mxu0 %v7052
        %9105 = vmatpush1.bf16.msra.mxu0 %v7051
        %9106 = vmatprep.subr.bf16.mxu0 %v7060
        %9107 = vmatpush1.bf16.msra.mxu0 %v7059
        %9108 = vmatprep.subr.bf16.mxu0 %v7068
        %9109 = vmatpush1.bf16.msra.mxu0 %v7067
        %9110 = vmatprep.subr.bf16.mxu0 %v7076
        %9111 = vmatpush1.bf16.msra.mxu0 %v7075
        %9112 = vmatprep.subr.bf16.mxu0 %v7084
        %9113 = vmatpush1.bf16.msra.mxu0 %v7083
        %9114 = vmatprep.subr.bf16.mxu0 %v7092
        %9115 = vmatpush1.bf16.msra.mxu0 %v7091
        %9116 = vmatprep.mubr.bf16.mxu0 %v3488
        %9117 = vmatmul.mubr.bf16.gmra.mrb[0].mxu0 %v3487
        %v9118 = vpop.f32.mrb[0].mxu0
        %v9119 = vadd.f32 %v9078, %v9118
        %v9120 = vpop.f32.mrb[0].mxu0
        %v9121 = vadd.f32 %v9080, %v9120
        %v9122 = vpop.f32.mrb[0].mxu0
        %v9123 = vpop.f32.mrb[0].mxu0
        %9124 = vdwg.mxu0
        %9125 = vmatprep.subr.bf16.mxu0 %v7100
        %9126 = vmatpush1.bf16.msra.mxu0 %v7099
        %9127 = vmatprep.subr.bf16.mxu0 %v7108
        %9128 = vmatpush1.bf16.msra.mxu0 %v7107
        %9129 = vmatprep.subr.bf16.mxu0 %v7116
        %9130 = vmatpush1.bf16.msra.mxu0 %v7115
        %9131 = vmatprep.subr.bf16.mxu0 %v7124
        %9132 = vmatpush1.bf16.msra.mxu0 %v7123
        %9133 = vmatprep.subr.bf16.mxu0 %v7132
        %9134 = vmatpush1.bf16.msra.mxu0 %v7131
        %9135 = vmatprep.subr.bf16.mxu0 %v7140
        %9136 = vmatpush1.bf16.msra.mxu0 %v7139
        %9137 = vmatprep.subr.bf16.mxu0 %v7148
        %9138 = vmatpush1.bf16.msra.mxu0 %v7147
        %9139 = vmatprep.subr.bf16.mxu0 %v7156
        %9140 = vmatpush1.bf16.msra.mxu0 %v7155
        %9141 = vmatprep.subr.bf16.mxu0 %v7164
        %9142 = vmatpush1.bf16.msra.mxu0 %v7163
        %9143 = vmatprep.subr.bf16.mxu0 %v7172
        %9144 = vmatpush1.bf16.msra.mxu0 %v7171
        %9145 = vmatprep.subr.bf16.mxu0 %v7180
        %9146 = vmatpush1.bf16.msra.mxu0 %v7179
        %9147 = vmatprep.subr.bf16.mxu0 %v7188
        %9148 = vmatpush1.bf16.msra.mxu0 %v7187
        %9149 = vmatprep.subr.bf16.mxu0 %v7196
        %9150 = vmatpush1.bf16.msra.mxu0 %v7195
        %9151 = vmatprep.subr.bf16.mxu0 %v7204
        %9152 = vmatpush1.bf16.msra.mxu0 %v7203
        %9153 = vmatprep.subr.bf16.mxu0 %v7212
        %9154 = vmatpush1.bf16.msra.mxu0 %v7211
        %9155 = vmatprep.subr.bf16.mxu0 %v7220
        %9156 = vmatpush1.bf16.msra.mxu0 %v7219
        %9157 = vmatprep.mubr.bf16.mxu0 %v3490
        %9158 = vmatmul.mubr.bf16.gmra.mrb[0].mxu0 %v3489
        %v9159 = vpop.f32.mrb[0].mxu0
        %v9160 = vadd.f32 %v9119, %v9159
        %v9161 = vpop.f32.mrb[0].mxu0
        %v9162 = vadd.f32 %v9121, %v9161
        %v9163 = vpop.f32.mrb[0].mxu0
        %v9164 = vpop.f32.mrb[0].mxu0
        %9165 = vdwg.mxu0
        %9166 = vmatprep.subr.bf16.mxu0 %v7228
        %9167 = vmatpush1.bf16.msra.mxu0 %v7227
        %9168 = vmatprep.subr.bf16.mxu0 %v7236
        %9169 = vmatpush1.bf16.msra.mxu0 %v7235
        %9170 = vmatprep.subr.bf16.mxu0 %v7244
        %9171 = vmatpush1.bf16.msra.mxu0 %v7243
        %9172 = vmatprep.subr.bf16.mxu0 %v7252
        %9173 = vmatpush1.bf16.msra.mxu0 %v7251
        %9174 = vmatprep.subr.bf16.mxu0 %v7260
        %9175 = vmatpush1.bf16.msra.mxu0 %v7259
        %9176 = vmatprep.subr.bf16.mxu0 %v7268
        %9177 = vmatpush1.bf16.msra.mxu0 %v7267
        %9178 = vmatprep.subr.bf16.mxu0 %v7276
        %9179 = vmatpush1.bf16.msra.mxu0 %v7275
        %9180 = vmatprep.subr.bf16.mxu0 %v7284
        %9181 = vmatpush1.bf16.msra.mxu0 %v7283
        %9182 = vmatprep.subr.bf16.mxu0 %v7292
        %9183 = vmatpush1.bf16.msra.mxu0 %v7291
        %9184 = vmatprep.subr.bf16.mxu0 %v7300
        %9185 = vmatpush1.bf16.msra.mxu0 %v7299
        %9186 = vmatprep.subr.bf16.mxu0 %v7308
        %9187 = vmatpush1.bf16.msra.mxu0 %v7307
        %9188 = vmatprep.subr.bf16.mxu0 %v7316
        %9189 = vmatpush1.bf16.msra.mxu0 %v7315
        %9190 = vmatprep.subr.bf16.mxu0 %v7324
        %9191 = vmatpush1.bf16.msra.mxu0 %v7323
        %9192 = vmatprep.subr.bf16.mxu0 %v7332
        %9193 = vmatpush1.bf16.msra.mxu0 %v7331
        %9194 = vmatprep.subr.bf16.mxu0 %v7340
        %9195 = vmatpush1.bf16.msra.mxu0 %v7339
        %9196 = vmatprep.subr.bf16.mxu0 %v7348
        %9197 = vmatpush1.bf16.msra.mxu0 %v7347
        %9198 = vmatprep.mubr.bf16.mxu0 %v3492
        %9199 = vmatmul.mubr.bf16.gmra.mrb[0].mxu0 %v3491
        %v9200 = vpop.f32.mrb[0].mxu0
        %v9201 = vadd.f32 %v9160, %v9200
        %v9202 = vpop.f32.mrb[0].mxu0
        %v9203 = vadd.f32 %v9162, %v9202
        %v9204 = vpop.f32.mrb[0].mxu0
        %v9205 = vpop.f32.mrb[0].mxu0
        %9206 = vdwg.mxu0
        %9207 = vmatprep.subr.bf16.mxu0 %v7356
        %9208 = vmatpush1.bf16.msra.mxu0 %v7355
        %9209 = vmatprep.subr.bf16.mxu0 %v7364
        %9210 = vmatpush1.bf16.msra.mxu0 %v7363
        %9211 = vmatprep.subr.bf16.mxu0 %v7372
        %9212 = vmatpush1.bf16.msra.mxu0 %v7371
        %9213 = vmatprep.subr.bf16.mxu0 %v7380
        %9214 = vmatpush1.bf16.msra.mxu0 %v7379
        %9215 = vmatprep.subr.bf16.mxu0 %v7388
        %9216 = vmatpush1.bf16.msra.mxu0 %v7387
        %9217 = vmatprep.subr.bf16.mxu0 %v7396
        %9218 = vmatpush1.bf16.msra.mxu0 %v7395
        %9219 = vmatprep.subr.bf16.mxu0 %v7404
        %9220 = vmatpush1.bf16.msra.mxu0 %v7403
        %9221 = vmatprep.subr.bf16.mxu0 %v7412
        %9222 = vmatpush1.bf16.msra.mxu0 %v7411
        %9223 = vmatprep.subr.bf16.mxu0 %v7420
        %9224 = vmatpush1.bf16.msra.mxu0 %v7419
        %9225 = vmatprep.subr.bf16.mxu0 %v7428
        %9226 = vmatpush1.bf16.msra.mxu0 %v7427
        %9227 = vmatprep.subr.bf16.mxu0 %v7436
        %9228 = vmatpush1.bf16.msra.mxu0 %v7435
        %9229 = vmatprep.subr.bf16.mxu0 %v7444
        %9230 = vmatpush1.bf16.msra.mxu0 %v7443
        %9231 = vmatprep.subr.bf16.mxu0 %v7452
        %9232 = vmatpush1.bf16.msra.mxu0 %v7451
        %9233 = vmatprep.subr.bf16.mxu0 %v7460
        %9234 = vmatpush1.bf16.msra.mxu0 %v7459
        %9235 = vmatprep.subr.bf16.mxu0 %v7468
        %9236 = vmatpush1.bf16.msra.mxu0 %v7467
        %9237 = vmatprep.subr.bf16.mxu0 %v7476
        %9238 = vmatpush1.bf16.msra.mxu0 %v7475
        %9239 = vmatprep.mubr.bf16.mxu0 %v3494
        %9240 = vmatmul.mubr.bf16.gmra.mrb[0].mxu0 %v3493
        %v9241 = vpop.f32.mrb[0].mxu0
        %v9242 = vadd.f32 %v9201, %v9241
        %v9243 = vpop.f32.mrb[0].mxu0
        %v9244 = vadd.f32 %v9203, %v9243
        %v9245 = vpop.f32.mrb[0].mxu0
        %v9246 = vpop.f32.mrb[0].mxu0
        %9247 = vdwg.mxu0
        %9248 = vmatprep.subr.bf16.mxu0 %v7484
        %9249 = vmatpush1.bf16.msra.mxu0 %v7483
        %9250 = vmatprep.subr.bf16.mxu0 %v7492
        %9251 = vmatpush1.bf16.msra.mxu0 %v7491
        %9252 = vmatprep.subr.bf16.mxu0 %v7500
        %9253 = vmatpush1.bf16.msra.mxu0 %v7499
        %9254 = vmatprep.subr.bf16.mxu0 %v7508
        %9255 = vmatpush1.bf16.msra.mxu0 %v7507
        %9256 = vmatprep.subr.bf16.mxu0 %v7516
        %9257 = vmatpush1.bf16.msra.mxu0 %v7515
        %9258 = vmatprep.subr.bf16.mxu0 %v7524
        %9259 = vmatpush1.bf16.msra.mxu0 %v7523
        %9260 = vmatprep.subr.bf16.mxu0 %v7532
        %9261 = vmatpush1.bf16.msra.mxu0 %v7531
        %9262 = vmatprep.subr.bf16.mxu0 %v7540
        %9263 = vmatpush1.bf16.msra.mxu0 %v7539
        %9264 = vmatprep.subr.bf16.mxu0 %v7548
        %9265 = vmatpush1.bf16.msra.mxu0 %v7547
        %9266 = vmatprep.subr.bf16.mxu0 %v7556
        %9267 = vmatpush1.bf16.msra.mxu0 %v7555
        %9268 = vmatprep.subr.bf16.mxu0 %v7564
        %9269 = vmatpush1.bf16.msra.mxu0 %v7563
        %9270 = vmatprep.subr.bf16.mxu0 %v7572
        %9271 = vmatpush1.bf16.msra.mxu0 %v7571
        %9272 = vmatprep.subr.bf16.mxu0 %v7580
        %9273 = vmatpush1.bf16.msra.mxu0 %v7579
        %9274 = vmatprep.subr.bf16.mxu0 %v7588
        %9275 = vmatpush1.bf16.msra.mxu0 %v7587
        %9276 = vmatprep.subr.bf16.mxu0 %v7596
        %9277 = vmatpush1.bf16.msra.mxu0 %v7595
        %9278 = vmatprep.subr.bf16.mxu0 %v7604
        %9279 = vmatpush1.bf16.msra.mxu0 %v7603
        %9280 = vmatprep.mubr.bf16.mxu0 %v3496
        %9281 = vmatmul.mubr.bf16.gmra.mrb[0].mxu0 %v3495
        %v9282 = vpop.f32.mrb[0].mxu0
        %v9283 = vadd.f32 %v9242, %v9282
        %v9284 = vpop.f32.mrb[0].mxu0
        %v9285 = vadd.f32 %v9244, %v9284
        %v9286 = vpop.f32.mrb[0].mxu0
        %v9287 = vpop.f32.mrb[0].mxu0
        %9288 = vdwg.mxu0
        %9289 = vmatprep.subr.bf16.mxu0 %v6590
        %9290 = vmatpush1.bf16.msra.mxu0 %v6589
        %9291 = vmatprep.subr.bf16.mxu0 %v6598
        %9292 = vmatpush1.bf16.msra.mxu0 %v6597
        %9293 = vmatprep.subr.bf16.mxu0 %v6606
        %9294 = vmatpush1.bf16.msra.mxu0 %v6605
        %9295 = vmatprep.subr.bf16.mxu0 %v6614
        %9296 = vmatpush1.bf16.msra.mxu0 %v6613
        %9297 = vmatprep.subr.bf16.mxu0 %v6622
        %9298 = vmatpush1.bf16.msra.mxu0 %v6621
        %9299 = vmatprep.subr.bf16.mxu0 %v6630
        %9300 = vmatpush1.bf16.msra.mxu0 %v6629
        %9301 = vmatprep.subr.bf16.mxu0 %v6638
        %9302 = vmatpush1.bf16.msra.mxu0 %v6637
        %9303 = vmatprep.subr.bf16.mxu0 %v6646
        %9304 = vmatpush1.bf16.msra.mxu0 %v6645
        %9305 = vmatprep.subr.bf16.mxu0 %v6654
        %9306 = vmatpush1.bf16.msra.mxu0 %v6653
        %9307 = vmatprep.subr.bf16.mxu0 %v6662
        %9308 = vmatpush1.bf16.msra.mxu0 %v6661
        %9309 = vmatprep.subr.bf16.mxu0 %v6670
        %9310 = vmatpush1.bf16.msra.mxu0 %v6669
        %9311 = vmatprep.subr.bf16.mxu0 %v6678
        %9312 = vmatpush1.bf16.msra.mxu0 %v6677
        %9313 = vmatprep.subr.bf16.mxu0 %v6686
        %9314 = vmatpush1.bf16.msra.mxu0 %v6685
        %9315 = vmatprep.subr.bf16.mxu0 %v6694
        %9316 = vmatpush1.bf16.msra.mxu0 %v6693
        %9317 = vmatprep.subr.bf16.mxu0 %v6702
        %9318 = vmatpush1.bf16.msra.mxu0 %v6701
        %9319 = vmatprep.subr.bf16.mxu0 %v6710
        %9320 = vmatpush1.bf16.msra.mxu0 %v6709
        %9321 = vmatprep.mubr.bf16.mxu0 %v3482
        %9322 = vmatmul.mubr.bf16.gmra.mrb[0].mxu0 %v3481
        %v9323 = vpop.f32.mrb[0].mxu0
        %v9324 = vadd.f32 0.0, %v9323
        %v9325 = vpop.f32.mrb[0].mxu0
        %v9326 = vadd.f32 0.0, %v9325
        %v9327 = vpop.f32.mrb[0].mxu0
        %v9328 = vpop.f32.mrb[0].mxu0
        %9329 = vdwg.mxu0
        %9330 = vmatprep.subr.bf16.mxu0 %v6718
        %9331 = vmatpush1.bf16.msra.mxu0 %v6717
        %9332 = vmatprep.subr.bf16.mxu0 %v6726
        %9333 = vmatpush1.bf16.msra.mxu0 %v6725
        %9334 = vmatprep.subr.bf16.mxu0 %v6734
        %9335 = vmatpush1.bf16.msra.mxu0 %v6733
        %9336 = vmatprep.subr.bf16.mxu0 %v6742
        %9337 = vmatpush1.bf16.msra.mxu0 %v6741
        %9338 = vmatprep.subr.bf16.mxu0 %v6750
        %9339 = vmatpush1.bf16.msra.mxu0 %v6749
        %9340 = vmatprep.subr.bf16.mxu0 %v6758
        %9341 = vmatpush1.bf16.msra.mxu0 %v6757
        %9342 = vmatprep.subr.bf16.mxu0 %v6766
        %9343 = vmatpush1.bf16.msra.mxu0 %v6765
        %9344 = vmatprep.subr.bf16.mxu0 %v6774
        %9345 = vmatpush1.bf16.msra.mxu0 %v6773
        %9346 = vmatprep.subr.bf16.mxu0 %v6782
        %9347 = vmatpush1.bf16.msra.mxu0 %v6781
        %9348 = vmatprep.subr.bf16.mxu0 %v6790
        %9349 = vmatpush1.bf16.msra.mxu0 %v6789
        %9350 = vmatprep.subr.bf16.mxu0 %v6798
        %9351 = vmatpush1.bf16.msra.mxu0 %v6797
        %9352 = vmatprep.subr.bf16.mxu0 %v6806
        %9353 = vmatpush1.bf16.msra.mxu0 %v6805
        %9354 = vmatprep.subr.bf16.mxu0 %v6814
        %9355 = vmatpush1.bf16.msra.mxu0 %v6813
        %9356 = vmatprep.subr.bf16.mxu0 %v6822
        %9357 = vmatpush1.bf16.msra.mxu0 %v6821
        %9358 = vmatprep.subr.bf16.mxu0 %v6830
        %9359 = vmatpush1.bf16.msra.mxu0 %v6829
        %9360 = vmatprep.subr.bf16.mxu0 %v6838
        %9361 = vmatpush1.bf16.msra.mxu0 %v6837
        %9362 = vmatprep.mubr.bf16.mxu0 %v3484
        %9363 = vmatmul.mubr.bf16.gmra.mrb[0].mxu0 %v3483
        %v9364 = vpop.f32.mrb[0].mxu0
        %v9365 = vadd.f32 %v9324, %v9364
        %v9366 = vpop.f32.mrb[0].mxu0
        %v9367 = vadd.f32 %v9326, %v9366
        %v9368 = vpop.f32.mrb[0].mxu0
        %v9369 = vpop.f32.mrb[0].mxu0
        %9370 = vdwg.mxu0
        %9371 = vmatprep.subr.bf16.mxu0 %v6846
        %9372 = vmatpush1.bf16.msra.mxu0 %v6845
        %9373 = vmatprep.subr.bf16.mxu0 %v6854
        %9374 = vmatpush1.bf16.msra.mxu0 %v6853
        %9375 = vmatprep.subr.bf16.mxu0 %v6862
        %9376 = vmatpush1.bf16.msra.mxu0 %v6861
        %9377 = vmatprep.subr.bf16.mxu0 %v6870
        %9378 = vmatpush1.bf16.msra.mxu0 %v6869
        %9379 = vmatprep.subr.bf16.mxu0 %v6878
        %9380 = vmatpush1.bf16.msra.mxu0 %v6877
        %9381 = vmatprep.subr.bf16.mxu0 %v6886
        %9382 = vmatpush1.bf16.msra.mxu0 %v6885
        %9383 = vmatprep.subr.bf16.mxu0 %v6894
        %9384 = vmatpush1.bf16.msra.mxu0 %v6893
        %9385 = vmatprep.subr.bf16.mxu0 %v6902
        %9386 = vmatpush1.bf16.msra.mxu0 %v6901
        %9387 = vmatprep.subr.bf16.mxu0 %v6910
        %9388 = vmatpush1.bf16.msra.mxu0 %v6909
        %9389 = vmatprep.subr.bf16.mxu0 %v6918
        %9390 = vmatpush1.bf16.msra.mxu0 %v6917
        %9391 = vmatprep.subr.bf16.mxu0 %v6926
        %9392 = vmatpush1.bf16.msra.mxu0 %v6925
        %9393 = vmatprep.subr.bf16.mxu0 %v6934
        %9394 = vmatpush1.bf16.msra.mxu0 %v6933
        %9395 = vmatprep.subr.bf16.mxu0 %v6942
        %9396 = vmatpush1.bf16.msra.mxu0 %v6941
        %9397 = vmatprep.subr.bf16.mxu0 %v6950
        %9398 = vmatpush1.bf16.msra.mxu0 %v6949
        %9399 = vmatprep.subr.bf16.mxu0 %v6958
        %9400 = vmatpush1.bf16.msra.mxu0 %v6957
        %9401 = vmatprep.subr.bf16.mxu0 %v6966
        %9402 = vmatpush1.bf16.msra.mxu0 %v6965
        %9403 = vmatprep.mubr.bf16.mxu0 %v3486
        %9404 = vmatmul.mubr.bf16.gmra.mrb[0].mxu0 %v3485
        %v9405 = vpop.f32.mrb[0].mxu0
        %v9406 = vadd.f32 %v9365, %v9405
        %v9407 = vpop.f32.mrb[0].mxu0
        %v9408 = vadd.f32 %v9367, %v9407
        %v9409 = vpop.f32.mrb[0].mxu0
        %v9410 = vpop.f32.mrb[0].mxu0
        %9411 = vdwg.mxu0
        %9412 = vmatprep.subr.bf16.mxu0 %v6974
        %9413 = vmatpush1.bf16.msra.mxu0 %v6973
        %9414 = vmatprep.subr.bf16.mxu0 %v6982
        %9415 = vmatpush1.bf16.msra.mxu0 %v6981
        %9416 = vmatprep.subr.bf16.mxu0 %v6990
        %9417 = vmatpush1.bf16.msra.mxu0 %v6989
        %9418 = vmatprep.subr.bf16.mxu0 %v6998
        %9419 = vmatpush1.bf16.msra.mxu0 %v6997
        %9420 = vmatprep.subr.bf16.mxu0 %v7006
        %9421 = vmatpush1.bf16.msra.mxu0 %v7005
        %9422 = vmatprep.subr.bf16.mxu0 %v7014
        %9423 = vmatpush1.bf16.msra.mxu0 %v7013
        %9424 = vmatprep.subr.bf16.mxu0 %v7022
        %9425 = vmatpush1.bf16.msra.mxu0 %v7021
        %9426 = vmatprep.subr.bf16.mxu0 %v7030
        %9427 = vmatpush1.bf16.msra.mxu0 %v7029
        %9428 = vmatprep.subr.bf16.mxu0 %v7038
        %9429 = vmatpush1.bf16.msra.mxu0 %v7037
        %9430 = vmatprep.subr.bf16.mxu0 %v7046
        %9431 = vmatpush1.bf16.msra.mxu0 %v7045
        %9432 = vmatprep.subr.bf16.mxu0 %v7054
        %9433 = vmatpush1.bf16.msra.mxu0 %v7053
        %9434 = vmatprep.subr.bf16.mxu0 %v7062
        %9435 = vmatpush1.bf16.msra.mxu0 %v7061
        %9436 = vmatprep.subr.bf16.mxu0 %v7070
        %9437 = vmatpush1.bf16.msra.mxu0 %v7069
        %9438 = vmatprep.subr.bf16.mxu0 %v7078
        %9439 = vmatpush1.bf16.msra.mxu0 %v7077
        %9440 = vmatprep.subr.bf16.mxu0 %v7086
        %9441 = vmatpush1.bf16.msra.mxu0 %v7085
        %9442 = vmatprep.subr.bf16.mxu0 %v7094
        %9443 = vmatpush1.bf16.msra.mxu0 %v7093
        %9444 = vmatprep.mubr.bf16.mxu0 %v3488
        %9445 = vmatmul.mubr.bf16.gmra.mrb[0].mxu0 %v3487
        %v9446 = vpop.f32.mrb[0].mxu0
        %v9447 = vadd.f32 %v9406, %v9446
        %v9448 = vpop.f32.mrb[0].mxu0
        %v9449 = vadd.f32 %v9408, %v9448
        %v9450 = vpop.f32.mrb[0].mxu0
        %v9451 = vpop.f32.mrb[0].mxu0
        %9452 = vdwg.mxu0
        %9453 = vmatprep.subr.bf16.mxu0 %v7102
        %9454 = vmatpush1.bf16.msra.mxu0 %v7101
        %9455 = vmatprep.subr.bf16.mxu0 %v7110
        %9456 = vmatpush1.bf16.msra.mxu0 %v7109
        %9457 = vmatprep.subr.bf16.mxu0 %v7118
        %9458 = vmatpush1.bf16.msra.mxu0 %v7117
        %9459 = vmatprep.subr.bf16.mxu0 %v7126
        %9460 = vmatpush1.bf16.msra.mxu0 %v7125
        %9461 = vmatprep.subr.bf16.mxu0 %v7134
        %9462 = vmatpush1.bf16.msra.mxu0 %v7133
        %9463 = vmatprep.subr.bf16.mxu0 %v7142
        %9464 = vmatpush1.bf16.msra.mxu0 %v7141
        %9465 = vmatprep.subr.bf16.mxu0 %v7150
        %9466 = vmatpush1.bf16.msra.mxu0 %v7149
        %9467 = vmatprep.subr.bf16.mxu0 %v7158
        %9468 = vmatpush1.bf16.msra.mxu0 %v7157
        %9469 = vmatprep.subr.bf16.mxu0 %v7166
        %9470 = vmatpush1.bf16.msra.mxu0 %v7165
        %9471 = vmatprep.subr.bf16.mxu0 %v7174
        %9472 = vmatpush1.bf16.msra.mxu0 %v7173
        %9473 = vmatprep.subr.bf16.mxu0 %v7182
        %9474 = vmatpush1.bf16.msra.mxu0 %v7181
        %9475 = vmatprep.subr.bf16.mxu0 %v7190
        %9476 = vmatpush1.bf16.msra.mxu0 %v7189
        %9477 = vmatprep.subr.bf16.mxu0 %v7198
        %9478 = vmatpush1.bf16.msra.mxu0 %v7197
        %9479 = vmatprep.subr.bf16.mxu0 %v7206
        %9480 = vmatpush1.bf16.msra.mxu0 %v7205
        %9481 = vmatprep.subr.bf16.mxu0 %v7214
        %9482 = vmatpush1.bf16.msra.mxu0 %v7213
        %9483 = vmatprep.subr.bf16.mxu0 %v7222
        %9484 = vmatpush1.bf16.msra.mxu0 %v7221
        %9485 = vmatprep.mubr.bf16.mxu0 %v3490
        %9486 = vmatmul.mubr.bf16.gmra.mrb[0].mxu0 %v3489
        %v9487 = vpop.f32.mrb[0].mxu0
        %v9488 = vadd.f32 %v9447, %v9487
        %v9489 = vpop.f32.mrb[0].mxu0
        %v9490 = vadd.f32 %v9449, %v9489
        %v9491 = vpop.f32.mrb[0].mxu0
        %v9492 = vpop.f32.mrb[0].mxu0
        %9493 = vdwg.mxu0
        %9494 = vmatprep.subr.bf16.mxu0 %v7230
        %9495 = vmatpush1.bf16.msra.mxu0 %v7229
        %9496 = vmatprep.subr.bf16.mxu0 %v7238
        %9497 = vmatpush1.bf16.msra.mxu0 %v7237
        %9498 = vmatprep.subr.bf16.mxu0 %v7246
        %9499 = vmatpush1.bf16.msra.mxu0 %v7245
        %9500 = vmatprep.subr.bf16.mxu0 %v7254
        %9501 = vmatpush1.bf16.msra.mxu0 %v7253
        %9502 = vmatprep.subr.bf16.mxu0 %v7262
        %9503 = vmatpush1.bf16.msra.mxu0 %v7261
        %9504 = vmatprep.subr.bf16.mxu0 %v7270
        %9505 = vmatpush1.bf16.msra.mxu0 %v7269
        %9506 = vmatprep.subr.bf16.mxu0 %v7278
        %9507 = vmatpush1.bf16.msra.mxu0 %v7277
        %9508 = vmatprep.subr.bf16.mxu0 %v7286
        %9509 = vmatpush1.bf16.msra.mxu0 %v7285
        %9510 = vmatprep.subr.bf16.mxu0 %v7294
        %9511 = vmatpush1.bf16.msra.mxu0 %v7293
        %9512 = vmatprep.subr.bf16.mxu0 %v7302
        %9513 = vmatpush1.bf16.msra.mxu0 %v7301
        %9514 = vmatprep.subr.bf16.mxu0 %v7310
        %9515 = vmatpush1.bf16.msra.mxu0 %v7309
        %9516 = vmatprep.subr.bf16.mxu0 %v7318
        %9517 = vmatpush1.bf16.msra.mxu0 %v7317
        %9518 = vmatprep.subr.bf16.mxu0 %v7326
        %9519 = vmatpush1.bf16.msra.mxu0 %v7325
        %9520 = vmatprep.subr.bf16.mxu0 %v7334
        %9521 = vmatpush1.bf16.msra.mxu0 %v7333
        %9522 = vmatprep.subr.bf16.mxu0 %v7342
        %9523 = vmatpush1.bf16.msra.mxu0 %v7341
        %9524 = vmatprep.subr.bf16.mxu0 %v7350
        %9525 = vmatpush1.bf16.msra.mxu0 %v7349
        %9526 = vmatprep.mubr.bf16.mxu0 %v3492
        %9527 = vmatmul.mubr.bf16.gmra.mrb[0].mxu0 %v3491
        %v9528 = vpop.f32.mrb[0].mxu0
        %v9529 = vadd.f32 %v9488, %v9528
        %v9530 = vpop.f32.mrb[0].mxu0
        %v9531 = vadd.f32 %v9490, %v9530
        %v9532 = vpop.f32.mrb[0].mxu0
        %v9533 = vpop.f32.mrb[0].mxu0
        %9534 = vdwg.mxu0
        %9535 = vmatprep.subr.bf16.mxu0 %v7358
        %9536 = vmatpush1.bf16.msra.mxu0 %v7357
        %9537 = vmatprep.subr.bf16.mxu0 %v7366
        %9538 = vmatpush1.bf16.msra.mxu0 %v7365
        %9539 = vmatprep.subr.bf16.mxu0 %v7374
        %9540 = vmatpush1.bf16.msra.mxu0 %v7373
        %9541 = vmatprep.subr.bf16.mxu0 %v7382
        %9542 = vmatpush1.bf16.msra.mxu0 %v7381
        %9543 = vmatprep.subr.bf16.mxu0 %v7390
        %9544 = vmatpush1.bf16.msra.mxu0 %v7389
        %9545 = vmatprep.subr.bf16.mxu0 %v7398
        %9546 = vmatpush1.bf16.msra.mxu0 %v7397
        %9547 = vmatprep.subr.bf16.mxu0 %v7406
        %9548 = vmatpush1.bf16.msra.mxu0 %v7405
        %9549 = vmatprep.subr.bf16.mxu0 %v7414
        %9550 = vmatpush1.bf16.msra.mxu0 %v7413
        %9551 = vmatprep.subr.bf16.mxu0 %v7422
        %9552 = vmatpush1.bf16.msra.mxu0 %v7421
        %9553 = vmatprep.subr.bf16.mxu0 %v7430
        %9554 = vmatpush1.bf16.msra.mxu0 %v7429
        %9555 = vmatprep.subr.bf16.mxu0 %v7438
        %9556 = vmatpush1.bf16.msra.mxu0 %v7437
        %9557 = vmatprep.subr.bf16.mxu0 %v7446
        %9558 = vmatpush1.bf16.msra.mxu0 %v7445
        %9559 = vmatprep.subr.bf16.mxu0 %v7454
        %9560 = vmatpush1.bf16.msra.mxu0 %v7453
        %9561 = vmatprep.subr.bf16.mxu0 %v7462
        %9562 = vmatpush1.bf16.msra.mxu0 %v7461
        %9563 = vmatprep.subr.bf16.mxu0 %v7470
        %9564 = vmatpush1.bf16.msra.mxu0 %v7469
        %9565 = vmatprep.subr.bf16.mxu0 %v7478
        %9566 = vmatpush1.bf16.msra.mxu0 %v7477
        %9567 = vmatprep.mubr.bf16.mxu0 %v3494
        %9568 = vmatmul.mubr.bf16.gmra.mrb[0].mxu0 %v3493
        %v9569 = vpop.f32.mrb[0].mxu0
        %v9570 = vadd.f32 %v9529, %v9569
        %v9571 = vpop.f32.mrb[0].mxu0
        %v9572 = vadd.f32 %v9531, %v9571
        %v9573 = vpop.f32.mrb[0].mxu0
        %v9574 = vpop.f32.mrb[0].mxu0
        %9575 = vdwg.mxu0
        %9576 = vmatprep.subr.bf16.mxu0 %v7486
        %9577 = vmatpush1.bf16.msra.mxu0 %v7485
        %9578 = vmatprep.subr.bf16.mxu0 %v7494
        %9579 = vmatpush1.bf16.msra.mxu0 %v7493
        %9580 = vmatprep.subr.bf16.mxu0 %v7502
        %9581 = vmatpush1.bf16.msra.mxu0 %v7501
        %9582 = vmatprep.subr.bf16.mxu0 %v7510
        %9583 = vmatpush1.bf16.msra.mxu0 %v7509
        %9584 = vmatprep.subr.bf16.mxu0 %v7518
        %9585 = vmatpush1.bf16.msra.mxu0 %v7517
        %9586 = vmatprep.subr.bf16.mxu0 %v7526
        %9587 = vmatpush1.bf16.msra.mxu0 %v7525
        %9588 = vmatprep.subr.bf16.mxu0 %v7534
        %9589 = vmatpush1.bf16.msra.mxu0 %v7533
        %9590 = vmatprep.subr.bf16.mxu0 %v7542
        %9591 = vmatpush1.bf16.msra.mxu0 %v7541
        %9592 = vmatprep.subr.bf16.mxu0 %v7550
        %9593 = vmatpush1.bf16.msra.mxu0 %v7549
        %9594 = vmatprep.subr.bf16.mxu0 %v7558
        %9595 = vmatpush1.bf16.msra.mxu0 %v7557
        %9596 = vmatprep.subr.bf16.mxu0 %v7566
        %9597 = vmatpush1.bf16.msra.mxu0 %v7565
        %9598 = vmatprep.subr.bf16.mxu0 %v7574
        %9599 = vmatpush1.bf16.msra.mxu0 %v7573
        %9600 = vmatprep.subr.bf16.mxu0 %v7582
        %9601 = vmatpush1.bf16.msra.mxu0 %v7581
        %9602 = vmatprep.subr.bf16.mxu0 %v7590
        %9603 = vmatpush1.bf16.msra.mxu0 %v7589
        %9604 = vmatprep.subr.bf16.mxu0 %v7598
        %9605 = vmatpush1.bf16.msra.mxu0 %v7597
        %9606 = vmatprep.subr.bf16.mxu0 %v7606
        %9607 = vmatpush1.bf16.msra.mxu0 %v7605
        %9608 = vmatprep.mubr.bf16.mxu0 %v3496
        %9609 = vmatmul.mubr.bf16.gmra.mrb[0].mxu0 %v3495
        %v9610 = vpop.f32.mrb[0].mxu0
        %v9611 = vadd.f32 %v9570, %v9610
        %v9612 = vpop.f32.mrb[0].mxu0
        %v9613 = vadd.f32 %v9572, %v9612
        %v9614 = vpop.f32.mrb[0].mxu0
        %v9615 = vpop.f32.mrb[0].mxu0
        %9616 = vdwg.mxu0
        %9617 = vmatprep.subr.bf16.mxu0 %v6592
        %9618 = vmatpush1.bf16.msra.mxu0 %v6591
        %9619 = vmatprep.subr.bf16.mxu0 %v6600
        %9620 = vmatpush1.bf16.msra.mxu0 %v6599
        %9621 = vmatprep.subr.bf16.mxu0 %v6608
        %9622 = vmatpush1.bf16.msra.mxu0 %v6607
        %9623 = vmatprep.subr.bf16.mxu0 %v6616
        %9624 = vmatpush1.bf16.msra.mxu0 %v6615
        %9625 = vmatprep.subr.bf16.mxu0 %v6624
        %9626 = vmatpush1.bf16.msra.mxu0 %v6623
        %9627 = vmatprep.subr.bf16.mxu0 %v6632
        %9628 = vmatpush1.bf16.msra.mxu0 %v6631
        %9629 = vmatprep.subr.bf16.mxu0 %v6640
        %9630 = vmatpush1.bf16.msra.mxu0 %v6639
        %9631 = vmatprep.subr.bf16.mxu0 %v6648
        %9632 = vmatpush1.bf16.msra.mxu0 %v6647
        %9633 = vmatprep.subr.bf16.mxu0 %v6656
        %9634 = vmatpush1.bf16.msra.mxu0 %v6655
        %9635 = vmatprep.subr.bf16.mxu0 %v6664
        %9636 = vmatpush1.bf16.msra.mxu0 %v6663
        %9637 = vmatprep.subr.bf16.mxu0 %v6672
        %9638 = vmatpush1.bf16.msra.mxu0 %v6671
        %9639 = vmatprep.subr.bf16.mxu0 %v6680
        %9640 = vmatpush1.bf16.msra.mxu0 %v6679
        %9641 = vmatprep.subr.bf16.mxu0 %v6688
        %9642 = vmatpush1.bf16.msra.mxu0 %v6687
        %9643 = vmatprep.subr.bf16.mxu0 %v6696
        %9644 = vmatpush1.bf16.msra.mxu0 %v6695
        %9645 = vmatprep.subr.bf16.mxu0 %v6704
        %9646 = vmatpush1.bf16.msra.mxu0 %v6703
        %9647 = vmatprep.subr.bf16.mxu0 %v6712
        %9648 = vmatpush1.bf16.msra.mxu0 %v6711
        %9649 = vmatprep.mubr.bf16.mxu0 %v3482
        %9650 = vmatmul.mubr.bf16.gmra.mrb[0].mxu0 %v3481
        %v9651 = vpop.f32.mrb[0].mxu0
        %v9652 = vadd.f32 0.0, %v9651
        %v9653 = vpop.f32.mrb[0].mxu0
        %v9654 = vadd.f32 0.0, %v9653
        %v9655 = vpop.f32.mrb[0].mxu0
        %v9656 = vpop.f32.mrb[0].mxu0
        %9657 = vdwg.mxu0
        %9658 = vmatprep.subr.bf16.mxu0 %v6720
        %9659 = vmatpush1.bf16.msra.mxu0 %v6719
        %9660 = vmatprep.subr.bf16.mxu0 %v6728
        %9661 = vmatpush1.bf16.msra.mxu0 %v6727
        %9662 = vmatprep.subr.bf16.mxu0 %v6736
        %9663 = vmatpush1.bf16.msra.mxu0 %v6735
        %9664 = vmatprep.subr.bf16.mxu0 %v6744
        %9665 = vmatpush1.bf16.msra.mxu0 %v6743
        %9666 = vmatprep.subr.bf16.mxu0 %v6752
        %9667 = vmatpush1.bf16.msra.mxu0 %v6751
        %9668 = vmatprep.subr.bf16.mxu0 %v6760
        %9669 = vmatpush1.bf16.msra.mxu0 %v6759
        %9670 = vmatprep.subr.bf16.mxu0 %v6768
        %9671 = vmatpush1.bf16.msra.mxu0 %v6767
        %9672 = vmatprep.subr.bf16.mxu0 %v6776
        %9673 = vmatpush1.bf16.msra.mxu0 %v6775
        %9674 = vmatprep.subr.bf16.mxu0 %v6784
        %9675 = vmatpush1.bf16.msra.mxu0 %v6783
        %9676 = vmatprep.subr.bf16.mxu0 %v6792
        %9677 = vmatpush1.bf16.msra.mxu0 %v6791
        %9678 = vmatprep.subr.bf16.mxu0 %v6800
        %9679 = vmatpush1.bf16.msra.mxu0 %v6799
        %9680 = vmatprep.subr.bf16.mxu0 %v6808
        %9681 = vmatpush1.bf16.msra.mxu0 %v6807
        %9682 = vmatprep.subr.bf16.mxu0 %v6816
        %9683 = vmatpush1.bf16.msra.mxu0 %v6815
        %9684 = vmatprep.subr.bf16.mxu0 %v6824
        %9685 = vmatpush1.bf16.msra.mxu0 %v6823
        %9686 = vmatprep.subr.bf16.mxu0 %v6832
        %9687 = vmatpush1.bf16.msra.mxu0 %v6831
        %9688 = vmatprep.subr.bf16.mxu0 %v6840
        %9689 = vmatpush1.bf16.msra.mxu0 %v6839
        %9690 = vmatprep.mubr.bf16.mxu0 %v3484
        %9691 = vmatmul.mubr.bf16.gmra.mrb[0].mxu0 %v3483
        %v9692 = vpop.f32.mrb[0].mxu0
        %v9693 = vadd.f32 %v9652, %v9692
        %v9694 = vpop.f32.mrb[0].mxu0
        %v9695 = vadd.f32 %v9654, %v9694
        %v9696 = vpop.f32.mrb[0].mxu0
        %v9697 = vpop.f32.mrb[0].mxu0
        %9698 = vdwg.mxu0
        %9699 = vmatprep.subr.bf16.mxu0 %v6848
        %9700 = vmatpush1.bf16.msra.mxu0 %v6847
        %9701 = vmatprep.subr.bf16.mxu0 %v6856
        %9702 = vmatpush1.bf16.msra.mxu0 %v6855
        %9703 = vmatprep.subr.bf16.mxu0 %v6864
        %9704 = vmatpush1.bf16.msra.mxu0 %v6863
        %9705 = vmatprep.subr.bf16.mxu0 %v6872
        %9706 = vmatpush1.bf16.msra.mxu0 %v6871
        %9707 = vmatprep.subr.bf16.mxu0 %v6880
        %9708 = vmatpush1.bf16.msra.mxu0 %v6879
        %9709 = vmatprep.subr.bf16.mxu0 %v6888
        %9710 = vmatpush1.bf16.msra.mxu0 %v6887
        %9711 = vmatprep.subr.bf16.mxu0 %v6896
        %9712 = vmatpush1.bf16.msra.mxu0 %v6895
        %9713 = vmatprep.subr.bf16.mxu0 %v6904
        %9714 = vmatpush1.bf16.msra.mxu0 %v6903
        %9715 = vmatprep.subr.bf16.mxu0 %v6912
        %9716 = vmatpush1.bf16.msra.mxu0 %v6911
        %9717 = vmatprep.subr.bf16.mxu0 %v6920
        %9718 = vmatpush1.bf16.msra.mxu0 %v6919
        %9719 = vmatprep.subr.bf16.mxu0 %v6928
        %9720 = vmatpush1.bf16.msra.mxu0 %v6927
        %9721 = vmatprep.subr.bf16.mxu0 %v6936
        %9722 = vmatpush1.bf16.msra.mxu0 %v6935
        %9723 = vmatprep.subr.bf16.mxu0 %v6944
        %9724 = vmatpush1.bf16.msra.mxu0 %v6943
        %9725 = vmatprep.subr.bf16.mxu0 %v6952
        %9726 = vmatpush1.bf16.msra.mxu0 %v6951
        %9727 = vmatprep.subr.bf16.mxu0 %v6960
        %9728 = vmatpush1.bf16.msra.mxu0 %v6959
        %9729 = vmatprep.subr.bf16.mxu0 %v6968
        %9730 = vmatpush1.bf16.msra.mxu0 %v6967
        %9731 = vmatprep.mubr.bf16.mxu0 %v3486
        %9732 = vmatmul.mubr.bf16.gmra.mrb[0].mxu0 %v3485
        %v9733 = vpop.f32.mrb[0].mxu0
        %v9734 = vadd.f32 %v9693, %v9733
        %v9735 = vpop.f32.mrb[0].mxu0
        %v9736 = vadd.f32 %v9695, %v9735
        %v9737 = vpop.f32.mrb[0].mxu0
        %v9738 = vpop.f32.mrb[0].mxu0
        %9739 = vdwg.mxu0
        %9740 = vmatprep.subr.bf16.mxu0 %v6976
        %9741 = vmatpush1.bf16.msra.mxu0 %v6975
        %9742 = vmatprep.subr.bf16.mxu0 %v6984
        %9743 = vmatpush1.bf16.msra.mxu0 %v6983
        %9744 = vmatprep.subr.bf16.mxu0 %v6992
        %9745 = vmatpush1.bf16.msra.mxu0 %v6991
        %9746 = vmatprep.subr.bf16.mxu0 %v7000
        %9747 = vmatpush1.bf16.msra.mxu0 %v6999
        %9748 = vmatprep.subr.bf16.mxu0 %v7008
        %9749 = vmatpush1.bf16.msra.mxu0 %v7007
        %9750 = vmatprep.subr.bf16.mxu0 %v7016
        %9751 = vmatpush1.bf16.msra.mxu0 %v7015
        %9752 = vmatprep.subr.bf16.mxu0 %v7024
        %9753 = vmatpush1.bf16.msra.mxu0 %v7023
        %9754 = vmatprep.subr.bf16.mxu0 %v7032
        %9755 = vmatpush1.bf16.msra.mxu0 %v7031
        %9756 = vmatprep.subr.bf16.mxu0 %v7040
        %9757 = vmatpush1.bf16.msra.mxu0 %v7039
        %9758 = vmatprep.subr.bf16.mxu0 %v7048
        %9759 = vmatpush1.bf16.msra.mxu0 %v7047
        %9760 = vmatprep.subr.bf16.mxu0 %v7056
        %9761 = vmatpush1.bf16.msra.mxu0 %v7055
        %9762 = vmatprep.subr.bf16.mxu0 %v7064
        %9763 = vmatpush1.bf16.msra.mxu0 %v7063
        %9764 = vmatprep.subr.bf16.mxu0 %v7072
        %9765 = vmatpush1.bf16.msra.mxu0 %v7071
        %9766 = vmatprep.subr.bf16.mxu0 %v7080
        %9767 = vmatpush1.bf16.msra.mxu0 %v7079
        %9768 = vmatprep.subr.bf16.mxu0 %v7088
        %9769 = vmatpush1.bf16.msra.mxu0 %v7087
        %9770 = vmatprep.subr.bf16.mxu0 %v7096
        %9771 = vmatpush1.bf16.msra.mxu0 %v7095
        %9772 = vmatprep.mubr.bf16.mxu0 %v3488
        %9773 = vmatmul.mubr.bf16.gmra.mrb[0].mxu0 %v3487
        %v9774 = vpop.f32.mrb[0].mxu0
        %v9775 = vadd.f32 %v9734, %v9774
        %v9776 = vpop.f32.mrb[0].mxu0
        %v9777 = vadd.f32 %v9736, %v9776
        %v9778 = vpop.f32.mrb[0].mxu0
        %v9779 = vpop.f32.mrb[0].mxu0
        %9780 = vdwg.mxu0
        %9781 = vmatprep.subr.bf16.mxu0 %v7104
        %9782 = vmatpush1.bf16.msra.mxu0 %v7103
        %9783 = vmatprep.subr.bf16.mxu0 %v7112
        %9784 = vmatpush1.bf16.msra.mxu0 %v7111
        %9785 = vmatprep.subr.bf16.mxu0 %v7120
        %9786 = vmatpush1.bf16.msra.mxu0 %v7119
        %9787 = vmatprep.subr.bf16.mxu0 %v7128
        %9788 = vmatpush1.bf16.msra.mxu0 %v7127
        %9789 = vmatprep.subr.bf16.mxu0 %v7136
        %9790 = vmatpush1.bf16.msra.mxu0 %v7135
        %9791 = vmatprep.subr.bf16.mxu0 %v7144
        %9792 = vmatpush1.bf16.msra.mxu0 %v7143
        %9793 = vmatprep.subr.bf16.mxu0 %v7152
        %9794 = vmatpush1.bf16.msra.mxu0 %v7151
        %9795 = vmatprep.subr.bf16.mxu0 %v7160
        %9796 = vmatpush1.bf16.msra.mxu0 %v7159
        %9797 = vmatprep.subr.bf16.mxu0 %v7168
        %9798 = vmatpush1.bf16.msra.mxu0 %v7167
        %9799 = vmatprep.subr.bf16.mxu0 %v7176
        %9800 = vmatpush1.bf16.msra.mxu0 %v7175
        %9801 = vmatprep.subr.bf16.mxu0 %v7184
        %9802 = vmatpush1.bf16.msra.mxu0 %v7183
        %9803 = vmatprep.subr.bf16.mxu0 %v7192
        %9804 = vmatpush1.bf16.msra.mxu0 %v7191
        %9805 = vmatprep.subr.bf16.mxu0 %v7200
        %9806 = vmatpush1.bf16.msra.mxu0 %v7199
        %9807 = vmatprep.subr.bf16.mxu0 %v7208
        %9808 = vmatpush1.bf16.msra.mxu0 %v7207
        %9809 = vmatprep.subr.bf16.mxu0 %v7216
        %9810 = vmatpush1.bf16.msra.mxu0 %v7215
        %9811 = vmatprep.subr.bf16.mxu0 %v7224
        %9812 = vmatpush1.bf16.msra.mxu0 %v7223
        %9813 = vmatprep.mubr.bf16.mxu0 %v3490
        %9814 = vmatmul.mubr.bf16.gmra.mrb[0].mxu0 %v3489
        %v9815 = vpop.f32.mrb[0].mxu0
        %v9816 = vadd.f32 %v9775, %v9815
        %v9817 = vpop.f32.mrb[0].mxu0
        %v9818 = vadd.f32 %v9777, %v9817
        %v9819 = vpop.f32.mrb[0].mxu0
        %v9820 = vpop.f32.mrb[0].mxu0
        %9821 = vdwg.mxu0
        %9822 = vmatprep.subr.bf16.mxu0 %v7232
        %9823 = vmatpush1.bf16.msra.mxu0 %v7231
        %9824 = vmatprep.subr.bf16.mxu0 %v7240
        %9825 = vmatpush1.bf16.msra.mxu0 %v7239
        %9826 = vmatprep.subr.bf16.mxu0 %v7248
        %9827 = vmatpush1.bf16.msra.mxu0 %v7247
        %9828 = vmatprep.subr.bf16.mxu0 %v7256
        %9829 = vmatpush1.bf16.msra.mxu0 %v7255
        %9830 = vmatprep.subr.bf16.mxu0 %v7264
        %9831 = vmatpush1.bf16.msra.mxu0 %v7263
        %9832 = vmatprep.subr.bf16.mxu0 %v7272
        %9833 = vmatpush1.bf16.msra.mxu0 %v7271
        %9834 = vmatprep.subr.bf16.mxu0 %v7280
        %9835 = vmatpush1.bf16.msra.mxu0 %v7279
        %9836 = vmatprep.subr.bf16.mxu0 %v7288
        %9837 = vmatpush1.bf16.msra.mxu0 %v7287
        %9838 = vmatprep.subr.bf16.mxu0 %v7296
        %9839 = vmatpush1.bf16.msra.mxu0 %v7295
        %9840 = vmatprep.subr.bf16.mxu0 %v7304
        %9841 = vmatpush1.bf16.msra.mxu0 %v7303
        %9842 = vmatprep.subr.bf16.mxu0 %v7312
        %9843 = vmatpush1.bf16.msra.mxu0 %v7311
        %9844 = vmatprep.subr.bf16.mxu0 %v7320
        %9845 = vmatpush1.bf16.msra.mxu0 %v7319
        %9846 = vmatprep.subr.bf16.mxu0 %v7328
        %9847 = vmatpush1.bf16.msra.mxu0 %v7327
        %9848 = vmatprep.subr.bf16.mxu0 %v7336
        %9849 = vmatpush1.bf16.msra.mxu0 %v7335
        %9850 = vmatprep.subr.bf16.mxu0 %v7344
        %9851 = vmatpush1.bf16.msra.mxu0 %v7343
        %9852 = vmatprep.subr.bf16.mxu0 %v7352
        %9853 = vmatpush1.bf16.msra.mxu0 %v7351
        %9854 = vmatprep.mubr.bf16.mxu0 %v3492
        %9855 = vmatmul.mubr.bf16.gmra.mrb[0].mxu0 %v3491
        %v9856 = vpop.f32.mrb[0].mxu0
        %v9857 = vadd.f32 %v9816, %v9856
        %v9858 = vpop.f32.mrb[0].mxu0
        %v9859 = vadd.f32 %v9818, %v9858
        %v9860 = vpop.f32.mrb[0].mxu0
        %v9861 = vpop.f32.mrb[0].mxu0
        %9862 = vdwg.mxu0
        %9863 = vmatprep.subr.bf16.mxu0 %v7360
        %9864 = vmatpush1.bf16.msra.mxu0 %v7359
        %9865 = vmatprep.subr.bf16.mxu0 %v7368
        %9866 = vmatpush1.bf16.msra.mxu0 %v7367
        %9867 = vmatprep.subr.bf16.mxu0 %v7376
        %9868 = vmatpush1.bf16.msra.mxu0 %v7375
        %9869 = vmatprep.subr.bf16.mxu0 %v7384
        %9870 = vmatpush1.bf16.msra.mxu0 %v7383
        %9871 = vmatprep.subr.bf16.mxu0 %v7392
        %9872 = vmatpush1.bf16.msra.mxu0 %v7391
        %9873 = vmatprep.subr.bf16.mxu0 %v7400
        %9874 = vmatpush1.bf16.msra.mxu0 %v7399
        %9875 = vmatprep.subr.bf16.mxu0 %v7408
        %9876 = vmatpush1.bf16.msra.mxu0 %v7407
        %9877 = vmatprep.subr.bf16.mxu0 %v7416
        %9878 = vmatpush1.bf16.msra.mxu0 %v7415
        %9879 = vmatprep.subr.bf16.mxu0 %v7424
        %9880 = vmatpush1.bf16.msra.mxu0 %v7423
        %9881 = vmatprep.subr.bf16.mxu0 %v7432
        %9882 = vmatpush1.bf16.msra.mxu0 %v7431
        %9883 = vmatprep.subr.bf16.mxu0 %v7440
        %9884 = vmatpush1.bf16.msra.mxu0 %v7439
        %9885 = vmatprep.subr.bf16.mxu0 %v7448
        %9886 = vmatpush1.bf16.msra.mxu0 %v7447
        %9887 = vmatprep.subr.bf16.mxu0 %v7456
        %9888 = vmatpush1.bf16.msra.mxu0 %v7455
        %9889 = vmatprep.subr.bf16.mxu0 %v7464
        %9890 = vmatpush1.bf16.msra.mxu0 %v7463
        %9891 = vmatprep.subr.bf16.mxu0 %v7472
        %9892 = vmatpush1.bf16.msra.mxu0 %v7471
        %9893 = vmatprep.subr.bf16.mxu0 %v7480
        %9894 = vmatpush1.bf16.msra.mxu0 %v7479
        %9895 = vmatprep.mubr.bf16.mxu0 %v3494
        %9896 = vmatmul.mubr.bf16.gmra.mrb[0].mxu0 %v3493
        %v9897 = vpop.f32.mrb[0].mxu0
        %v9898 = vadd.f32 %v9857, %v9897
        %v9899 = vpop.f32.mrb[0].mxu0
        %v9900 = vadd.f32 %v9859, %v9899
        %v9901 = vpop.f32.mrb[0].mxu0
        %v9902 = vpop.f32.mrb[0].mxu0
        %9903 = vdwg.mxu0
        %9904 = vmatprep.subr.bf16.mxu0 %v7488
        %9905 = vmatpush1.bf16.msra.mxu0 %v7487
        %9906 = vmatprep.subr.bf16.mxu0 %v7496
        %9907 = vmatpush1.bf16.msra.mxu0 %v7495
        %9908 = vmatprep.subr.bf16.mxu0 %v7504
        %9909 = vmatpush1.bf16.msra.mxu0 %v7503
        %9910 = vmatprep.subr.bf16.mxu0 %v7512
        %9911 = vmatpush1.bf16.msra.mxu0 %v7511
        %9912 = vmatprep.subr.bf16.mxu0 %v7520
        %9913 = vmatpush1.bf16.msra.mxu0 %v7519
        %9914 = vmatprep.subr.bf16.mxu0 %v7528
        %9915 = vmatpush1.bf16.msra.mxu0 %v7527
        %9916 = vmatprep.subr.bf16.mxu0 %v7536
        %9917 = vmatpush1.bf16.msra.mxu0 %v7535
        %9918 = vmatprep.subr.bf16.mxu0 %v7544
        %9919 = vmatpush1.bf16.msra.mxu0 %v7543
        %9920 = vmatprep.subr.bf16.mxu0 %v7552
        %9921 = vmatpush1.bf16.msra.mxu0 %v7551
        %9922 = vmatprep.subr.bf16.mxu0 %v7560
        %9923 = vmatpush1.bf16.msra.mxu0 %v7559
        %9924 = vmatprep.subr.bf16.mxu0 %v7568
        %9925 = vmatpush1.bf16.msra.mxu0 %v7567
        %9926 = vmatprep.subr.bf16.mxu0 %v7576
        %9927 = vmatpush1.bf16.msra.mxu0 %v7575
        %9928 = vmatprep.subr.bf16.mxu0 %v7584
        %9929 = vmatpush1.bf16.msra.mxu0 %v7583
        %9930 = vmatprep.subr.bf16.mxu0 %v7592
        %9931 = vmatpush1.bf16.msra.mxu0 %v7591
        %9932 = vmatprep.subr.bf16.mxu0 %v7600
        %9933 = vmatpush1.bf16.msra.mxu0 %v7599
        %9934 = vmatprep.subr.bf16.mxu0 %v7608
        %9935 = vmatpush1.bf16.msra.mxu0 %v7607
        %9936 = vmatprep.mubr.bf16.mxu0 %v3496
        %9937 = vmatmul.mubr.bf16.gmra.mrb[0].mxu0 %v3495
        %v9938 = vpop.f32.mrb[0].mxu0
        %v9939 = vadd.f32 %v9898, %v9938
        %v9940 = vpop.f32.mrb[0].mxu0
        %v9941 = vadd.f32 %v9900, %v9940
        %v9942 = vpop.f32.mrb[0].mxu0
        %v9943 = vpop.f32.mrb[0].mxu0
        %9944 = vdwg.mxu0
        %v9945 = vadd.f32 %v2425, %v8955
        %v9946 = vadd.f32 %v2426, %v8957
        %v9947 = vadd.f32 %v2427, %v9283
        %v9948 = vadd.f32 %v2428, %v9285
        %v9949 = vadd.f32 %v2429, %v9611
        %v9950 = vadd.f32 %v2430, %v9613
        %v9951 = vadd.f32 %v2431, %v9939
        %v9952 = vadd.f32 %v2432, %v9941
        %9953 = vst [vmem:[#allocation2] sm:$0xff] %v9945
        %9954 = vst [vmem:[#allocation2 + $0x8] sm:$0xff] %v9946
        %9955 = vst [vmem:[#allocation2 + $0x10] sm:$0xff] %v9947
        %9956 = vst [vmem:[#allocation2 + $0x18] sm:$0xff] %v9948
        %9957 = vst [vmem:[#allocation2 + $0x20] sm:$0xff] %v9949
        %9958 = vst [vmem:[#allocation2 + $0x28] sm:$0xff] %v9950
        %9959 = vst [vmem:[#allocation2 + $0x30] sm:$0xff] %v9951
        %9960 = vst [vmem:[#allocation2 + $0x38] sm:$0xff] %v9952
        %p9961 = scmp.eq.s32.totalorder %s29, 1
        // Predicated region
        $region80: #{embedding_image_nn.1} parent=58 // pred_check
          %p9962 = pneg %p9961
        $region81: #{embedding_image_nn.1} parent=58 // pred_check_branch
          %9964 = sbr.rel (%p9962) target = $region83
        $region82: #{embedding_image_nn.1} parent=58 // pred_region
          %v9965 = vld [vmem:[#allocation2] sm:$0xff]
          %v9966 = vld [vmem:[#allocation2 + $0x8] sm:$0xff]
          %v9967 = vld [vmem:[#allocation2 + $0x10] sm:$0xff]
          %v9968 = vld [vmem:[#allocation2 + $0x18] sm:$0xff]
          %v9969 = vld [vmem:[#allocation2 + $0x20] sm:$0xff]
          %v9970 = vld [vmem:[#allocation2 + $0x28] sm:$0xff]
          %v9971 = vld [vmem:[#allocation2 + $0x30] sm:$0xff]
          %v9972 = vld [vmem:[#allocation2 + $0x38] sm:$0xff]
          %v9973 = vld [vmem:[%s2350] sm:$0xff]
          %v9975 = vlaneseq
          %v9976 = vshrl.u32 %v9975, 7
          %v9977 = vsub.s32 0, %v9976
          %v9978 = vrot.slane %v9973, %v9977
          %v9979 = vlaneseq
          %v9980 = vshrl.u32 %v9979, 7
          %v9981 = vsub.s32 1, %v9980
          %v9982 = vrot.slane %v9973, %v9981
          %v9983 = vlaneseq
          %v9984 = vshrl.u32 %v9983, 7
          %v9985 = vsub.s32 2, %v9984
          %v9986 = vrot.slane %v9973, %v9985
          %v9987 = vlaneseq
          %v9988 = vshrl.u32 %v9987, 7
          %v9989 = vsub.s32 3, %v9988
          %v9990 = vrot.slane %v9973, %v9989
          %v9991 = vlaneseq
          %v9992 = vshrl.u32 %v9991, 7
          %v9993 = vsub.s32 4, %v9992
          %v9994 = vrot.slane %v9973, %v9993
          %v9995 = vlaneseq
          %v9996 = vshrl.u32 %v9995, 7
          %v9997 = vsub.s32 5, %v9996
          %v9998 = vrot.slane %v9973, %v9997
          %v9999 = vlaneseq
          %v10000 = vshrl.u32 %v9999, 7
          %v10001 = vsub.s32 6, %v10000
          %v10002 = vrot.slane %v9973, %v10001
          %v10003 = vlaneseq
          %v10004 = vshrl.u32 %v10003, 7
          %v10005 = vsub.s32 7, %v10004
          %v10006 = vrot.slane %v9973, %v10005
          %v10015 = vadd.f32 %v9965, %v9978
          %v10016 = vadd.f32 %v9966, %v9982
          %v10017 = vadd.f32 %v9967, %v9986
          %v10018 = vadd.f32 %v9968, %v9990
          %v10019 = vadd.f32 %v9969, %v9994
          %v10020 = vadd.f32 %v9970, %v9998
          %v10021 = vadd.f32 %v9971, %v10002
          %v10022 = vadd.f32 %v9972, %v10006
          %s10023 = sld [smem:[#allocation3]]
          %vm10024 = vcmp.ge.f32.partialorder %v10015, 0.0
          %vm10025 = vcmp.ge.f32.partialorder %v10016, 0.0
          %vm10026 = vcmp.ge.f32.partialorder %v10017, 0.0
          %vm10027 = vcmp.ge.f32.partialorder %v10018, 0.0
          %vm10028 = vcmp.ge.f32.partialorder %v10019, 0.0
          %vm10029 = vcmp.ge.f32.partialorder %v10020, 0.0
          %vm10030 = vcmp.ge.f32.partialorder %v10021, 0.0
          %vm10031 = vcmp.ge.f32.partialorder %v10022, 0.0
          %v10032 = vstv %s10023
          %v10033 = vmul.f32 %v10032, %v10015
          %v10034 = vmul.f32 %v10032, %v10016
          %v10035 = vmul.f32 %v10032, %v10017
          %v10036 = vmul.f32 %v10032, %v10018
          %v10037 = vmul.f32 %v10032, %v10019
          %v10038 = vmul.f32 %v10032, %v10020
          %v10039 = vmul.f32 %v10032, %v10021
          %v10040 = vmul.f32 %v10032, %v10022
          %v10041 = vsel %vm10024, %v10015, %v10033
          %v10042 = vsel %vm10025, %v10016, %v10034
          %v10043 = vsel %vm10026, %v10017, %v10035
          %v10044 = vsel %vm10027, %v10018, %v10036
          %v10045 = vsel %vm10028, %v10019, %v10037
          %v10046 = vsel %vm10029, %v10020, %v10038
          %v10047 = vsel %vm10030, %v10021, %v10039
          %v10048 = vsel %vm10031, %v10022, %v10040
          %v10049 = vpack.c.bf16 %v10041, %v10041
          %v10050 = vpack.c.bf16 %v10042, %v10042
          %v10051 = vpack.c.bf16 %v10043, %v10043
          %v10052 = vpack.c.bf16 %v10044, %v10044
          %v10053 = vpack.c.bf16 %v10045, %v10045
          %v10054 = vpack.c.bf16 %v10046, %v10046
          %v10055 = vpack.c.bf16 %v10047, %v10047
          %v10056 = vpack.c.bf16 %v10048, %v10048
          %v10057 = vld [vmem:[%s2359] sm:$0xf]
          %v10058 = vld [vmem:[%s2359 + $0x4] sm:$0xf]
          %v10059 = vld [vmem:[%s2359 + $0x8] sm:$0xf]
          %v10060 = vld [vmem:[%s2359 + $0xc] sm:$0xf]
          %v10061 = vld [vmem:[%s2359 + $0x10] sm:$0xf]
          %v10062 = vld [vmem:[%s2359 + $0x14] sm:$0xf]
          %v10063 = vld [vmem:[%s2359 + $0x18] sm:$0xf]
          %v10064 = vld [vmem:[%s2359 + $0x1c] sm:$0xf]
          %v10065 = vld [vmem:[%s2359 + $0x20] sm:$0xf]
          %v10066 = vld [vmem:[%s2359 + $0x24] sm:$0xf]
          %v10067 = vld [vmem:[%s2359 + $0x28] sm:$0xf]
          %v10068 = vld [vmem:[%s2359 + $0x2c] sm:$0xf]
          %v10069 = vld [vmem:[%s2359 + $0x30] sm:$0xf]
          %v10070 = vld [vmem:[%s2359 + $0x34] sm:$0xf]
          %v10071 = vld [vmem:[%s2359 + $0x38] sm:$0xf]
          %v10072 = vld [vmem:[%s2359 + $0x3c] sm:$0xf]
          %v10073 = vld [vmem:[%s2359 + $0x40] sm:$0xf]
          %v10074 = vld [vmem:[%s2359 + $0x44] sm:$0xf]
          %v10075 = vld [vmem:[%s2359 + $0x48] sm:$0xf]
          %v10076 = vld [vmem:[%s2359 + $0x4c] sm:$0xf]
          %v10077 = vld [vmem:[%s2359 + $0x50] sm:$0xf]
          %v10078 = vld [vmem:[%s2359 + $0x54] sm:$0xf]
          %v10079 = vld [vmem:[%s2359 + $0x58] sm:$0xf]
          %v10080 = vld [vmem:[%s2359 + $0x5c] sm:$0xf]
          %v10081 = vld [vmem:[%s2359 + $0x60] sm:$0xf]
          %v10082 = vld [vmem:[%s2359 + $0x64] sm:$0xf]
          %v10083 = vld [vmem:[%s2359 + $0x68] sm:$0xf]
          %v10084 = vld [vmem:[%s2359 + $0x6c] sm:$0xf]
          %v10085 = vld [vmem:[%s2359 + $0x70] sm:$0xf]
          %v10086 = vld [vmem:[%s2359 + $0x74] sm:$0xf]
          %v10087 = vld [vmem:[%s2359 + $0x78] sm:$0xf]
          %v10088 = vld [vmem:[%s2359 + $0x7c] sm:$0xf]
          %v10089 = vld [vmem:[%s2359 + $0x80] sm:$0xf]
          %v10090 = vld [vmem:[%s2359 + $0x84] sm:$0xf]
          %v10091 = vld [vmem:[%s2359 + $0x88] sm:$0xf]
          %v10092 = vld [vmem:[%s2359 + $0x8c] sm:$0xf]
          %v10093 = vld [vmem:[%s2359 + $0x90] sm:$0xf]
          %v10094 = vld [vmem:[%s2359 + $0x94] sm:$0xf]
          %v10095 = vld [vmem:[%s2359 + $0x98] sm:$0xf]
          %v10096 = vld [vmem:[%s2359 + $0x9c] sm:$0xf]
          %v10097 = vld [vmem:[%s2359 + $0xa0] sm:$0xf]
          %v10098 = vld [vmem:[%s2359 + $0xa4] sm:$0xf]
          %v10099 = vld [vmem:[%s2359 + $0xa8] sm:$0xf]
          %v10100 = vld [vmem:[%s2359 + $0xac] sm:$0xf]
          %v10101 = vld [vmem:[%s2359 + $0xb0] sm:$0xf]
          %v10102 = vld [vmem:[%s2359 + $0xb4] sm:$0xf]
          %v10103 = vld [vmem:[%s2359 + $0xb8] sm:$0xf]
          %v10104 = vld [vmem:[%s2359 + $0xbc] sm:$0xf]
          %v10105 = vld [vmem:[%s2359 + $0xc0] sm:$0xf]
          %v10106 = vld [vmem:[%s2359 + $0xc4] sm:$0xf]
          %v10107 = vld [vmem:[%s2359 + $0xc8] sm:$0xf]
          %v10108 = vld [vmem:[%s2359 + $0xcc] sm:$0xf]
          %v10109 = vld [vmem:[%s2359 + $0xd0] sm:$0xf]
          %v10110 = vld [vmem:[%s2359 + $0xd4] sm:$0xf]
          %v10111 = vld [vmem:[%s2359 + $0xd8] sm:$0xf]
          %v10112 = vld [vmem:[%s2359 + $0xdc] sm:$0xf]
          %v10113 = vld [vmem:[%s2359 + $0xe0] sm:$0xf]
          %v10114 = vld [vmem:[%s2359 + $0xe4] sm:$0xf]
          %v10115 = vld [vmem:[%s2359 + $0xe8] sm:$0xf]
          %v10116 = vld [vmem:[%s2359 + $0xec] sm:$0xf]
          %v10117 = vld [vmem:[%s2359 + $0xf0] sm:$0xf]
          %v10118 = vld [vmem:[%s2359 + $0xf4] sm:$0xf]
          %v10119 = vld [vmem:[%s2359 + $0xf8] sm:$0xf]
          %v10120 = vld [vmem:[%s2359 + $0xfc] sm:$0xf]
          %v10121 = vld [vmem:[%s2359 + $0x100] sm:$0xf]
          %v10122 = vld [vmem:[%s2359 + $0x104] sm:$0xf]
          %v10123 = vld [vmem:[%s2359 + $0x108] sm:$0xf]
          %v10124 = vld [vmem:[%s2359 + $0x10c] sm:$0xf]
          %v10125 = vld [vmem:[%s2359 + $0x110] sm:$0xf]
          %v10126 = vld [vmem:[%s2359 + $0x114] sm:$0xf]
          %v10127 = vld [vmem:[%s2359 + $0x118] sm:$0xf]
          %v10128 = vld [vmem:[%s2359 + $0x11c] sm:$0xf]
          %v10129 = vld [vmem:[%s2359 + $0x120] sm:$0xf]
          %v10130 = vld [vmem:[%s2359 + $0x124] sm:$0xf]
          %v10131 = vld [vmem:[%s2359 + $0x128] sm:$0xf]
          %v10132 = vld [vmem:[%s2359 + $0x12c] sm:$0xf]
          %v10133 = vld [vmem:[%s2359 + $0x130] sm:$0xf]
          %v10134 = vld [vmem:[%s2359 + $0x134] sm:$0xf]
          %v10135 = vld [vmem:[%s2359 + $0x138] sm:$0xf]
          %v10136 = vld [vmem:[%s2359 + $0x13c] sm:$0xf]
          %v10137 = vld [vmem:[%s2359 + $0x140] sm:$0xf]
          %v10138 = vld [vmem:[%s2359 + $0x144] sm:$0xf]
          %v10139 = vld [vmem:[%s2359 + $0x148] sm:$0xf]
          %v10140 = vld [vmem:[%s2359 + $0x14c] sm:$0xf]
          %v10141 = vld [vmem:[%s2359 + $0x150] sm:$0xf]
          %v10142 = vld [vmem:[%s2359 + $0x154] sm:$0xf]
          %v10143 = vld [vmem:[%s2359 + $0x158] sm:$0xf]
          %v10144 = vld [vmem:[%s2359 + $0x15c] sm:$0xf]
          %v10145 = vld [vmem:[%s2359 + $0x160] sm:$0xf]
          %v10146 = vld [vmem:[%s2359 + $0x164] sm:$0xf]
          %v10147 = vld [vmem:[%s2359 + $0x168] sm:$0xf]
          %v10148 = vld [vmem:[%s2359 + $0x16c] sm:$0xf]
          %v10149 = vld [vmem:[%s2359 + $0x170] sm:$0xf]
          %v10150 = vld [vmem:[%s2359 + $0x174] sm:$0xf]
          %v10151 = vld [vmem:[%s2359 + $0x178] sm:$0xf]
          %v10152 = vld [vmem:[%s2359 + $0x17c] sm:$0xf]
          %v10153 = vld [vmem:[%s2359 + $0x180] sm:$0xf]
          %v10154 = vld [vmem:[%s2359 + $0x184] sm:$0xf]
          %v10155 = vld [vmem:[%s2359 + $0x188] sm:$0xf]
          %v10156 = vld [vmem:[%s2359 + $0x18c] sm:$0xf]
          %v10157 = vld [vmem:[%s2359 + $0x190] sm:$0xf]
          %v10158 = vld [vmem:[%s2359 + $0x194] sm:$0xf]
          %v10159 = vld [vmem:[%s2359 + $0x198] sm:$0xf]
          %v10160 = vld [vmem:[%s2359 + $0x19c] sm:$0xf]
          %v10161 = vld [vmem:[%s2359 + $0x1a0] sm:$0xf]
          %v10162 = vld [vmem:[%s2359 + $0x1a4] sm:$0xf]
          %v10163 = vld [vmem:[%s2359 + $0x1a8] sm:$0xf]
          %v10164 = vld [vmem:[%s2359 + $0x1ac] sm:$0xf]
          %v10165 = vld [vmem:[%s2359 + $0x1b0] sm:$0xf]
          %v10166 = vld [vmem:[%s2359 + $0x1b4] sm:$0xf]
          %v10167 = vld [vmem:[%s2359 + $0x1b8] sm:$0xf]
          %v10168 = vld [vmem:[%s2359 + $0x1bc] sm:$0xf]
          %v10169 = vld [vmem:[%s2359 + $0x1c0] sm:$0xf]
          %v10170 = vld [vmem:[%s2359 + $0x1c4] sm:$0xf]
          %v10171 = vld [vmem:[%s2359 + $0x1c8] sm:$0xf]
          %v10172 = vld [vmem:[%s2359 + $0x1cc] sm:$0xf]
          %v10173 = vld [vmem:[%s2359 + $0x1d0] sm:$0xf]
          %v10174 = vld [vmem:[%s2359 + $0x1d4] sm:$0xf]
          %v10175 = vld [vmem:[%s2359 + $0x1d8] sm:$0xf]
          %v10176 = vld [vmem:[%s2359 + $0x1dc] sm:$0xf]
          %v10177 = vld [vmem:[%s2359 + $0x1e0] sm:$0xf]
          %v10178 = vld [vmem:[%s2359 + $0x1e4] sm:$0xf]
          %v10179 = vld [vmem:[%s2359 + $0x1e8] sm:$0xf]
          %v10180 = vld [vmem:[%s2359 + $0x1ec] sm:$0xf]
          %v10181 = vld [vmem:[%s2359 + $0x1f0] sm:$0xf]
          %v10182 = vld [vmem:[%s2359 + $0x1f4] sm:$0xf]
          %v10183 = vld [vmem:[%s2359 + $0x1f8] sm:$0xf]
          %v10184 = vld [vmem:[%s2359 + $0x1fc] sm:$0xf]
          %v10313 = vunpack.c.l.b16 %v10057
          %v10314 = vunpack.c.l.b16 %v10058
          %v10315 = vunpack.c.l.b16 %v10059
          %v10316 = vunpack.c.l.b16 %v10060
          %v10317 = vunpack.c.l.b16 %v10061
          %v10318 = vunpack.c.l.b16 %v10062
          %v10319 = vunpack.c.l.b16 %v10063
          %v10320 = vunpack.c.l.b16 %v10064
          %v10321 = vunpack.c.l.b16 %v10065
          %v10322 = vunpack.c.l.b16 %v10066
          %v10323 = vunpack.c.l.b16 %v10067
          %v10324 = vunpack.c.l.b16 %v10068
          %v10325 = vunpack.c.l.b16 %v10069
          %v10326 = vunpack.c.l.b16 %v10070
          %v10327 = vunpack.c.l.b16 %v10071
          %v10328 = vunpack.c.l.b16 %v10072
          %v10329 = vunpack.c.l.b16 %v10073
          %v10330 = vunpack.c.l.b16 %v10074
          %v10331 = vunpack.c.l.b16 %v10075
          %v10332 = vunpack.c.l.b16 %v10076
          %v10333 = vunpack.c.l.b16 %v10077
          %v10334 = vunpack.c.l.b16 %v10078
          %v10335 = vunpack.c.l.b16 %v10079
          %v10336 = vunpack.c.l.b16 %v10080
          %v10337 = vunpack.c.l.b16 %v10081
          %v10338 = vunpack.c.l.b16 %v10082
          %v10339 = vunpack.c.l.b16 %v10083
          %v10340 = vunpack.c.l.b16 %v10084
          %v10341 = vunpack.c.l.b16 %v10085
          %v10342 = vunpack.c.l.b16 %v10086
          %v10343 = vunpack.c.l.b16 %v10087
          %v10344 = vunpack.c.l.b16 %v10088
          %v10345 = vunpack.c.l.b16 %v10089
          %v10346 = vunpack.c.l.b16 %v10090
          %v10347 = vunpack.c.l.b16 %v10091
          %v10348 = vunpack.c.l.b16 %v10092
          %v10349 = vunpack.c.l.b16 %v10093
          %v10350 = vunpack.c.l.b16 %v10094
          %v10351 = vunpack.c.l.b16 %v10095
          %v10352 = vunpack.c.l.b16 %v10096
          %v10353 = vunpack.c.l.b16 %v10097
          %v10354 = vunpack.c.l.b16 %v10098
          %v10355 = vunpack.c.l.b16 %v10099
          %v10356 = vunpack.c.l.b16 %v10100
          %v10357 = vunpack.c.l.b16 %v10101
          %v10358 = vunpack.c.l.b16 %v10102
          %v10359 = vunpack.c.l.b16 %v10103
          %v10360 = vunpack.c.l.b16 %v10104
          %v10361 = vunpack.c.l.b16 %v10105
          %v10362 = vunpack.c.l.b16 %v10106
          %v10363 = vunpack.c.l.b16 %v10107
          %v10364 = vunpack.c.l.b16 %v10108
          %v10365 = vunpack.c.l.b16 %v10109
          %v10366 = vunpack.c.l.b16 %v10110
          %v10367 = vunpack.c.l.b16 %v10111
          %v10368 = vunpack.c.l.b16 %v10112
          %v10369 = vunpack.c.l.b16 %v10113
          %v10370 = vunpack.c.l.b16 %v10114
          %v10371 = vunpack.c.l.b16 %v10115
          %v10372 = vunpack.c.l.b16 %v10116
          %v10373 = vunpack.c.l.b16 %v10117
          %v10374 = vunpack.c.l.b16 %v10118
          %v10375 = vunpack.c.l.b16 %v10119
          %v10376 = vunpack.c.l.b16 %v10120
          %v10377 = vunpack.c.l.b16 %v10121
          %v10378 = vunpack.c.l.b16 %v10122
          %v10379 = vunpack.c.l.b16 %v10123
          %v10380 = vunpack.c.l.b16 %v10124
          %v10381 = vunpack.c.l.b16 %v10125
          %v10382 = vunpack.c.l.b16 %v10126
          %v10383 = vunpack.c.l.b16 %v10127
          %v10384 = vunpack.c.l.b16 %v10128
          %v10385 = vunpack.c.l.b16 %v10129
          %v10386 = vunpack.c.l.b16 %v10130
          %v10387 = vunpack.c.l.b16 %v10131
          %v10388 = vunpack.c.l.b16 %v10132
          %v10389 = vunpack.c.l.b16 %v10133
          %v10390 = vunpack.c.l.b16 %v10134
          %v10391 = vunpack.c.l.b16 %v10135
          %v10392 = vunpack.c.l.b16 %v10136
          %v10393 = vunpack.c.l.b16 %v10137
          %v10394 = vunpack.c.l.b16 %v10138
          %v10395 = vunpack.c.l.b16 %v10139
          %v10396 = vunpack.c.l.b16 %v10140
          %v10397 = vunpack.c.l.b16 %v10141
          %v10398 = vunpack.c.l.b16 %v10142
          %v10399 = vunpack.c.l.b16 %v10143
          %v10400 = vunpack.c.l.b16 %v10144
          %v10401 = vunpack.c.l.b16 %v10145
          %v10402 = vunpack.c.l.b16 %v10146
          %v10403 = vunpack.c.l.b16 %v10147
          %v10404 = vunpack.c.l.b16 %v10148
          %v10405 = vunpack.c.l.b16 %v10149
          %v10406 = vunpack.c.l.b16 %v10150
          %v10407 = vunpack.c.l.b16 %v10151
          %v10408 = vunpack.c.l.b16 %v10152
          %v10409 = vunpack.c.l.b16 %v10153
          %v10410 = vunpack.c.l.b16 %v10154
          %v10411 = vunpack.c.l.b16 %v10155
          %v10412 = vunpack.c.l.b16 %v10156
          %v10413 = vunpack.c.l.b16 %v10157
          %v10414 = vunpack.c.l.b16 %v10158
          %v10415 = vunpack.c.l.b16 %v10159
          %v10416 = vunpack.c.l.b16 %v10160
          %v10417 = vunpack.c.l.b16 %v10161
          %v10418 = vunpack.c.l.b16 %v10162
          %v10419 = vunpack.c.l.b16 %v10163
          %v10420 = vunpack.c.l.b16 %v10164
          %v10421 = vunpack.c.l.b16 %v10165
          %v10422 = vunpack.c.l.b16 %v10166
          %v10423 = vunpack.c.l.b16 %v10167
          %v10424 = vunpack.c.l.b16 %v10168
          %v10425 = vunpack.c.l.b16 %v10169
          %v10426 = vunpack.c.l.b16 %v10170
          %v10427 = vunpack.c.l.b16 %v10171
          %v10428 = vunpack.c.l.b16 %v10172
          %v10429 = vunpack.c.l.b16 %v10173
          %v10430 = vunpack.c.l.b16 %v10174
          %v10431 = vunpack.c.l.b16 %v10175
          %v10432 = vunpack.c.l.b16 %v10176
          %v10433 = vunpack.c.l.b16 %v10177
          %v10434 = vunpack.c.l.b16 %v10178
          %v10435 = vunpack.c.l.b16 %v10179
          %v10436 = vunpack.c.l.b16 %v10180
          %v10437 = vunpack.c.l.b16 %v10181
          %v10438 = vunpack.c.l.b16 %v10182
          %v10439 = vunpack.c.l.b16 %v10183
          %v10440 = vunpack.c.l.b16 %v10184
          %v10441 = vpack.c.b16 %v10314, %v10313
          %v10442 = vpack.c.b16 %v10316, %v10315
          %v10443 = vpack.c.b16 %v10318, %v10317
          %v10444 = vpack.c.b16 %v10320, %v10319
          %v10445 = vpack.c.b16 %v10322, %v10321
          %v10446 = vpack.c.b16 %v10324, %v10323
          %v10447 = vpack.c.b16 %v10326, %v10325
          %v10448 = vpack.c.b16 %v10328, %v10327
          %v10449 = vpack.c.b16 %v10330, %v10329
          %v10450 = vpack.c.b16 %v10332, %v10331
          %v10451 = vpack.c.b16 %v10334, %v10333
          %v10452 = vpack.c.b16 %v10336, %v10335
          %v10453 = vpack.c.b16 %v10338, %v10337
          %v10454 = vpack.c.b16 %v10340, %v10339
          %v10455 = vpack.c.b16 %v10342, %v10341
          %v10456 = vpack.c.b16 %v10344, %v10343
          %v10457 = vpack.c.b16 %v10346, %v10345
          %v10458 = vpack.c.b16 %v10348, %v10347
          %v10459 = vpack.c.b16 %v10350, %v10349
          %v10460 = vpack.c.b16 %v10352, %v10351
          %v10461 = vpack.c.b16 %v10354, %v10353
          %v10462 = vpack.c.b16 %v10356, %v10355
          %v10463 = vpack.c.b16 %v10358, %v10357
          %v10464 = vpack.c.b16 %v10360, %v10359
          %v10465 = vpack.c.b16 %v10362, %v10361
          %v10466 = vpack.c.b16 %v10364, %v10363
          %v10467 = vpack.c.b16 %v10366, %v10365
          %v10468 = vpack.c.b16 %v10368, %v10367
          %v10469 = vpack.c.b16 %v10370, %v10369
          %v10470 = vpack.c.b16 %v10372, %v10371
          %v10471 = vpack.c.b16 %v10374, %v10373
          %v10472 = vpack.c.b16 %v10376, %v10375
          %v10473 = vpack.c.b16 %v10378, %v10377
          %v10474 = vpack.c.b16 %v10380, %v10379
          %v10475 = vpack.c.b16 %v10382, %v10381
          %v10476 = vpack.c.b16 %v10384, %v10383
          %v10477 = vpack.c.b16 %v10386, %v10385
          %v10478 = vpack.c.b16 %v10388, %v10387
          %v10479 = vpack.c.b16 %v10390, %v10389
          %v10480 = vpack.c.b16 %v10392, %v10391
          %v10481 = vpack.c.b16 %v10394, %v10393
          %v10482 = vpack.c.b16 %v10396, %v10395
          %v10483 = vpack.c.b16 %v10398, %v10397
          %v10484 = vpack.c.b16 %v10400, %v10399
          %v10485 = vpack.c.b16 %v10402, %v10401
          %v10486 = vpack.c.b16 %v10404, %v10403
          %v10487 = vpack.c.b16 %v10406, %v10405
          %v10488 = vpack.c.b16 %v10408, %v10407
          %v10489 = vpack.c.b16 %v10410, %v10409
          %v10490 = vpack.c.b16 %v10412, %v10411
          %v10491 = vpack.c.b16 %v10414, %v10413
          %v10492 = vpack.c.b16 %v10416, %v10415
          %v10493 = vpack.c.b16 %v10418, %v10417
          %v10494 = vpack.c.b16 %v10420, %v10419
          %v10495 = vpack.c.b16 %v10422, %v10421
          %v10496 = vpack.c.b16 %v10424, %v10423
          %v10497 = vpack.c.b16 %v10426, %v10425
          %v10498 = vpack.c.b16 %v10428, %v10427
          %v10499 = vpack.c.b16 %v10430, %v10429
          %v10500 = vpack.c.b16 %v10432, %v10431
          %v10501 = vpack.c.b16 %v10434, %v10433
          %v10502 = vpack.c.b16 %v10436, %v10435
          %v10503 = vpack.c.b16 %v10438, %v10437
          %v10504 = vpack.c.b16 %v10440, %v10439
          %10569 = vmatprep.subr.bf16.mxu0 0
          %10570 = vmatpush1.bf16.msra.mxu0 %v10441
          %10571 = vmatprep.subr.bf16.mxu0 0
          %10572 = vmatpush1.bf16.msra.mxu0 %v10442
          %10573 = vmatprep.subr.bf16.mxu0 0
          %10574 = vmatpush1.bf16.msra.mxu0 %v10443
          %10575 = vmatprep.subr.bf16.mxu0 0
          %10576 = vmatpush1.bf16.msra.mxu0 %v10444
          %10577 = vmatprep.subr.bf16.mxu0 0
          %10578 = vmatpush1.bf16.msra.mxu0 %v10445
          %10579 = vmatprep.subr.bf16.mxu0 0
          %10580 = vmatpush1.bf16.msra.mxu0 %v10446
          %10581 = vmatprep.subr.bf16.mxu0 0
          %10582 = vmatpush1.bf16.msra.mxu0 %v10447
          %10583 = vmatprep.subr.bf16.mxu0 0
          %10584 = vmatpush1.bf16.msra.mxu0 %v10448
          %10585 = vmatprep.subr.bf16.mxu0 0
          %10586 = vmatpush1.bf16.msra.mxu0 %v10449
          %10587 = vmatprep.subr.bf16.mxu0 0
          %10588 = vmatpush1.bf16.msra.mxu0 %v10450
          %10589 = vmatprep.subr.bf16.mxu0 0
          %10590 = vmatpush1.bf16.msra.mxu0 %v10451
          %10591 = vmatprep.subr.bf16.mxu0 0
          %10592 = vmatpush1.bf16.msra.mxu0 %v10452
          %10593 = vmatprep.subr.bf16.mxu0 0
          %10594 = vmatpush1.bf16.msra.mxu0 %v10453
          %10595 = vmatprep.subr.bf16.mxu0 0
          %10596 = vmatpush1.bf16.msra.mxu0 %v10454
          %10597 = vmatprep.subr.bf16.mxu0 0
          %10598 = vmatpush1.bf16.msra.mxu0 %v10455
          %10599 = vmatprep.subr.bf16.mxu0 0
          %10600 = vmatpush1.bf16.msra.mxu0 %v10456
          %10601 = vmatprep.mubr.bf16.mxu0 %v10050
          %10602 = vmatmul.mubr.bf16.gmra.mrb[0].mxu0 %v10049
          %v10603 = vpop.f32.mrb[0].mxu0
          %v10604 = vadd.f32 0.0, %v10603
          %v10605 = vpop.f32.mrb[0].mxu0
          %v10606 = vpop.f32.mrb[0].mxu0
          %v10607 = vpop.f32.mrb[0].mxu0
          %10608 = vdwg.mxu0
          %10609 = vmatprep.subr.bf16.mxu0 0
          %10610 = vmatpush1.bf16.msra.mxu0 %v10457
          %10611 = vmatprep.subr.bf16.mxu0 0
          %10612 = vmatpush1.bf16.msra.mxu0 %v10458
          %10613 = vmatprep.subr.bf16.mxu0 0
          %10614 = vmatpush1.bf16.msra.mxu0 %v10459
          %10615 = vmatprep.subr.bf16.mxu0 0
          %10616 = vmatpush1.bf16.msra.mxu0 %v10460
          %10617 = vmatprep.subr.bf16.mxu0 0
          %10618 = vmatpush1.bf16.msra.mxu0 %v10461
          %10619 = vmatprep.subr.bf16.mxu0 0
          %10620 = vmatpush1.bf16.msra.mxu0 %v10462
          %10621 = vmatprep.subr.bf16.mxu0 0
          %10622 = vmatpush1.bf16.msra.mxu0 %v10463
          %10623 = vmatprep.subr.bf16.mxu0 0
          %10624 = vmatpush1.bf16.msra.mxu0 %v10464
          %10625 = vmatprep.subr.bf16.mxu0 0
          %10626 = vmatpush1.bf16.msra.mxu0 %v10465
          %10627 = vmatprep.subr.bf16.mxu0 0
          %10628 = vmatpush1.bf16.msra.mxu0 %v10466
          %10629 = vmatprep.subr.bf16.mxu0 0
          %10630 = vmatpush1.bf16.msra.mxu0 %v10467
          %10631 = vmatprep.subr.bf16.mxu0 0
          %10632 = vmatpush1.bf16.msra.mxu0 %v10468
          %10633 = vmatprep.subr.bf16.mxu0 0
          %10634 = vmatpush1.bf16.msra.mxu0 %v10469
          %10635 = vmatprep.subr.bf16.mxu0 0
          %10636 = vmatpush1.bf16.msra.mxu0 %v10470
          %10637 = vmatprep.subr.bf16.mxu0 0
          %10638 = vmatpush1.bf16.msra.mxu0 %v10471
          %10639 = vmatprep.subr.bf16.mxu0 0
          %10640 = vmatpush1.bf16.msra.mxu0 %v10472
          %10641 = vmatprep.mubr.bf16.mxu0 %v10052
          %10642 = vmatmul.mubr.bf16.gmra.mrb[0].mxu0 %v10051
          %v10643 = vpop.f32.mrb[0].mxu0
          %v10644 = vadd.f32 %v10604, %v10643
          %v10645 = vpop.f32.mrb[0].mxu0
          %v10646 = vpop.f32.mrb[0].mxu0
          %v10647 = vpop.f32.mrb[0].mxu0
          %10648 = vdwg.mxu0
          %10649 = vmatprep.subr.bf16.mxu0 0
          %10650 = vmatpush1.bf16.msra.mxu0 %v10473
          %10651 = vmatprep.subr.bf16.mxu0 0
          %10652 = vmatpush1.bf16.msra.mxu0 %v10474
          %10653 = vmatprep.subr.bf16.mxu0 0
          %10654 = vmatpush1.bf16.msra.mxu0 %v10475
          %10655 = vmatprep.subr.bf16.mxu0 0
          %10656 = vmatpush1.bf16.msra.mxu0 %v10476
          %10657 = vmatprep.subr.bf16.mxu0 0
          %10658 = vmatpush1.bf16.msra.mxu0 %v10477
          %10659 = vmatprep.subr.bf16.mxu0 0
          %10660 = vmatpush1.bf16.msra.mxu0 %v10478
          %10661 = vmatprep.subr.bf16.mxu0 0
          %10662 = vmatpush1.bf16.msra.mxu0 %v10479
          %10663 = vmatprep.subr.bf16.mxu0 0
          %10664 = vmatpush1.bf16.msra.mxu0 %v10480
          %10665 = vmatprep.subr.bf16.mxu0 0
          %10666 = vmatpush1.bf16.msra.mxu0 %v10481
          %10667 = vmatprep.subr.bf16.mxu0 0
          %10668 = vmatpush1.bf16.msra.mxu0 %v10482
          %10669 = vmatprep.subr.bf16.mxu0 0
          %10670 = vmatpush1.bf16.msra.mxu0 %v10483
          %10671 = vmatprep.subr.bf16.mxu0 0
          %10672 = vmatpush1.bf16.msra.mxu0 %v10484
          %10673 = vmatprep.subr.bf16.mxu0 0
          %10674 = vmatpush1.bf16.msra.mxu0 %v10485
          %10675 = vmatprep.subr.bf16.mxu0 0
          %10676 = vmatpush1.bf16.msra.mxu0 %v10486
          %10677 = vmatprep.subr.bf16.mxu0 0
          %10678 = vmatpush1.bf16.msra.mxu0 %v10487
          %10679 = vmatprep.subr.bf16.mxu0 0
          %10680 = vmatpush1.bf16.msra.mxu0 %v10488
          %10681 = vmatprep.mubr.bf16.mxu0 %v10054
          %10682 = vmatmul.mubr.bf16.gmra.mrb[0].mxu0 %v10053
          %v10683 = vpop.f32.mrb[0].mxu0
          %v10684 = vadd.f32 %v10644, %v10683
          %v10685 = vpop.f32.mrb[0].mxu0
          %v10686 = vpop.f32.mrb[0].mxu0
          %v10687 = vpop.f32.mrb[0].mxu0
          %10688 = vdwg.mxu0
          %10689 = vmatprep.subr.bf16.mxu0 0
          %10690 = vmatpush1.bf16.msra.mxu0 %v10489
          %10691 = vmatprep.subr.bf16.mxu0 0
          %10692 = vmatpush1.bf16.msra.mxu0 %v10490
          %10693 = vmatprep.subr.bf16.mxu0 0
          %10694 = vmatpush1.bf16.msra.mxu0 %v10491
          %10695 = vmatprep.subr.bf16.mxu0 0
          %10696 = vmatpush1.bf16.msra.mxu0 %v10492
          %10697 = vmatprep.subr.bf16.mxu0 0
          %10698 = vmatpush1.bf16.msra.mxu0 %v10493
          %10699 = vmatprep.subr.bf16.mxu0 0
          %10700 = vmatpush1.bf16.msra.mxu0 %v10494
          %10701 = vmatprep.subr.bf16.mxu0 0
          %10702 = vmatpush1.bf16.msra.mxu0 %v10495
          %10703 = vmatprep.subr.bf16.mxu0 0
          %10704 = vmatpush1.bf16.msra.mxu0 %v10496
          %10705 = vmatprep.subr.bf16.mxu0 0
          %10706 = vmatpush1.bf16.msra.mxu0 %v10497
          %10707 = vmatprep.subr.bf16.mxu0 0
          %10708 = vmatpush1.bf16.msra.mxu0 %v10498
          %10709 = vmatprep.subr.bf16.mxu0 0
          %10710 = vmatpush1.bf16.msra.mxu0 %v10499
          %10711 = vmatprep.subr.bf16.mxu0 0
          %10712 = vmatpush1.bf16.msra.mxu0 %v10500
          %10713 = vmatprep.subr.bf16.mxu0 0
          %10714 = vmatpush1.bf16.msra.mxu0 %v10501
          %10715 = vmatprep.subr.bf16.mxu0 0
          %10716 = vmatpush1.bf16.msra.mxu0 %v10502
          %10717 = vmatprep.subr.bf16.mxu0 0
          %10718 = vmatpush1.bf16.msra.mxu0 %v10503
          %10719 = vmatprep.subr.bf16.mxu0 0
          %10720 = vmatpush1.bf16.msra.mxu0 %v10504
          %10721 = vmatprep.mubr.bf16.mxu0 %v10056
          %10722 = vmatmul.mubr.bf16.gmra.mrb[0].mxu0 %v10055
          %v10723 = vpop.f32.mrb[0].mxu0
          %v10724 = vadd.f32 %v10684, %v10723
          %v10725 = vpop.f32.mrb[0].mxu0
          %v10726 = vpop.f32.mrb[0].mxu0
          %v10727 = vpop.f32.mrb[0].mxu0
          %10728 = vdwg.mxu0
          %10729 = vst [vmem:[%s2394] sm:$0xff] %v10724
        $region83: #{embedding_image_nn.1} parent=58 // pred_fallthru
          _
        %s10730 = sand.u32 %s166, 1
        %s10731 = scalar_lea.sflag [#allocation6], %s10730
        %s10732 = sand.u32 %s166, 1
        %s10733 = smul.addr %s10732, 8
        %s10734 = scalar_lea.vmem [#allocation11], %s10733
        // Predicated region
        $region84: #{embedding_image_nn.1} parent=58 // pred_check
          %p10735 = pneg %p176
        $region85: #{embedding_image_nn.1} parent=58 // pred_check_branch
          %10737 = sbr.rel (%p10735) target = $region87
        $region86: #{embedding_image_nn.1} parent=58 // pred_region
          %s10739 = ssub.s32 128, 128
          %10740 = vsyncadd %s10731, %s10739
          %s10741 = smul.addr %s28, 128
          %s10742 = scalar_lea.hbm %s5, %s10741
          %s10744 = sshll.u32 %s10734, 4
          %s10745 = int_to_ptr.vmem [resolvable:$true] %s10744
          %10747 = dma.vmem_to_hbm [thread:$0]  %s10745, 128, %s10742, %s10731
        $region87: #{embedding_image_nn.1} parent=58 // pred_fallthru
          _
      $region59: #{embedding_image_nn.1} parent=5 // pred_fallthru
        _
      %p10748 = scmp.le.s32.totalorder 2, %s19
      // Predicated region
      $region88: #{embedding_image_nn.1} parent=5 // pred_check
        %p10749 = pneg %p10748
      $region89: #{embedding_image_nn.1} parent=5 // pred_check_branch
        %10751 = sbr.rel (%p10749) target = $region91
      $region90: #{embedding_image_nn.1} parent=5 // pred_region
        %s10752 = ssub.s32 %s19, 2
        // Predicated region
        $region92: #{embedding_image_nn.1} parent=90 // pred_check
          %p10753 = pneg %p182
        $region93: #{embedding_image_nn.1} parent=90 // pred_check_branch
          %10755 = sbr.rel (%p10753) target = $region95
        $region94: #{embedding_image_nn.1} parent=90 // pred_region
          %s10756 = sand.u32 %s167, 1
          %s10757 = scalar_lea.sflag [#allocation6], %s10756
          %s10758 = sand.u32 %s167, 1
          %s10759 = smul.addr %s10758, 8
          %s10760 = scalar_lea.vmem [#allocation11], %s10759
          %10761 = dma.done %s10757, 128
        $region95: #{embedding_image_nn.1} parent=90 // pred_fallthru
          _
      $region91: #{embedding_image_nn.1} parent=5 // pred_fallthru
        _
    $region6: #{embedding_image_nn.1} parent=1 // loop_footer
      %s23 = sadd.s32 1, %s19
    $region7: #{embedding_image_nn.1} parent=1 // loop_footer_branch
      %18 = sbr.rel target = $region3
    $region8: #{embedding_image_nn.1} parent=1 // loop_exit
      _
    %10762 = vsyncpa [#allocation5], 1
    %s10763 = scalar_lea.sflag [#allocation5], 1
    %10764 = vsyncpa %s10763, 1
    %10765 = vsyncpa [#allocation9], 1
    %s10766 = scalar_lea.sflag [#allocation9], 1
    %10767 = vsyncpa %s10766, 1
    %10768 = vsyncpa [#allocation6], 1
    %s10769 = scalar_lea.sflag [#allocation6], 1
    %10770 = vsyncpa %s10769, 1

</llo_original>
